<compile_context>
chip_gen: v5e
topology: v5e:2x2
jax: 0.10.0
libtpu: 0.0.40
codegen_flags: <defaults>
</compile_context>

<pallas_src>
import functools

import jax
import jax.numpy as jnp
from jax.experimental import pallas as pl
from jax.experimental.pallas import tpu as pltpu

NEG_SLOPE = 0.2
BN_EPS = 1e-5
GF_DIM = 8        # gf_dim (small for the demo; PyTorch default is 16)
N_CHANNELS = 2    # n_channels

_MAX_TK = 512     # K-reduction tile (multiple of 128)
_MAX_TM = 1024    # lane (M) tile


# ----------------------------------------------------------------------------- #
# Pallas kernels: fused (Co,K) @ (K,M) matmul + affine + LeakyReLU + residual
# ----------------------------------------------------------------------------- #
def _epilogue(y, s, t, r, act, neg_slope):
    y = y * s + t                                  # bias + eval-BN folded affine
    if act:
        y = jnp.where(y >= 0, y, neg_slope * y)    # (possibly folded) LeakyReLU
    if r is not None:
        y = y + r                                  # fused residual add
    return y


def _conv_mm_single_kernel(w_ref, x_ref, s_ref, t_ref, *rest,
                           act, neg_slope, has_res):
    # Whole K reduction fits in one tile: single MXU matmul, epilogue, direct store.
    if has_res:
        r_ref, o_ref = rest
        r = r_ref[...]
    else:
        (o_ref,) = rest
        r = None
    y = jnp.dot(w_ref[...], x_ref[...], preferred_element_type=jnp.float32)
    o_ref[...] = _epilogue(y, s_ref[...], t_ref[...], r, act, neg_slope)


def _conv_mm_acc_kernel(w_ref, x_ref, s_ref, t_ref, *rest,
                        act, neg_slope, has_res):
    # General K-tiled reduction with a VMEM f32 accumulator.
    if has_res:
        r_ref, o_ref, acc_ref = rest
    else:
        o_ref, acc_ref = rest
        r_ref = None

    @pl.when(pl.program_id(1) == 0)
    def _init():
        acc_ref[...] = jnp.zeros_like(acc_ref)

    acc_ref[...] += jnp.dot(w_ref[...], x_ref[...],
                            preferred_element_type=jnp.float32)

    @pl.when(pl.program_id(1) == pl.num_programs(1) - 1)
    def _finalize():
        r = r_ref[...] if has_res else None
        o_ref[...] = _epilogue(acc_ref[...], s_ref[...], t_ref[...], r,
                               act, neg_slope)


# ----------------------------------------------------------------------------- #
# Wrapper helpers
# ----------------------------------------------------------------------------- #
def _round_up(x, m):
    return (x + m - 1) // m * m


def _pad_k(cin):
    kp = _round_up(27 * cin, 128)
    if kp > _MAX_TK:
        kp = _round_up(kp, _MAX_TK)
    return kp


def _im2col_T(x, stride, kp):
    """x: (Cin, D, H, W) f32  ->  (kp, M) bf16 im2col^T at output resolution."""
    c, d, h, w = x.shape
    do, ho, wo = d, (h - 1) // stride + 1, (w - 1) // stride + 1
    xpad = jnp.pad(x, ((0, 0), (1, 1), (1, 1), (1, 1)))
    cols = []
    for kd in range(3):
        for kh in range(3):
            for kw in range(3):
                cols.append(xpad[:, kd:kd + do,
                                 kh:kh + (ho - 1) * stride + 1:stride,
                                 kw:kw + (wo - 1) * stride + 1:stride])
    xcol = jnp.stack(cols, axis=0).reshape(27 * c, do * ho * wo)
    xcol = jnp.pad(xcol, ((0, kp - 27 * c), (0, 0)))
    return xcol.astype(jnp.bfloat16)


def conv3d(x, p, *, stride=1, act=False, slope=NEG_SLOPE, residual=None):
    """Fused 3x3x3 conv (pad=1, stride (1,s,s)) + bias + eval-BN + LeakyReLU [+ residual].

    x: (Cin, D, H, W) f32.  p: {'wT': (Co, Kp) bf16, 'scale','shift': (Co,1) f32}.
    Returns (Co, Do, Ho, Wo) f32.
    """
    _, d, h, w = x.shape
    co, kp = p['wT'].shape
    do, ho, wo = d, (h - 1) // stride + 1, (w - 1) // stride + 1
    m = do * ho * wo

    xcol = _im2col_T(x, stride, kp)

    # M tiling: keep the whole thing in one lane-dense block when it fits, otherwise
    # pad M to a multiple of the tile so every store stays an unmasked vst.
    if m <= _MAX_TM:
        tm, mp = m, m
    else:
        tm = _MAX_TM
        mp = _round_up(m, tm)
    if mp != m:
        xcol = jnp.pad(xcol, ((0, 0), (0, mp - m)))

    tk = min(kp, _MAX_TK)
    grid = (mp // tm, kp // tk)
    single = grid[1] == 1

    args = [p['wT'], xcol, p['scale'], p['shift']]
    in_specs = [
        pl.BlockSpec((co, tk), lambda i, k: (0, k)),   # weights^T
        pl.BlockSpec((tk, tm), lambda i, k: (k, i)),   # im2col^T (lane-dense in M)
        pl.BlockSpec((co, 1), lambda i, k: (0, 0)),    # fused scale
        pl.BlockSpec((co, 1), lambda i, k: (0, 0)),    # fused shift
    ]
    if residual is not None:
        res2d = residual.reshape(co, m)
        if mp != m:
            res2d = jnp.pad(res2d, ((0, 0), (0, mp - m)))
        args.append(res2d)
        in_specs.append(pl.BlockSpec((co, tm), lambda i, k: (0, i)))

    kern_fn = _conv_mm_single_kernel if single else _conv_mm_acc_kernel
    kern = functools.partial(kern_fn, act=act, neg_slope=slope,
                             has_res=residual is not None)
    scratch = () if single else (pltpu.VMEM((co, tm), jnp.float32),)

    out = pl.pallas_call(
        kern,
        out_shape=jax.ShapeDtypeStruct((co, mp), jnp.float32),
        grid_spec=pltpu.PrefetchScalarGridSpec(
            num_scalar_prefetch=0,
            grid=grid,
            in_specs=in_specs,
            out_specs=pl.BlockSpec((co, tm), lambda i, k: (0, i)),
            scratch_shapes=scratch),
        compiler_params=pltpu.CompilerParams(
            dimension_semantics=("parallel", "arbitrary")),
    )(*args)
    if mp != m:
        out = out[:, :m]
    return out.reshape(co, do, ho, wo)


# ----------------------------------------------------------------------------- #
# XLA glue (layout plumbing / resampling on small tensors)
# ----------------------------------------------------------------------------- #
def up_hw(x):              # nn.Upsample(scale_factor=(1,2,2), mode='nearest')
    return jnp.repeat(jnp.repeat(x, 2, axis=2), 2, axis=3)


def nearest_resize(x, size):   # F.interpolate(..., mode='nearest') semantics
    d2, h2, w2 = size
    _, d, h, w = x.shape
    di = (jnp.arange(d2) * d) // d2
    hi = (jnp.arange(h2) * h) // h2
    wi = (jnp.arange(w2) * w) // w2
    return x[:, di][:, :, hi][:, :, :, wi]


# ----------------------------------------------------------------------------- #
# Blocks (exact PyTorch forward semantics, fused per conv)
# ----------------------------------------------------------------------------- #
def resblock_down(p, x, act=True):
    # conv1: conv(s=(1,2,2)) -> BN -> LReLU        (always activated)
    c1 = conv3d(x, p['c1'], stride=2, act=True)
    # conv3: conv(s=(1,2,2)) -> BN [-> LReLU]
    c3 = conv3d(x, p['c3'], stride=2, act=act)
    # conv2: conv -> BN [-> LReLU], residual add of c3 fused into the epilogue
    return conv3d(c1, p['c2'], act=act, residual=c3)


def resblock_up(p, x, act=True):
    # conv1: conv -> Up -> BN -> LReLU == Up(LReLU(BN(conv)))  (eval-BN / LReLU are
    # per-channel / per-element, so they commute with nearest upsampling).
    c1 = up_hw(conv3d(x, p['c1'], act=True))
    # conv3: conv -> Up -> BN -> LReLU [-> LReLU]; double LReLU folds to slope 0.04.
    c3 = up_hw(conv3d(x, p['c3'], act=True,
                      slope=NEG_SLOPE * NEG_SLOPE if act else NEG_SLOPE))
    # conv2: conv -> BN [-> LReLU] + c3
    return conv3d(c1, p['c2'], act=act, residual=c3)


def resblock_mid(p, x, act=True):
    slope = NEG_SLOPE * NEG_SLOPE if act else NEG_SLOPE   # double LReLU fold
    c1 = conv3d(x, p['c1'], act=True, slope=slope)
    return conv3d(c1, p['c2'], act=True, slope=slope, residual=c1)


def encode_3(P, x):
    h = conv3d(x, P['enc_conv1'], act=True)
    return resblock_down(P['enc_res1'], h, act=True)


def encode_2(P, z, key):
    z_mean = resblock_down(P['enc_res2_mu'], z, act=True)
    z_std = resblock_down(P['enc_res2_std'], z, act=False)
    eps = jax.random.normal(key, z_std.shape, jnp.float32)   # torch.randn_like
    zz = z_mean + eps * jnp.exp(z_std)
    return zz, z_mean, z_std


def midblock(P, z):
    x = resblock_mid(P['mid_res0'], z)
    x = resblock_mid(P['mid_res1'], x)
    return conv3d(x, P['mid_conv1'], act=True)


def decoder(P, z):
    x = resblock_up(P['dec_res5'], z)
    x = resblock_up(P['dec_res6'], x)
    x = conv3d(x, P['dec_conv1'], act=True)
    return conv3d(x, P['dec_out'], act=False)


# ----------------------------------------------------------------------------- #
# Register_VAE.forward  (inputs in PyTorch NCDHW layout, batch == 1)
# ----------------------------------------------------------------------------- #
def register_vae_forward(P, x1_in, aff1_in, x2_in, aff2_in, key):
    assert x1_in.shape[0] == 1 and x2_in.shape[0] == 1, "batch must be 1"
    keys = jax.random.split(key, 6)
    ki = 0

    # encode_3 is deterministic -> compute once per series and reuse across both
    # loop iterations (the PyTorch loop recomputes identical values).
    lat_a = encode_3(P, x1_in[0])
    lat_b = encode_3(P, x2_in[0])

    dic_list = []
    for (xa, affa, xb, affb, x1_latent, x2_latent) in [
            (x1_in, aff1_in, x2_in, aff2_in, lat_a, lat_b),
            (x2_in, aff2_in, x1_in, aff1_in, lat_b, lat_a)]:
        x1 = xa[0]     # (C, D, H, W)
        x2 = xb[0]

        x1_lat_new, _, _ = encode_2(
            P, jnp.concatenate([x1_latent, x1_latent], axis=0), keys[ki]); ki += 1
        m1_latent = jnp.ones_like(x1_latent)

        x2_lat_new, _, _ = encode_2(
            P, jnp.concatenate([x2_latent, x2_latent], axis=0), keys[ki]); ki += 1
        m2_latent = jnp.ones_like(x2_latent)

        # TODO(synk): `feat_regist` is an externally supplied registration network
        # (None in this module's __init__); stage-0 approximated by concat(moving,
        # fixed), stage-1 by identity warps.
        x1tox2_latent = jnp.concatenate([x2_latent, x1_latent], axis=0)
        m1tom2_latent = m2_latent

        x1tox2_latent = midblock(P, x1tox2_latent)
        x1tox2_latent, mu1tomu2, std1tostd2 = encode_2(P, x1tox2_latent, keys[ki]); ki += 1

        x1_rep = jnp.concatenate([x1_latent, x1_latent], axis=0)
        x1_rep = nearest_resize(x1_rep, x1tox2_latent.shape[1:4])
        x1_latent_new = x1_rep           # feat_regist[1] placeholder (identity)
        m1_latent_new = m1_latent        # feat_regist[1] placeholder (identity)

        m1_new = nearest_resize(m1_latent_new[0:1], x1.shape[1:4])
        m2_new = nearest_resize(m1tom2_latent[0:1], x2.shape[1:4])

        x1_reconstruction = decoder(P, x1_latent_new)
        x2_reconstruction = decoder(P, x1tox2_latent)

        m1tom2_lat_new = nearest_resize(m1tom2_latent[0:1], x1tox2_latent.shape[1:4])
        m1_lat_new = nearest_resize(m1_latent_new[0:1], x1_latent_new.shape[1:4])

        lat_loss_1 = jnp.mean((x1tox2_latent * m1tom2_lat_new
                               - x2_lat_new * m1tom2_lat_new) ** 2)
        lat_loss_2 = jnp.mean((x1_latent_new * m1_lat_new
                               - x1_lat_new * m1_lat_new) ** 2)

        dic = {
            'x1_mu': None, 'x1_std': None,
            'mu1tomu2': mu1tomu2[None], 'std1tostd2': std1tostd2[None],
            'x1_reconstruction': (x1_reconstruction * m1_new)[None],
            'aff1': affa, 'x1_input': (x1 * m1_new)[None], 'x1_input_ori': xa,
            'x2_reconstruction': (x2_reconstruction * m2_new)[None],
            'aff2': affb, 'x2_input': (x2 * m2_new)[None], 'x2_input_ori': xb,
            'lat_loss_1': lat_loss_1, 'lat_loss_2': lat_loss_2,
        }
        dic_list.append(dic)
    return dic_list


# ----------------------------------------------------------------------------- #
# Deterministic parameter initialization (shapes from the module's __init__).
# Weights are pre-packed as (Co, Kp) bf16; bias + eval-BN are folded into a single
# per-channel (scale, shift) pair so the kernel epilogue is one FMA.
# ----------------------------------------------------------------------------- #
def init_conv_bn(key, cin, cout, bn=True):
    ks = jax.random.split(key, 6)
    fan_in = cin * 27
    w = jax.random.normal(ks[0], (3, 3, 3, cin, cout), jnp.float32) / jnp.sqrt(fan_in)
    b = 0.01 * jax.random.normal(ks[1], (cout,), jnp.float32)
    if bn:
        gamma = 1.0 + 0.1 * jax.random.normal(ks[2], (cout,), jnp.float32)
        beta = 0.1 * jax.random.normal(ks[3], (cout,), jnp.float32)
        rmean = 0.1 * jax.random.normal(ks[4], (cout,), jnp.float32)
        rvar = 1.0 + 0.1 * jnp.abs(jax.random.normal(ks[5], (cout,), jnp.float32))
        bn_scale = gamma / jnp.sqrt(rvar + BN_EPS)
        bn_shift = beta - rmean * bn_scale
        scale = bn_scale                   # y = (conv + b)*s + t  ->  conv*s + (b*s+t)
        shift = b * bn_scale + bn_shift
    else:
        scale = jnp.ones((cout,), jnp.float32)
        shift = b
    kp = _pad_k(cin)
    wT = jnp.pad(w.reshape(27 * cin, cout), ((0, kp - 27 * cin), (0, 0)))
    wT = wT.T.astype(jnp.bfloat16)         # (Co, Kp), tap-major / channel-minor K
    return {'wT': wT, 'scale': scale.reshape(cout, 1), 'shift': shift.reshape(cout, 1)}


def init_resblock(key, cin, cout):
    k1, k2, k3 = jax.random.split(key, 3)
    return {'c1': init_conv_bn(k1, cin, cin),
            'c2': init_conv_bn(k2, cin, cout),
            'c3': init_conv_bn(k3, cin, cout)}


def init_resblock_mid(key, cin):
    k1, k2 = jax.random.split(key, 2)
    return {'c1': init_conv_bn(k1, cin, cin), 'c2': init_conv_bn(k2, cin, cin)}


def init_params(key, n_channels=N_CHANNELS, gf=GF_DIM):
    ks = jax.random.split(key, 12)
    return {
        'enc_conv1':    init_conv_bn(ks[0], n_channels, gf),
        'enc_res1':     init_resblock(ks[1], gf, gf),
        'enc_res2_mu':  init_resblock(ks[2], 2 * gf, 2 * gf),
        'enc_res2_std': init_resblock(ks[3], 2 * gf, 2 * gf),
        'mid_res0':     init_resblock_mid(ks[4], 2 * gf),
        'mid_res1':     init_resblock_mid(ks[5], 2 * gf),
        'mid_conv1':    init_conv_bn(ks[6], 2 * gf, 2 * gf),
        'dec_res5':     init_resblock(ks[7], 2 * gf, gf),
        'dec_res6':     init_resblock(ks[8], gf, gf),
        'dec_conv1':    init_conv_bn(ks[9], gf, gf),
        'dec_out':      init_conv_bn(ks[10], gf, n_channels, bn=False),
    }


# ----------------------------------------------------------------------------- #
if __name__ == "__main__":
    key = jax.random.PRNGKey(0)
    kparam, kx1, kx2, keps = jax.random.split(key, 4)
    params = init_params(kparam)

    # Series images in PyTorch layout NCDHW: (1, n_channels, D, H, W)
    D, H, W = 2, 16, 16
    x1 = jax.random.normal(kx1, (1, N_CHANNELS, D, H, W), jnp.float32)
    x2 = jax.random.normal(kx2, (1, N_CHANNELS, D, H, W), jnp.float32)
    aff1 = jnp.eye(4, dtype=jnp.float32)[None]
    aff2 = jnp.eye(4, dtype=jnp.float32)[None]

    fwd = jax.jit(register_vae_forward)
    out = fwd(params, x1, aff1, x2, aff2, keps)
    jax.block_until_ready(out)
    print("KERNEL_OK")
</pallas_src>

<mosaic_0001>
module attributes {stable_mosaic.version = 11 : i64} {
  func.func @_conv_mm_single_kernel(%arg0: i32, %arg1: i32, %arg2: memref<8x128xbf16, #tpu.memory_space<vmem>>, %arg3: memref<128x512xbf16, #tpu.memory_space<vmem>>, %arg4: memref<8x1xf32, #tpu.memory_space<vmem>>, %arg5: memref<8x1xf32, #tpu.memory_space<vmem>>, %arg6: memref<8x512xf32, #tpu.memory_space<vmem>>) attributes {dimension_semantics = [#tpu.dimension_semantics<parallel>, #tpu.dimension_semantics<arbitrary>], iteration_bounds = array<i64: 1, 1>, scalar_prefetch = 0 : i64, scratch_operands = 0 : i64, tpu.core_type = #tpu.core_type<tc>, window_params = [{transform_indices = @transform_0, window_bounds = array<i64: 8, 128>}, {transform_indices = @transform_1, window_bounds = array<i64: 128, 512>}, {pipeline_mode = #tpu.pipeline_mode<synchronous>, transform_indices = @transform_2, window_bounds = array<i64: 8, 1>}, {pipeline_mode = #tpu.pipeline_mode<synchronous>, transform_indices = @transform_3, window_bounds = array<i64: 8, 1>}, {transform_indices = @transform_4, window_bounds = array<i64: 8, 512>}]} {
    %c0 = arith.constant 0 : index
    %c0_0 = arith.constant 0 : index
    %0 = vector.load %arg2[%c0, %c0_0] : memref<8x128xbf16, #tpu.memory_space<vmem>>, vector<8x128xbf16>
    %c0_1 = arith.constant 0 : index
    %c0_2 = arith.constant 0 : index
    %1 = vector.load %arg3[%c0_1, %c0_2] : memref<128x512xbf16, #tpu.memory_space<vmem>>, vector<128x512xbf16>
    %cst = arith.constant dense<0.000000e+00> : vector<8x512xf32>
    %2 = tpu.matmul %0, %1, %cst {dimension_numbers = #tpu.dot_dimension_numbers<[1], [0], [0], [1], [0, 0, 1, 1], [], []>} : vector<8x128xbf16>, vector<128x512xbf16>, vector<8x512xf32> -> vector<8x512xf32>
    %c0_3 = arith.constant 0 : index
    %c0_4 = arith.constant 0 : index
    %3 = vector.load %arg4[%c0_3, %c0_4] : memref<8x1xf32, #tpu.memory_space<vmem>>, vector<8x1xf32>
    %c0_5 = arith.constant 0 : index
    %c0_6 = arith.constant 0 : index
    %4 = vector.load %arg5[%c0_5, %c0_6] : memref<8x1xf32, #tpu.memory_space<vmem>>, vector<8x1xf32>
    %5 = vector.broadcast %3 : vector<8x1xf32> to vector<8x512xf32>
    %6 = arith.mulf %2, %5 : vector<8x512xf32>
    %7 = vector.broadcast %4 : vector<8x1xf32> to vector<8x512xf32>
    %8 = arith.addf %6, %7 : vector<8x512xf32>
    %cst_7 = arith.constant 0.000000e+00 : f32
    %9 = vector.broadcast %cst_7 : f32 to vector<8x512xf32>
    %10 = arith.cmpf oge, %8, %9 : vector<8x512xf32>
    %cst_8 = arith.constant 2.000000e-01 : f32
    %11 = vector.broadcast %cst_8 : f32 to vector<8x512xf32>
    %12 = arith.mulf %11, %8 : vector<8x512xf32>
    %13 = arith.select %10, %8, %12 : vector<8x512xi1>, vector<8x512xf32>
    %c0_9 = arith.constant 0 : index
    %c0_10 = arith.constant 0 : index
    %14 = vector.load %arg6[%c0_9, %c0_10] : memref<8x512xf32, #tpu.memory_space<vmem>>, vector<8x512xf32>
    tpu.vector_store %arg6[%c0_9, %c0_10], %13 {strides = array<i32>} : memref<8x512xf32, #tpu.memory_space<vmem>>, vector<8x512xf32>,
    return
  }
  func.func @transform_0(%arg0: i32, %arg1: i32) -> (i32, i32) {
    %c0_i32 = arith.constant 0 : i32
    %c0_i32_0 = arith.constant 0 : i32
    return %c0_i32, %arg1 : i32, i32
  }
  func.func @transform_1(%arg0: i32, %arg1: i32) -> (i32, i32) {
    %c0_i32 = arith.constant 0 : i32
    return %arg1, %arg0 : i32, i32
  }
  func.func @transform_2(%arg0: i32, %arg1: i32) -> (i32, i32) {
    %c0_i32 = arith.constant 0 : i32
    %c0_i32_0 = arith.constant 0 : i32
    %c0_i32_1 = arith.constant 0 : i32
    return %c0_i32, %c0_i32_0 : i32, i32
  }
  func.func @transform_3(%arg0: i32, %arg1: i32) -> (i32, i32) {
    %c0_i32 = arith.constant 0 : i32
    %c0_i32_0 = arith.constant 0 : i32
    %c0_i32_1 = arith.constant 0 : i32
    return %c0_i32, %c0_i32_0 : i32, i32
  }
  func.func @transform_4(%arg0: i32, %arg1: i32) -> (i32, i32) {
    %c0_i32 = arith.constant 0 : i32
    %c0_i32_0 = arith.constant 0 : i32
    return %c0_i32, %arg0 : i32, i32
  }
}

module attributes {stable_mosaic.version = 11 : i64} {
  func.func @_conv_mm_single_kernel(%arg0: i32, %arg1: i32, %arg2: memref<8x256xbf16, #tpu.memory_space<vmem>>, %arg3: memref<256x128xbf16, #tpu.memory_space<vmem>>, %arg4: memref<8x1xf32, #tpu.memory_space<vmem>>, %arg5: memref<8x1xf32, #tpu.memory_space<vmem>>, %arg6: memref<8x128xf32, #tpu.memory_space<vmem>>) attributes {dimension_semantics = [#tpu.dimension_semantics<parallel>, #tpu.dimension_semantics<arbitrary>], iteration_bounds = array<i64: 1, 1>, scalar_prefetch = 0 : i64, scratch_operands = 0 : i64, tpu.core_type = #tpu.core_type<tc>, window_params = [{transform_indices = @transform_0, window_bounds = array<i64: 8, 256>}, {transform_indices = @transform_1, window_bounds = array<i64: 256, 128>}, {pipeline_mode = #tpu.pipeline_mode<synchronous>, transform_indices = @transform_2, window_bounds = array<i64: 8, 1>}, {pipeline_mode = #tpu.pipeline_mode<synchronous>, transform_indices = @transform_3, window_bounds = array<i64: 8, 1>}, {transform_indices = @transform_4, window_bounds = array<i64: 8, 128>}]} {
    %c0 = arith.constant 0 : index
    %c0_0 = arith.constant 0 : index
    %0 = vector.load %arg2[%c0, %c0_0] : memref<8x256xbf16, #tpu.memory_space<vmem>>, vector<8x256xbf16>
    %c0_1 = arith.constant 0 : index
    %c0_2 = arith.constant 0 : index
    %1 = vector.load %arg3[%c0_1, %c0_2] : memref<256x128xbf16, #tpu.memory_space<vmem>>, vector<256x128xbf16>
    %cst = arith.constant dense<0.000000e+00> : vector<8x128xf32>
    %2 = tpu.matmul %0, %1, %cst {dimension_numbers = #tpu.dot_dimension_numbers<[1], [0], [0], [1], [0, 0, 1, 1], [], []>} : vector<8x256xbf16>, vector<256x128xbf16>, vector<8x128xf32> -> vector<8x128xf32>
    %c0_3 = arith.constant 0 : index
    %c0_4 = arith.constant 0 : index
    %3 = vector.load %arg4[%c0_3, %c0_4] : memref<8x1xf32, #tpu.memory_space<vmem>>, vector<8x1xf32>
    %c0_5 = arith.constant 0 : index
    %c0_6 = arith.constant 0 : index
    %4 = vector.load %arg5[%c0_5, %c0_6] : memref<8x1xf32, #tpu.memory_space<vmem>>, vector<8x1xf32>
    %5 = vector.broadcast %3 : vector<8x1xf32> to vector<8x128xf32>
    %6 = arith.mulf %2, %5 : vector<8x128xf32>
    %7 = vector.broadcast %4 : vector<8x1xf32> to vector<8x128xf32>
    %8 = arith.addf %6, %7 : vector<8x128xf32>
    %cst_7 = arith.constant 0.000000e+00 : f32
    %9 = vector.broadcast %cst_7 : f32 to vector<8x128xf32>
    %10 = arith.cmpf oge, %8, %9 : vector<8x128xf32>
    %cst_8 = arith.constant 2.000000e-01 : f32
    %11 = vector.broadcast %cst_8 : f32 to vector<8x128xf32>
    %12 = arith.mulf %11, %8 : vector<8x128xf32>
    %13 = arith.select %10, %8, %12 : vector<8x128xi1>, vector<8x128xf32>
    %c0_9 = arith.constant 0 : index
    %c0_10 = arith.constant 0 : index
    %14 = vector.load %arg6[%c0_9, %c0_10] : memref<8x128xf32, #tpu.memory_space<vmem>>, vector<8x128xf32>
    tpu.vector_store %arg6[%c0_9, %c0_10], %13 {strides = array<i32>} : memref<8x128xf32, #tpu.memory_space<vmem>>, vector<8x128xf32>,
    return
  }
  func.func @transform_0(%arg0: i32, %arg1: i32) -> (i32, i32) {
    %c0_i32 = arith.constant 0 : i32
    %c0_i32_0 = arith.constant 0 : i32
    return %c0_i32, %arg1 : i32, i32
  }
  func.func @transform_1(%arg0: i32, %arg1: i32) -> (i32, i32) {
    %c0_i32 = arith.constant 0 : i32
    return %arg1, %arg0 : i32, i32
  }
  func.func @transform_2(%arg0: i32, %arg1: i32) -> (i32, i32) {
    %c0_i32 = arith.constant 0 : i32
    %c0_i32_0 = arith.constant 0 : i32
    %c0_i32_1 = arith.constant 0 : i32
    return %c0_i32, %c0_i32_0 : i32, i32
  }
  func.func @transform_3(%arg0: i32, %arg1: i32) -> (i32, i32) {
    %c0_i32 = arith.constant 0 : i32
    %c0_i32_0 = arith.constant 0 : i32
    %c0_i32_1 = arith.constant 0 : i32
    return %c0_i32, %c0_i32_0 : i32, i32
  }
  func.func @transform_4(%arg0: i32, %arg1: i32) -> (i32, i32) {
    %c0_i32 = arith.constant 0 : i32
    %c0_i32_0 = arith.constant 0 : i32
    return %c0_i32, %arg0 : i32, i32
  }
}

module attributes {stable_mosaic.version = 11 : i64} {
  func.func @_conv_mm_single_kernel(%arg0: i32, %arg1: i32, %arg2: memref<8x256xbf16, #tpu.memory_space<vmem>>, %arg3: memref<256x128xbf16, #tpu.memory_space<vmem>>, %arg4: memref<8x1xf32, #tpu.memory_space<vmem>>, %arg5: memref<8x1xf32, #tpu.memory_space<vmem>>, %arg6: memref<8x128xf32, #tpu.memory_space<vmem>>, %arg7: memref<8x128xf32, #tpu.memory_space<vmem>>) attributes {dimension_semantics = [#tpu.dimension_semantics<parallel>, #tpu.dimension_semantics<arbitrary>], iteration_bounds = array<i64: 1, 1>, scalar_prefetch = 0 : i64, scratch_operands = 0 : i64, tpu.core_type = #tpu.core_type<tc>, window_params = [{transform_indices = @transform_0, window_bounds = array<i64: 8, 256>}, {transform_indices = @transform_1, window_bounds = array<i64: 256, 128>}, {pipeline_mode = #tpu.pipeline_mode<synchronous>, transform_indices = @transform_2, window_bounds = array<i64: 8, 1>}, {pipeline_mode = #tpu.pipeline_mode<synchronous>, transform_indices = @transform_3, window_bounds = array<i64: 8, 1>}, {transform_indices = @transform_4, window_bounds = array<i64: 8, 128>}, {transform_indices = @transform_5, window_bounds = array<i64: 8, 128>}]} {
    %c0 = arith.constant 0 : index
    %c0_0 = arith.constant 0 : index
    %0 = vector.load %arg6[%c0, %c0_0] : memref<8x128xf32, #tpu.memory_space<vmem>>, vector<8x128xf32>
    %c0_1 = arith.constant 0 : index
    %c0_2 = arith.constant 0 : index
    %1 = vector.load %arg2[%c0_1, %c0_2] : memref<8x256xbf16, #tpu.memory_space<vmem>>, vector<8x256xbf16>
    %c0_3 = arith.constant 0 : index
    %c0_4 = arith.constant 0 : index
    %2 = vector.load %arg3[%c0_3, %c0_4] : memref<256x128xbf16, #tpu.memory_space<vmem>>, vector<256x128xbf16>
    %cst = arith.constant dense<0.000000e+00> : vector<8x128xf32>
    %3 = tpu.matmul %1, %2, %cst {dimension_numbers = #tpu.dot_dimension_numbers<[1], [0], [0], [1], [0, 0, 1, 1], [], []>} : vector<8x256xbf16>, vector<256x128xbf16>, vector<8x128xf32> -> vector<8x128xf32>
    %c0_5 = arith.constant 0 : index
    %c0_6 = arith.constant 0 : index
    %4 = vector.load %arg4[%c0_5, %c0_6] : memref<8x1xf32, #tpu.memory_space<vmem>>, vector<8x1xf32>
    %c0_7 = arith.constant 0 : index
    %c0_8 = arith.constant 0 : index
    %5 = vector.load %arg5[%c0_7, %c0_8] : memref<8x1xf32, #tpu.memory_space<vmem>>, vector<8x1xf32>
    %6 = vector.broadcast %4 : vector<8x1xf32> to vector<8x128xf32>
    %7 = arith.mulf %3, %6 : vector<8x128xf32>
    %8 = vector.broadcast %5 : vector<8x1xf32> to vector<8x128xf32>
    %9 = arith.addf %7, %8 : vector<8x128xf32>
    %cst_9 = arith.constant 0.000000e+00 : f32
    %10 = vector.broadcast %cst_9 : f32 to vector<8x128xf32>
    %11 = arith.cmpf oge, %9, %10 : vector<8x128xf32>
    %cst_10 = arith.constant 2.000000e-01 : f32
    %12 = vector.broadcast %cst_10 : f32 to vector<8x128xf32>
    %13 = arith.mulf %12, %9 : vector<8x128xf32>
    %14 = arith.select %11, %9, %13 : vector<8x128xi1>, vector<8x128xf32>
    %15 = arith.addf %14, %0 : vector<8x128xf32>
    %c0_11 = arith.constant 0 : index
    %c0_12 = arith.constant 0 : index
    %16 = vector.load %arg7[%c0_11, %c0_12] : memref<8x128xf32, #tpu.memory_space<vmem>>, vector<8x128xf32>
    tpu.vector_store %arg7[%c0_11, %c0_12], %15 {strides = array<i32>} : memref<8x128xf32, #tpu.memory_space<vmem>>, vector<8x128xf32>,
    return
  }
  func.func @transform_0(%arg0: i32, %arg1: i32) -> (i32, i32) {
    %c0_i32 = arith.constant 0 : i32
    %c0_i32_0 = arith.constant 0 : i32
    return %c0_i32, %arg1 : i32, i32
  }
  func.func @transform_1(%arg0: i32, %arg1: i32) -> (i32, i32) {
    %c0_i32 = arith.constant 0 : i32
    return %arg1, %arg0 : i32, i32
  }
  func.func @transform_2(%arg0: i32, %arg1: i32) -> (i32, i32) {
    %c0_i32 = arith.constant 0 : i32
    %c0_i32_0 = arith.constant 0 : i32
    %c0_i32_1 = arith.constant 0 : i32
    return %c0_i32, %c0_i32_0 : i32, i32
  }
  func.func @transform_3(%arg0: i32, %arg1: i32) -> (i32, i32) {
    %c0_i32 = arith.constant 0 : i32
    %c0_i32_0 = arith.constant 0 : i32
    %c0_i32_1 = arith.constant 0 : i32
    return %c0_i32, %c0_i32_0 : i32, i32
  }
  func.func @transform_4(%arg0: i32, %arg1: i32) -> (i32, i32) {
    %c0_i32 = arith.constant 0 : i32
    %c0_i32_0 = arith.constant 0 : i32
    return %c0_i32, %arg0 : i32, i32
  }
  func.func @transform_5(%arg0: i32, %arg1: i32) -> (i32, i32) {
    %c0_i32 = arith.constant 0 : i32
    %c0_i32_0 = arith.constant 0 : i32
    return %c0_i32, %arg0 : i32, i32
  }
}

module attributes {stable_mosaic.version = 11 : i64} {
  func.func @_conv_mm_single_kernel(%arg0: i32, %arg1: i32, %arg2: memref<16x512xbf16, #tpu.memory_space<vmem>>, %arg3: memref<512x32xbf16, #tpu.memory_space<vmem>>, %arg4: memref<16x1xf32, #tpu.memory_space<vmem>>, %arg5: memref<16x1xf32, #tpu.memory_space<vmem>>, %arg6: memref<16x32xf32, #tpu.memory_space<vmem>>) attributes {dimension_semantics = [#tpu.dimension_semantics<parallel>, #tpu.dimension_semantics<arbitrary>], iteration_bounds = array<i64: 1, 1>, scalar_prefetch = 0 : i64, scratch_operands = 0 : i64, tpu.core_type = #tpu.core_type<tc>, window_params = [{transform_indices = @transform_0, window_bounds = array<i64: 16, 512>}, {transform_indices = @transform_1, window_bounds = array<i64: 512, 32>}, {pipeline_mode = #tpu.pipeline_mode<synchronous>, transform_indices = @transform_2, window_bounds = array<i64: 16, 1>}, {pipeline_mode = #tpu.pipeline_mode<synchronous>, transform_indices = @transform_3, window_bounds = array<i64: 16, 1>}, {transform_indices = @transform_4, window_bounds = array<i64: 16, 32>}]} {
    %c0 = arith.constant 0 : index
    %c0_0 = arith.constant 0 : index
    %0 = vector.load %arg2[%c0, %c0_0] : memref<16x512xbf16, #tpu.memory_space<vmem>>, vector<16x512xbf16>
    %c0_1 = arith.constant 0 : index
    %c0_2 = arith.constant 0 : index
    %1 = vector.load %arg3[%c0_1, %c0_2] : memref<512x32xbf16, #tpu.memory_space<vmem>>, vector<512x32xbf16>
    %cst = arith.constant dense<0.000000e+00> : vector<16x32xf32>
    %2 = tpu.matmul %0, %1, %cst {dimension_numbers = #tpu.dot_dimension_numbers<[1], [0], [0], [1], [0, 0, 1, 1], [], []>} : vector<16x512xbf16>, vector<512x32xbf16>, vector<16x32xf32> -> vector<16x32xf32>
    %c0_3 = arith.constant 0 : index
    %c0_4 = arith.constant 0 : index
    %3 = vector.load %arg4[%c0_3, %c0_4] : memref<16x1xf32, #tpu.memory_space<vmem>>, vector<16x1xf32>
    %c0_5 = arith.constant 0 : index
    %c0_6 = arith.constant 0 : index
    %4 = vector.load %arg5[%c0_5, %c0_6] : memref<16x1xf32, #tpu.memory_space<vmem>>, vector<16x1xf32>
    %5 = vector.broadcast %3 : vector<16x1xf32> to vector<16x32xf32>
    %6 = arith.mulf %2, %5 : vector<16x32xf32>
    %7 = vector.broadcast %4 : vector<16x1xf32> to vector<16x32xf32>
    %8 = arith.addf %6, %7 : vector<16x32xf32>
    %cst_7 = arith.constant 0.000000e+00 : f32
    %9 = vector.broadcast %cst_7 : f32 to vector<16x32xf32>
    %10 = arith.cmpf oge, %8, %9 : vector<16x32xf32>
    %cst_8 = arith.constant 2.000000e-01 : f32
    %11 = vector.broadcast %cst_8 : f32 to vector<16x32xf32>
    %12 = arith.mulf %11, %8 : vector<16x32xf32>
    %13 = arith.select %10, %8, %12 : vector<16x32xi1>, vector<16x32xf32>
    %c0_9 = arith.constant 0 : index
    %c0_10 = arith.constant 0 : index
    %14 = vector.load %arg6[%c0_9, %c0_10] : memref<16x32xf32, #tpu.memory_space<vmem>>, vector<16x32xf32>
    tpu.vector_store %arg6[%c0_9, %c0_10], %13 {strides = array<i32>} : memref<16x32xf32, #tpu.memory_space<vmem>>, vector<16x32xf32>,
    return
  }
  func.func @transform_0(%arg0: i32, %arg1: i32) -> (i32, i32) {
    %c0_i32 = arith.constant 0 : i32
    %c0_i32_0 = arith.constant 0 : i32
    return %c0_i32, %arg1 : i32, i32
  }
  func.func @transform_1(%arg0: i32, %arg1: i32) -> (i32, i32) {
    %c0_i32 = arith.constant 0 : i32
    return %arg1, %arg0 : i32, i32
  }
  func.func @transform_2(%arg0: i32, %arg1: i32) -> (i32, i32) {
    %c0_i32 = arith.constant 0 : i32
    %c0_i32_0 = arith.constant 0 : i32
    %c0_i32_1 = arith.constant 0 : i32
    return %c0_i32, %c0_i32_0 : i32, i32
  }
  func.func @transform_3(%arg0: i32, %arg1: i32) -> (i32, i32) {
    %c0_i32 = arith.constant 0 : i32
    %c0_i32_0 = arith.constant 0 : i32
    %c0_i32_1 = arith.constant 0 : i32
    return %c0_i32, %c0_i32_0 : i32, i32
  }
  func.func @transform_4(%arg0: i32, %arg1: i32) -> (i32, i32) {
    %c0_i32 = arith.constant 0 : i32
    %c0_i32_0 = arith.constant 0 : i32
    return %c0_i32, %arg0 : i32, i32
  }
}

module attributes {stable_mosaic.version = 11 : i64} {
  func.func @_conv_mm_single_kernel(%arg0: i32, %arg1: i32, %arg2: memref<16x512xbf16, #tpu.memory_space<vmem>>, %arg3: memref<512x32xbf16, #tpu.memory_space<vmem>>, %arg4: memref<16x1xf32, #tpu.memory_space<vmem>>, %arg5: memref<16x1xf32, #tpu.memory_space<vmem>>, %arg6: memref<16x32xf32, #tpu.memory_space<vmem>>, %arg7: memref<16x32xf32, #tpu.memory_space<vmem>>) attributes {dimension_semantics = [#tpu.dimension_semantics<parallel>, #tpu.dimension_semantics<arbitrary>], iteration_bounds = array<i64: 1, 1>, scalar_prefetch = 0 : i64, scratch_operands = 0 : i64, tpu.core_type = #tpu.core_type<tc>, window_params = [{transform_indices = @transform_0, window_bounds = array<i64: 16, 512>}, {transform_indices = @transform_1, window_bounds = array<i64: 512, 32>}, {pipeline_mode = #tpu.pipeline_mode<synchronous>, transform_indices = @transform_2, window_bounds = array<i64: 16, 1>}, {pipeline_mode = #tpu.pipeline_mode<synchronous>, transform_indices = @transform_3, window_bounds = array<i64: 16, 1>}, {transform_indices = @transform_4, window_bounds = array<i64: 16, 32>}, {transform_indices = @transform_5, window_bounds = array<i64: 16, 32>}]} {
    %c0 = arith.constant 0 : index
    %c0_0 = arith.constant 0 : index
    %0 = vector.load %arg6[%c0, %c0_0] : memref<16x32xf32, #tpu.memory_space<vmem>>, vector<16x32xf32>
    %c0_1 = arith.constant 0 : index
    %c0_2 = arith.constant 0 : index
    %1 = vector.load %arg2[%c0_1, %c0_2] : memref<16x512xbf16, #tpu.memory_space<vmem>>, vector<16x512xbf16>
    %c0_3 = arith.constant 0 : index
    %c0_4 = arith.constant 0 : index
    %2 = vector.load %arg3[%c0_3, %c0_4] : memref<512x32xbf16, #tpu.memory_space<vmem>>, vector<512x32xbf16>
    %cst = arith.constant dense<0.000000e+00> : vector<16x32xf32>
    %3 = tpu.matmul %1, %2, %cst {dimension_numbers = #tpu.dot_dimension_numbers<[1], [0], [0], [1], [0, 0, 1, 1], [], []>} : vector<16x512xbf16>, vector<512x32xbf16>, vector<16x32xf32> -> vector<16x32xf32>
    %c0_5 = arith.constant 0 : index
    %c0_6 = arith.constant 0 : index
    %4 = vector.load %arg4[%c0_5, %c0_6] : memref<16x1xf32, #tpu.memory_space<vmem>>, vector<16x1xf32>
    %c0_7 = arith.constant 0 : index
    %c0_8 = arith.constant 0 : index
    %5 = vector.load %arg5[%c0_7, %c0_8] : memref<16x1xf32, #tpu.memory_space<vmem>>, vector<16x1xf32>
    %6 = vector.broadcast %4 : vector<16x1xf32> to vector<16x32xf32>
    %7 = arith.mulf %3, %6 : vector<16x32xf32>
    %8 = vector.broadcast %5 : vector<16x1xf32> to vector<16x32xf32>
    %9 = arith.addf %7, %8 : vector<16x32xf32>
    %cst_9 = arith.constant 0.000000e+00 : f32
    %10 = vector.broadcast %cst_9 : f32 to vector<16x32xf32>
    %11 = arith.cmpf oge, %9, %10 : vector<16x32xf32>
    %cst_10 = arith.constant 2.000000e-01 : f32
    %12 = vector.broadcast %cst_10 : f32 to vector<16x32xf32>
    %13 = arith.mulf %12, %9 : vector<16x32xf32>
    %14 = arith.select %11, %9, %13 : vector<16x32xi1>, vector<16x32xf32>
    %15 = arith.addf %14, %0 : vector<16x32xf32>
    %c0_11 = arith.constant 0 : index
    %c0_12 = arith.constant 0 : index
    %16 = vector.load %arg7[%c0_11, %c0_12] : memref<16x32xf32, #tpu.memory_space<vmem>>, vector<16x32xf32>
    tpu.vector_store %arg7[%c0_11, %c0_12], %15 {strides = array<i32>} : memref<16x32xf32, #tpu.memory_space<vmem>>, vector<16x32xf32>,
    return
  }
  func.func @transform_0(%arg0: i32, %arg1: i32) -> (i32, i32) {
    %c0_i32 = arith.constant 0 : i32
    %c0_i32_0 = arith.constant 0 : i32
    return %c0_i32, %arg1 : i32, i32
  }
  func.func @transform_1(%arg0: i32, %arg1: i32) -> (i32, i32) {
    %c0_i32 = arith.constant 0 : i32
    return %arg1, %arg0 : i32, i32
  }
  func.func @transform_2(%arg0: i32, %arg1: i32) -> (i32, i32) {
    %c0_i32 = arith.constant 0 : i32
    %c0_i32_0 = arith.constant 0 : i32
    %c0_i32_1 = arith.constant 0 : i32
    return %c0_i32, %c0_i32_0 : i32, i32
  }
  func.func @transform_3(%arg0: i32, %arg1: i32) -> (i32, i32) {
    %c0_i32 = arith.constant 0 : i32
    %c0_i32_0 = arith.constant 0 : i32
    %c0_i32_1 = arith.constant 0 : i32
    return %c0_i32, %c0_i32_0 : i32, i32
  }
  func.func @transform_4(%arg0: i32, %arg1: i32) -> (i32, i32) {
    %c0_i32 = arith.constant 0 : i32
    %c0_i32_0 = arith.constant 0 : i32
    return %c0_i32, %arg0 : i32, i32
  }
  func.func @transform_5(%arg0: i32, %arg1: i32) -> (i32, i32) {
    %c0_i32 = arith.constant 0 : i32
    %c0_i32_0 = arith.constant 0 : i32
    return %c0_i32, %arg0 : i32, i32
  }
}

module attributes {stable_mosaic.version = 11 : i64} {
  func.func @_conv_mm_single_kernel(%arg0: i32, %arg1: i32, %arg2: memref<16x512xbf16, #tpu.memory_space<vmem>>, %arg3: memref<512x32xbf16, #tpu.memory_space<vmem>>, %arg4: memref<16x1xf32, #tpu.memory_space<vmem>>, %arg5: memref<16x1xf32, #tpu.memory_space<vmem>>, %arg6: memref<16x32xf32, #tpu.memory_space<vmem>>) attributes {dimension_semantics = [#tpu.dimension_semantics<parallel>, #tpu.dimension_semantics<arbitrary>], iteration_bounds = array<i64: 1, 1>, scalar_prefetch = 0 : i64, scratch_operands = 0 : i64, tpu.core_type = #tpu.core_type<tc>, window_params = [{transform_indices = @transform_0, window_bounds = array<i64: 16, 512>}, {transform_indices = @transform_1, window_bounds = array<i64: 512, 32>}, {pipeline_mode = #tpu.pipeline_mode<synchronous>, transform_indices = @transform_2, window_bounds = array<i64: 16, 1>}, {pipeline_mode = #tpu.pipeline_mode<synchronous>, transform_indices = @transform_3, window_bounds = array<i64: 16, 1>}, {transform_indices = @transform_4, window_bounds = array<i64: 16, 32>}]} {
    %c0 = arith.constant 0 : index
    %c0_0 = arith.constant 0 : index
    %0 = vector.load %arg2[%c0, %c0_0] : memref<16x512xbf16, #tpu.memory_space<vmem>>, vector<16x512xbf16>
    %c0_1 = arith.constant 0 : index
    %c0_2 = arith.constant 0 : index
    %1 = vector.load %arg3[%c0_1, %c0_2] : memref<512x32xbf16, #tpu.memory_space<vmem>>, vector<512x32xbf16>
    %cst = arith.constant dense<0.000000e+00> : vector<16x32xf32>
    %2 = tpu.matmul %0, %1, %cst {dimension_numbers = #tpu.dot_dimension_numbers<[1], [0], [0], [1], [0, 0, 1, 1], [], []>} : vector<16x512xbf16>, vector<512x32xbf16>, vector<16x32xf32> -> vector<16x32xf32>
    %c0_3 = arith.constant 0 : index
    %c0_4 = arith.constant 0 : index
    %3 = vector.load %arg4[%c0_3, %c0_4] : memref<16x1xf32, #tpu.memory_space<vmem>>, vector<16x1xf32>
    %c0_5 = arith.constant 0 : index
    %c0_6 = arith.constant 0 : index
    %4 = vector.load %arg5[%c0_5, %c0_6] : memref<16x1xf32, #tpu.memory_space<vmem>>, vector<16x1xf32>
    %5 = vector.broadcast %3 : vector<16x1xf32> to vector<16x32xf32>
    %6 = arith.mulf %2, %5 : vector<16x32xf32>
    %7 = vector.broadcast %4 : vector<16x1xf32> to vector<16x32xf32>
    %8 = arith.addf %6, %7 : vector<16x32xf32>
    %c0_7 = arith.constant 0 : index
    %c0_8 = arith.constant 0 : index
    %9 = vector.load %arg6[%c0_7, %c0_8] : memref<16x32xf32, #tpu.memory_space<vmem>>, vector<16x32xf32>
    tpu.vector_store %arg6[%c0_7, %c0_8], %8 {strides = array<i32>} : memref<16x32xf32, #tpu.memory_space<vmem>>, vector<16x32xf32>,
    return
  }
  func.func @transform_0(%arg0: i32, %arg1: i32) -> (i32, i32) {
    %c0_i32 = arith.constant 0 : i32
    %c0_i32_0 = arith.constant 0 : i32
    return %c0_i32, %arg1 : i32, i32
  }
  func.func @transform_1(%arg0: i32, %arg1: i32) -> (i32, i32) {
    %c0_i32 = arith.constant 0 : i32
    return %arg1, %arg0 : i32, i32
  }
  func.func @transform_2(%arg0: i32, %arg1: i32) -> (i32, i32) {
    %c0_i32 = arith.constant 0 : i32
    %c0_i32_0 = arith.constant 0 : i32
    %c0_i32_1 = arith.constant 0 : i32
    return %c0_i32, %c0_i32_0 : i32, i32
  }
  func.func @transform_3(%arg0: i32, %arg1: i32) -> (i32, i32) {
    %c0_i32 = arith.constant 0 : i32
    %c0_i32_0 = arith.constant 0 : i32
    %c0_i32_1 = arith.constant 0 : i32
    return %c0_i32, %c0_i32_0 : i32, i32
  }
  func.func @transform_4(%arg0: i32, %arg1: i32) -> (i32, i32) {
    %c0_i32 = arith.constant 0 : i32
    %c0_i32_0 = arith.constant 0 : i32
    return %c0_i32, %arg0 : i32, i32
  }
}

module attributes {stable_mosaic.version = 11 : i64} {
  func.func @_conv_mm_single_kernel(%arg0: i32, %arg1: i32, %arg2: memref<16x512xbf16, #tpu.memory_space<vmem>>, %arg3: memref<512x32xbf16, #tpu.memory_space<vmem>>, %arg4: memref<16x1xf32, #tpu.memory_space<vmem>>, %arg5: memref<16x1xf32, #tpu.memory_space<vmem>>, %arg6: memref<16x32xf32, #tpu.memory_space<vmem>>, %arg7: memref<16x32xf32, #tpu.memory_space<vmem>>) attributes {dimension_semantics = [#tpu.dimension_semantics<parallel>, #tpu.dimension_semantics<arbitrary>], iteration_bounds = array<i64: 1, 1>, scalar_prefetch = 0 : i64, scratch_operands = 0 : i64, tpu.core_type = #tpu.core_type<tc>, window_params = [{transform_indices = @transform_0, window_bounds = array<i64: 16, 512>}, {transform_indices = @transform_1, window_bounds = array<i64: 512, 32>}, {pipeline_mode = #tpu.pipeline_mode<synchronous>, transform_indices = @transform_2, window_bounds = array<i64: 16, 1>}, {pipeline_mode = #tpu.pipeline_mode<synchronous>, transform_indices = @transform_3, window_bounds = array<i64: 16, 1>}, {transform_indices = @transform_4, window_bounds = array<i64: 16, 32>}, {transform_indices = @transform_5, window_bounds = array<i64: 16, 32>}]} {
    %c0 = arith.constant 0 : index
    %c0_0 = arith.constant 0 : index
    %0 = vector.load %arg6[%c0, %c0_0] : memref<16x32xf32, #tpu.memory_space<vmem>>, vector<16x32xf32>
    %c0_1 = arith.constant 0 : index
    %c0_2 = arith.constant 0 : index
    %1 = vector.load %arg2[%c0_1, %c0_2] : memref<16x512xbf16, #tpu.memory_space<vmem>>, vector<16x512xbf16>
    %c0_3 = arith.constant 0 : index
    %c0_4 = arith.constant 0 : index
    %2 = vector.load %arg3[%c0_3, %c0_4] : memref<512x32xbf16, #tpu.memory_space<vmem>>, vector<512x32xbf16>
    %cst = arith.constant dense<0.000000e+00> : vector<16x32xf32>
    %3 = tpu.matmul %1, %2, %cst {dimension_numbers = #tpu.dot_dimension_numbers<[1], [0], [0], [1], [0, 0, 1, 1], [], []>} : vector<16x512xbf16>, vector<512x32xbf16>, vector<16x32xf32> -> vector<16x32xf32>
    %c0_5 = arith.constant 0 : index
    %c0_6 = arith.constant 0 : index
    %4 = vector.load %arg4[%c0_5, %c0_6] : memref<16x1xf32, #tpu.memory_space<vmem>>, vector<16x1xf32>
    %c0_7 = arith.constant 0 : index
    %c0_8 = arith.constant 0 : index
    %5 = vector.load %arg5[%c0_7, %c0_8] : memref<16x1xf32, #tpu.memory_space<vmem>>, vector<16x1xf32>
    %6 = vector.broadcast %4 : vector<16x1xf32> to vector<16x32xf32>
    %7 = arith.mulf %3, %6 : vector<16x32xf32>
    %8 = vector.broadcast %5 : vector<16x1xf32> to vector<16x32xf32>
    %9 = arith.addf %7, %8 : vector<16x32xf32>
    %10 = arith.addf %9, %0 : vector<16x32xf32>
    %c0_9 = arith.constant 0 : index
    %c0_10 = arith.constant 0 : index
    %11 = vector.load %arg7[%c0_9, %c0_10] : memref<16x32xf32, #tpu.memory_space<vmem>>, vector<16x32xf32>
    tpu.vector_store %arg7[%c0_9, %c0_10], %10 {strides = array<i32>} : memref<16x32xf32, #tpu.memory_space<vmem>>, vector<16x32xf32>,
    return
  }
  func.func @transform_0(%arg0: i32, %arg1: i32) -> (i32, i32) {
    %c0_i32 = arith.constant 0 : i32
    %c0_i32_0 = arith.constant 0 : i32
    return %c0_i32, %arg1 : i32, i32
  }
  func.func @transform_1(%arg0: i32, %arg1: i32) -> (i32, i32) {
    %c0_i32 = arith.constant 0 : i32
    return %arg1, %arg0 : i32, i32
  }
  func.func @transform_2(%arg0: i32, %arg1: i32) -> (i32, i32) {
    %c0_i32 = arith.constant 0 : i32
    %c0_i32_0 = arith.constant 0 : i32
    %c0_i32_1 = arith.constant 0 : i32
    return %c0_i32, %c0_i32_0 : i32, i32
  }
  func.func @transform_3(%arg0: i32, %arg1: i32) -> (i32, i32) {
    %c0_i32 = arith.constant 0 : i32
    %c0_i32_0 = arith.constant 0 : i32
    %c0_i32_1 = arith.constant 0 : i32
    return %c0_i32, %c0_i32_0 : i32, i32
  }
  func.func @transform_4(%arg0: i32, %arg1: i32) -> (i32, i32) {
    %c0_i32 = arith.constant 0 : i32
    %c0_i32_0 = arith.constant 0 : i32
    return %c0_i32, %arg0 : i32, i32
  }
  func.func @transform_5(%arg0: i32, %arg1: i32) -> (i32, i32) {
    %c0_i32 = arith.constant 0 : i32
    %c0_i32_0 = arith.constant 0 : i32
    return %c0_i32, %arg0 : i32, i32
  }
}

module attributes {stable_mosaic.version = 11 : i64} {
  func.func @_conv_mm_single_kernel(%arg0: i32, %arg1: i32, %arg2: memref<8x128xbf16, #tpu.memory_space<vmem>>, %arg3: memref<128x512xbf16, #tpu.memory_space<vmem>>, %arg4: memref<8x1xf32, #tpu.memory_space<vmem>>, %arg5: memref<8x1xf32, #tpu.memory_space<vmem>>, %arg6: memref<8x512xf32, #tpu.memory_space<vmem>>) attributes {dimension_semantics = [#tpu.dimension_semantics<parallel>, #tpu.dimension_semantics<arbitrary>], iteration_bounds = array<i64: 1, 1>, scalar_prefetch = 0 : i64, scratch_operands = 0 : i64, tpu.core_type = #tpu.core_type<tc>, window_params = [{transform_indices = @transform_0, window_bounds = array<i64: 8, 128>}, {transform_indices = @transform_1, window_bounds = array<i64: 128, 512>}, {pipeline_mode = #tpu.pipeline_mode<synchronous>, transform_indices = @transform_2, window_bounds = array<i64: 8, 1>}, {pipeline_mode = #tpu.pipeline_mode<synchronous>, transform_indices = @transform_3, window_bounds = array<i64: 8, 1>}, {transform_indices = @transform_4, window_bounds = array<i64: 8, 512>}]} {
    %c0 = arith.constant 0 : index
    %c0_0 = arith.constant 0 : index
    %0 = vector.load %arg2[%c0, %c0_0] : memref<8x128xbf16, #tpu.memory_space<vmem>>, vector<8x128xbf16>
    %c0_1 = arith.constant 0 : index
    %c0_2 = arith.constant 0 : index
    %1 = vector.load %arg3[%c0_1, %c0_2] : memref<128x512xbf16, #tpu.memory_space<vmem>>, vector<128x512xbf16>
    %cst = arith.constant dense<0.000000e+00> : vector<8x512xf32>
    %2 = tpu.matmul %0, %1, %cst {dimension_numbers = #tpu.dot_dimension_numbers<[1], [0], [0], [1], [0, 0, 1, 1], [], []>} : vector<8x128xbf16>, vector<128x512xbf16>, vector<8x512xf32> -> vector<8x512xf32>
    %c0_3 = arith.constant 0 : index
    %c0_4 = arith.constant 0 : index
    %3 = vector.load %arg4[%c0_3, %c0_4] : memref<8x1xf32, #tpu.memory_space<vmem>>, vector<8x1xf32>
    %c0_5 = arith.constant 0 : index
    %c0_6 = arith.constant 0 : index
    %4 = vector.load %arg5[%c0_5, %c0_6] : memref<8x1xf32, #tpu.memory_space<vmem>>, vector<8x1xf32>
    %5 = vector.broadcast %3 : vector<8x1xf32> to vector<8x512xf32>
    %6 = arith.mulf %2, %5 : vector<8x512xf32>
    %7 = vector.broadcast %4 : vector<8x1xf32> to vector<8x512xf32>
    %8 = arith.addf %6, %7 : vector<8x512xf32>
    %cst_7 = arith.constant 0.000000e+00 : f32
    %9 = vector.broadcast %cst_7 : f32 to vector<8x512xf32>
    %10 = arith.cmpf oge, %8, %9 : vector<8x512xf32>
    %cst_8 = arith.constant 2.000000e-01 : f32
    %11 = vector.broadcast %cst_8 : f32 to vector<8x512xf32>
    %12 = arith.mulf %11, %8 : vector<8x512xf32>
    %13 = arith.select %10, %8, %12 : vector<8x512xi1>, vector<8x512xf32>
    %c0_9 = arith.constant 0 : index
    %c0_10 = arith.constant 0 : index
    %14 = vector.load %arg6[%c0_9, %c0_10] : memref<8x512xf32, #tpu.memory_space<vmem>>, vector<8x512xf32>
    tpu.vector_store %arg6[%c0_9, %c0_10], %13 {strides = array<i32>} : memref<8x512xf32, #tpu.memory_space<vmem>>, vector<8x512xf32>,
    return
  }
  func.func @transform_0(%arg0: i32, %arg1: i32) -> (i32, i32) {
    %c0_i32 = arith.constant 0 : i32
    %c0_i32_0 = arith.constant 0 : i32
    return %c0_i32, %arg1 : i32, i32
  }
  func.func @transform_1(%arg0: i32, %arg1: i32) -> (i32, i32) {
    %c0_i32 = arith.constant 0 : i32
    return %arg1, %arg0 : i32, i32
  }
  func.func @transform_2(%arg0: i32, %arg1: i32) -> (i32, i32) {
    %c0_i32 = arith.constant 0 : i32
    %c0_i32_0 = arith.constant 0 : i32
    %c0_i32_1 = arith.constant 0 : i32
    return %c0_i32, %c0_i32_0 : i32, i32
  }
  func.func @transform_3(%arg0: i32, %arg1: i32) -> (i32, i32) {
    %c0_i32 = arith.constant 0 : i32
    %c0_i32_0 = arith.constant 0 : i32
    %c0_i32_1 = arith.constant 0 : i32
    return %c0_i32, %c0_i32_0 : i32, i32
  }
  func.func @transform_4(%arg0: i32, %arg1: i32) -> (i32, i32) {
    %c0_i32 = arith.constant 0 : i32
    %c0_i32_0 = arith.constant 0 : i32
    return %c0_i32, %arg0 : i32, i32
  }
}

module attributes {stable_mosaic.version = 11 : i64} {
  func.func @_conv_mm_single_kernel(%arg0: i32, %arg1: i32, %arg2: memref<16x512xbf16, #tpu.memory_space<vmem>>, %arg3: memref<512x128xbf16, #tpu.memory_space<vmem>>, %arg4: memref<16x1xf32, #tpu.memory_space<vmem>>, %arg5: memref<16x1xf32, #tpu.memory_space<vmem>>, %arg6: memref<16x128xf32, #tpu.memory_space<vmem>>) attributes {dimension_semantics = [#tpu.dimension_semantics<parallel>, #tpu.dimension_semantics<arbitrary>], iteration_bounds = array<i64: 1, 1>, scalar_prefetch = 0 : i64, scratch_operands = 0 : i64, tpu.core_type = #tpu.core_type<tc>, window_params = [{transform_indices = @transform_0, window_bounds = array<i64: 16, 512>}, {transform_indices = @transform_1, window_bounds = array<i64: 512, 128>}, {pipeline_mode = #tpu.pipeline_mode<synchronous>, transform_indices = @transform_2, window_bounds = array<i64: 16, 1>}, {pipeline_mode = #tpu.pipeline_mode<synchronous>, transform_indices = @transform_3, window_bounds = array<i64: 16, 1>}, {transform_indices = @transform_4, window_bounds = array<i64: 16, 128>}]} {
    %c0 = arith.constant 0 : index
    %c0_0 = arith.constant 0 : index
    %0 = vector.load %arg2[%c0, %c0_0] : memref<16x512xbf16, #tpu.memory_space<vmem>>, vector<16x512xbf16>
    %c0_1 = arith.constant 0 : index
    %c0_2 = arith.constant 0 : index
    %1 = vector.load %arg3[%c0_1, %c0_2] : memref<512x128xbf16, #tpu.memory_space<vmem>>, vector<512x128xbf16>
    %cst = arith.constant dense<0.000000e+00> : vector<16x128xf32>
    %2 = tpu.matmul %0, %1, %cst {dimension_numbers = #tpu.dot_dimension_numbers<[1], [0], [0], [1], [0, 0, 1, 1], [], []>} : vector<16x512xbf16>, vector<512x128xbf16>, vector<16x128xf32> -> vector<16x128xf32>
    %c0_3 = arith.constant 0 : index
    %c0_4 = arith.constant 0 : index
    %3 = vector.load %arg4[%c0_3, %c0_4] : memref<16x1xf32, #tpu.memory_space<vmem>>, vector<16x1xf32>
    %c0_5 = arith.constant 0 : index
    %c0_6 = arith.constant 0 : index
    %4 = vector.load %arg5[%c0_5, %c0_6] : memref<16x1xf32, #tpu.memory_space<vmem>>, vector<16x1xf32>
    %5 = vector.broadcast %3 : vector<16x1xf32> to vector<16x128xf32>
    %6 = arith.mulf %2, %5 : vector<16x128xf32>
    %7 = vector.broadcast %4 : vector<16x1xf32> to vector<16x128xf32>
    %8 = arith.addf %6, %7 : vector<16x128xf32>
    %cst_7 = arith.constant 0.000000e+00 : f32
    %9 = vector.broadcast %cst_7 : f32 to vector<16x128xf32>
    %10 = arith.cmpf oge, %8, %9 : vector<16x128xf32>
    %cst_8 = arith.constant 4.000000e-02 : f32
    %11 = vector.broadcast %cst_8 : f32 to vector<16x128xf32>
    %12 = arith.mulf %11, %8 : vector<16x128xf32>
    %13 = arith.select %10, %8, %12 : vector<16x128xi1>, vector<16x128xf32>
    %c0_9 = arith.constant 0 : index
    %c0_10 = arith.constant 0 : index
    %14 = vector.load %arg6[%c0_9, %c0_10] : memref<16x128xf32, #tpu.memory_space<vmem>>, vector<16x128xf32>
    tpu.vector_store %arg6[%c0_9, %c0_10], %13 {strides = array<i32>} : memref<16x128xf32, #tpu.memory_space<vmem>>, vector<16x128xf32>,
    return
  }
  func.func @transform_0(%arg0: i32, %arg1: i32) -> (i32, i32) {
    %c0_i32 = arith.constant 0 : i32
    %c0_i32_0 = arith.constant 0 : i32
    return %c0_i32, %arg1 : i32, i32
  }
  func.func @transform_1(%arg0: i32, %arg1: i32) -> (i32, i32) {
    %c0_i32 = arith.constant 0 : i32
    return %arg1, %arg0 : i32, i32
  }
  func.func @transform_2(%arg0: i32, %arg1: i32) -> (i32, i32) {
    %c0_i32 = arith.constant 0 : i32
    %c0_i32_0 = arith.constant 0 : i32
    %c0_i32_1 = arith.constant 0 : i32
    return %c0_i32, %c0_i32_0 : i32, i32
  }
  func.func @transform_3(%arg0: i32, %arg1: i32) -> (i32, i32) {
    %c0_i32 = arith.constant 0 : i32
    %c0_i32_0 = arith.constant 0 : i32
    %c0_i32_1 = arith.constant 0 : i32
    return %c0_i32, %c0_i32_0 : i32, i32
  }
  func.func @transform_4(%arg0: i32, %arg1: i32) -> (i32, i32) {
    %c0_i32 = arith.constant 0 : i32
    %c0_i32_0 = arith.constant 0 : i32
    return %c0_i32, %arg0 : i32, i32
  }
}

module attributes {stable_mosaic.version = 11 : i64} {
  func.func @_conv_mm_single_kernel(%arg0: i32, %arg1: i32, %arg2: memref<16x512xbf16, #tpu.memory_space<vmem>>, %arg3: memref<512x128xbf16, #tpu.memory_space<vmem>>, %arg4: memref<16x1xf32, #tpu.memory_space<vmem>>, %arg5: memref<16x1xf32, #tpu.memory_space<vmem>>, %arg6: memref<16x128xf32, #tpu.memory_space<vmem>>, %arg7: memref<16x128xf32, #tpu.memory_space<vmem>>) attributes {dimension_semantics = [#tpu.dimension_semantics<parallel>, #tpu.dimension_semantics<arbitrary>], iteration_bounds = array<i64: 1, 1>, scalar_prefetch = 0 : i64, scratch_operands = 0 : i64, tpu.core_type = #tpu.core_type<tc>, window_params = [{transform_indices = @transform_0, window_bounds = array<i64: 16, 512>}, {transform_indices = @transform_1, window_bounds = array<i64: 512, 128>}, {pipeline_mode = #tpu.pipeline_mode<synchronous>, transform_indices = @transform_2, window_bounds = array<i64: 16, 1>}, {pipeline_mode = #tpu.pipeline_mode<synchronous>, transform_indices = @transform_3, window_bounds = array<i64: 16, 1>}, {transform_indices = @transform_4, window_bounds = array<i64: 16, 128>}, {transform_indices = @transform_5, window_bounds = array<i64: 16, 128>}]} {
    %c0 = arith.constant 0 : index
    %c0_0 = arith.constant 0 : index
    %0 = vector.load %arg6[%c0, %c0_0] : memref<16x128xf32, #tpu.memory_space<vmem>>, vector<16x128xf32>
    %c0_1 = arith.constant 0 : index
    %c0_2 = arith.constant 0 : index
    %1 = vector.load %arg2[%c0_1, %c0_2] : memref<16x512xbf16, #tpu.memory_space<vmem>>, vector<16x512xbf16>
    %c0_3 = arith.constant 0 : index
    %c0_4 = arith.constant 0 : index
    %2 = vector.load %arg3[%c0_3, %c0_4] : memref<512x128xbf16, #tpu.memory_space<vmem>>, vector<512x128xbf16>
    %cst = arith.constant dense<0.000000e+00> : vector<16x128xf32>
    %3 = tpu.matmul %1, %2, %cst {dimension_numbers = #tpu.dot_dimension_numbers<[1], [0], [0], [1], [0, 0, 1, 1], [], []>} : vector<16x512xbf16>, vector<512x128xbf16>, vector<16x128xf32> -> vector<16x128xf32>
    %c0_5 = arith.constant 0 : index
    %c0_6 = arith.constant 0 : index
    %4 = vector.load %arg4[%c0_5, %c0_6] : memref<16x1xf32, #tpu.memory_space<vmem>>, vector<16x1xf32>
    %c0_7 = arith.constant 0 : index
    %c0_8 = arith.constant 0 : index
    %5 = vector.load %arg5[%c0_7, %c0_8] : memref<16x1xf32, #tpu.memory_space<vmem>>, vector<16x1xf32>
    %6 = vector.broadcast %4 : vector<16x1xf32> to vector<16x128xf32>
    %7 = arith.mulf %3, %6 : vector<16x128xf32>
    %8 = vector.broadcast %5 : vector<16x1xf32> to vector<16x128xf32>
    %9 = arith.addf %7, %8 : vector<16x128xf32>
    %cst_9 = arith.constant 0.000000e+00 : f32
    %10 = vector.broadcast %cst_9 : f32 to vector<16x128xf32>
    %11 = arith.cmpf oge, %9, %10 : vector<16x128xf32>
    %cst_10 = arith.constant 4.000000e-02 : f32
    %12 = vector.broadcast %cst_10 : f32 to vector<16x128xf32>
    %13 = arith.mulf %12, %9 : vector<16x128xf32>
    %14 = arith.select %11, %9, %13 : vector<16x128xi1>, vector<16x128xf32>
    %15 = arith.addf %14, %0 : vector<16x128xf32>
    %c0_11 = arith.constant 0 : index
    %c0_12 = arith.constant 0 : index
    %16 = vector.load %arg7[%c0_11, %c0_12] : memref<16x128xf32, #tpu.memory_space<vmem>>, vector<16x128xf32>
    tpu.vector_store %arg7[%c0_11, %c0_12], %15 {strides = array<i32>} : memref<16x128xf32, #tpu.memory_space<vmem>>, vector<16x128xf32>,
    return
  }
  func.func @transform_0(%arg0: i32, %arg1: i32) -> (i32, i32) {
    %c0_i32 = arith.constant 0 : i32
    %c0_i32_0 = arith.constant 0 : i32
    return %c0_i32, %arg1 : i32, i32
  }
  func.func @transform_1(%arg0: i32, %arg1: i32) -> (i32, i32) {
    %c0_i32 = arith.constant 0 : i32
    return %arg1, %arg0 : i32, i32
  }
  func.func @transform_2(%arg0: i32, %arg1: i32) -> (i32, i32) {
    %c0_i32 = arith.constant 0 : i32
    %c0_i32_0 = arith.constant 0 : i32
    %c0_i32_1 = arith.constant 0 : i32
    return %c0_i32, %c0_i32_0 : i32, i32
  }
  func.func @transform_3(%arg0: i32, %arg1: i32) -> (i32, i32) {
    %c0_i32 = arith.constant 0 : i32
    %c0_i32_0 = arith.constant 0 : i32
    %c0_i32_1 = arith.constant 0 : i32
    return %c0_i32, %c0_i32_0 : i32, i32
  }
  func.func @transform_4(%arg0: i32, %arg1: i32) -> (i32, i32) {
    %c0_i32 = arith.constant 0 : i32
    %c0_i32_0 = arith.constant 0 : i32
    return %c0_i32, %arg0 : i32, i32
  }
  func.func @transform_5(%arg0: i32, %arg1: i32) -> (i32, i32) {
    %c0_i32 = arith.constant 0 : i32
    %c0_i32_0 = arith.constant 0 : i32
    return %c0_i32, %arg0 : i32, i32
  }
}

module attributes {stable_mosaic.version = 11 : i64} {
  func.func @_conv_mm_single_kernel(%arg0: i32, %arg1: i32, %arg2: memref<16x512xbf16, #tpu.memory_space<vmem>>, %arg3: memref<512x128xbf16, #tpu.memory_space<vmem>>, %arg4: memref<16x1xf32, #tpu.memory_space<vmem>>, %arg5: memref<16x1xf32, #tpu.memory_space<vmem>>, %arg6: memref<16x128xf32, #tpu.memory_space<vmem>>) attributes {dimension_semantics = [#tpu.dimension_semantics<parallel>, #tpu.dimension_semantics<arbitrary>], iteration_bounds = array<i64: 1, 1>, scalar_prefetch = 0 : i64, scratch_operands = 0 : i64, tpu.core_type = #tpu.core_type<tc>, window_params = [{transform_indices = @transform_0, window_bounds = array<i64: 16, 512>}, {transform_indices = @transform_1, window_bounds = array<i64: 512, 128>}, {pipeline_mode = #tpu.pipeline_mode<synchronous>, transform_indices = @transform_2, window_bounds = array<i64: 16, 1>}, {pipeline_mode = #tpu.pipeline_mode<synchronous>, transform_indices = @transform_3, window_bounds = array<i64: 16, 1>}, {transform_indices = @transform_4, window_bounds = array<i64: 16, 128>}]} {
    %c0 = arith.constant 0 : index
    %c0_0 = arith.constant 0 : index
    %0 = vector.load %arg2[%c0, %c0_0] : memref<16x512xbf16, #tpu.memory_space<vmem>>, vector<16x512xbf16>
    %c0_1 = arith.constant 0 : index
    %c0_2 = arith.constant 0 : index
    %1 = vector.load %arg3[%c0_1, %c0_2] : memref<512x128xbf16, #tpu.memory_space<vmem>>, vector<512x128xbf16>
    %cst = arith.constant dense<0.000000e+00> : vector<16x128xf32>
    %2 = tpu.matmul %0, %1, %cst {dimension_numbers = #tpu.dot_dimension_numbers<[1], [0], [0], [1], [0, 0, 1, 1], [], []>} : vector<16x512xbf16>, vector<512x128xbf16>, vector<16x128xf32> -> vector<16x128xf32>
    %c0_3 = arith.constant 0 : index
    %c0_4 = arith.constant 0 : index
    %3 = vector.load %arg4[%c0_3, %c0_4] : memref<16x1xf32, #tpu.memory_space<vmem>>, vector<16x1xf32>
    %c0_5 = arith.constant 0 : index
    %c0_6 = arith.constant 0 : index
    %4 = vector.load %arg5[%c0_5, %c0_6] : memref<16x1xf32, #tpu.memory_space<vmem>>, vector<16x1xf32>
    %5 = vector.broadcast %3 : vector<16x1xf32> to vector<16x128xf32>
    %6 = arith.mulf %2, %5 : vector<16x128xf32>
    %7 = vector.broadcast %4 : vector<16x1xf32> to vector<16x128xf32>
    %8 = arith.addf %6, %7 : vector<16x128xf32>
    %cst_7 = arith.constant 0.000000e+00 : f32
    %9 = vector.broadcast %cst_7 : f32 to vector<16x128xf32>
    %10 = arith.cmpf oge, %8, %9 : vector<16x128xf32>
    %cst_8 = arith.constant 2.000000e-01 : f32
    %11 = vector.broadcast %cst_8 : f32 to vector<16x128xf32>
    %12 = arith.mulf %11, %8 : vector<16x128xf32>
    %13 = arith.select %10, %8, %12 : vector<16x128xi1>, vector<16x128xf32>
    %c0_9 = arith.constant 0 : index
    %c0_10 = arith.constant 0 : index
    %14 = vector.load %arg6[%c0_9, %c0_10] : memref<16x128xf32, #tpu.memory_space<vmem>>, vector<16x128xf32>
    tpu.vector_store %arg6[%c0_9, %c0_10], %13 {strides = array<i32>} : memref<16x128xf32, #tpu.memory_space<vmem>>, vector<16x128xf32>,
    return
  }
  func.func @transform_0(%arg0: i32, %arg1: i32) -> (i32, i32) {
    %c0_i32 = arith.constant 0 : i32
    %c0_i32_0 = arith.constant 0 : i32
    return %c0_i32, %arg1 : i32, i32
  }
  func.func @transform_1(%arg0: i32, %arg1: i32) -> (i32, i32) {
    %c0_i32 = arith.constant 0 : i32
    return %arg1, %arg0 : i32, i32
  }
  func.func @transform_2(%arg0: i32, %arg1: i32) -> (i32, i32) {
    %c0_i32 = arith.constant 0 : i32
    %c0_i32_0 = arith.constant 0 : i32
    %c0_i32_1 = arith.constant 0 : i32
    return %c0_i32, %c0_i32_0 : i32, i32
  }
  func.func @transform_3(%arg0: i32, %arg1: i32) -> (i32, i32) {
    %c0_i32 = arith.constant 0 : i32
    %c0_i32_0 = arith.constant 0 : i32
    %c0_i32_1 = arith.constant 0 : i32
    return %c0_i32, %c0_i32_0 : i32, i32
  }
  func.func @transform_4(%arg0: i32, %arg1: i32) -> (i32, i32) {
    %c0_i32 = arith.constant 0 : i32
    %c0_i32_0 = arith.constant 0 : i32
    return %c0_i32, %arg0 : i32, i32
  }
}

module attributes {stable_mosaic.version = 11 : i64} {
  func.func @_conv_mm_single_kernel(%arg0: i32, %arg1: i32, %arg2: memref<8x512xbf16, #tpu.memory_space<vmem>>, %arg3: memref<512x32xbf16, #tpu.memory_space<vmem>>, %arg4: memref<8x1xf32, #tpu.memory_space<vmem>>, %arg5: memref<8x1xf32, #tpu.memory_space<vmem>>, %arg6: memref<8x32xf32, #tpu.memory_space<vmem>>) attributes {dimension_semantics = [#tpu.dimension_semantics<parallel>, #tpu.dimension_semantics<arbitrary>], iteration_bounds = array<i64: 1, 1>, scalar_prefetch = 0 : i64, scratch_operands = 0 : i64, tpu.core_type = #tpu.core_type<tc>, window_params = [{transform_indices = @transform_0, window_bounds = array<i64: 8, 512>}, {transform_indices = @transform_1, window_bounds = array<i64: 512, 32>}, {pipeline_mode = #tpu.pipeline_mode<synchronous>, transform_indices = @transform_2, window_bounds = array<i64: 8, 1>}, {pipeline_mode = #tpu.pipeline_mode<synchronous>, transform_indices = @transform_3, window_bounds = array<i64: 8, 1>}, {transform_indices = @transform_4, window_bounds = array<i64: 8, 32>}]} {
    %c0 = arith.constant 0 : index
    %c0_0 = arith.constant 0 : index
    %0 = vector.load %arg2[%c0, %c0_0] : memref<8x512xbf16, #tpu.memory_space<vmem>>, vector<8x512xbf16>
    %c0_1 = arith.constant 0 : index
    %c0_2 = arith.constant 0 : index
    %1 = vector.load %arg3[%c0_1, %c0_2] : memref<512x32xbf16, #tpu.memory_space<vmem>>, vector<512x32xbf16>
    %cst = arith.constant dense<0.000000e+00> : vector<8x32xf32>
    %2 = tpu.matmul %0, %1, %cst {dimension_numbers = #tpu.dot_dimension_numbers<[1], [0], [0], [1], [0, 0, 1, 1], [], []>} : vector<8x512xbf16>, vector<512x32xbf16>, vector<8x32xf32> -> vector<8x32xf32>
    %c0_3 = arith.constant 0 : index
    %c0_4 = arith.constant 0 : index
    %3 = vector.load %arg4[%c0_3, %c0_4] : memref<8x1xf32, #tpu.memory_space<vmem>>, vector<8x1xf32>
    %c0_5 = arith.constant 0 : index
    %c0_6 = arith.constant 0 : index
    %4 = vector.load %arg5[%c0_5, %c0_6] : memref<8x1xf32, #tpu.memory_space<vmem>>, vector<8x1xf32>
    %5 = vector.broadcast %3 : vector<8x1xf32> to vector<8x32xf32>
    %6 = arith.mulf %2, %5 : vector<8x32xf32>
    %7 = vector.broadcast %4 : vector<8x1xf32> to vector<8x32xf32>
    %8 = arith.addf %6, %7 : vector<8x32xf32>
    %cst_7 = arith.constant 0.000000e+00 : f32
    %9 = vector.broadcast %cst_7 : f32 to vector<8x32xf32>
    %10 = arith.cmpf oge, %8, %9 : vector<8x32xf32>
    %cst_8 = arith.constant 4.000000e-02 : f32
    %11 = vector.broadcast %cst_8 : f32 to vector<8x32xf32>
    %12 = arith.mulf %11, %8 : vector<8x32xf32>
    %13 = arith.select %10, %8, %12 : vector<8x32xi1>, vector<8x32xf32>
    %c0_9 = arith.constant 0 : index
    %c0_10 = arith.constant 0 : index
    %14 = vector.load %arg6[%c0_9, %c0_10] : memref<8x32xf32, #tpu.memory_space<vmem>>, vector<8x32xf32>
    tpu.vector_store %arg6[%c0_9, %c0_10], %13 {strides = array<i32>} : memref<8x32xf32, #tpu.memory_space<vmem>>, vector<8x32xf32>,
    return
  }
  func.func @transform_0(%arg0: i32, %arg1: i32) -> (i32, i32) {
    %c0_i32 = arith.constant 0 : i32
    %c0_i32_0 = arith.constant 0 : i32
    return %c0_i32, %arg1 : i32, i32
  }
  func.func @transform_1(%arg0: i32, %arg1: i32) -> (i32, i32) {
    %c0_i32 = arith.constant 0 : i32
    return %arg1, %arg0 : i32, i32
  }
  func.func @transform_2(%arg0: i32, %arg1: i32) -> (i32, i32) {
    %c0_i32 = arith.constant 0 : i32
    %c0_i32_0 = arith.constant 0 : i32
    %c0_i32_1 = arith.constant 0 : i32
    return %c0_i32, %c0_i32_0 : i32, i32
  }
  func.func @transform_3(%arg0: i32, %arg1: i32) -> (i32, i32) {
    %c0_i32 = arith.constant 0 : i32
    %c0_i32_0 = arith.constant 0 : i32
    %c0_i32_1 = arith.constant 0 : i32
    return %c0_i32, %c0_i32_0 : i32, i32
  }
  func.func @transform_4(%arg0: i32, %arg1: i32) -> (i32, i32) {
    %c0_i32 = arith.constant 0 : i32
    %c0_i32_0 = arith.constant 0 : i32
    return %c0_i32, %arg0 : i32, i32
  }
}

module attributes {stable_mosaic.version = 11 : i64} {
  func.func @_conv_mm_single_kernel(%arg0: i32, %arg1: i32, %arg2: memref<8x512xbf16, #tpu.memory_space<vmem>>, %arg3: memref<512x128xbf16, #tpu.memory_space<vmem>>, %arg4: memref<8x1xf32, #tpu.memory_space<vmem>>, %arg5: memref<8x1xf32, #tpu.memory_space<vmem>>, %arg6: memref<8x128xf32, #tpu.memory_space<vmem>>, %arg7: memref<8x128xf32, #tpu.memory_space<vmem>>) attributes {dimension_semantics = [#tpu.dimension_semantics<parallel>, #tpu.dimension_semantics<arbitrary>], iteration_bounds = array<i64: 1, 1>, scalar_prefetch = 0 : i64, scratch_operands = 0 : i64, tpu.core_type = #tpu.core_type<tc>, window_params = [{transform_indices = @transform_0, window_bounds = array<i64: 8, 512>}, {transform_indices = @transform_1, window_bounds = array<i64: 512, 128>}, {pipeline_mode = #tpu.pipeline_mode<synchronous>, transform_indices = @transform_2, window_bounds = array<i64: 8, 1>}, {pipeline_mode = #tpu.pipeline_mode<synchronous>, transform_indices = @transform_3, window_bounds = array<i64: 8, 1>}, {transform_indices = @transform_4, window_bounds = array<i64: 8, 128>}, {transform_indices = @transform_5, window_bounds = array<i64: 8, 128>}]} {
    %c0 = arith.constant 0 : index
    %c0_0 = arith.constant 0 : index
    %0 = vector.load %arg6[%c0, %c0_0] : memref<8x128xf32, #tpu.memory_space<vmem>>, vector<8x128xf32>
    %c0_1 = arith.constant 0 : index
    %c0_2 = arith.constant 0 : index
    %1 = vector.load %arg2[%c0_1, %c0_2] : memref<8x512xbf16, #tpu.memory_space<vmem>>, vector<8x512xbf16>
    %c0_3 = arith.constant 0 : index
    %c0_4 = arith.constant 0 : index
    %2 = vector.load %arg3[%c0_3, %c0_4] : memref<512x128xbf16, #tpu.memory_space<vmem>>, vector<512x128xbf16>
    %cst = arith.constant dense<0.000000e+00> : vector<8x128xf32>
    %3 = tpu.matmul %1, %2, %cst {dimension_numbers = #tpu.dot_dimension_numbers<[1], [0], [0], [1], [0, 0, 1, 1], [], []>} : vector<8x512xbf16>, vector<512x128xbf16>, vector<8x128xf32> -> vector<8x128xf32>
    %c0_5 = arith.constant 0 : index
    %c0_6 = arith.constant 0 : index
    %4 = vector.load %arg4[%c0_5, %c0_6] : memref<8x1xf32, #tpu.memory_space<vmem>>, vector<8x1xf32>
    %c0_7 = arith.constant 0 : index
    %c0_8 = arith.constant 0 : index
    %5 = vector.load %arg5[%c0_7, %c0_8] : memref<8x1xf32, #tpu.memory_space<vmem>>, vector<8x1xf32>
    %6 = vector.broadcast %4 : vector<8x1xf32> to vector<8x128xf32>
    %7 = arith.mulf %3, %6 : vector<8x128xf32>
    %8 = vector.broadcast %5 : vector<8x1xf32> to vector<8x128xf32>
    %9 = arith.addf %7, %8 : vector<8x128xf32>
    %cst_9 = arith.constant 0.000000e+00 : f32
    %10 = vector.broadcast %cst_9 : f32 to vector<8x128xf32>
    %11 = arith.cmpf oge, %9, %10 : vector<8x128xf32>
    %cst_10 = arith.constant 2.000000e-01 : f32
    %12 = vector.broadcast %cst_10 : f32 to vector<8x128xf32>
    %13 = arith.mulf %12, %9 : vector<8x128xf32>
    %14 = arith.select %11, %9, %13 : vector<8x128xi1>, vector<8x128xf32>
    %15 = arith.addf %14, %0 : vector<8x128xf32>
    %c0_11 = arith.constant 0 : index
    %c0_12 = arith.constant 0 : index
    %16 = vector.load %arg7[%c0_11, %c0_12] : memref<8x128xf32, #tpu.memory_space<vmem>>, vector<8x128xf32>
    tpu.vector_store %arg7[%c0_11, %c0_12], %15 {strides = array<i32>} : memref<8x128xf32, #tpu.memory_space<vmem>>, vector<8x128xf32>,
    return
  }
  func.func @transform_0(%arg0: i32, %arg1: i32) -> (i32, i32) {
    %c0_i32 = arith.constant 0 : i32
    %c0_i32_0 = arith.constant 0 : i32
    return %c0_i32, %arg1 : i32, i32
  }
  func.func @transform_1(%arg0: i32, %arg1: i32) -> (i32, i32) {
    %c0_i32 = arith.constant 0 : i32
    return %arg1, %arg0 : i32, i32
  }
  func.func @transform_2(%arg0: i32, %arg1: i32) -> (i32, i32) {
    %c0_i32 = arith.constant 0 : i32
    %c0_i32_0 = arith.constant 0 : i32
    %c0_i32_1 = arith.constant 0 : i32
    return %c0_i32, %c0_i32_0 : i32, i32
  }
  func.func @transform_3(%arg0: i32, %arg1: i32) -> (i32, i32) {
    %c0_i32 = arith.constant 0 : i32
    %c0_i32_0 = arith.constant 0 : i32
    %c0_i32_1 = arith.constant 0 : i32
    return %c0_i32, %c0_i32_0 : i32, i32
  }
  func.func @transform_4(%arg0: i32, %arg1: i32) -> (i32, i32) {
    %c0_i32 = arith.constant 0 : i32
    %c0_i32_0 = arith.constant 0 : i32
    return %c0_i32, %arg0 : i32, i32
  }
  func.func @transform_5(%arg0: i32, %arg1: i32) -> (i32, i32) {
    %c0_i32 = arith.constant 0 : i32
    %c0_i32_0 = arith.constant 0 : i32
    return %c0_i32, %arg0 : i32, i32
  }
}

module attributes {stable_mosaic.version = 11 : i64} {
  func.func @_conv_mm_single_kernel(%arg0: i32, %arg1: i32, %arg2: memref<8x256xbf16, #tpu.memory_space<vmem>>, %arg3: memref<256x128xbf16, #tpu.memory_space<vmem>>, %arg4: memref<8x1xf32, #tpu.memory_space<vmem>>, %arg5: memref<8x1xf32, #tpu.memory_space<vmem>>, %arg6: memref<8x128xf32, #tpu.memory_space<vmem>>) attributes {dimension_semantics = [#tpu.dimension_semantics<parallel>, #tpu.dimension_semantics<arbitrary>], iteration_bounds = array<i64: 1, 1>, scalar_prefetch = 0 : i64, scratch_operands = 0 : i64, tpu.core_type = #tpu.core_type<tc>, window_params = [{transform_indices = @transform_0, window_bounds = array<i64: 8, 256>}, {transform_indices = @transform_1, window_bounds = array<i64: 256, 128>}, {pipeline_mode = #tpu.pipeline_mode<synchronous>, transform_indices = @transform_2, window_bounds = array<i64: 8, 1>}, {pipeline_mode = #tpu.pipeline_mode<synchronous>, transform_indices = @transform_3, window_bounds = array<i64: 8, 1>}, {transform_indices = @transform_4, window_bounds = array<i64: 8, 128>}]} {
    %c0 = arith.constant 0 : index
    %c0_0 = arith.constant 0 : index
    %0 = vector.load %arg2[%c0, %c0_0] : memref<8x256xbf16, #tpu.memory_space<vmem>>, vector<8x256xbf16>
    %c0_1 = arith.constant 0 : index
    %c0_2 = arith.constant 0 : index
    %1 = vector.load %arg3[%c0_1, %c0_2] : memref<256x128xbf16, #tpu.memory_space<vmem>>, vector<256x128xbf16>
    %cst = arith.constant dense<0.000000e+00> : vector<8x128xf32>
    %2 = tpu.matmul %0, %1, %cst {dimension_numbers = #tpu.dot_dimension_numbers<[1], [0], [0], [1], [0, 0, 1, 1], [], []>} : vector<8x256xbf16>, vector<256x128xbf16>, vector<8x128xf32> -> vector<8x128xf32>
    %c0_3 = arith.constant 0 : index
    %c0_4 = arith.constant 0 : index
    %3 = vector.load %arg4[%c0_3, %c0_4] : memref<8x1xf32, #tpu.memory_space<vmem>>, vector<8x1xf32>
    %c0_5 = arith.constant 0 : index
    %c0_6 = arith.constant 0 : index
    %4 = vector.load %arg5[%c0_5, %c0_6] : memref<8x1xf32, #tpu.memory_space<vmem>>, vector<8x1xf32>
    %5 = vector.broadcast %3 : vector<8x1xf32> to vector<8x128xf32>
    %6 = arith.mulf %2, %5 : vector<8x128xf32>
    %7 = vector.broadcast %4 : vector<8x1xf32> to vector<8x128xf32>
    %8 = arith.addf %6, %7 : vector<8x128xf32>
    %cst_7 = arith.constant 0.000000e+00 : f32
    %9 = vector.broadcast %cst_7 : f32 to vector<8x128xf32>
    %10 = arith.cmpf oge, %8, %9 : vector<8x128xf32>
    %cst_8 = arith.constant 4.000000e-02 : f32
    %11 = vector.broadcast %cst_8 : f32 to vector<8x128xf32>
    %12 = arith.mulf %11, %8 : vector<8x128xf32>
    %13 = arith.select %10, %8, %12 : vector<8x128xi1>, vector<8x128xf32>
    %c0_9 = arith.constant 0 : index
    %c0_10 = arith.constant 0 : index
    %14 = vector.load %arg6[%c0_9, %c0_10] : memref<8x128xf32, #tpu.memory_space<vmem>>, vector<8x128xf32>
    tpu.vector_store %arg6[%c0_9, %c0_10], %13 {strides = array<i32>} : memref<8x128xf32, #tpu.memory_space<vmem>>, vector<8x128xf32>,
    return
  }
  func.func @transform_0(%arg0: i32, %arg1: i32) -> (i32, i32) {
    %c0_i32 = arith.constant 0 : i32
    %c0_i32_0 = arith.constant 0 : i32
    return %c0_i32, %arg1 : i32, i32
  }
  func.func @transform_1(%arg0: i32, %arg1: i32) -> (i32, i32) {
    %c0_i32 = arith.constant 0 : i32
    return %arg1, %arg0 : i32, i32
  }
  func.func @transform_2(%arg0: i32, %arg1: i32) -> (i32, i32) {
    %c0_i32 = arith.constant 0 : i32
    %c0_i32_0 = arith.constant 0 : i32
    %c0_i32_1 = arith.constant 0 : i32
    return %c0_i32, %c0_i32_0 : i32, i32
  }
  func.func @transform_3(%arg0: i32, %arg1: i32) -> (i32, i32) {
    %c0_i32 = arith.constant 0 : i32
    %c0_i32_0 = arith.constant 0 : i32
    %c0_i32_1 = arith.constant 0 : i32
    return %c0_i32, %c0_i32_0 : i32, i32
  }
  func.func @transform_4(%arg0: i32, %arg1: i32) -> (i32, i32) {
    %c0_i32 = arith.constant 0 : i32
    %c0_i32_0 = arith.constant 0 : i32
    return %c0_i32, %arg0 : i32, i32
  }
}

module attributes {stable_mosaic.version = 11 : i64} {
  func.func @_conv_mm_single_kernel(%arg0: i32, %arg1: i32, %arg2: memref<8x256xbf16, #tpu.memory_space<vmem>>, %arg3: memref<256x512xbf16, #tpu.memory_space<vmem>>, %arg4: memref<8x1xf32, #tpu.memory_space<vmem>>, %arg5: memref<8x1xf32, #tpu.memory_space<vmem>>, %arg6: memref<8x512xf32, #tpu.memory_space<vmem>>, %arg7: memref<8x512xf32, #tpu.memory_space<vmem>>) attributes {dimension_semantics = [#tpu.dimension_semantics<parallel>, #tpu.dimension_semantics<arbitrary>], iteration_bounds = array<i64: 1, 1>, scalar_prefetch = 0 : i64, scratch_operands = 0 : i64, tpu.core_type = #tpu.core_type<tc>, window_params = [{transform_indices = @transform_0, window_bounds = array<i64: 8, 256>}, {transform_indices = @transform_1, window_bounds = array<i64: 256, 512>}, {pipeline_mode = #tpu.pipeline_mode<synchronous>, transform_indices = @transform_2, window_bounds = array<i64: 8, 1>}, {pipeline_mode = #tpu.pipeline_mode<synchronous>, transform_indices = @transform_3, window_bounds = array<i64: 8, 1>}, {transform_indices = @transform_4, window_bounds = array<i64: 8, 512>}, {transform_indices = @transform_5, window_bounds = array<i64: 8, 512>}]} {
    %c0 = arith.constant 0 : index
    %c0_0 = arith.constant 0 : index
    %0 = vector.load %arg6[%c0, %c0_0] : memref<8x512xf32, #tpu.memory_space<vmem>>, vector<8x512xf32>
    %c0_1 = arith.constant 0 : index
    %c0_2 = arith.constant 0 : index
    %1 = vector.load %arg2[%c0_1, %c0_2] : memref<8x256xbf16, #tpu.memory_space<vmem>>, vector<8x256xbf16>
    %c0_3 = arith.constant 0 : index
    %c0_4 = arith.constant 0 : index
    %2 = vector.load %arg3[%c0_3, %c0_4] : memref<256x512xbf16, #tpu.memory_space<vmem>>, vector<256x512xbf16>
    %cst = arith.constant dense<0.000000e+00> : vector<8x512xf32>
    %3 = tpu.matmul %1, %2, %cst {dimension_numbers = #tpu.dot_dimension_numbers<[1], [0], [0], [1], [0, 0, 1, 1], [], []>} : vector<8x256xbf16>, vector<256x512xbf16>, vector<8x512xf32> -> vector<8x512xf32>
    %c0_5 = arith.constant 0 : index
    %c0_6 = arith.constant 0 : index
    %4 = vector.load %arg4[%c0_5, %c0_6] : memref<8x1xf32, #tpu.memory_space<vmem>>, vector<8x1xf32>
    %c0_7 = arith.constant 0 : index
    %c0_8 = arith.constant 0 : index
    %5 = vector.load %arg5[%c0_7, %c0_8] : memref<8x1xf32, #tpu.memory_space<vmem>>, vector<8x1xf32>
    %6 = vector.broadcast %4 : vector<8x1xf32> to vector<8x512xf32>
    %7 = arith.mulf %3, %6 : vector<8x512xf32>
    %8 = vector.broadcast %5 : vector<8x1xf32> to vector<8x512xf32>
    %9 = arith.addf %7, %8 : vector<8x512xf32>
    %cst_9 = arith.constant 0.000000e+00 : f32
    %10 = vector.broadcast %cst_9 : f32 to vector<8x512xf32>
    %11 = arith.cmpf oge, %9, %10 : vector<8x512xf32>
    %cst_10 = arith.constant 2.000000e-01 : f32
    %12 = vector.broadcast %cst_10 : f32 to vector<8x512xf32>
    %13 = arith.mulf %12, %9 : vector<8x512xf32>
    %14 = arith.select %11, %9, %13 : vector<8x512xi1>, vector<8x512xf32>
    %15 = arith.addf %14, %0 : vector<8x512xf32>
    %c0_11 = arith.constant 0 : index
    %c0_12 = arith.constant 0 : index
    %16 = vector.load %arg7[%c0_11, %c0_12] : memref<8x512xf32, #tpu.memory_space<vmem>>, vector<8x512xf32>
    tpu.vector_store %arg7[%c0_11, %c0_12], %15 {strides = array<i32>} : memref<8x512xf32, #tpu.memory_space<vmem>>, vector<8x512xf32>,
    return
  }
  func.func @transform_0(%arg0: i32, %arg1: i32) -> (i32, i32) {
    %c0_i32 = arith.constant 0 : i32
    %c0_i32_0 = arith.constant 0 : i32
    return %c0_i32, %arg1 : i32, i32
  }
  func.func @transform_1(%arg0: i32, %arg1: i32) -> (i32, i32) {
    %c0_i32 = arith.constant 0 : i32
    return %arg1, %arg0 : i32, i32
  }
  func.func @transform_2(%arg0: i32, %arg1: i32) -> (i32, i32) {
    %c0_i32 = arith.constant 0 : i32
    %c0_i32_0 = arith.constant 0 : i32
    %c0_i32_1 = arith.constant 0 : i32
    return %c0_i32, %c0_i32_0 : i32, i32
  }
  func.func @transform_3(%arg0: i32, %arg1: i32) -> (i32, i32) {
    %c0_i32 = arith.constant 0 : i32
    %c0_i32_0 = arith.constant 0 : i32
    %c0_i32_1 = arith.constant 0 : i32
    return %c0_i32, %c0_i32_0 : i32, i32
  }
  func.func @transform_4(%arg0: i32, %arg1: i32) -> (i32, i32) {
    %c0_i32 = arith.constant 0 : i32
    %c0_i32_0 = arith.constant 0 : i32
    return %c0_i32, %arg0 : i32, i32
  }
  func.func @transform_5(%arg0: i32, %arg1: i32) -> (i32, i32) {
    %c0_i32 = arith.constant 0 : i32
    %c0_i32_0 = arith.constant 0 : i32
    return %c0_i32, %arg0 : i32, i32
  }
}

module attributes {stable_mosaic.version = 11 : i64} {
  func.func @_conv_mm_single_kernel(%arg0: i32, %arg1: i32, %arg2: memref<8x256xbf16, #tpu.memory_space<vmem>>, %arg3: memref<256x512xbf16, #tpu.memory_space<vmem>>, %arg4: memref<8x1xf32, #tpu.memory_space<vmem>>, %arg5: memref<8x1xf32, #tpu.memory_space<vmem>>, %arg6: memref<8x512xf32, #tpu.memory_space<vmem>>) attributes {dimension_semantics = [#tpu.dimension_semantics<parallel>, #tpu.dimension_semantics<arbitrary>], iteration_bounds = array<i64: 1, 1>, scalar_prefetch = 0 : i64, scratch_operands = 0 : i64, tpu.core_type = #tpu.core_type<tc>, window_params = [{transform_indices = @transform_0, window_bounds = array<i64: 8, 256>}, {transform_indices = @transform_1, window_bounds = array<i64: 256, 512>}, {pipeline_mode = #tpu.pipeline_mode<synchronous>, transform_indices = @transform_2, window_bounds = array<i64: 8, 1>}, {pipeline_mode = #tpu.pipeline_mode<synchronous>, transform_indices = @transform_3, window_bounds = array<i64: 8, 1>}, {transform_indices = @transform_4, window_bounds = array<i64: 8, 512>}]} {
    %c0 = arith.constant 0 : index
    %c0_0 = arith.constant 0 : index
    %0 = vector.load %arg2[%c0, %c0_0] : memref<8x256xbf16, #tpu.memory_space<vmem>>, vector<8x256xbf16>
    %c0_1 = arith.constant 0 : index
    %c0_2 = arith.constant 0 : index
    %1 = vector.load %arg3[%c0_1, %c0_2] : memref<256x512xbf16, #tpu.memory_space<vmem>>, vector<256x512xbf16>
    %cst = arith.constant dense<0.000000e+00> : vector<8x512xf32>
    %2 = tpu.matmul %0, %1, %cst {dimension_numbers = #tpu.dot_dimension_numbers<[1], [0], [0], [1], [0, 0, 1, 1], [], []>} : vector<8x256xbf16>, vector<256x512xbf16>, vector<8x512xf32> -> vector<8x512xf32>
    %c0_3 = arith.constant 0 : index
    %c0_4 = arith.constant 0 : index
    %3 = vector.load %arg4[%c0_3, %c0_4] : memref<8x1xf32, #tpu.memory_space<vmem>>, vector<8x1xf32>
    %c0_5 = arith.constant 0 : index
    %c0_6 = arith.constant 0 : index
    %4 = vector.load %arg5[%c0_5, %c0_6] : memref<8x1xf32, #tpu.memory_space<vmem>>, vector<8x1xf32>
    %5 = vector.broadcast %3 : vector<8x1xf32> to vector<8x512xf32>
    %6 = arith.mulf %2, %5 : vector<8x512xf32>
    %7 = vector.broadcast %4 : vector<8x1xf32> to vector<8x512xf32>
    %8 = arith.addf %6, %7 : vector<8x512xf32>
    %cst_7 = arith.constant 0.000000e+00 : f32
    %9 = vector.broadcast %cst_7 : f32 to vector<8x512xf32>
    %10 = arith.cmpf oge, %8, %9 : vector<8x512xf32>
    %cst_8 = arith.constant 2.000000e-01 : f32
    %11 = vector.broadcast %cst_8 : f32 to vector<8x512xf32>
    %12 = arith.mulf %11, %8 : vector<8x512xf32>
    %13 = arith.select %10, %8, %12 : vector<8x512xi1>, vector<8x512xf32>
    %c0_9 = arith.constant 0 : index
    %c0_10 = arith.constant 0 : index
    %14 = vector.load %arg6[%c0_9, %c0_10] : memref<8x512xf32, #tpu.memory_space<vmem>>, vector<8x512xf32>
    tpu.vector_store %arg6[%c0_9, %c0_10], %13 {strides = array<i32>} : memref<8x512xf32, #tpu.memory_space<vmem>>, vector<8x512xf32>,
    return
  }
  func.func @transform_0(%arg0: i32, %arg1: i32) -> (i32, i32) {
    %c0_i32 = arith.constant 0 : i32
    %c0_i32_0 = arith.constant 0 : i32
    return %c0_i32, %arg1 : i32, i32
  }
  func.func @transform_1(%arg0: i32, %arg1: i32) -> (i32, i32) {
    %c0_i32 = arith.constant 0 : i32
    return %arg1, %arg0 : i32, i32
  }
  func.func @transform_2(%arg0: i32, %arg1: i32) -> (i32, i32) {
    %c0_i32 = arith.constant 0 : i32
    %c0_i32_0 = arith.constant 0 : i32
    %c0_i32_1 = arith.constant 0 : i32
    return %c0_i32, %c0_i32_0 : i32, i32
  }
  func.func @transform_3(%arg0: i32, %arg1: i32) -> (i32, i32) {
    %c0_i32 = arith.constant 0 : i32
    %c0_i32_0 = arith.constant 0 : i32
    %c0_i32_1 = arith.constant 0 : i32
    return %c0_i32, %c0_i32_0 : i32, i32
  }
  func.func @transform_4(%arg0: i32, %arg1: i32) -> (i32, i32) {
    %c0_i32 = arith.constant 0 : i32
    %c0_i32_0 = arith.constant 0 : i32
    return %c0_i32, %arg0 : i32, i32
  }
}

module attributes {stable_mosaic.version = 11 : i64} {
  func.func @_conv_mm_single_kernel(%arg0: i32, %arg1: i32, %arg2: memref<2x256xbf16, #tpu.memory_space<vmem>>, %arg3: memref<256x512xbf16, #tpu.memory_space<vmem>>, %arg4: memref<2x1xf32, #tpu.memory_space<vmem>>, %arg5: memref<2x1xf32, #tpu.memory_space<vmem>>, %arg6: memref<2x512xf32, #tpu.memory_space<vmem>>) attributes {dimension_semantics = [#tpu.dimension_semantics<parallel>, #tpu.dimension_semantics<arbitrary>], iteration_bounds = array<i64: 1, 1>, scalar_prefetch = 0 : i64, scratch_operands = 0 : i64, tpu.core_type = #tpu.core_type<tc>, window_params = [{transform_indices = @transform_0, window_bounds = array<i64: 2, 256>}, {transform_indices = @transform_1, window_bounds = array<i64: 256, 512>}, {pipeline_mode = #tpu.pipeline_mode<synchronous>, transform_indices = @transform_2, window_bounds = array<i64: 2, 1>}, {pipeline_mode = #tpu.pipeline_mode<synchronous>, transform_indices = @transform_3, window_bounds = array<i64: 2, 1>}, {transform_indices = @transform_4, window_bounds = array<i64: 2, 512>}]} {
    %c0 = arith.constant 0 : index
    %c0_0 = arith.constant 0 : index
    %0 = vector.load %arg2[%c0, %c0_0] : memref<2x256xbf16, #tpu.memory_space<vmem>>, vector<2x256xbf16>
    %c0_1 = arith.constant 0 : index
    %c0_2 = arith.constant 0 : index
    %1 = vector.load %arg3[%c0_1, %c0_2] : memref<256x512xbf16, #tpu.memory_space<vmem>>, vector<256x512xbf16>
    %cst = arith.constant dense<0.000000e+00> : vector<2x512xf32>
    %2 = tpu.matmul %0, %1, %cst {dimension_numbers = #tpu.dot_dimension_numbers<[1], [0], [0], [1], [0, 0, 1, 1], [], []>} : vector<2x256xbf16>, vector<256x512xbf16>, vector<2x512xf32> -> vector<2x512xf32>
    %c0_3 = arith.constant 0 : index
    %c0_4 = arith.constant 0 : index
    %3 = vector.load %arg4[%c0_3, %c0_4] : memref<2x1xf32, #tpu.memory_space<vmem>>, vector<2x1xf32>
    %c0_5 = arith.constant 0 : index
    %c0_6 = arith.constant 0 : index
    %4 = vector.load %arg5[%c0_5, %c0_6] : memref<2x1xf32, #tpu.memory_space<vmem>>, vector<2x1xf32>
    %5 = vector.broadcast %3 : vector<2x1xf32> to vector<2x512xf32>
    %6 = arith.mulf %2, %5 : vector<2x512xf32>
    %7 = vector.broadcast %4 : vector<2x1xf32> to vector<2x512xf32>
    %8 = arith.addf %6, %7 : vector<2x512xf32>
    %c0_7 = arith.constant 0 : index
    %c0_8 = arith.constant 0 : index
    %9 = vector.load %arg6[%c0_7, %c0_8] : memref<2x512xf32, #tpu.memory_space<vmem>>, vector<2x512xf32>
    tpu.vector_store %arg6[%c0_7, %c0_8], %8 {strides = array<i32>} : memref<2x512xf32, #tpu.memory_space<vmem>>, vector<2x512xf32>,
    return
  }
  func.func @transform_0(%arg0: i32, %arg1: i32) -> (i32, i32) {
    %c0_i32 = arith.constant 0 : i32
    %c0_i32_0 = arith.constant 0 : i32
    return %c0_i32, %arg1 : i32, i32
  }
  func.func @transform_1(%arg0: i32, %arg1: i32) -> (i32, i32) {
    %c0_i32 = arith.constant 0 : i32
    return %arg1, %arg0 : i32, i32
  }
  func.func @transform_2(%arg0: i32, %arg1: i32) -> (i32, i32) {
    %c0_i32 = arith.constant 0 : i32
    %c0_i32_0 = arith.constant 0 : i32
    %c0_i32_1 = arith.constant 0 : i32
    return %c0_i32, %c0_i32_0 : i32, i32
  }
  func.func @transform_3(%arg0: i32, %arg1: i32) -> (i32, i32) {
    %c0_i32 = arith.constant 0 : i32
    %c0_i32_0 = arith.constant 0 : i32
    %c0_i32_1 = arith.constant 0 : i32
    return %c0_i32, %c0_i32_0 : i32, i32
  }
  func.func @transform_4(%arg0: i32, %arg1: i32) -> (i32, i32) {
    %c0_i32 = arith.constant 0 : i32
    %c0_i32_0 = arith.constant 0 : i32
    return %c0_i32, %arg0 : i32, i32
  }
}

</mosaic_0001>

<llo_original>
// kernel: register_vae_forward.88
$region0: #{register_vae_forward.88}
  #allocation0 [shape = 'u32[]', space=smem, size = 0x4, offset = 0x4, fixed_abs, tag = 'smem constant byte address 0x4 - core index']
  #allocation1 [shape = 'u32[72,128]{1,0:T(1,128)}', space=vmem, size = 0x9000, scoped, tag = 'internal scratch']
  %s0 = inlined_call_operand.hbm [shape: bf16[8,128], index: 0, kind: input, shape index: {}]
  %s1 = inlined_call_operand.vmem [shape: bf16[128,512], index: 1, kind: input, shape index: {}]
  %s2 = inlined_call_operand.vmem [shape: f32[8,1], index: 2, kind: input, shape index: {}]
  %s3 = inlined_call_operand.vmem [shape: f32[8,1], index: 3, kind: input, shape index: {}]
  %s4 = inlined_call_operand.vmem [shape: f32[8,512], index: 4, kind: output, shape index: {}]
  %s5 = sld [smem:[#allocation0]]
  $region30: #{register_vae_forward.88} parent=0
    _
  %s7 = ssub.s32 1, %s5
  %s8 = scalar_select 0, %s7, %s5
  $region1: #{register_vae_forward.88} parent=0
    #allocation2 [shape = 'u8[2048]{0}', space=vmem, size = 0x800, scoped, tag = 'input window, operand 0, single buffered']
    #allocation3 [shape = 's32[1]{0}', space=sflag, size = 0x4, scoped, tag = 'scoped memory for register_vae_forward.88']
    %9 = vsyncpa [#allocation3], 0
    // Predicated region
    $region2: #{register_vae_forward.88} parent=1 // pred_check
      _
    $region3: #{register_vae_forward.88} parent=1 // pred_check_branch
      %11 = sbr.rel (0) target = $region5
    $region4: #{register_vae_forward.88} parent=1 // pred_region
      %13 = vsyncadd [#allocation3], 0
      %s15 = sshll.u32 %s0, 4
      %s16 = int_to_ptr.hbm [resolvable:$true] %s15
      %s17 = sshll.u32 [#allocation2], 4
      %s18 = int_to_ptr.vmem [resolvable:$true] %s17
      %20 = dma.hbm_to_vmem [thread:$0]  %s16, 64, %s18, [#allocation3]
    $region5: #{register_vae_forward.88} parent=1 // pred_fallthru
      _
    // Predicated region
    $region6: #{register_vae_forward.88} parent=1 // pred_check
      _
    $region7: #{register_vae_forward.88} parent=1 // pred_check_branch
      %22 = sbr.rel (0) target = $region9
    $region8: #{register_vae_forward.88} parent=1 // pred_region
      _
    $region9: #{register_vae_forward.88} parent=1 // pred_fallthru
      _
    // Predicated region
    $region10: #{register_vae_forward.88} parent=1 // pred_check
      _
    $region11: #{register_vae_forward.88} parent=1 // pred_check_branch
      %24 = sbr.rel (0) target = $region13
    $region12: #{register_vae_forward.88} parent=1 // pred_region
      _
    $region13: #{register_vae_forward.88} parent=1 // pred_fallthru
      _
    // Predicated region
    $region14: #{register_vae_forward.88} parent=1 // pred_check
      _
    $region15: #{register_vae_forward.88} parent=1 // pred_check_branch
      %26 = sbr.rel (0) target = $region17
    $region16: #{register_vae_forward.88} parent=1 // pred_region
      _
    $region17: #{register_vae_forward.88} parent=1 // pred_fallthru
      _
    // Predicated region
    $region18: #{register_vae_forward.88} parent=1 // pred_check
      _
    $region19: #{register_vae_forward.88} parent=1 // pred_check_branch
      %28 = sbr.rel (0) target = $region21
    $region20: #{register_vae_forward.88} parent=1 // pred_region
      %30 = dma.done [#allocation3], 64
    $region21: #{register_vae_forward.88} parent=1 // pred_fallthru
      _
    %v31 = vld [vmem:[#allocation2] sm:$0xf]
    %v32 = vld [vmem:[%s1] sm:$0xff]
    %v33 = vld [vmem:[%s1 + $0x8] sm:$0xff]
    %v34 = vld [vmem:[%s1 + $0x10] sm:$0xff]
    %v35 = vld [vmem:[%s1 + $0x18] sm:$0xff]
    %v36 = vld [vmem:[%s1 + $0x20] sm:$0xff]
    %v37 = vld [vmem:[%s1 + $0x28] sm:$0xff]
    %v38 = vld [vmem:[%s1 + $0x30] sm:$0xff]
    %v39 = vld [vmem:[%s1 + $0x38] sm:$0xff]
    %v40 = vld [vmem:[%s1 + $0x40] sm:$0xff]
    %v41 = vld [vmem:[%s1 + $0x48] sm:$0xff]
    %v42 = vld [vmem:[%s1 + $0x50] sm:$0xff]
    %v43 = vld [vmem:[%s1 + $0x58] sm:$0xff]
    %v44 = vld [vmem:[%s1 + $0x60] sm:$0xff]
    %v45 = vld [vmem:[%s1 + $0x68] sm:$0xff]
    %v46 = vld [vmem:[%s1 + $0x70] sm:$0xff]
    %v47 = vld [vmem:[%s1 + $0x78] sm:$0xff]
    %v48 = vld [vmem:[%s1 + $0x80] sm:$0xff]
    %v49 = vld [vmem:[%s1 + $0x88] sm:$0xff]
    %v50 = vld [vmem:[%s1 + $0x90] sm:$0xff]
    %v51 = vld [vmem:[%s1 + $0x98] sm:$0xff]
    %v52 = vld [vmem:[%s1 + $0xa0] sm:$0xff]
    %v53 = vld [vmem:[%s1 + $0xa8] sm:$0xff]
    %v54 = vld [vmem:[%s1 + $0xb0] sm:$0xff]
    %v55 = vld [vmem:[%s1 + $0xb8] sm:$0xff]
    %v56 = vld [vmem:[%s1 + $0xc0] sm:$0xff]
    %v57 = vld [vmem:[%s1 + $0xc8] sm:$0xff]
    %v58 = vld [vmem:[%s1 + $0xd0] sm:$0xff]
    %v59 = vld [vmem:[%s1 + $0xd8] sm:$0xff]
    %v60 = vld [vmem:[%s1 + $0xe0] sm:$0xff]
    %v61 = vld [vmem:[%s1 + $0xe8] sm:$0xff]
    %v62 = vld [vmem:[%s1 + $0xf0] sm:$0xff]
    %v63 = vld [vmem:[%s1 + $0xf8] sm:$0xff]
    %v96 = vunpack.c.l.b16 %v32
    %v97 = vunpack.c.h.b16 %v32
    %v98 = vunpack.c.l.b16 %v33
    %v99 = vunpack.c.h.b16 %v33
    %v100 = vunpack.c.l.b16 %v34
    %v101 = vunpack.c.h.b16 %v34
    %v102 = vunpack.c.l.b16 %v35
    %v103 = vunpack.c.h.b16 %v35
    %v104 = vunpack.c.l.b16 %v36
    %v105 = vunpack.c.h.b16 %v36
    %v106 = vunpack.c.l.b16 %v37
    %v107 = vunpack.c.h.b16 %v37
    %v108 = vunpack.c.l.b16 %v38
    %v109 = vunpack.c.h.b16 %v38
    %v110 = vunpack.c.l.b16 %v39
    %v111 = vunpack.c.h.b16 %v39
    %v112 = vunpack.c.l.b16 %v40
    %v113 = vunpack.c.h.b16 %v40
    %v114 = vunpack.c.l.b16 %v41
    %v115 = vunpack.c.h.b16 %v41
    %v116 = vunpack.c.l.b16 %v42
    %v117 = vunpack.c.h.b16 %v42
    %v118 = vunpack.c.l.b16 %v43
    %v119 = vunpack.c.h.b16 %v43
    %v120 = vunpack.c.l.b16 %v44
    %v121 = vunpack.c.h.b16 %v44
    %v122 = vunpack.c.l.b16 %v45
    %v123 = vunpack.c.h.b16 %v45
    %v124 = vunpack.c.l.b16 %v46
    %v125 = vunpack.c.h.b16 %v46
    %v126 = vunpack.c.l.b16 %v47
    %v127 = vunpack.c.h.b16 %v47
    %v128 = vunpack.c.l.b16 %v48
    %v129 = vunpack.c.h.b16 %v48
    %v130 = vunpack.c.l.b16 %v49
    %v131 = vunpack.c.h.b16 %v49
    %v132 = vunpack.c.l.b16 %v50
    %v133 = vunpack.c.h.b16 %v50
    %v134 = vunpack.c.l.b16 %v51
    %v135 = vunpack.c.h.b16 %v51
    %v136 = vunpack.c.l.b16 %v52
    %v137 = vunpack.c.h.b16 %v52
    %v138 = vunpack.c.l.b16 %v53
    %v139 = vunpack.c.h.b16 %v53
    %v140 = vunpack.c.l.b16 %v54
    %v141 = vunpack.c.h.b16 %v54
    %v142 = vunpack.c.l.b16 %v55
    %v143 = vunpack.c.h.b16 %v55
    %v144 = vunpack.c.l.b16 %v56
    %v145 = vunpack.c.h.b16 %v56
    %v146 = vunpack.c.l.b16 %v57
    %v147 = vunpack.c.h.b16 %v57
    %v148 = vunpack.c.l.b16 %v58
    %v149 = vunpack.c.h.b16 %v58
    %v150 = vunpack.c.l.b16 %v59
    %v151 = vunpack.c.h.b16 %v59
    %v152 = vunpack.c.l.b16 %v60
    %v153 = vunpack.c.h.b16 %v60
    %v154 = vunpack.c.l.b16 %v61
    %v155 = vunpack.c.h.b16 %v61
    %v156 = vunpack.c.l.b16 %v62
    %v157 = vunpack.c.h.b16 %v62
    %v158 = vunpack.c.l.b16 %v63
    %v159 = vunpack.c.h.b16 %v63
    %v160 = vpack.c.b16 %v100, %v96
    %v161 = vpack.c.b16 %v101, %v97
    %v162 = vpack.c.b16 %v102, %v98
    %v163 = vpack.c.b16 %v103, %v99
    %v164 = vpack.c.b16 %v108, %v104
    %v165 = vpack.c.b16 %v109, %v105
    %v166 = vpack.c.b16 %v110, %v106
    %v167 = vpack.c.b16 %v111, %v107
    %v168 = vpack.c.b16 %v116, %v112
    %v169 = vpack.c.b16 %v117, %v113
    %v170 = vpack.c.b16 %v118, %v114
    %v171 = vpack.c.b16 %v119, %v115
    %v172 = vpack.c.b16 %v124, %v120
    %v173 = vpack.c.b16 %v125, %v121
    %v174 = vpack.c.b16 %v126, %v122
    %v175 = vpack.c.b16 %v127, %v123
    %v176 = vpack.c.b16 %v132, %v128
    %v177 = vpack.c.b16 %v133, %v129
    %v178 = vpack.c.b16 %v134, %v130
    %v179 = vpack.c.b16 %v135, %v131
    %v180 = vpack.c.b16 %v140, %v136
    %v181 = vpack.c.b16 %v141, %v137
    %v182 = vpack.c.b16 %v142, %v138
    %v183 = vpack.c.b16 %v143, %v139
    %v184 = vpack.c.b16 %v148, %v144
    %v185 = vpack.c.b16 %v149, %v145
    %v186 = vpack.c.b16 %v150, %v146
    %v187 = vpack.c.b16 %v151, %v147
    %v188 = vpack.c.b16 %v156, %v152
    %v189 = vpack.c.b16 %v157, %v153
    %v190 = vpack.c.b16 %v158, %v154
    %v191 = vpack.c.b16 %v159, %v155
    %224 = vmatpush.bf16.msra.mxu0 %v188
    %225 = vmatpush.bf16.msra.mxu0 %v184
    %226 = vmatpush.bf16.msra.mxu0 %v180
    %227 = vmatpush.bf16.msra.mxu0 %v176
    %228 = vmatpush.bf16.msra.mxu0 %v172
    %229 = vmatpush.bf16.msra.mxu0 %v168
    %230 = vmatpush.bf16.msra.mxu0 %v164
    %231 = vmatpush.bf16.msra.mxu0 %v160
    %232 = vmatmul.bf16.gmra.mxu0 %v31
    %v233 = vpop.f32.mrf.mxu0
    %v234 = vadd.f32 0.0, %v233
    %v235 = vpop.f32.mrf.mxu0
    %236 = vdwg.mxu0
    %237 = vmatpush.bf16.msra.mxu0 %v189
    %238 = vmatpush.bf16.msra.mxu0 %v185
    %239 = vmatpush.bf16.msra.mxu0 %v181
    %240 = vmatpush.bf16.msra.mxu0 %v177
    %241 = vmatpush.bf16.msra.mxu0 %v173
    %242 = vmatpush.bf16.msra.mxu0 %v169
    %243 = vmatpush.bf16.msra.mxu0 %v165
    %244 = vmatpush.bf16.msra.mxu0 %v161
    %245 = vmatmul.bf16.gmra.mxu0 %v31
    %v246 = vpop.f32.mrf.mxu0
    %v247 = vadd.f32 0.0, %v246
    %v248 = vpop.f32.mrf.mxu0
    %249 = vdwg.mxu0
    %250 = vmatpush.bf16.msra.mxu0 %v190
    %251 = vmatpush.bf16.msra.mxu0 %v186
    %252 = vmatpush.bf16.msra.mxu0 %v182
    %253 = vmatpush.bf16.msra.mxu0 %v178
    %254 = vmatpush.bf16.msra.mxu0 %v174
    %255 = vmatpush.bf16.msra.mxu0 %v170
    %256 = vmatpush.bf16.msra.mxu0 %v166
    %257 = vmatpush.bf16.msra.mxu0 %v162
    %258 = vmatmul.bf16.gmra.mxu0 %v31
    %v259 = vpop.f32.mrf.mxu0
    %v260 = vadd.f32 0.0, %v259
    %v261 = vpop.f32.mrf.mxu0
    %262 = vdwg.mxu0
    %263 = vmatpush.bf16.msra.mxu0 %v191
    %264 = vmatpush.bf16.msra.mxu0 %v187
    %265 = vmatpush.bf16.msra.mxu0 %v183
    %266 = vmatpush.bf16.msra.mxu0 %v179
    %267 = vmatpush.bf16.msra.mxu0 %v175
    %268 = vmatpush.bf16.msra.mxu0 %v171
    %269 = vmatpush.bf16.msra.mxu0 %v167
    %270 = vmatpush.bf16.msra.mxu0 %v163
    %271 = vmatmul.bf16.gmra.mxu0 %v31
    %v272 = vpop.f32.mrf.mxu0
    %v273 = vadd.f32 0.0, %v272
    %v274 = vpop.f32.mrf.mxu0
    %275 = vdwg.mxu0
    %v276 = vld [vmem:[%s2] sm:$0xff]
    %v277 = vld [vmem:[%s3] sm:$0xff]
    %279 = vset.pattern.permute.xlu0 0
    %280 = vperm.xlu0 %279, %v276
    %v281 = vpop.permute.xlu0 %280
    %v283 = vmul.f32 %v234, %v281
    %v284 = vmul.f32 %v247, %v281
    %v285 = vmul.f32 %v260, %v281
    %v286 = vmul.f32 %v273, %v281
    %288 = vset.pattern.permute.xlu0 0
    %289 = vperm.xlu0 %288, %v277
    %v290 = vpop.permute.xlu0 %289
    %v292 = vadd.f32 %v283, %v290
    %v293 = vadd.f32 %v284, %v290
    %v294 = vadd.f32 %v285, %v290
    %v295 = vadd.f32 %v286, %v290
    %vm296 = vcmp.ge.f32.partialorder %v292, 0.0
    %vm297 = vcmp.ge.f32.partialorder %v293, 0.0
    %vm298 = vcmp.ge.f32.partialorder %v294, 0.0
    %vm299 = vcmp.ge.f32.partialorder %v295, 0.0
    %v300 = vmul.f32 %v292, 0.2
    %v301 = vmul.f32 %v293, 0.2
    %v302 = vmul.f32 %v294, 0.2
    %v303 = vmul.f32 %v295, 0.2
    %v304 = vsel %vm296, %v292, %v300
    %v305 = vsel %vm297, %v293, %v301
    %v306 = vsel %vm298, %v294, %v302
    %v307 = vsel %vm299, %v295, %v303
    %308 = vst [vmem:[%s4] sm:$0xff] %v304
    %309 = vst [vmem:[%s4 + $0x8] sm:$0xff] %v305
    %310 = vst [vmem:[%s4 + $0x10] sm:$0xff] %v306
    %311 = vst [vmem:[%s4 + $0x18] sm:$0xff] %v307
    // Predicated region
    $region22: #{register_vae_forward.88} parent=1 // pred_check
      _
    $region23: #{register_vae_forward.88} parent=1 // pred_check_branch
      %313 = sbr.rel (0) target = $region25
    $region24: #{register_vae_forward.88} parent=1 // pred_region
      _
    $region25: #{register_vae_forward.88} parent=1 // pred_fallthru
      _
    // Predicated region
    $region26: #{register_vae_forward.88} parent=1 // pred_check
      _
    $region27: #{register_vae_forward.88} parent=1 // pred_check_branch
      %315 = sbr.rel (0) target = $region29
    $region28: #{register_vae_forward.88} parent=1 // pred_region
      _
    $region29: #{register_vae_forward.88} parent=1 // pred_fallthru
      _
    %316 = vsyncpa [#allocation3], 1

// kernel: register_vae_forward.89
$region0: #{register_vae_forward.89}
  #allocation0 [shape = 'u32[]', space=smem, size = 0x4, offset = 0x4, fixed_abs, tag = 'smem constant byte address 0x4 - core index']
  #allocation1 [shape = 'u32[72,128]{1,0:T(1,128)}', space=vmem, size = 0x9000, scoped, tag = 'internal scratch']
  %s0 = inlined_call_operand.vmem [shape: bf16[8,256], index: 0, kind: input, shape index: {}]
  %s1 = inlined_call_operand.vmem [shape: bf16[256,128], index: 1, kind: input, shape index: {}]
  %s2 = inlined_call_operand.vmem [shape: f32[8,1], index: 2, kind: input, shape index: {}]
  %s3 = inlined_call_operand.vmem [shape: f32[8,1], index: 3, kind: input, shape index: {}]
  %s4 = inlined_call_operand.vmem [shape: f32[8,128], index: 4, kind: output, shape index: {}]
  %s5 = sld [smem:[#allocation0]]
  $region26: #{register_vae_forward.89} parent=0
    _
  %s7 = ssub.s32 1, %s5
  %s8 = scalar_select 0, %s7, %s5
  // Predicated region
  $region2: #{register_vae_forward.89} parent=0 // pred_check
    _
  $region3: #{register_vae_forward.89} parent=0 // pred_check_branch
    %10 = sbr.rel (0) target = $region5
  $region4: #{register_vae_forward.89} parent=0 // pred_region
    _
  $region5: #{register_vae_forward.89} parent=0 // pred_fallthru
    _
  // Predicated region
  $region6: #{register_vae_forward.89} parent=0 // pred_check
    _
  $region7: #{register_vae_forward.89} parent=0 // pred_check_branch
    %12 = sbr.rel (0) target = $region9
  $region8: #{register_vae_forward.89} parent=0 // pred_region
    _
  $region9: #{register_vae_forward.89} parent=0 // pred_fallthru
    _
  // Predicated region
  $region10: #{register_vae_forward.89} parent=0 // pred_check
    _
  $region11: #{register_vae_forward.89} parent=0 // pred_check_branch
    %14 = sbr.rel (0) target = $region13
  $region12: #{register_vae_forward.89} parent=0 // pred_region
    _
  $region13: #{register_vae_forward.89} parent=0 // pred_fallthru
    _
  // Predicated region
  $region14: #{register_vae_forward.89} parent=0 // pred_check
    _
  $region15: #{register_vae_forward.89} parent=0 // pred_check_branch
    %16 = sbr.rel (0) target = $region17
  $region16: #{register_vae_forward.89} parent=0 // pred_region
    _
  $region17: #{register_vae_forward.89} parent=0 // pred_fallthru
    _
  %v17 = vld [vmem:[%s0] sm:$0xff]
  %v18 = vld [vmem:[%s1] sm:$0xf]
  %v19 = vld [vmem:[%s1 + $0x4] sm:$0xf]
  %v20 = vld [vmem:[%s1 + $0x8] sm:$0xf]
  %v21 = vld [vmem:[%s1 + $0xc] sm:$0xf]
  %v22 = vld [vmem:[%s1 + $0x10] sm:$0xf]
  %v23 = vld [vmem:[%s1 + $0x14] sm:$0xf]
  %v24 = vld [vmem:[%s1 + $0x18] sm:$0xf]
  %v25 = vld [vmem:[%s1 + $0x1c] sm:$0xf]
  %v26 = vld [vmem:[%s1 + $0x20] sm:$0xf]
  %v27 = vld [vmem:[%s1 + $0x24] sm:$0xf]
  %v28 = vld [vmem:[%s1 + $0x28] sm:$0xf]
  %v29 = vld [vmem:[%s1 + $0x2c] sm:$0xf]
  %v30 = vld [vmem:[%s1 + $0x30] sm:$0xf]
  %v31 = vld [vmem:[%s1 + $0x34] sm:$0xf]
  %v32 = vld [vmem:[%s1 + $0x38] sm:$0xf]
  %v33 = vld [vmem:[%s1 + $0x3c] sm:$0xf]
  %v34 = vld [vmem:[%s1 + $0x40] sm:$0xf]
  %v35 = vld [vmem:[%s1 + $0x44] sm:$0xf]
  %v36 = vld [vmem:[%s1 + $0x48] sm:$0xf]
  %v37 = vld [vmem:[%s1 + $0x4c] sm:$0xf]
  %v38 = vld [vmem:[%s1 + $0x50] sm:$0xf]
  %v39 = vld [vmem:[%s1 + $0x54] sm:$0xf]
  %v40 = vld [vmem:[%s1 + $0x58] sm:$0xf]
  %v41 = vld [vmem:[%s1 + $0x5c] sm:$0xf]
  %v42 = vld [vmem:[%s1 + $0x60] sm:$0xf]
  %v43 = vld [vmem:[%s1 + $0x64] sm:$0xf]
  %v44 = vld [vmem:[%s1 + $0x68] sm:$0xf]
  %v45 = vld [vmem:[%s1 + $0x6c] sm:$0xf]
  %v46 = vld [vmem:[%s1 + $0x70] sm:$0xf]
  %v47 = vld [vmem:[%s1 + $0x74] sm:$0xf]
  %v48 = vld [vmem:[%s1 + $0x78] sm:$0xf]
  %v49 = vld [vmem:[%s1 + $0x7c] sm:$0xf]
  %v51 = vunpack.c.l.b16 %v17
  %v52 = vunpack.c.h.b16 %v17
  %v53 = vpack.c.b16 %v51, %v51
  %v54 = vpack.c.b16 %v52, %v52
  %v89 = vunpack.c.l.b16 %v18
  %v90 = vunpack.c.l.b16 %v19
  %v91 = vunpack.c.l.b16 %v20
  %v92 = vunpack.c.l.b16 %v21
  %v93 = vunpack.c.l.b16 %v22
  %v94 = vunpack.c.l.b16 %v23
  %v95 = vunpack.c.l.b16 %v24
  %v96 = vunpack.c.l.b16 %v25
  %v97 = vunpack.c.l.b16 %v26
  %v98 = vunpack.c.l.b16 %v27
  %v99 = vunpack.c.l.b16 %v28
  %v100 = vunpack.c.l.b16 %v29
  %v101 = vunpack.c.l.b16 %v30
  %v102 = vunpack.c.l.b16 %v31
  %v103 = vunpack.c.l.b16 %v32
  %v104 = vunpack.c.l.b16 %v33
  %v105 = vunpack.c.l.b16 %v34
  %v106 = vunpack.c.l.b16 %v35
  %v107 = vunpack.c.l.b16 %v36
  %v108 = vunpack.c.l.b16 %v37
  %v109 = vunpack.c.l.b16 %v38
  %v110 = vunpack.c.l.b16 %v39
  %v111 = vunpack.c.l.b16 %v40
  %v112 = vunpack.c.l.b16 %v41
  %v113 = vunpack.c.l.b16 %v42
  %v114 = vunpack.c.l.b16 %v43
  %v115 = vunpack.c.l.b16 %v44
  %v116 = vunpack.c.l.b16 %v45
  %v117 = vunpack.c.l.b16 %v46
  %v118 = vunpack.c.l.b16 %v47
  %v119 = vunpack.c.l.b16 %v48
  %v120 = vunpack.c.l.b16 %v49
  %v121 = vpack.c.b16 %v90, %v89
  %v122 = vpack.c.b16 %v92, %v91
  %v123 = vpack.c.b16 %v94, %v93
  %v124 = vpack.c.b16 %v96, %v95
  %v125 = vpack.c.b16 %v98, %v97
  %v126 = vpack.c.b16 %v100, %v99
  %v127 = vpack.c.b16 %v102, %v101
  %v128 = vpack.c.b16 %v104, %v103
  %v129 = vpack.c.b16 %v106, %v105
  %v130 = vpack.c.b16 %v108, %v107
  %v131 = vpack.c.b16 %v110, %v109
  %v132 = vpack.c.b16 %v112, %v111
  %v133 = vpack.c.b16 %v114, %v113
  %v134 = vpack.c.b16 %v116, %v115
  %v135 = vpack.c.b16 %v118, %v117
  %v136 = vpack.c.b16 %v120, %v119
  %153 = vmatpush.bf16.msra.mxu0 %v128
  %154 = vmatpush.bf16.msra.mxu0 %v127
  %155 = vmatpush.bf16.msra.mxu0 %v126
  %156 = vmatpush.bf16.msra.mxu0 %v125
  %157 = vmatpush.bf16.msra.mxu0 %v124
  %158 = vmatpush.bf16.msra.mxu0 %v123
  %159 = vmatpush.bf16.msra.mxu0 %v122
  %160 = vmatpush.bf16.msra.mxu0 %v121
  %161 = vmatmul.bf16.gmra.mxu0 %v53
  %v162 = vpop.f32.mrf.mxu0
  %v163 = vadd.f32 0.0, %v162
  %v164 = vpop.f32.mrf.mxu0
  %165 = vdwg.mxu0
  %166 = vmatpush.bf16.msra.mxu0 %v136
  %167 = vmatpush.bf16.msra.mxu0 %v135
  %168 = vmatpush.bf16.msra.mxu0 %v134
  %169 = vmatpush.bf16.msra.mxu0 %v133
  %170 = vmatpush.bf16.msra.mxu0 %v132
  %171 = vmatpush.bf16.msra.mxu0 %v131
  %172 = vmatpush.bf16.msra.mxu0 %v130
  %173 = vmatpush.bf16.msra.mxu0 %v129
  %174 = vmatmul.bf16.gmra.mxu0 %v54
  %v175 = vpop.f32.mrf.mxu0
  %v176 = vadd.f32 %v163, %v175
  %v177 = vpop.f32.mrf.mxu0
  %178 = vdwg.mxu0
  %v179 = vld [vmem:[%s2] sm:$0xff]
  %v180 = vld [vmem:[%s3] sm:$0xff]
  %182 = vset.pattern.permute.xlu0 0
  %183 = vperm.xlu0 %182, %v179
  %v184 = vpop.permute.xlu0 %183
  %v186 = vmul.f32 %v176, %v184
  %188 = vset.pattern.permute.xlu0 0
  %189 = vperm.xlu0 %188, %v180
  %v190 = vpop.permute.xlu0 %189
  %v192 = vadd.f32 %v186, %v190
  %vm193 = vcmp.ge.f32.partialorder %v192, 0.0
  %v194 = vmul.f32 %v192, 0.2
  %v195 = vsel %vm193, %v192, %v194
  %196 = vst [vmem:[%s4] sm:$0xff] %v195
  // Predicated region
  $region18: #{register_vae_forward.89} parent=0 // pred_check
    _
  $region19: #{register_vae_forward.89} parent=0 // pred_check_branch
    %198 = sbr.rel (0) target = $region21
  $region20: #{register_vae_forward.89} parent=0 // pred_region
    _
  $region21: #{register_vae_forward.89} parent=0 // pred_fallthru
    _
  // Predicated region
  $region22: #{register_vae_forward.89} parent=0 // pred_check
    _
  $region23: #{register_vae_forward.89} parent=0 // pred_check_branch
    %200 = sbr.rel (0) target = $region25
  $region24: #{register_vae_forward.89} parent=0 // pred_region
    _
  $region25: #{register_vae_forward.89} parent=0 // pred_fallthru
    _

// kernel: register_vae_forward.91
$region0: #{register_vae_forward.91}
  #allocation0 [shape = 'u32[]', space=smem, size = 0x4, offset = 0x4, fixed_abs, tag = 'smem constant byte address 0x4 - core index']
  #allocation1 [shape = 'u32[72,128]{1,0:T(1,128)}', space=vmem, size = 0x9000, scoped, tag = 'internal scratch']
  %s0 = inlined_call_operand.vmem [shape: bf16[8,256], index: 0, kind: input, shape index: {}]
  %s1 = inlined_call_operand.vmem [shape: bf16[256,128], index: 1, kind: input, shape index: {}]
  %s2 = inlined_call_operand.vmem [shape: f32[8,1], index: 2, kind: input, shape index: {}]
  %s3 = inlined_call_operand.vmem [shape: f32[8,1], index: 3, kind: input, shape index: {}]
  %s4 = inlined_call_operand.vmem [shape: f32[8,128], index: 4, kind: input, shape index: {}]
  %s5 = inlined_call_operand.vmem [shape: f32[8,128], index: 5, kind: output, shape index: {}]
  %s6 = sld [smem:[#allocation0]]
  $region30: #{register_vae_forward.91} parent=0
    _
  %s8 = ssub.s32 1, %s6
  %s9 = scalar_select 0, %s8, %s6
  // Predicated region
  $region2: #{register_vae_forward.91} parent=0 // pred_check
    _
  $region3: #{register_vae_forward.91} parent=0 // pred_check_branch
    %11 = sbr.rel (0) target = $region5
  $region4: #{register_vae_forward.91} parent=0 // pred_region
    _
  $region5: #{register_vae_forward.91} parent=0 // pred_fallthru
    _
  // Predicated region
  $region6: #{register_vae_forward.91} parent=0 // pred_check
    _
  $region7: #{register_vae_forward.91} parent=0 // pred_check_branch
    %13 = sbr.rel (0) target = $region9
  $region8: #{register_vae_forward.91} parent=0 // pred_region
    _
  $region9: #{register_vae_forward.91} parent=0 // pred_fallthru
    _
  // Predicated region
  $region10: #{register_vae_forward.91} parent=0 // pred_check
    _
  $region11: #{register_vae_forward.91} parent=0 // pred_check_branch
    %15 = sbr.rel (0) target = $region13
  $region12: #{register_vae_forward.91} parent=0 // pred_region
    _
  $region13: #{register_vae_forward.91} parent=0 // pred_fallthru
    _
  // Predicated region
  $region14: #{register_vae_forward.91} parent=0 // pred_check
    _
  $region15: #{register_vae_forward.91} parent=0 // pred_check_branch
    %17 = sbr.rel (0) target = $region17
  $region16: #{register_vae_forward.91} parent=0 // pred_region
    _
  $region17: #{register_vae_forward.91} parent=0 // pred_fallthru
    _
  // Predicated region
  $region18: #{register_vae_forward.91} parent=0 // pred_check
    _
  $region19: #{register_vae_forward.91} parent=0 // pred_check_branch
    %19 = sbr.rel (0) target = $region21
  $region20: #{register_vae_forward.91} parent=0 // pred_region
    _
  $region21: #{register_vae_forward.91} parent=0 // pred_fallthru
    _
  %v20 = vld [vmem:[%s4] sm:$0xff]
  %v21 = vld [vmem:[%s0] sm:$0xff]
  %v22 = vld [vmem:[%s1] sm:$0xf]
  %v23 = vld [vmem:[%s1 + $0x4] sm:$0xf]
  %v24 = vld [vmem:[%s1 + $0x8] sm:$0xf]
  %v25 = vld [vmem:[%s1 + $0xc] sm:$0xf]
  %v26 = vld [vmem:[%s1 + $0x10] sm:$0xf]
  %v27 = vld [vmem:[%s1 + $0x14] sm:$0xf]
  %v28 = vld [vmem:[%s1 + $0x18] sm:$0xf]
  %v29 = vld [vmem:[%s1 + $0x1c] sm:$0xf]
  %v30 = vld [vmem:[%s1 + $0x20] sm:$0xf]
  %v31 = vld [vmem:[%s1 + $0x24] sm:$0xf]
  %v32 = vld [vmem:[%s1 + $0x28] sm:$0xf]
  %v33 = vld [vmem:[%s1 + $0x2c] sm:$0xf]
  %v34 = vld [vmem:[%s1 + $0x30] sm:$0xf]
  %v35 = vld [vmem:[%s1 + $0x34] sm:$0xf]
  %v36 = vld [vmem:[%s1 + $0x38] sm:$0xf]
  %v37 = vld [vmem:[%s1 + $0x3c] sm:$0xf]
  %v38 = vld [vmem:[%s1 + $0x40] sm:$0xf]
  %v39 = vld [vmem:[%s1 + $0x44] sm:$0xf]
  %v40 = vld [vmem:[%s1 + $0x48] sm:$0xf]
  %v41 = vld [vmem:[%s1 + $0x4c] sm:$0xf]
  %v42 = vld [vmem:[%s1 + $0x50] sm:$0xf]
  %v43 = vld [vmem:[%s1 + $0x54] sm:$0xf]
  %v44 = vld [vmem:[%s1 + $0x58] sm:$0xf]
  %v45 = vld [vmem:[%s1 + $0x5c] sm:$0xf]
  %v46 = vld [vmem:[%s1 + $0x60] sm:$0xf]
  %v47 = vld [vmem:[%s1 + $0x64] sm:$0xf]
  %v48 = vld [vmem:[%s1 + $0x68] sm:$0xf]
  %v49 = vld [vmem:[%s1 + $0x6c] sm:$0xf]
  %v50 = vld [vmem:[%s1 + $0x70] sm:$0xf]
  %v51 = vld [vmem:[%s1 + $0x74] sm:$0xf]
  %v52 = vld [vmem:[%s1 + $0x78] sm:$0xf]
  %v53 = vld [vmem:[%s1 + $0x7c] sm:$0xf]
  %v55 = vunpack.c.l.b16 %v21
  %v56 = vunpack.c.h.b16 %v21
  %v57 = vpack.c.b16 %v55, %v55
  %v58 = vpack.c.b16 %v56, %v56
  %v93 = vunpack.c.l.b16 %v22
  %v94 = vunpack.c.l.b16 %v23
  %v95 = vunpack.c.l.b16 %v24
  %v96 = vunpack.c.l.b16 %v25
  %v97 = vunpack.c.l.b16 %v26
  %v98 = vunpack.c.l.b16 %v27
  %v99 = vunpack.c.l.b16 %v28
  %v100 = vunpack.c.l.b16 %v29
  %v101 = vunpack.c.l.b16 %v30
  %v102 = vunpack.c.l.b16 %v31
  %v103 = vunpack.c.l.b16 %v32
  %v104 = vunpack.c.l.b16 %v33
  %v105 = vunpack.c.l.b16 %v34
  %v106 = vunpack.c.l.b16 %v35
  %v107 = vunpack.c.l.b16 %v36
  %v108 = vunpack.c.l.b16 %v37
  %v109 = vunpack.c.l.b16 %v38
  %v110 = vunpack.c.l.b16 %v39
  %v111 = vunpack.c.l.b16 %v40
  %v112 = vunpack.c.l.b16 %v41
  %v113 = vunpack.c.l.b16 %v42
  %v114 = vunpack.c.l.b16 %v43
  %v115 = vunpack.c.l.b16 %v44
  %v116 = vunpack.c.l.b16 %v45
  %v117 = vunpack.c.l.b16 %v46
  %v118 = vunpack.c.l.b16 %v47
  %v119 = vunpack.c.l.b16 %v48
  %v120 = vunpack.c.l.b16 %v49
  %v121 = vunpack.c.l.b16 %v50
  %v122 = vunpack.c.l.b16 %v51
  %v123 = vunpack.c.l.b16 %v52
  %v124 = vunpack.c.l.b16 %v53
  %v125 = vpack.c.b16 %v94, %v93
  %v126 = vpack.c.b16 %v96, %v95
  %v127 = vpack.c.b16 %v98, %v97
  %v128 = vpack.c.b16 %v100, %v99
  %v129 = vpack.c.b16 %v102, %v101
  %v130 = vpack.c.b16 %v104, %v103
  %v131 = vpack.c.b16 %v106, %v105
  %v132 = vpack.c.b16 %v108, %v107
  %v133 = vpack.c.b16 %v110, %v109
  %v134 = vpack.c.b16 %v112, %v111
  %v135 = vpack.c.b16 %v114, %v113
  %v136 = vpack.c.b16 %v116, %v115
  %v137 = vpack.c.b16 %v118, %v117
  %v138 = vpack.c.b16 %v120, %v119
  %v139 = vpack.c.b16 %v122, %v121
  %v140 = vpack.c.b16 %v124, %v123
  %157 = vmatpush.bf16.msra.mxu0 %v132
  %158 = vmatpush.bf16.msra.mxu0 %v131
  %159 = vmatpush.bf16.msra.mxu0 %v130
  %160 = vmatpush.bf16.msra.mxu0 %v129
  %161 = vmatpush.bf16.msra.mxu0 %v128
  %162 = vmatpush.bf16.msra.mxu0 %v127
  %163 = vmatpush.bf16.msra.mxu0 %v126
  %164 = vmatpush.bf16.msra.mxu0 %v125
  %165 = vmatmul.bf16.gmra.mxu0 %v57
  %v166 = vpop.f32.mrf.mxu0
  %v167 = vadd.f32 0.0, %v166
  %v168 = vpop.f32.mrf.mxu0
  %169 = vdwg.mxu0
  %170 = vmatpush.bf16.msra.mxu0 %v140
  %171 = vmatpush.bf16.msra.mxu0 %v139
  %172 = vmatpush.bf16.msra.mxu0 %v138
  %173 = vmatpush.bf16.msra.mxu0 %v137
  %174 = vmatpush.bf16.msra.mxu0 %v136
  %175 = vmatpush.bf16.msra.mxu0 %v135
  %176 = vmatpush.bf16.msra.mxu0 %v134
  %177 = vmatpush.bf16.msra.mxu0 %v133
  %178 = vmatmul.bf16.gmra.mxu0 %v58
  %v179 = vpop.f32.mrf.mxu0
  %v180 = vadd.f32 %v167, %v179
  %v181 = vpop.f32.mrf.mxu0
  %182 = vdwg.mxu0
  %v183 = vld [vmem:[%s2] sm:$0xff]
  %v184 = vld [vmem:[%s3] sm:$0xff]
  %186 = vset.pattern.permute.xlu0 0
  %187 = vperm.xlu0 %186, %v183
  %v188 = vpop.permute.xlu0 %187
  %v190 = vmul.f32 %v180, %v188
  %192 = vset.pattern.permute.xlu0 0
  %193 = vperm.xlu0 %192, %v184
  %v194 = vpop.permute.xlu0 %193
  %v196 = vadd.f32 %v190, %v194
  %vm197 = vcmp.ge.f32.partialorder %v196, 0.0
  %v198 = vmul.f32 %v196, 0.2
  %v199 = vsel %vm197, %v196, %v198
  %v200 = vadd.f32 %v199, %v20
  %201 = vst [vmem:[%s5] sm:$0xff] %v200
  // Predicated region
  $region22: #{register_vae_forward.91} parent=0 // pred_check
    _
  $region23: #{register_vae_forward.91} parent=0 // pred_check_branch
    %203 = sbr.rel (0) target = $region25
  $region24: #{register_vae_forward.91} parent=0 // pred_region
    _
  $region25: #{register_vae_forward.91} parent=0 // pred_fallthru
    _
  // Predicated region
  $region26: #{register_vae_forward.91} parent=0 // pred_check
    _
  $region27: #{register_vae_forward.91} parent=0 // pred_check_branch
    %205 = sbr.rel (0) target = $region29
  $region28: #{register_vae_forward.91} parent=0 // pred_region
    _
  $region29: #{register_vae_forward.91} parent=0 // pred_fallthru
    _

// kernel: register_vae_forward.107
$region0: #{register_vae_forward.107}
  #allocation0 [shape = 'u32[]', space=smem, size = 0x4, offset = 0x4, fixed_abs, tag = 'smem constant byte address 0x4 - core index']
  #allocation1 [shape = 'u32[72,128]{1,0:T(1,128)}', space=vmem, size = 0x9000, scoped, tag = 'internal scratch']
  %s0 = inlined_call_operand.vmem [shape: bf16[16,512], index: 0, kind: input, shape index: {}]
  %s1 = inlined_call_operand.vmem [shape: bf16[512,32], index: 1, kind: input, shape index: {}]
  %s2 = inlined_call_operand.vmem [shape: f32[16,1], index: 2, kind: input, shape index: {}]
  %s3 = inlined_call_operand.vmem [shape: f32[16,1], index: 3, kind: input, shape index: {}]
  %s4 = inlined_call_operand.vmem [shape: f32[16,32], index: 4, kind: output, shape index: {}]
  %s5 = sld [smem:[#allocation0]]
  $region26: #{register_vae_forward.107} parent=0
    _
  %s7 = ssub.s32 1, %s5
  %s8 = scalar_select 0, %s7, %s5
  // Predicated region
  $region2: #{register_vae_forward.107} parent=0 // pred_check
    _
  $region3: #{register_vae_forward.107} parent=0 // pred_check_branch
    %10 = sbr.rel (0) target = $region5
  $region4: #{register_vae_forward.107} parent=0 // pred_region
    _
  $region5: #{register_vae_forward.107} parent=0 // pred_fallthru
    _
  // Predicated region
  $region6: #{register_vae_forward.107} parent=0 // pred_check
    _
  $region7: #{register_vae_forward.107} parent=0 // pred_check_branch
    %12 = sbr.rel (0) target = $region9
  $region8: #{register_vae_forward.107} parent=0 // pred_region
    _
  $region9: #{register_vae_forward.107} parent=0 // pred_fallthru
    _
  // Predicated region
  $region10: #{register_vae_forward.107} parent=0 // pred_check
    _
  $region11: #{register_vae_forward.107} parent=0 // pred_check_branch
    %14 = sbr.rel (0) target = $region13
  $region12: #{register_vae_forward.107} parent=0 // pred_region
    _
  $region13: #{register_vae_forward.107} parent=0 // pred_fallthru
    _
  // Predicated region
  $region14: #{register_vae_forward.107} parent=0 // pred_check
    _
  $region15: #{register_vae_forward.107} parent=0 // pred_check_branch
    %16 = sbr.rel (0) target = $region17
  $region16: #{register_vae_forward.107} parent=0 // pred_region
    _
  $region17: #{register_vae_forward.107} parent=0 // pred_fallthru
    _
  %v17 = vld [vmem:[%s0] sm:$0xff]
  %v18 = vld [vmem:[%s0 + $0x8] sm:$0xff]
  %v19 = vld [vmem:[%s0 + $0x10] sm:$0xff]
  %v20 = vld [vmem:[%s0 + $0x18] sm:$0xff]
  %v21 = vld [vmem:[%s1] sm:$0xf]
  %v22 = vld [vmem:[%s1 + $0x4] sm:$0xf]
  %v23 = vld [vmem:[%s1 + $0x8] sm:$0xf]
  %v24 = vld [vmem:[%s1 + $0xc] sm:$0xf]
  %v25 = vld [vmem:[%s1 + $0x10] sm:$0xf]
  %v26 = vld [vmem:[%s1 + $0x14] sm:$0xf]
  %v27 = vld [vmem:[%s1 + $0x18] sm:$0xf]
  %v28 = vld [vmem:[%s1 + $0x1c] sm:$0xf]
  %v29 = vld [vmem:[%s1 + $0x20] sm:$0xf]
  %v30 = vld [vmem:[%s1 + $0x24] sm:$0xf]
  %v31 = vld [vmem:[%s1 + $0x28] sm:$0xf]
  %v32 = vld [vmem:[%s1 + $0x2c] sm:$0xf]
  %v33 = vld [vmem:[%s1 + $0x30] sm:$0xf]
  %v34 = vld [vmem:[%s1 + $0x34] sm:$0xf]
  %v35 = vld [vmem:[%s1 + $0x38] sm:$0xf]
  %v36 = vld [vmem:[%s1 + $0x3c] sm:$0xf]
  %v37 = vld [vmem:[%s1 + $0x40] sm:$0xf]
  %v38 = vld [vmem:[%s1 + $0x44] sm:$0xf]
  %v39 = vld [vmem:[%s1 + $0x48] sm:$0xf]
  %v40 = vld [vmem:[%s1 + $0x4c] sm:$0xf]
  %v41 = vld [vmem:[%s1 + $0x50] sm:$0xf]
  %v42 = vld [vmem:[%s1 + $0x54] sm:$0xf]
  %v43 = vld [vmem:[%s1 + $0x58] sm:$0xf]
  %v44 = vld [vmem:[%s1 + $0x5c] sm:$0xf]
  %v45 = vld [vmem:[%s1 + $0x60] sm:$0xf]
  %v46 = vld [vmem:[%s1 + $0x64] sm:$0xf]
  %v47 = vld [vmem:[%s1 + $0x68] sm:$0xf]
  %v48 = vld [vmem:[%s1 + $0x6c] sm:$0xf]
  %v49 = vld [vmem:[%s1 + $0x70] sm:$0xf]
  %v50 = vld [vmem:[%s1 + $0x74] sm:$0xf]
  %v51 = vld [vmem:[%s1 + $0x78] sm:$0xf]
  %v52 = vld [vmem:[%s1 + $0x7c] sm:$0xf]
  %v53 = vld [vmem:[%s1 + $0x80] sm:$0xf]
  %v54 = vld [vmem:[%s1 + $0x84] sm:$0xf]
  %v55 = vld [vmem:[%s1 + $0x88] sm:$0xf]
  %v56 = vld [vmem:[%s1 + $0x8c] sm:$0xf]
  %v57 = vld [vmem:[%s1 + $0x90] sm:$0xf]
  %v58 = vld [vmem:[%s1 + $0x94] sm:$0xf]
  %v59 = vld [vmem:[%s1 + $0x98] sm:$0xf]
  %v60 = vld [vmem:[%s1 + $0x9c] sm:$0xf]
  %v61 = vld [vmem:[%s1 + $0xa0] sm:$0xf]
  %v62 = vld [vmem:[%s1 + $0xa4] sm:$0xf]
  %v63 = vld [vmem:[%s1 + $0xa8] sm:$0xf]
  %v64 = vld [vmem:[%s1 + $0xac] sm:$0xf]
  %v65 = vld [vmem:[%s1 + $0xb0] sm:$0xf]
  %v66 = vld [vmem:[%s1 + $0xb4] sm:$0xf]
  %v67 = vld [vmem:[%s1 + $0xb8] sm:$0xf]
  %v68 = vld [vmem:[%s1 + $0xbc] sm:$0xf]
  %v69 = vld [vmem:[%s1 + $0xc0] sm:$0xf]
  %v70 = vld [vmem:[%s1 + $0xc4] sm:$0xf]
  %v71 = vld [vmem:[%s1 + $0xc8] sm:$0xf]
  %v72 = vld [vmem:[%s1 + $0xcc] sm:$0xf]
  %v73 = vld [vmem:[%s1 + $0xd0] sm:$0xf]
  %v74 = vld [vmem:[%s1 + $0xd4] sm:$0xf]
  %v75 = vld [vmem:[%s1 + $0xd8] sm:$0xf]
  %v76 = vld [vmem:[%s1 + $0xdc] sm:$0xf]
  %v77 = vld [vmem:[%s1 + $0xe0] sm:$0xf]
  %v78 = vld [vmem:[%s1 + $0xe4] sm:$0xf]
  %v79 = vld [vmem:[%s1 + $0xe8] sm:$0xf]
  %v80 = vld [vmem:[%s1 + $0xec] sm:$0xf]
  %v81 = vld [vmem:[%s1 + $0xf0] sm:$0xf]
  %v82 = vld [vmem:[%s1 + $0xf4] sm:$0xf]
  %v83 = vld [vmem:[%s1 + $0xf8] sm:$0xf]
  %v84 = vld [vmem:[%s1 + $0xfc] sm:$0xf]
  %v89 = vunpack.c.l.b16 %v17
  %v90 = vunpack.c.h.b16 %v17
  %v91 = vunpack.c.l.b16 %v18
  %v92 = vunpack.c.h.b16 %v18
  %v93 = vunpack.c.l.b16 %v19
  %v94 = vunpack.c.h.b16 %v19
  %v95 = vunpack.c.l.b16 %v20
  %v96 = vunpack.c.h.b16 %v20
  %v97 = vpack.c.b16 %v93, %v89
  %v98 = vpack.c.b16 %v94, %v90
  %v99 = vpack.c.b16 %v95, %v91
  %v100 = vpack.c.b16 %v96, %v92
  %v169 = vunpack.c.l.b16 %v21
  %v170 = vunpack.c.l.b16 %v22
  %v171 = vunpack.c.l.b16 %v23
  %v172 = vunpack.c.l.b16 %v24
  %v173 = vunpack.c.l.b16 %v25
  %v174 = vunpack.c.l.b16 %v26
  %v175 = vunpack.c.l.b16 %v27
  %v176 = vunpack.c.l.b16 %v28
  %v177 = vunpack.c.l.b16 %v29
  %v178 = vunpack.c.l.b16 %v30
  %v179 = vunpack.c.l.b16 %v31
  %v180 = vunpack.c.l.b16 %v32
  %v181 = vunpack.c.l.b16 %v33
  %v182 = vunpack.c.l.b16 %v34
  %v183 = vunpack.c.l.b16 %v35
  %v184 = vunpack.c.l.b16 %v36
  %v185 = vunpack.c.l.b16 %v37
  %v186 = vunpack.c.l.b16 %v38
  %v187 = vunpack.c.l.b16 %v39
  %v188 = vunpack.c.l.b16 %v40
  %v189 = vunpack.c.l.b16 %v41
  %v190 = vunpack.c.l.b16 %v42
  %v191 = vunpack.c.l.b16 %v43
  %v192 = vunpack.c.l.b16 %v44
  %v193 = vunpack.c.l.b16 %v45
  %v194 = vunpack.c.l.b16 %v46
  %v195 = vunpack.c.l.b16 %v47
  %v196 = vunpack.c.l.b16 %v48
  %v197 = vunpack.c.l.b16 %v49
  %v198 = vunpack.c.l.b16 %v50
  %v199 = vunpack.c.l.b16 %v51
  %v200 = vunpack.c.l.b16 %v52
  %v201 = vunpack.c.l.b16 %v53
  %v202 = vunpack.c.l.b16 %v54
  %v203 = vunpack.c.l.b16 %v55
  %v204 = vunpack.c.l.b16 %v56
  %v205 = vunpack.c.l.b16 %v57
  %v206 = vunpack.c.l.b16 %v58
  %v207 = vunpack.c.l.b16 %v59
  %v208 = vunpack.c.l.b16 %v60
  %v209 = vunpack.c.l.b16 %v61
  %v210 = vunpack.c.l.b16 %v62
  %v211 = vunpack.c.l.b16 %v63
  %v212 = vunpack.c.l.b16 %v64
  %v213 = vunpack.c.l.b16 %v65
  %v214 = vunpack.c.l.b16 %v66
  %v215 = vunpack.c.l.b16 %v67
  %v216 = vunpack.c.l.b16 %v68
  %v217 = vunpack.c.l.b16 %v69
  %v218 = vunpack.c.l.b16 %v70
  %v219 = vunpack.c.l.b16 %v71
  %v220 = vunpack.c.l.b16 %v72
  %v221 = vunpack.c.l.b16 %v73
  %v222 = vunpack.c.l.b16 %v74
  %v223 = vunpack.c.l.b16 %v75
  %v224 = vunpack.c.l.b16 %v76
  %v225 = vunpack.c.l.b16 %v77
  %v226 = vunpack.c.l.b16 %v78
  %v227 = vunpack.c.l.b16 %v79
  %v228 = vunpack.c.l.b16 %v80
  %v229 = vunpack.c.l.b16 %v81
  %v230 = vunpack.c.l.b16 %v82
  %v231 = vunpack.c.l.b16 %v83
  %v232 = vunpack.c.l.b16 %v84
  %v233 = vpack.c.b16 %v170, %v169
  %v234 = vpack.c.b16 %v172, %v171
  %v235 = vpack.c.b16 %v174, %v173
  %v236 = vpack.c.b16 %v176, %v175
  %v237 = vpack.c.b16 %v178, %v177
  %v238 = vpack.c.b16 %v180, %v179
  %v239 = vpack.c.b16 %v182, %v181
  %v240 = vpack.c.b16 %v184, %v183
  %v241 = vpack.c.b16 %v186, %v185
  %v242 = vpack.c.b16 %v188, %v187
  %v243 = vpack.c.b16 %v190, %v189
  %v244 = vpack.c.b16 %v192, %v191
  %v245 = vpack.c.b16 %v194, %v193
  %v246 = vpack.c.b16 %v196, %v195
  %v247 = vpack.c.b16 %v198, %v197
  %v248 = vpack.c.b16 %v200, %v199
  %v249 = vpack.c.b16 %v202, %v201
  %v250 = vpack.c.b16 %v204, %v203
  %v251 = vpack.c.b16 %v206, %v205
  %v252 = vpack.c.b16 %v208, %v207
  %v253 = vpack.c.b16 %v210, %v209
  %v254 = vpack.c.b16 %v212, %v211
  %v255 = vpack.c.b16 %v214, %v213
  %v256 = vpack.c.b16 %v216, %v215
  %v257 = vpack.c.b16 %v218, %v217
  %v258 = vpack.c.b16 %v220, %v219
  %v259 = vpack.c.b16 %v222, %v221
  %v260 = vpack.c.b16 %v224, %v223
  %v261 = vpack.c.b16 %v226, %v225
  %v262 = vpack.c.b16 %v228, %v227
  %v263 = vpack.c.b16 %v230, %v229
  %v264 = vpack.c.b16 %v232, %v231
  %297 = vmatpush.bf16.msra.mxu0 %v240
  %298 = vmatpush.bf16.msra.mxu0 %v239
  %299 = vmatpush.bf16.msra.mxu0 %v238
  %300 = vmatpush.bf16.msra.mxu0 %v237
  %301 = vmatpush.bf16.msra.mxu0 %v236
  %302 = vmatpush.bf16.msra.mxu0 %v235
  %303 = vmatpush.bf16.msra.mxu0 %v234
  %304 = vmatpush.bf16.msra.mxu0 %v233
  %305 = vmatmul.bf16.gmra.mxu0 %v97
  %v306 = vpop.f32.mrf.mxu0
  %v307 = vadd.f32 0.0, %v306
  %v308 = vpop.f32.mrf.mxu0
  %v309 = vadd.f32 0.0, %v308
  %310 = vdwg.mxu0
  %311 = vmatpush.bf16.msra.mxu0 %v248
  %312 = vmatpush.bf16.msra.mxu0 %v247
  %313 = vmatpush.bf16.msra.mxu0 %v246
  %314 = vmatpush.bf16.msra.mxu0 %v245
  %315 = vmatpush.bf16.msra.mxu0 %v244
  %316 = vmatpush.bf16.msra.mxu0 %v243
  %317 = vmatpush.bf16.msra.mxu0 %v242
  %318 = vmatpush.bf16.msra.mxu0 %v241
  %319 = vmatmul.bf16.gmra.mxu0 %v98
  %v320 = vpop.f32.mrf.mxu0
  %v321 = vadd.f32 %v307, %v320
  %v322 = vpop.f32.mrf.mxu0
  %v323 = vadd.f32 %v309, %v322
  %324 = vdwg.mxu0
  %325 = vmatpush.bf16.msra.mxu0 %v256
  %326 = vmatpush.bf16.msra.mxu0 %v255
  %327 = vmatpush.bf16.msra.mxu0 %v254
  %328 = vmatpush.bf16.msra.mxu0 %v253
  %329 = vmatpush.bf16.msra.mxu0 %v252
  %330 = vmatpush.bf16.msra.mxu0 %v251
  %331 = vmatpush.bf16.msra.mxu0 %v250
  %332 = vmatpush.bf16.msra.mxu0 %v249
  %333 = vmatmul.bf16.gmra.mxu0 %v99
  %v334 = vpop.f32.mrf.mxu0
  %v335 = vadd.f32 %v321, %v334
  %v336 = vpop.f32.mrf.mxu0
  %v337 = vadd.f32 %v323, %v336
  %338 = vdwg.mxu0
  %339 = vmatpush.bf16.msra.mxu0 %v264
  %340 = vmatpush.bf16.msra.mxu0 %v263
  %341 = vmatpush.bf16.msra.mxu0 %v262
  %342 = vmatpush.bf16.msra.mxu0 %v261
  %343 = vmatpush.bf16.msra.mxu0 %v260
  %344 = vmatpush.bf16.msra.mxu0 %v259
  %345 = vmatpush.bf16.msra.mxu0 %v258
  %346 = vmatpush.bf16.msra.mxu0 %v257
  %347 = vmatmul.bf16.gmra.mxu0 %v100
  %v348 = vpop.f32.mrf.mxu0
  %v349 = vadd.f32 %v335, %v348
  %v350 = vpop.f32.mrf.mxu0
  %v351 = vadd.f32 %v337, %v350
  %352 = vdwg.mxu0
  %v353 = vld [vmem:[%s2] sm:$0xff]
  %v354 = vld [vmem:[%s2 + $0x8] sm:$0xff]
  %v355 = vld [vmem:[%s3] sm:$0xff]
  %v356 = vld [vmem:[%s3 + $0x8] sm:$0xff]
  %358 = vset.pattern.permute.xlu0 0
  %359 = vperm.xlu0 %358, %v353
  %v360 = vpop.permute.xlu0 %359
  %363 = vset.pattern.permute.xlu0 0
  %364 = vperm.xlu0 %363, %v354
  %v365 = vpop.permute.xlu0 %364
  %v367 = vmul.f32 %v349, %v360
  %v368 = vmul.f32 %v351, %v365
  %370 = vset.pattern.permute.xlu0 0
  %371 = vperm.xlu0 %370, %v355
  %v372 = vpop.permute.xlu0 %371
  %375 = vset.pattern.permute.xlu0 0
  %376 = vperm.xlu0 %375, %v356
  %v377 = vpop.permute.xlu0 %376
  %v379 = vadd.f32 %v367, %v372
  %v380 = vadd.f32 %v368, %v377
  %vm381 = vcmp.ge.f32.partialorder %v379, 0.0
  %vm382 = vcmp.ge.f32.partialorder %v380, 0.0
  %v383 = vmul.f32 %v379, 0.2
  %v384 = vmul.f32 %v380, 0.2
  %v385 = vsel %vm381, %v379, %v383
  %v386 = vsel %vm382, %v380, %v384
  %vm387 = vcmask 261120
  %388 = vst.msk [vmem:[%s4] sm:$0xff] %vm387, %v385
  %389 = vst.msk [vmem:[%s4 + $0x8] sm:$0xff] %vm387, %v386
  // Predicated region
  $region18: #{register_vae_forward.107} parent=0 // pred_check
    _
  $region19: #{register_vae_forward.107} parent=0 // pred_check_branch
    %391 = sbr.rel (0) target = $region21
  $region20: #{register_vae_forward.107} parent=0 // pred_region
    _
  $region21: #{register_vae_forward.107} parent=0 // pred_fallthru
    _
  // Predicated region
  $region22: #{register_vae_forward.107} parent=0 // pred_check
    _
  $region23: #{register_vae_forward.107} parent=0 // pred_check_branch
    %393 = sbr.rel (0) target = $region25
  $region24: #{register_vae_forward.107} parent=0 // pred_region
    _
  $region25: #{register_vae_forward.107} parent=0 // pred_fallthru
    _

// kernel: register_vae_forward.109
$region0: #{register_vae_forward.109}
  #allocation0 [shape = 'u32[]', space=smem, size = 0x4, offset = 0x4, fixed_abs, tag = 'smem constant byte address 0x4 - core index']
  #allocation1 [shape = 'u32[72,128]{1,0:T(1,128)}', space=vmem, size = 0x9000, scoped, tag = 'internal scratch']
  %s0 = inlined_call_operand.vmem [shape: bf16[16,512], index: 0, kind: input, shape index: {}]
  %s1 = inlined_call_operand.vmem [shape: bf16[512,32], index: 1, kind: input, shape index: {}]
  %s2 = inlined_call_operand.vmem [shape: f32[16,1], index: 2, kind: input, shape index: {}]
  %s3 = inlined_call_operand.vmem [shape: f32[16,1], index: 3, kind: input, shape index: {}]
  %s4 = inlined_call_operand.vmem [shape: f32[16,32], index: 4, kind: input, shape index: {}]
  %s5 = inlined_call_operand.vmem [shape: f32[16,32], index: 5, kind: output, shape index: {}]
  %s6 = sld [smem:[#allocation0]]
  $region30: #{register_vae_forward.109} parent=0
    _
  %s8 = ssub.s32 1, %s6
  %s9 = scalar_select 0, %s8, %s6
  // Predicated region
  $region2: #{register_vae_forward.109} parent=0 // pred_check
    _
  $region3: #{register_vae_forward.109} parent=0 // pred_check_branch
    %11 = sbr.rel (0) target = $region5
  $region4: #{register_vae_forward.109} parent=0 // pred_region
    _
  $region5: #{register_vae_forward.109} parent=0 // pred_fallthru
    _
  // Predicated region
  $region6: #{register_vae_forward.109} parent=0 // pred_check
    _
  $region7: #{register_vae_forward.109} parent=0 // pred_check_branch
    %13 = sbr.rel (0) target = $region9
  $region8: #{register_vae_forward.109} parent=0 // pred_region
    _
  $region9: #{register_vae_forward.109} parent=0 // pred_fallthru
    _
  // Predicated region
  $region10: #{register_vae_forward.109} parent=0 // pred_check
    _
  $region11: #{register_vae_forward.109} parent=0 // pred_check_branch
    %15 = sbr.rel (0) target = $region13
  $region12: #{register_vae_forward.109} parent=0 // pred_region
    _
  $region13: #{register_vae_forward.109} parent=0 // pred_fallthru
    _
  // Predicated region
  $region14: #{register_vae_forward.109} parent=0 // pred_check
    _
  $region15: #{register_vae_forward.109} parent=0 // pred_check_branch
    %17 = sbr.rel (0) target = $region17
  $region16: #{register_vae_forward.109} parent=0 // pred_region
    _
  $region17: #{register_vae_forward.109} parent=0 // pred_fallthru
    _
  // Predicated region
  $region18: #{register_vae_forward.109} parent=0 // pred_check
    _
  $region19: #{register_vae_forward.109} parent=0 // pred_check_branch
    %19 = sbr.rel (0) target = $region21
  $region20: #{register_vae_forward.109} parent=0 // pred_region
    _
  $region21: #{register_vae_forward.109} parent=0 // pred_fallthru
    _
  %v20 = vld [vmem:[%s4] sm:$0xff]
  %v21 = vld [vmem:[%s4 + $0x8] sm:$0xff]
  %v22 = vld [vmem:[%s0] sm:$0xff]
  %v23 = vld [vmem:[%s0 + $0x8] sm:$0xff]
  %v24 = vld [vmem:[%s0 + $0x10] sm:$0xff]
  %v25 = vld [vmem:[%s0 + $0x18] sm:$0xff]
  %v26 = vld [vmem:[%s1] sm:$0xf]
  %v27 = vld [vmem:[%s1 + $0x4] sm:$0xf]
  %v28 = vld [vmem:[%s1 + $0x8] sm:$0xf]
  %v29 = vld [vmem:[%s1 + $0xc] sm:$0xf]
  %v30 = vld [vmem:[%s1 + $0x10] sm:$0xf]
  %v31 = vld [vmem:[%s1 + $0x14] sm:$0xf]
  %v32 = vld [vmem:[%s1 + $0x18] sm:$0xf]
  %v33 = vld [vmem:[%s1 + $0x1c] sm:$0xf]
  %v34 = vld [vmem:[%s1 + $0x20] sm:$0xf]
  %v35 = vld [vmem:[%s1 + $0x24] sm:$0xf]
  %v36 = vld [vmem:[%s1 + $0x28] sm:$0xf]
  %v37 = vld [vmem:[%s1 + $0x2c] sm:$0xf]
  %v38 = vld [vmem:[%s1 + $0x30] sm:$0xf]
  %v39 = vld [vmem:[%s1 + $0x34] sm:$0xf]
  %v40 = vld [vmem:[%s1 + $0x38] sm:$0xf]
  %v41 = vld [vmem:[%s1 + $0x3c] sm:$0xf]
  %v42 = vld [vmem:[%s1 + $0x40] sm:$0xf]
  %v43 = vld [vmem:[%s1 + $0x44] sm:$0xf]
  %v44 = vld [vmem:[%s1 + $0x48] sm:$0xf]
  %v45 = vld [vmem:[%s1 + $0x4c] sm:$0xf]
  %v46 = vld [vmem:[%s1 + $0x50] sm:$0xf]
  %v47 = vld [vmem:[%s1 + $0x54] sm:$0xf]
  %v48 = vld [vmem:[%s1 + $0x58] sm:$0xf]
  %v49 = vld [vmem:[%s1 + $0x5c] sm:$0xf]
  %v50 = vld [vmem:[%s1 + $0x60] sm:$0xf]
  %v51 = vld [vmem:[%s1 + $0x64] sm:$0xf]
  %v52 = vld [vmem:[%s1 + $0x68] sm:$0xf]
  %v53 = vld [vmem:[%s1 + $0x6c] sm:$0xf]
  %v54 = vld [vmem:[%s1 + $0x70] sm:$0xf]
  %v55 = vld [vmem:[%s1 + $0x74] sm:$0xf]
  %v56 = vld [vmem:[%s1 + $0x78] sm:$0xf]
  %v57 = vld [vmem:[%s1 + $0x7c] sm:$0xf]
  %v58 = vld [vmem:[%s1 + $0x80] sm:$0xf]
  %v59 = vld [vmem:[%s1 + $0x84] sm:$0xf]
  %v60 = vld [vmem:[%s1 + $0x88] sm:$0xf]
  %v61 = vld [vmem:[%s1 + $0x8c] sm:$0xf]
  %v62 = vld [vmem:[%s1 + $0x90] sm:$0xf]
  %v63 = vld [vmem:[%s1 + $0x94] sm:$0xf]
  %v64 = vld [vmem:[%s1 + $0x98] sm:$0xf]
  %v65 = vld [vmem:[%s1 + $0x9c] sm:$0xf]
  %v66 = vld [vmem:[%s1 + $0xa0] sm:$0xf]
  %v67 = vld [vmem:[%s1 + $0xa4] sm:$0xf]
  %v68 = vld [vmem:[%s1 + $0xa8] sm:$0xf]
  %v69 = vld [vmem:[%s1 + $0xac] sm:$0xf]
  %v70 = vld [vmem:[%s1 + $0xb0] sm:$0xf]
  %v71 = vld [vmem:[%s1 + $0xb4] sm:$0xf]
  %v72 = vld [vmem:[%s1 + $0xb8] sm:$0xf]
  %v73 = vld [vmem:[%s1 + $0xbc] sm:$0xf]
  %v74 = vld [vmem:[%s1 + $0xc0] sm:$0xf]
  %v75 = vld [vmem:[%s1 + $0xc4] sm:$0xf]
  %v76 = vld [vmem:[%s1 + $0xc8] sm:$0xf]
  %v77 = vld [vmem:[%s1 + $0xcc] sm:$0xf]
  %v78 = vld [vmem:[%s1 + $0xd0] sm:$0xf]
  %v79 = vld [vmem:[%s1 + $0xd4] sm:$0xf]
  %v80 = vld [vmem:[%s1 + $0xd8] sm:$0xf]
  %v81 = vld [vmem:[%s1 + $0xdc] sm:$0xf]
  %v82 = vld [vmem:[%s1 + $0xe0] sm:$0xf]
  %v83 = vld [vmem:[%s1 + $0xe4] sm:$0xf]
  %v84 = vld [vmem:[%s1 + $0xe8] sm:$0xf]
  %v85 = vld [vmem:[%s1 + $0xec] sm:$0xf]
  %v86 = vld [vmem:[%s1 + $0xf0] sm:$0xf]
  %v87 = vld [vmem:[%s1 + $0xf4] sm:$0xf]
  %v88 = vld [vmem:[%s1 + $0xf8] sm:$0xf]
  %v89 = vld [vmem:[%s1 + $0xfc] sm:$0xf]
  %v94 = vunpack.c.l.b16 %v22
  %v95 = vunpack.c.h.b16 %v22
  %v96 = vunpack.c.l.b16 %v23
  %v97 = vunpack.c.h.b16 %v23
  %v98 = vunpack.c.l.b16 %v24
  %v99 = vunpack.c.h.b16 %v24
  %v100 = vunpack.c.l.b16 %v25
  %v101 = vunpack.c.h.b16 %v25
  %v102 = vpack.c.b16 %v98, %v94
  %v103 = vpack.c.b16 %v99, %v95
  %v104 = vpack.c.b16 %v100, %v96
  %v105 = vpack.c.b16 %v101, %v97
  %v174 = vunpack.c.l.b16 %v26
  %v175 = vunpack.c.l.b16 %v27
  %v176 = vunpack.c.l.b16 %v28
  %v177 = vunpack.c.l.b16 %v29
  %v178 = vunpack.c.l.b16 %v30
  %v179 = vunpack.c.l.b16 %v31
  %v180 = vunpack.c.l.b16 %v32
  %v181 = vunpack.c.l.b16 %v33
  %v182 = vunpack.c.l.b16 %v34
  %v183 = vunpack.c.l.b16 %v35
  %v184 = vunpack.c.l.b16 %v36
  %v185 = vunpack.c.l.b16 %v37
  %v186 = vunpack.c.l.b16 %v38
  %v187 = vunpack.c.l.b16 %v39
  %v188 = vunpack.c.l.b16 %v40
  %v189 = vunpack.c.l.b16 %v41
  %v190 = vunpack.c.l.b16 %v42
  %v191 = vunpack.c.l.b16 %v43
  %v192 = vunpack.c.l.b16 %v44
  %v193 = vunpack.c.l.b16 %v45
  %v194 = vunpack.c.l.b16 %v46
  %v195 = vunpack.c.l.b16 %v47
  %v196 = vunpack.c.l.b16 %v48
  %v197 = vunpack.c.l.b16 %v49
  %v198 = vunpack.c.l.b16 %v50
  %v199 = vunpack.c.l.b16 %v51
  %v200 = vunpack.c.l.b16 %v52
  %v201 = vunpack.c.l.b16 %v53
  %v202 = vunpack.c.l.b16 %v54
  %v203 = vunpack.c.l.b16 %v55
  %v204 = vunpack.c.l.b16 %v56
  %v205 = vunpack.c.l.b16 %v57
  %v206 = vunpack.c.l.b16 %v58
  %v207 = vunpack.c.l.b16 %v59
  %v208 = vunpack.c.l.b16 %v60
  %v209 = vunpack.c.l.b16 %v61
  %v210 = vunpack.c.l.b16 %v62
  %v211 = vunpack.c.l.b16 %v63
  %v212 = vunpack.c.l.b16 %v64
  %v213 = vunpack.c.l.b16 %v65
  %v214 = vunpack.c.l.b16 %v66
  %v215 = vunpack.c.l.b16 %v67
  %v216 = vunpack.c.l.b16 %v68
  %v217 = vunpack.c.l.b16 %v69
  %v218 = vunpack.c.l.b16 %v70
  %v219 = vunpack.c.l.b16 %v71
  %v220 = vunpack.c.l.b16 %v72
  %v221 = vunpack.c.l.b16 %v73
  %v222 = vunpack.c.l.b16 %v74
  %v223 = vunpack.c.l.b16 %v75
  %v224 = vunpack.c.l.b16 %v76
  %v225 = vunpack.c.l.b16 %v77
  %v226 = vunpack.c.l.b16 %v78
  %v227 = vunpack.c.l.b16 %v79
  %v228 = vunpack.c.l.b16 %v80
  %v229 = vunpack.c.l.b16 %v81
  %v230 = vunpack.c.l.b16 %v82
  %v231 = vunpack.c.l.b16 %v83
  %v232 = vunpack.c.l.b16 %v84
  %v233 = vunpack.c.l.b16 %v85
  %v234 = vunpack.c.l.b16 %v86
  %v235 = vunpack.c.l.b16 %v87
  %v236 = vunpack.c.l.b16 %v88
  %v237 = vunpack.c.l.b16 %v89
  %v238 = vpack.c.b16 %v175, %v174
  %v239 = vpack.c.b16 %v177, %v176
  %v240 = vpack.c.b16 %v179, %v178
  %v241 = vpack.c.b16 %v181, %v180
  %v242 = vpack.c.b16 %v183, %v182
  %v243 = vpack.c.b16 %v185, %v184
  %v244 = vpack.c.b16 %v187, %v186
  %v245 = vpack.c.b16 %v189, %v188
  %v246 = vpack.c.b16 %v191, %v190
  %v247 = vpack.c.b16 %v193, %v192
  %v248 = vpack.c.b16 %v195, %v194
  %v249 = vpack.c.b16 %v197, %v196
  %v250 = vpack.c.b16 %v199, %v198
  %v251 = vpack.c.b16 %v201, %v200
  %v252 = vpack.c.b16 %v203, %v202
  %v253 = vpack.c.b16 %v205, %v204
  %v254 = vpack.c.b16 %v207, %v206
  %v255 = vpack.c.b16 %v209, %v208
  %v256 = vpack.c.b16 %v211, %v210
  %v257 = vpack.c.b16 %v213, %v212
  %v258 = vpack.c.b16 %v215, %v214
  %v259 = vpack.c.b16 %v217, %v216
  %v260 = vpack.c.b16 %v219, %v218
  %v261 = vpack.c.b16 %v221, %v220
  %v262 = vpack.c.b16 %v223, %v222
  %v263 = vpack.c.b16 %v225, %v224
  %v264 = vpack.c.b16 %v227, %v226
  %v265 = vpack.c.b16 %v229, %v228
  %v266 = vpack.c.b16 %v231, %v230
  %v267 = vpack.c.b16 %v233, %v232
  %v268 = vpack.c.b16 %v235, %v234
  %v269 = vpack.c.b16 %v237, %v236
  %302 = vmatpush.bf16.msra.mxu0 %v245
  %303 = vmatpush.bf16.msra.mxu0 %v244
  %304 = vmatpush.bf16.msra.mxu0 %v243
  %305 = vmatpush.bf16.msra.mxu0 %v242
  %306 = vmatpush.bf16.msra.mxu0 %v241
  %307 = vmatpush.bf16.msra.mxu0 %v240
  %308 = vmatpush.bf16.msra.mxu0 %v239
  %309 = vmatpush.bf16.msra.mxu0 %v238
  %310 = vmatmul.bf16.gmra.mxu0 %v102
  %v311 = vpop.f32.mrf.mxu0
  %v312 = vadd.f32 0.0, %v311
  %v313 = vpop.f32.mrf.mxu0
  %v314 = vadd.f32 0.0, %v313
  %315 = vdwg.mxu0
  %316 = vmatpush.bf16.msra.mxu0 %v253
  %317 = vmatpush.bf16.msra.mxu0 %v252
  %318 = vmatpush.bf16.msra.mxu0 %v251
  %319 = vmatpush.bf16.msra.mxu0 %v250
  %320 = vmatpush.bf16.msra.mxu0 %v249
  %321 = vmatpush.bf16.msra.mxu0 %v248
  %322 = vmatpush.bf16.msra.mxu0 %v247
  %323 = vmatpush.bf16.msra.mxu0 %v246
  %324 = vmatmul.bf16.gmra.mxu0 %v103
  %v325 = vpop.f32.mrf.mxu0
  %v326 = vadd.f32 %v312, %v325
  %v327 = vpop.f32.mrf.mxu0
  %v328 = vadd.f32 %v314, %v327
  %329 = vdwg.mxu0
  %330 = vmatpush.bf16.msra.mxu0 %v261
  %331 = vmatpush.bf16.msra.mxu0 %v260
  %332 = vmatpush.bf16.msra.mxu0 %v259
  %333 = vmatpush.bf16.msra.mxu0 %v258
  %334 = vmatpush.bf16.msra.mxu0 %v257
  %335 = vmatpush.bf16.msra.mxu0 %v256
  %336 = vmatpush.bf16.msra.mxu0 %v255
  %337 = vmatpush.bf16.msra.mxu0 %v254
  %338 = vmatmul.bf16.gmra.mxu0 %v104
  %v339 = vpop.f32.mrf.mxu0
  %v340 = vadd.f32 %v326, %v339
  %v341 = vpop.f32.mrf.mxu0
  %v342 = vadd.f32 %v328, %v341
  %343 = vdwg.mxu0
  %344 = vmatpush.bf16.msra.mxu0 %v269
  %345 = vmatpush.bf16.msra.mxu0 %v268
  %346 = vmatpush.bf16.msra.mxu0 %v267
  %347 = vmatpush.bf16.msra.mxu0 %v266
  %348 = vmatpush.bf16.msra.mxu0 %v265
  %349 = vmatpush.bf16.msra.mxu0 %v264
  %350 = vmatpush.bf16.msra.mxu0 %v263
  %351 = vmatpush.bf16.msra.mxu0 %v262
  %352 = vmatmul.bf16.gmra.mxu0 %v105
  %v353 = vpop.f32.mrf.mxu0
  %v354 = vadd.f32 %v340, %v353
  %v355 = vpop.f32.mrf.mxu0
  %v356 = vadd.f32 %v342, %v355
  %357 = vdwg.mxu0
  %v358 = vld [vmem:[%s2] sm:$0xff]
  %v359 = vld [vmem:[%s2 + $0x8] sm:$0xff]
  %v360 = vld [vmem:[%s3] sm:$0xff]
  %v361 = vld [vmem:[%s3 + $0x8] sm:$0xff]
  %363 = vset.pattern.permute.xlu0 0
  %364 = vperm.xlu0 %363, %v358
  %v365 = vpop.permute.xlu0 %364
  %368 = vset.pattern.permute.xlu0 0
  %369 = vperm.xlu0 %368, %v359
  %v370 = vpop.permute.xlu0 %369
  %v372 = vmul.f32 %v354, %v365
  %v373 = vmul.f32 %v356, %v370
  %375 = vset.pattern.permute.xlu0 0
  %376 = vperm.xlu0 %375, %v360
  %v377 = vpop.permute.xlu0 %376
  %380 = vset.pattern.permute.xlu0 0
  %381 = vperm.xlu0 %380, %v361
  %v382 = vpop.permute.xlu0 %381
  %v384 = vadd.f32 %v372, %v377
  %v385 = vadd.f32 %v373, %v382
  %vm386 = vcmp.ge.f32.partialorder %v384, 0.0
  %vm387 = vcmp.ge.f32.partialorder %v385, 0.0
  %v388 = vmul.f32 %v384, 0.2
  %v389 = vmul.f32 %v385, 0.2
  %v390 = vsel %vm386, %v384, %v388
  %v391 = vsel %vm387, %v385, %v389
  %v392 = vadd.f32 %v390, %v20
  %v393 = vadd.f32 %v391, %v21
  %vm394 = vcmask 261120
  %395 = vst.msk [vmem:[%s5] sm:$0xff] %vm394, %v392
  %396 = vst.msk [vmem:[%s5 + $0x8] sm:$0xff] %vm394, %v393
  // Predicated region
  $region22: #{register_vae_forward.109} parent=0 // pred_check
    _
  $region23: #{register_vae_forward.109} parent=0 // pred_check_branch
    %398 = sbr.rel (0) target = $region25
  $region24: #{register_vae_forward.109} parent=0 // pred_region
    _
  $region25: #{register_vae_forward.109} parent=0 // pred_fallthru
    _
  // Predicated region
  $region26: #{register_vae_forward.109} parent=0 // pred_check
    _
  $region27: #{register_vae_forward.109} parent=0 // pred_check_branch
    %400 = sbr.rel (0) target = $region29
  $region28: #{register_vae_forward.109} parent=0 // pred_region
    _
  $region29: #{register_vae_forward.109} parent=0 // pred_fallthru
    _

// kernel: register_vae_forward.111
$region0: #{register_vae_forward.111}
  #allocation0 [shape = 'u32[]', space=smem, size = 0x4, offset = 0x4, fixed_abs, tag = 'smem constant byte address 0x4 - core index']
  #allocation1 [shape = 'u32[72,128]{1,0:T(1,128)}', space=vmem, size = 0x9000, scoped, tag = 'internal scratch']
  %s0 = inlined_call_operand.vmem [shape: bf16[16,512], index: 0, kind: input, shape index: {}]
  %s1 = inlined_call_operand.vmem [shape: bf16[512,32], index: 1, kind: input, shape index: {}]
  %s2 = inlined_call_operand.vmem [shape: f32[16,1], index: 2, kind: input, shape index: {}]
  %s3 = inlined_call_operand.vmem [shape: f32[16,1], index: 3, kind: input, shape index: {}]
  %s4 = inlined_call_operand.vmem [shape: f32[16,32], index: 4, kind: output, shape index: {}]
  %s5 = sld [smem:[#allocation0]]
  $region26: #{register_vae_forward.111} parent=0
    _
  %s7 = ssub.s32 1, %s5
  %s8 = scalar_select 0, %s7, %s5
  // Predicated region
  $region2: #{register_vae_forward.111} parent=0 // pred_check
    _
  $region3: #{register_vae_forward.111} parent=0 // pred_check_branch
    %10 = sbr.rel (0) target = $region5
  $region4: #{register_vae_forward.111} parent=0 // pred_region
    _
  $region5: #{register_vae_forward.111} parent=0 // pred_fallthru
    _
  // Predicated region
  $region6: #{register_vae_forward.111} parent=0 // pred_check
    _
  $region7: #{register_vae_forward.111} parent=0 // pred_check_branch
    %12 = sbr.rel (0) target = $region9
  $region8: #{register_vae_forward.111} parent=0 // pred_region
    _
  $region9: #{register_vae_forward.111} parent=0 // pred_fallthru
    _
  // Predicated region
  $region10: #{register_vae_forward.111} parent=0 // pred_check
    _
  $region11: #{register_vae_forward.111} parent=0 // pred_check_branch
    %14 = sbr.rel (0) target = $region13
  $region12: #{register_vae_forward.111} parent=0 // pred_region
    _
  $region13: #{register_vae_forward.111} parent=0 // pred_fallthru
    _
  // Predicated region
  $region14: #{register_vae_forward.111} parent=0 // pred_check
    _
  $region15: #{register_vae_forward.111} parent=0 // pred_check_branch
    %16 = sbr.rel (0) target = $region17
  $region16: #{register_vae_forward.111} parent=0 // pred_region
    _
  $region17: #{register_vae_forward.111} parent=0 // pred_fallthru
    _
  %v17 = vld [vmem:[%s0] sm:$0xff]
  %v18 = vld [vmem:[%s0 + $0x8] sm:$0xff]
  %v19 = vld [vmem:[%s0 + $0x10] sm:$0xff]
  %v20 = vld [vmem:[%s0 + $0x18] sm:$0xff]
  %v21 = vld [vmem:[%s1] sm:$0xf]
  %v22 = vld [vmem:[%s1 + $0x4] sm:$0xf]
  %v23 = vld [vmem:[%s1 + $0x8] sm:$0xf]
  %v24 = vld [vmem:[%s1 + $0xc] sm:$0xf]
  %v25 = vld [vmem:[%s1 + $0x10] sm:$0xf]
  %v26 = vld [vmem:[%s1 + $0x14] sm:$0xf]
  %v27 = vld [vmem:[%s1 + $0x18] sm:$0xf]
  %v28 = vld [vmem:[%s1 + $0x1c] sm:$0xf]
  %v29 = vld [vmem:[%s1 + $0x20] sm:$0xf]
  %v30 = vld [vmem:[%s1 + $0x24] sm:$0xf]
  %v31 = vld [vmem:[%s1 + $0x28] sm:$0xf]
  %v32 = vld [vmem:[%s1 + $0x2c] sm:$0xf]
  %v33 = vld [vmem:[%s1 + $0x30] sm:$0xf]
  %v34 = vld [vmem:[%s1 + $0x34] sm:$0xf]
  %v35 = vld [vmem:[%s1 + $0x38] sm:$0xf]
  %v36 = vld [vmem:[%s1 + $0x3c] sm:$0xf]
  %v37 = vld [vmem:[%s1 + $0x40] sm:$0xf]
  %v38 = vld [vmem:[%s1 + $0x44] sm:$0xf]
  %v39 = vld [vmem:[%s1 + $0x48] sm:$0xf]
  %v40 = vld [vmem:[%s1 + $0x4c] sm:$0xf]
  %v41 = vld [vmem:[%s1 + $0x50] sm:$0xf]
  %v42 = vld [vmem:[%s1 + $0x54] sm:$0xf]
  %v43 = vld [vmem:[%s1 + $0x58] sm:$0xf]
  %v44 = vld [vmem:[%s1 + $0x5c] sm:$0xf]
  %v45 = vld [vmem:[%s1 + $0x60] sm:$0xf]
  %v46 = vld [vmem:[%s1 + $0x64] sm:$0xf]
  %v47 = vld [vmem:[%s1 + $0x68] sm:$0xf]
  %v48 = vld [vmem:[%s1 + $0x6c] sm:$0xf]
  %v49 = vld [vmem:[%s1 + $0x70] sm:$0xf]
  %v50 = vld [vmem:[%s1 + $0x74] sm:$0xf]
  %v51 = vld [vmem:[%s1 + $0x78] sm:$0xf]
  %v52 = vld [vmem:[%s1 + $0x7c] sm:$0xf]
  %v53 = vld [vmem:[%s1 + $0x80] sm:$0xf]
  %v54 = vld [vmem:[%s1 + $0x84] sm:$0xf]
  %v55 = vld [vmem:[%s1 + $0x88] sm:$0xf]
  %v56 = vld [vmem:[%s1 + $0x8c] sm:$0xf]
  %v57 = vld [vmem:[%s1 + $0x90] sm:$0xf]
  %v58 = vld [vmem:[%s1 + $0x94] sm:$0xf]
  %v59 = vld [vmem:[%s1 + $0x98] sm:$0xf]
  %v60 = vld [vmem:[%s1 + $0x9c] sm:$0xf]
  %v61 = vld [vmem:[%s1 + $0xa0] sm:$0xf]
  %v62 = vld [vmem:[%s1 + $0xa4] sm:$0xf]
  %v63 = vld [vmem:[%s1 + $0xa8] sm:$0xf]
  %v64 = vld [vmem:[%s1 + $0xac] sm:$0xf]
  %v65 = vld [vmem:[%s1 + $0xb0] sm:$0xf]
  %v66 = vld [vmem:[%s1 + $0xb4] sm:$0xf]
  %v67 = vld [vmem:[%s1 + $0xb8] sm:$0xf]
  %v68 = vld [vmem:[%s1 + $0xbc] sm:$0xf]
  %v69 = vld [vmem:[%s1 + $0xc0] sm:$0xf]
  %v70 = vld [vmem:[%s1 + $0xc4] sm:$0xf]
  %v71 = vld [vmem:[%s1 + $0xc8] sm:$0xf]
  %v72 = vld [vmem:[%s1 + $0xcc] sm:$0xf]
  %v73 = vld [vmem:[%s1 + $0xd0] sm:$0xf]
  %v74 = vld [vmem:[%s1 + $0xd4] sm:$0xf]
  %v75 = vld [vmem:[%s1 + $0xd8] sm:$0xf]
  %v76 = vld [vmem:[%s1 + $0xdc] sm:$0xf]
  %v77 = vld [vmem:[%s1 + $0xe0] sm:$0xf]
  %v78 = vld [vmem:[%s1 + $0xe4] sm:$0xf]
  %v79 = vld [vmem:[%s1 + $0xe8] sm:$0xf]
  %v80 = vld [vmem:[%s1 + $0xec] sm:$0xf]
  %v81 = vld [vmem:[%s1 + $0xf0] sm:$0xf]
  %v82 = vld [vmem:[%s1 + $0xf4] sm:$0xf]
  %v83 = vld [vmem:[%s1 + $0xf8] sm:$0xf]
  %v84 = vld [vmem:[%s1 + $0xfc] sm:$0xf]
  %v89 = vunpack.c.l.b16 %v17
  %v90 = vunpack.c.h.b16 %v17
  %v91 = vunpack.c.l.b16 %v18
  %v92 = vunpack.c.h.b16 %v18
  %v93 = vunpack.c.l.b16 %v19
  %v94 = vunpack.c.h.b16 %v19
  %v95 = vunpack.c.l.b16 %v20
  %v96 = vunpack.c.h.b16 %v20
  %v97 = vpack.c.b16 %v93, %v89
  %v98 = vpack.c.b16 %v94, %v90
  %v99 = vpack.c.b16 %v95, %v91
  %v100 = vpack.c.b16 %v96, %v92
  %v169 = vunpack.c.l.b16 %v21
  %v170 = vunpack.c.l.b16 %v22
  %v171 = vunpack.c.l.b16 %v23
  %v172 = vunpack.c.l.b16 %v24
  %v173 = vunpack.c.l.b16 %v25
  %v174 = vunpack.c.l.b16 %v26
  %v175 = vunpack.c.l.b16 %v27
  %v176 = vunpack.c.l.b16 %v28
  %v177 = vunpack.c.l.b16 %v29
  %v178 = vunpack.c.l.b16 %v30
  %v179 = vunpack.c.l.b16 %v31
  %v180 = vunpack.c.l.b16 %v32
  %v181 = vunpack.c.l.b16 %v33
  %v182 = vunpack.c.l.b16 %v34
  %v183 = vunpack.c.l.b16 %v35
  %v184 = vunpack.c.l.b16 %v36
  %v185 = vunpack.c.l.b16 %v37
  %v186 = vunpack.c.l.b16 %v38
  %v187 = vunpack.c.l.b16 %v39
  %v188 = vunpack.c.l.b16 %v40
  %v189 = vunpack.c.l.b16 %v41
  %v190 = vunpack.c.l.b16 %v42
  %v191 = vunpack.c.l.b16 %v43
  %v192 = vunpack.c.l.b16 %v44
  %v193 = vunpack.c.l.b16 %v45
  %v194 = vunpack.c.l.b16 %v46
  %v195 = vunpack.c.l.b16 %v47
  %v196 = vunpack.c.l.b16 %v48
  %v197 = vunpack.c.l.b16 %v49
  %v198 = vunpack.c.l.b16 %v50
  %v199 = vunpack.c.l.b16 %v51
  %v200 = vunpack.c.l.b16 %v52
  %v201 = vunpack.c.l.b16 %v53
  %v202 = vunpack.c.l.b16 %v54
  %v203 = vunpack.c.l.b16 %v55
  %v204 = vunpack.c.l.b16 %v56
  %v205 = vunpack.c.l.b16 %v57
  %v206 = vunpack.c.l.b16 %v58
  %v207 = vunpack.c.l.b16 %v59
  %v208 = vunpack.c.l.b16 %v60
  %v209 = vunpack.c.l.b16 %v61
  %v210 = vunpack.c.l.b16 %v62
  %v211 = vunpack.c.l.b16 %v63
  %v212 = vunpack.c.l.b16 %v64
  %v213 = vunpack.c.l.b16 %v65
  %v214 = vunpack.c.l.b16 %v66
  %v215 = vunpack.c.l.b16 %v67
  %v216 = vunpack.c.l.b16 %v68
  %v217 = vunpack.c.l.b16 %v69
  %v218 = vunpack.c.l.b16 %v70
  %v219 = vunpack.c.l.b16 %v71
  %v220 = vunpack.c.l.b16 %v72
  %v221 = vunpack.c.l.b16 %v73
  %v222 = vunpack.c.l.b16 %v74
  %v223 = vunpack.c.l.b16 %v75
  %v224 = vunpack.c.l.b16 %v76
  %v225 = vunpack.c.l.b16 %v77
  %v226 = vunpack.c.l.b16 %v78
  %v227 = vunpack.c.l.b16 %v79
  %v228 = vunpack.c.l.b16 %v80
  %v229 = vunpack.c.l.b16 %v81
  %v230 = vunpack.c.l.b16 %v82
  %v231 = vunpack.c.l.b16 %v83
  %v232 = vunpack.c.l.b16 %v84
  %v233 = vpack.c.b16 %v170, %v169
  %v234 = vpack.c.b16 %v172, %v171
  %v235 = vpack.c.b16 %v174, %v173
  %v236 = vpack.c.b16 %v176, %v175
  %v237 = vpack.c.b16 %v178, %v177
  %v238 = vpack.c.b16 %v180, %v179
  %v239 = vpack.c.b16 %v182, %v181
  %v240 = vpack.c.b16 %v184, %v183
  %v241 = vpack.c.b16 %v186, %v185
  %v242 = vpack.c.b16 %v188, %v187
  %v243 = vpack.c.b16 %v190, %v189
  %v244 = vpack.c.b16 %v192, %v191
  %v245 = vpack.c.b16 %v194, %v193
  %v246 = vpack.c.b16 %v196, %v195
  %v247 = vpack.c.b16 %v198, %v197
  %v248 = vpack.c.b16 %v200, %v199
  %v249 = vpack.c.b16 %v202, %v201
  %v250 = vpack.c.b16 %v204, %v203
  %v251 = vpack.c.b16 %v206, %v205
  %v252 = vpack.c.b16 %v208, %v207
  %v253 = vpack.c.b16 %v210, %v209
  %v254 = vpack.c.b16 %v212, %v211
  %v255 = vpack.c.b16 %v214, %v213
  %v256 = vpack.c.b16 %v216, %v215
  %v257 = vpack.c.b16 %v218, %v217
  %v258 = vpack.c.b16 %v220, %v219
  %v259 = vpack.c.b16 %v222, %v221
  %v260 = vpack.c.b16 %v224, %v223
  %v261 = vpack.c.b16 %v226, %v225
  %v262 = vpack.c.b16 %v228, %v227
  %v263 = vpack.c.b16 %v230, %v229
  %v264 = vpack.c.b16 %v232, %v231
  %297 = vmatpush.bf16.msra.mxu0 %v240
  %298 = vmatpush.bf16.msra.mxu0 %v239
  %299 = vmatpush.bf16.msra.mxu0 %v238
  %300 = vmatpush.bf16.msra.mxu0 %v237
  %301 = vmatpush.bf16.msra.mxu0 %v236
  %302 = vmatpush.bf16.msra.mxu0 %v235
  %303 = vmatpush.bf16.msra.mxu0 %v234
  %304 = vmatpush.bf16.msra.mxu0 %v233
  %305 = vmatmul.bf16.gmra.mxu0 %v97
  %v306 = vpop.f32.mrf.mxu0
  %v307 = vadd.f32 0.0, %v306
  %v308 = vpop.f32.mrf.mxu0
  %v309 = vadd.f32 0.0, %v308
  %310 = vdwg.mxu0
  %311 = vmatpush.bf16.msra.mxu0 %v248
  %312 = vmatpush.bf16.msra.mxu0 %v247
  %313 = vmatpush.bf16.msra.mxu0 %v246
  %314 = vmatpush.bf16.msra.mxu0 %v245
  %315 = vmatpush.bf16.msra.mxu0 %v244
  %316 = vmatpush.bf16.msra.mxu0 %v243
  %317 = vmatpush.bf16.msra.mxu0 %v242
  %318 = vmatpush.bf16.msra.mxu0 %v241
  %319 = vmatmul.bf16.gmra.mxu0 %v98
  %v320 = vpop.f32.mrf.mxu0
  %v321 = vadd.f32 %v307, %v320
  %v322 = vpop.f32.mrf.mxu0
  %v323 = vadd.f32 %v309, %v322
  %324 = vdwg.mxu0
  %325 = vmatpush.bf16.msra.mxu0 %v256
  %326 = vmatpush.bf16.msra.mxu0 %v255
  %327 = vmatpush.bf16.msra.mxu0 %v254
  %328 = vmatpush.bf16.msra.mxu0 %v253
  %329 = vmatpush.bf16.msra.mxu0 %v252
  %330 = vmatpush.bf16.msra.mxu0 %v251
  %331 = vmatpush.bf16.msra.mxu0 %v250
  %332 = vmatpush.bf16.msra.mxu0 %v249
  %333 = vmatmul.bf16.gmra.mxu0 %v99
  %v334 = vpop.f32.mrf.mxu0
  %v335 = vadd.f32 %v321, %v334
  %v336 = vpop.f32.mrf.mxu0
  %v337 = vadd.f32 %v323, %v336
  %338 = vdwg.mxu0
  %339 = vmatpush.bf16.msra.mxu0 %v264
  %340 = vmatpush.bf16.msra.mxu0 %v263
  %341 = vmatpush.bf16.msra.mxu0 %v262
  %342 = vmatpush.bf16.msra.mxu0 %v261
  %343 = vmatpush.bf16.msra.mxu0 %v260
  %344 = vmatpush.bf16.msra.mxu0 %v259
  %345 = vmatpush.bf16.msra.mxu0 %v258
  %346 = vmatpush.bf16.msra.mxu0 %v257
  %347 = vmatmul.bf16.gmra.mxu0 %v100
  %v348 = vpop.f32.mrf.mxu0
  %v349 = vadd.f32 %v335, %v348
  %v350 = vpop.f32.mrf.mxu0
  %v351 = vadd.f32 %v337, %v350
  %352 = vdwg.mxu0
  %v353 = vld [vmem:[%s2] sm:$0xff]
  %v354 = vld [vmem:[%s2 + $0x8] sm:$0xff]
  %v355 = vld [vmem:[%s3] sm:$0xff]
  %v356 = vld [vmem:[%s3 + $0x8] sm:$0xff]
  %358 = vset.pattern.permute.xlu0 0
  %359 = vperm.xlu0 %358, %v353
  %v360 = vpop.permute.xlu0 %359
  %363 = vset.pattern.permute.xlu0 0
  %364 = vperm.xlu0 %363, %v354
  %v365 = vpop.permute.xlu0 %364
  %v367 = vmul.f32 %v349, %v360
  %v368 = vmul.f32 %v351, %v365
  %370 = vset.pattern.permute.xlu0 0
  %371 = vperm.xlu0 %370, %v355
  %v372 = vpop.permute.xlu0 %371
  %375 = vset.pattern.permute.xlu0 0
  %376 = vperm.xlu0 %375, %v356
  %v377 = vpop.permute.xlu0 %376
  %v379 = vadd.f32 %v367, %v372
  %v380 = vadd.f32 %v368, %v377
  %vm381 = vcmask 261120
  %382 = vst.msk [vmem:[%s4] sm:$0xff] %vm381, %v379
  %383 = vst.msk [vmem:[%s4 + $0x8] sm:$0xff] %vm381, %v380
  // Predicated region
  $region18: #{register_vae_forward.111} parent=0 // pred_check
    _
  $region19: #{register_vae_forward.111} parent=0 // pred_check_branch
    %385 = sbr.rel (0) target = $region21
  $region20: #{register_vae_forward.111} parent=0 // pred_region
    _
  $region21: #{register_vae_forward.111} parent=0 // pred_fallthru
    _
  // Predicated region
  $region22: #{register_vae_forward.111} parent=0 // pred_check
    _
  $region23: #{register_vae_forward.111} parent=0 // pred_check_branch
    %387 = sbr.rel (0) target = $region25
  $region24: #{register_vae_forward.111} parent=0 // pred_region
    _
  $region25: #{register_vae_forward.111} parent=0 // pred_fallthru
    _

// kernel: register_vae_forward.112
$region0: #{register_vae_forward.112}
  #allocation0 [shape = 'u32[]', space=smem, size = 0x4, offset = 0x4, fixed_abs, tag = 'smem constant byte address 0x4 - core index']
  #allocation1 [shape = 'u32[72,128]{1,0:T(1,128)}', space=vmem, size = 0x9000, scoped, tag = 'internal scratch']
  %s0 = inlined_call_operand.vmem [shape: bf16[16,512], index: 0, kind: input, shape index: {}]
  %s1 = inlined_call_operand.vmem [shape: bf16[512,32], index: 1, kind: input, shape index: {}]
  %s2 = inlined_call_operand.vmem [shape: f32[16,1], index: 2, kind: input, shape index: {}]
  %s3 = inlined_call_operand.vmem [shape: f32[16,1], index: 3, kind: input, shape index: {}]
  %s4 = inlined_call_operand.vmem [shape: f32[16,32], index: 4, kind: input, shape index: {}]
  %s5 = inlined_call_operand.vmem [shape: f32[16,32], index: 5, kind: output, shape index: {}]
  %s6 = sld [smem:[#allocation0]]
  $region30: #{register_vae_forward.112} parent=0
    _
  %s8 = ssub.s32 1, %s6
  %s9 = scalar_select 0, %s8, %s6
  // Predicated region
  $region2: #{register_vae_forward.112} parent=0 // pred_check
    _
  $region3: #{register_vae_forward.112} parent=0 // pred_check_branch
    %11 = sbr.rel (0) target = $region5
  $region4: #{register_vae_forward.112} parent=0 // pred_region
    _
  $region5: #{register_vae_forward.112} parent=0 // pred_fallthru
    _
  // Predicated region
  $region6: #{register_vae_forward.112} parent=0 // pred_check
    _
  $region7: #{register_vae_forward.112} parent=0 // pred_check_branch
    %13 = sbr.rel (0) target = $region9
  $region8: #{register_vae_forward.112} parent=0 // pred_region
    _
  $region9: #{register_vae_forward.112} parent=0 // pred_fallthru
    _
  // Predicated region
  $region10: #{register_vae_forward.112} parent=0 // pred_check
    _
  $region11: #{register_vae_forward.112} parent=0 // pred_check_branch
    %15 = sbr.rel (0) target = $region13
  $region12: #{register_vae_forward.112} parent=0 // pred_region
    _
  $region13: #{register_vae_forward.112} parent=0 // pred_fallthru
    _
  // Predicated region
  $region14: #{register_vae_forward.112} parent=0 // pred_check
    _
  $region15: #{register_vae_forward.112} parent=0 // pred_check_branch
    %17 = sbr.rel (0) target = $region17
  $region16: #{register_vae_forward.112} parent=0 // pred_region
    _
  $region17: #{register_vae_forward.112} parent=0 // pred_fallthru
    _
  // Predicated region
  $region18: #{register_vae_forward.112} parent=0 // pred_check
    _
  $region19: #{register_vae_forward.112} parent=0 // pred_check_branch
    %19 = sbr.rel (0) target = $region21
  $region20: #{register_vae_forward.112} parent=0 // pred_region
    _
  $region21: #{register_vae_forward.112} parent=0 // pred_fallthru
    _
  %v20 = vld [vmem:[%s4] sm:$0xff]
  %v21 = vld [vmem:[%s4 + $0x8] sm:$0xff]
  %v22 = vld [vmem:[%s0] sm:$0xff]
  %v23 = vld [vmem:[%s0 + $0x8] sm:$0xff]
  %v24 = vld [vmem:[%s0 + $0x10] sm:$0xff]
  %v25 = vld [vmem:[%s0 + $0x18] sm:$0xff]
  %v26 = vld [vmem:[%s1] sm:$0xf]
  %v27 = vld [vmem:[%s1 + $0x4] sm:$0xf]
  %v28 = vld [vmem:[%s1 + $0x8] sm:$0xf]
  %v29 = vld [vmem:[%s1 + $0xc] sm:$0xf]
  %v30 = vld [vmem:[%s1 + $0x10] sm:$0xf]
  %v31 = vld [vmem:[%s1 + $0x14] sm:$0xf]
  %v32 = vld [vmem:[%s1 + $0x18] sm:$0xf]
  %v33 = vld [vmem:[%s1 + $0x1c] sm:$0xf]
  %v34 = vld [vmem:[%s1 + $0x20] sm:$0xf]
  %v35 = vld [vmem:[%s1 + $0x24] sm:$0xf]
  %v36 = vld [vmem:[%s1 + $0x28] sm:$0xf]
  %v37 = vld [vmem:[%s1 + $0x2c] sm:$0xf]
  %v38 = vld [vmem:[%s1 + $0x30] sm:$0xf]
  %v39 = vld [vmem:[%s1 + $0x34] sm:$0xf]
  %v40 = vld [vmem:[%s1 + $0x38] sm:$0xf]
  %v41 = vld [vmem:[%s1 + $0x3c] sm:$0xf]
  %v42 = vld [vmem:[%s1 + $0x40] sm:$0xf]
  %v43 = vld [vmem:[%s1 + $0x44] sm:$0xf]
  %v44 = vld [vmem:[%s1 + $0x48] sm:$0xf]
  %v45 = vld [vmem:[%s1 + $0x4c] sm:$0xf]
  %v46 = vld [vmem:[%s1 + $0x50] sm:$0xf]
  %v47 = vld [vmem:[%s1 + $0x54] sm:$0xf]
  %v48 = vld [vmem:[%s1 + $0x58] sm:$0xf]
  %v49 = vld [vmem:[%s1 + $0x5c] sm:$0xf]
  %v50 = vld [vmem:[%s1 + $0x60] sm:$0xf]
  %v51 = vld [vmem:[%s1 + $0x64] sm:$0xf]
  %v52 = vld [vmem:[%s1 + $0x68] sm:$0xf]
  %v53 = vld [vmem:[%s1 + $0x6c] sm:$0xf]
  %v54 = vld [vmem:[%s1 + $0x70] sm:$0xf]
  %v55 = vld [vmem:[%s1 + $0x74] sm:$0xf]
  %v56 = vld [vmem:[%s1 + $0x78] sm:$0xf]
  %v57 = vld [vmem:[%s1 + $0x7c] sm:$0xf]
  %v58 = vld [vmem:[%s1 + $0x80] sm:$0xf]
  %v59 = vld [vmem:[%s1 + $0x84] sm:$0xf]
  %v60 = vld [vmem:[%s1 + $0x88] sm:$0xf]
  %v61 = vld [vmem:[%s1 + $0x8c] sm:$0xf]
  %v62 = vld [vmem:[%s1 + $0x90] sm:$0xf]
  %v63 = vld [vmem:[%s1 + $0x94] sm:$0xf]
  %v64 = vld [vmem:[%s1 + $0x98] sm:$0xf]
  %v65 = vld [vmem:[%s1 + $0x9c] sm:$0xf]
  %v66 = vld [vmem:[%s1 + $0xa0] sm:$0xf]
  %v67 = vld [vmem:[%s1 + $0xa4] sm:$0xf]
  %v68 = vld [vmem:[%s1 + $0xa8] sm:$0xf]
  %v69 = vld [vmem:[%s1 + $0xac] sm:$0xf]
  %v70 = vld [vmem:[%s1 + $0xb0] sm:$0xf]
  %v71 = vld [vmem:[%s1 + $0xb4] sm:$0xf]
  %v72 = vld [vmem:[%s1 + $0xb8] sm:$0xf]
  %v73 = vld [vmem:[%s1 + $0xbc] sm:$0xf]
  %v74 = vld [vmem:[%s1 + $0xc0] sm:$0xf]
  %v75 = vld [vmem:[%s1 + $0xc4] sm:$0xf]
  %v76 = vld [vmem:[%s1 + $0xc8] sm:$0xf]
  %v77 = vld [vmem:[%s1 + $0xcc] sm:$0xf]
  %v78 = vld [vmem:[%s1 + $0xd0] sm:$0xf]
  %v79 = vld [vmem:[%s1 + $0xd4] sm:$0xf]
  %v80 = vld [vmem:[%s1 + $0xd8] sm:$0xf]
  %v81 = vld [vmem:[%s1 + $0xdc] sm:$0xf]
  %v82 = vld [vmem:[%s1 + $0xe0] sm:$0xf]
  %v83 = vld [vmem:[%s1 + $0xe4] sm:$0xf]
  %v84 = vld [vmem:[%s1 + $0xe8] sm:$0xf]
  %v85 = vld [vmem:[%s1 + $0xec] sm:$0xf]
  %v86 = vld [vmem:[%s1 + $0xf0] sm:$0xf]
  %v87 = vld [vmem:[%s1 + $0xf4] sm:$0xf]
  %v88 = vld [vmem:[%s1 + $0xf8] sm:$0xf]
  %v89 = vld [vmem:[%s1 + $0xfc] sm:$0xf]
  %v94 = vunpack.c.l.b16 %v22
  %v95 = vunpack.c.h.b16 %v22
  %v96 = vunpack.c.l.b16 %v23
  %v97 = vunpack.c.h.b16 %v23
  %v98 = vunpack.c.l.b16 %v24
  %v99 = vunpack.c.h.b16 %v24
  %v100 = vunpack.c.l.b16 %v25
  %v101 = vunpack.c.h.b16 %v25
  %v102 = vpack.c.b16 %v98, %v94
  %v103 = vpack.c.b16 %v99, %v95
  %v104 = vpack.c.b16 %v100, %v96
  %v105 = vpack.c.b16 %v101, %v97
  %v174 = vunpack.c.l.b16 %v26
  %v175 = vunpack.c.l.b16 %v27
  %v176 = vunpack.c.l.b16 %v28
  %v177 = vunpack.c.l.b16 %v29
  %v178 = vunpack.c.l.b16 %v30
  %v179 = vunpack.c.l.b16 %v31
  %v180 = vunpack.c.l.b16 %v32
  %v181 = vunpack.c.l.b16 %v33
  %v182 = vunpack.c.l.b16 %v34
  %v183 = vunpack.c.l.b16 %v35
  %v184 = vunpack.c.l.b16 %v36
  %v185 = vunpack.c.l.b16 %v37
  %v186 = vunpack.c.l.b16 %v38
  %v187 = vunpack.c.l.b16 %v39
  %v188 = vunpack.c.l.b16 %v40
  %v189 = vunpack.c.l.b16 %v41
  %v190 = vunpack.c.l.b16 %v42
  %v191 = vunpack.c.l.b16 %v43
  %v192 = vunpack.c.l.b16 %v44
  %v193 = vunpack.c.l.b16 %v45
  %v194 = vunpack.c.l.b16 %v46
  %v195 = vunpack.c.l.b16 %v47
  %v196 = vunpack.c.l.b16 %v48
  %v197 = vunpack.c.l.b16 %v49
  %v198 = vunpack.c.l.b16 %v50
  %v199 = vunpack.c.l.b16 %v51
  %v200 = vunpack.c.l.b16 %v52
  %v201 = vunpack.c.l.b16 %v53
  %v202 = vunpack.c.l.b16 %v54
  %v203 = vunpack.c.l.b16 %v55
  %v204 = vunpack.c.l.b16 %v56
  %v205 = vunpack.c.l.b16 %v57
  %v206 = vunpack.c.l.b16 %v58
  %v207 = vunpack.c.l.b16 %v59
  %v208 = vunpack.c.l.b16 %v60
  %v209 = vunpack.c.l.b16 %v61
  %v210 = vunpack.c.l.b16 %v62
  %v211 = vunpack.c.l.b16 %v63
  %v212 = vunpack.c.l.b16 %v64
  %v213 = vunpack.c.l.b16 %v65
  %v214 = vunpack.c.l.b16 %v66
  %v215 = vunpack.c.l.b16 %v67
  %v216 = vunpack.c.l.b16 %v68
  %v217 = vunpack.c.l.b16 %v69
  %v218 = vunpack.c.l.b16 %v70
  %v219 = vunpack.c.l.b16 %v71
  %v220 = vunpack.c.l.b16 %v72
  %v221 = vunpack.c.l.b16 %v73
  %v222 = vunpack.c.l.b16 %v74
  %v223 = vunpack.c.l.b16 %v75
  %v224 = vunpack.c.l.b16 %v76
  %v225 = vunpack.c.l.b16 %v77
  %v226 = vunpack.c.l.b16 %v78
  %v227 = vunpack.c.l.b16 %v79
  %v228 = vunpack.c.l.b16 %v80
  %v229 = vunpack.c.l.b16 %v81
  %v230 = vunpack.c.l.b16 %v82
  %v231 = vunpack.c.l.b16 %v83
  %v232 = vunpack.c.l.b16 %v84
  %v233 = vunpack.c.l.b16 %v85
  %v234 = vunpack.c.l.b16 %v86
  %v235 = vunpack.c.l.b16 %v87
  %v236 = vunpack.c.l.b16 %v88
  %v237 = vunpack.c.l.b16 %v89
  %v238 = vpack.c.b16 %v175, %v174
  %v239 = vpack.c.b16 %v177, %v176
  %v240 = vpack.c.b16 %v179, %v178
  %v241 = vpack.c.b16 %v181, %v180
  %v242 = vpack.c.b16 %v183, %v182
  %v243 = vpack.c.b16 %v185, %v184
  %v244 = vpack.c.b16 %v187, %v186
  %v245 = vpack.c.b16 %v189, %v188
  %v246 = vpack.c.b16 %v191, %v190
  %v247 = vpack.c.b16 %v193, %v192
  %v248 = vpack.c.b16 %v195, %v194
  %v249 = vpack.c.b16 %v197, %v196
  %v250 = vpack.c.b16 %v199, %v198
  %v251 = vpack.c.b16 %v201, %v200
  %v252 = vpack.c.b16 %v203, %v202
  %v253 = vpack.c.b16 %v205, %v204
  %v254 = vpack.c.b16 %v207, %v206
  %v255 = vpack.c.b16 %v209, %v208
  %v256 = vpack.c.b16 %v211, %v210
  %v257 = vpack.c.b16 %v213, %v212
  %v258 = vpack.c.b16 %v215, %v214
  %v259 = vpack.c.b16 %v217, %v216
  %v260 = vpack.c.b16 %v219, %v218
  %v261 = vpack.c.b16 %v221, %v220
  %v262 = vpack.c.b16 %v223, %v222
  %v263 = vpack.c.b16 %v225, %v224
  %v264 = vpack.c.b16 %v227, %v226
  %v265 = vpack.c.b16 %v229, %v228
  %v266 = vpack.c.b16 %v231, %v230
  %v267 = vpack.c.b16 %v233, %v232
  %v268 = vpack.c.b16 %v235, %v234
  %v269 = vpack.c.b16 %v237, %v236
  %302 = vmatpush.bf16.msra.mxu0 %v245
  %303 = vmatpush.bf16.msra.mxu0 %v244
  %304 = vmatpush.bf16.msra.mxu0 %v243
  %305 = vmatpush.bf16.msra.mxu0 %v242
  %306 = vmatpush.bf16.msra.mxu0 %v241
  %307 = vmatpush.bf16.msra.mxu0 %v240
  %308 = vmatpush.bf16.msra.mxu0 %v239
  %309 = vmatpush.bf16.msra.mxu0 %v238
  %310 = vmatmul.bf16.gmra.mxu0 %v102
  %v311 = vpop.f32.mrf.mxu0
  %v312 = vadd.f32 0.0, %v311
  %v313 = vpop.f32.mrf.mxu0
  %v314 = vadd.f32 0.0, %v313
  %315 = vdwg.mxu0
  %316 = vmatpush.bf16.msra.mxu0 %v253
  %317 = vmatpush.bf16.msra.mxu0 %v252
  %318 = vmatpush.bf16.msra.mxu0 %v251
  %319 = vmatpush.bf16.msra.mxu0 %v250
  %320 = vmatpush.bf16.msra.mxu0 %v249
  %321 = vmatpush.bf16.msra.mxu0 %v248
  %322 = vmatpush.bf16.msra.mxu0 %v247
  %323 = vmatpush.bf16.msra.mxu0 %v246
  %324 = vmatmul.bf16.gmra.mxu0 %v103
  %v325 = vpop.f32.mrf.mxu0
  %v326 = vadd.f32 %v312, %v325
  %v327 = vpop.f32.mrf.mxu0
  %v328 = vadd.f32 %v314, %v327
  %329 = vdwg.mxu0
  %330 = vmatpush.bf16.msra.mxu0 %v261
  %331 = vmatpush.bf16.msra.mxu0 %v260
  %332 = vmatpush.bf16.msra.mxu0 %v259
  %333 = vmatpush.bf16.msra.mxu0 %v258
  %334 = vmatpush.bf16.msra.mxu0 %v257
  %335 = vmatpush.bf16.msra.mxu0 %v256
  %336 = vmatpush.bf16.msra.mxu0 %v255
  %337 = vmatpush.bf16.msra.mxu0 %v254
  %338 = vmatmul.bf16.gmra.mxu0 %v104
  %v339 = vpop.f32.mrf.mxu0
  %v340 = vadd.f32 %v326, %v339
  %v341 = vpop.f32.mrf.mxu0
  %v342 = vadd.f32 %v328, %v341
  %343 = vdwg.mxu0
  %344 = vmatpush.bf16.msra.mxu0 %v269
  %345 = vmatpush.bf16.msra.mxu0 %v268
  %346 = vmatpush.bf16.msra.mxu0 %v267
  %347 = vmatpush.bf16.msra.mxu0 %v266
  %348 = vmatpush.bf16.msra.mxu0 %v265
  %349 = vmatpush.bf16.msra.mxu0 %v264
  %350 = vmatpush.bf16.msra.mxu0 %v263
  %351 = vmatpush.bf16.msra.mxu0 %v262
  %352 = vmatmul.bf16.gmra.mxu0 %v105
  %v353 = vpop.f32.mrf.mxu0
  %v354 = vadd.f32 %v340, %v353
  %v355 = vpop.f32.mrf.mxu0
  %v356 = vadd.f32 %v342, %v355
  %357 = vdwg.mxu0
  %v358 = vld [vmem:[%s2] sm:$0xff]
  %v359 = vld [vmem:[%s2 + $0x8] sm:$0xff]
  %v360 = vld [vmem:[%s3] sm:$0xff]
  %v361 = vld [vmem:[%s3 + $0x8] sm:$0xff]
  %363 = vset.pattern.permute.xlu0 0
  %364 = vperm.xlu0 %363, %v358
  %v365 = vpop.permute.xlu0 %364
  %368 = vset.pattern.permute.xlu0 0
  %369 = vperm.xlu0 %368, %v359
  %v370 = vpop.permute.xlu0 %369
  %v372 = vmul.f32 %v354, %v365
  %v373 = vmul.f32 %v356, %v370
  %375 = vset.pattern.permute.xlu0 0
  %376 = vperm.xlu0 %375, %v360
  %v377 = vpop.permute.xlu0 %376
  %380 = vset.pattern.permute.xlu0 0
  %381 = vperm.xlu0 %380, %v361
  %v382 = vpop.permute.xlu0 %381
  %v384 = vadd.f32 %v372, %v377
  %v385 = vadd.f32 %v373, %v382
  %v386 = vadd.f32 %v384, %v20
  %v387 = vadd.f32 %v385, %v21
  %vm388 = vcmask 261120
  %389 = vst.msk [vmem:[%s5] sm:$0xff] %vm388, %v386
  %390 = vst.msk [vmem:[%s5 + $0x8] sm:$0xff] %vm388, %v387
  // Predicated region
  $region22: #{register_vae_forward.112} parent=0 // pred_check
    _
  $region23: #{register_vae_forward.112} parent=0 // pred_check_branch
    %392 = sbr.rel (0) target = $region25
  $region24: #{register_vae_forward.112} parent=0 // pred_region
    _
  $region25: #{register_vae_forward.112} parent=0 // pred_fallthru
    _
  // Predicated region
  $region26: #{register_vae_forward.112} parent=0 // pred_check
    _
  $region27: #{register_vae_forward.112} parent=0 // pred_check_branch
    %394 = sbr.rel (0) target = $region29
  $region28: #{register_vae_forward.112} parent=0 // pred_region
    _
  $region29: #{register_vae_forward.112} parent=0 // pred_fallthru
    _

// kernel: register_vae_forward.92
$region0: #{register_vae_forward.92}
  #allocation0 [shape = 'u32[]', space=smem, size = 0x4, offset = 0x4, fixed_abs, tag = 'smem constant byte address 0x4 - core index']
  #allocation1 [shape = 'u32[72,128]{1,0:T(1,128)}', space=vmem, size = 0x9000, scoped, tag = 'internal scratch']
  %s0 = inlined_call_operand.vmem [shape: bf16[8,128], index: 0, kind: input, shape index: {}]
  %s1 = inlined_call_operand.vmem [shape: bf16[128,512], index: 1, kind: input, shape index: {}]
  %s2 = inlined_call_operand.vmem [shape: f32[8,1], index: 2, kind: input, shape index: {}]
  %s3 = inlined_call_operand.vmem [shape: f32[8,1], index: 3, kind: input, shape index: {}]
  %s4 = inlined_call_operand.vmem [shape: f32[8,512], index: 4, kind: output, shape index: {}]
  %s5 = sld [smem:[#allocation0]]
  $region26: #{register_vae_forward.92} parent=0
    _
  %s7 = ssub.s32 1, %s5
  %s8 = scalar_select 0, %s7, %s5
  // Predicated region
  $region2: #{register_vae_forward.92} parent=0 // pred_check
    _
  $region3: #{register_vae_forward.92} parent=0 // pred_check_branch
    %10 = sbr.rel (0) target = $region5
  $region4: #{register_vae_forward.92} parent=0 // pred_region
    _
  $region5: #{register_vae_forward.92} parent=0 // pred_fallthru
    _
  // Predicated region
  $region6: #{register_vae_forward.92} parent=0 // pred_check
    _
  $region7: #{register_vae_forward.92} parent=0 // pred_check_branch
    %12 = sbr.rel (0) target = $region9
  $region8: #{register_vae_forward.92} parent=0 // pred_region
    _
  $region9: #{register_vae_forward.92} parent=0 // pred_fallthru
    _
  // Predicated region
  $region10: #{register_vae_forward.92} parent=0 // pred_check
    _
  $region11: #{register_vae_forward.92} parent=0 // pred_check_branch
    %14 = sbr.rel (0) target = $region13
  $region12: #{register_vae_forward.92} parent=0 // pred_region
    _
  $region13: #{register_vae_forward.92} parent=0 // pred_fallthru
    _
  // Predicated region
  $region14: #{register_vae_forward.92} parent=0 // pred_check
    _
  $region15: #{register_vae_forward.92} parent=0 // pred_check_branch
    %16 = sbr.rel (0) target = $region17
  $region16: #{register_vae_forward.92} parent=0 // pred_region
    _
  $region17: #{register_vae_forward.92} parent=0 // pred_fallthru
    _
  %v17 = vld [vmem:[%s0] sm:$0xf]
  %v18 = vld [vmem:[%s1] sm:$0xff]
  %v19 = vld [vmem:[%s1 + $0x8] sm:$0xff]
  %v20 = vld [vmem:[%s1 + $0x10] sm:$0xff]
  %v21 = vld [vmem:[%s1 + $0x18] sm:$0xff]
  %v22 = vld [vmem:[%s1 + $0x20] sm:$0xff]
  %v23 = vld [vmem:[%s1 + $0x28] sm:$0xff]
  %v24 = vld [vmem:[%s1 + $0x30] sm:$0xff]
  %v25 = vld [vmem:[%s1 + $0x38] sm:$0xff]
  %v26 = vld [vmem:[%s1 + $0x40] sm:$0xff]
  %v27 = vld [vmem:[%s1 + $0x48] sm:$0xff]
  %v28 = vld [vmem:[%s1 + $0x50] sm:$0xff]
  %v29 = vld [vmem:[%s1 + $0x58] sm:$0xff]
  %v30 = vld [vmem:[%s1 + $0x60] sm:$0xff]
  %v31 = vld [vmem:[%s1 + $0x68] sm:$0xff]
  %v32 = vld [vmem:[%s1 + $0x70] sm:$0xff]
  %v33 = vld [vmem:[%s1 + $0x78] sm:$0xff]
  %v34 = vld [vmem:[%s1 + $0x80] sm:$0xff]
  %v35 = vld [vmem:[%s1 + $0x88] sm:$0xff]
  %v36 = vld [vmem:[%s1 + $0x90] sm:$0xff]
  %v37 = vld [vmem:[%s1 + $0x98] sm:$0xff]
  %v38 = vld [vmem:[%s1 + $0xa0] sm:$0xff]
  %v39 = vld [vmem:[%s1 + $0xa8] sm:$0xff]
  %v40 = vld [vmem:[%s1 + $0xb0] sm:$0xff]
  %v41 = vld [vmem:[%s1 + $0xb8] sm:$0xff]
  %v42 = vld [vmem:[%s1 + $0xc0] sm:$0xff]
  %v43 = vld [vmem:[%s1 + $0xc8] sm:$0xff]
  %v44 = vld [vmem:[%s1 + $0xd0] sm:$0xff]
  %v45 = vld [vmem:[%s1 + $0xd8] sm:$0xff]
  %v46 = vld [vmem:[%s1 + $0xe0] sm:$0xff]
  %v47 = vld [vmem:[%s1 + $0xe8] sm:$0xff]
  %v48 = vld [vmem:[%s1 + $0xf0] sm:$0xff]
  %v49 = vld [vmem:[%s1 + $0xf8] sm:$0xff]
  %v82 = vunpack.c.l.b16 %v18
  %v83 = vunpack.c.h.b16 %v18
  %v84 = vunpack.c.l.b16 %v19
  %v85 = vunpack.c.h.b16 %v19
  %v86 = vunpack.c.l.b16 %v20
  %v87 = vunpack.c.h.b16 %v20
  %v88 = vunpack.c.l.b16 %v21
  %v89 = vunpack.c.h.b16 %v21
  %v90 = vunpack.c.l.b16 %v22
  %v91 = vunpack.c.h.b16 %v22
  %v92 = vunpack.c.l.b16 %v23
  %v93 = vunpack.c.h.b16 %v23
  %v94 = vunpack.c.l.b16 %v24
  %v95 = vunpack.c.h.b16 %v24
  %v96 = vunpack.c.l.b16 %v25
  %v97 = vunpack.c.h.b16 %v25
  %v98 = vunpack.c.l.b16 %v26
  %v99 = vunpack.c.h.b16 %v26
  %v100 = vunpack.c.l.b16 %v27
  %v101 = vunpack.c.h.b16 %v27
  %v102 = vunpack.c.l.b16 %v28
  %v103 = vunpack.c.h.b16 %v28
  %v104 = vunpack.c.l.b16 %v29
  %v105 = vunpack.c.h.b16 %v29
  %v106 = vunpack.c.l.b16 %v30
  %v107 = vunpack.c.h.b16 %v30
  %v108 = vunpack.c.l.b16 %v31
  %v109 = vunpack.c.h.b16 %v31
  %v110 = vunpack.c.l.b16 %v32
  %v111 = vunpack.c.h.b16 %v32
  %v112 = vunpack.c.l.b16 %v33
  %v113 = vunpack.c.h.b16 %v33
  %v114 = vunpack.c.l.b16 %v34
  %v115 = vunpack.c.h.b16 %v34
  %v116 = vunpack.c.l.b16 %v35
  %v117 = vunpack.c.h.b16 %v35
  %v118 = vunpack.c.l.b16 %v36
  %v119 = vunpack.c.h.b16 %v36
  %v120 = vunpack.c.l.b16 %v37
  %v121 = vunpack.c.h.b16 %v37
  %v122 = vunpack.c.l.b16 %v38
  %v123 = vunpack.c.h.b16 %v38
  %v124 = vunpack.c.l.b16 %v39
  %v125 = vunpack.c.h.b16 %v39
  %v126 = vunpack.c.l.b16 %v40
  %v127 = vunpack.c.h.b16 %v40
  %v128 = vunpack.c.l.b16 %v41
  %v129 = vunpack.c.h.b16 %v41
  %v130 = vunpack.c.l.b16 %v42
  %v131 = vunpack.c.h.b16 %v42
  %v132 = vunpack.c.l.b16 %v43
  %v133 = vunpack.c.h.b16 %v43
  %v134 = vunpack.c.l.b16 %v44
  %v135 = vunpack.c.h.b16 %v44
  %v136 = vunpack.c.l.b16 %v45
  %v137 = vunpack.c.h.b16 %v45
  %v138 = vunpack.c.l.b16 %v46
  %v139 = vunpack.c.h.b16 %v46
  %v140 = vunpack.c.l.b16 %v47
  %v141 = vunpack.c.h.b16 %v47
  %v142 = vunpack.c.l.b16 %v48
  %v143 = vunpack.c.h.b16 %v48
  %v144 = vunpack.c.l.b16 %v49
  %v145 = vunpack.c.h.b16 %v49
  %v146 = vpack.c.b16 %v86, %v82
  %v147 = vpack.c.b16 %v87, %v83
  %v148 = vpack.c.b16 %v88, %v84
  %v149 = vpack.c.b16 %v89, %v85
  %v150 = vpack.c.b16 %v94, %v90
  %v151 = vpack.c.b16 %v95, %v91
  %v152 = vpack.c.b16 %v96, %v92
  %v153 = vpack.c.b16 %v97, %v93
  %v154 = vpack.c.b16 %v102, %v98
  %v155 = vpack.c.b16 %v103, %v99
  %v156 = vpack.c.b16 %v104, %v100
  %v157 = vpack.c.b16 %v105, %v101
  %v158 = vpack.c.b16 %v110, %v106
  %v159 = vpack.c.b16 %v111, %v107
  %v160 = vpack.c.b16 %v112, %v108
  %v161 = vpack.c.b16 %v113, %v109
  %v162 = vpack.c.b16 %v118, %v114
  %v163 = vpack.c.b16 %v119, %v115
  %v164 = vpack.c.b16 %v120, %v116
  %v165 = vpack.c.b16 %v121, %v117
  %v166 = vpack.c.b16 %v126, %v122
  %v167 = vpack.c.b16 %v127, %v123
  %v168 = vpack.c.b16 %v128, %v124
  %v169 = vpack.c.b16 %v129, %v125
  %v170 = vpack.c.b16 %v134, %v130
  %v171 = vpack.c.b16 %v135, %v131
  %v172 = vpack.c.b16 %v136, %v132
  %v173 = vpack.c.b16 %v137, %v133
  %v174 = vpack.c.b16 %v142, %v138
  %v175 = vpack.c.b16 %v143, %v139
  %v176 = vpack.c.b16 %v144, %v140
  %v177 = vpack.c.b16 %v145, %v141
  %210 = vmatpush.bf16.msra.mxu0 %v174
  %211 = vmatpush.bf16.msra.mxu0 %v170
  %212 = vmatpush.bf16.msra.mxu0 %v166
  %213 = vmatpush.bf16.msra.mxu0 %v162
  %214 = vmatpush.bf16.msra.mxu0 %v158
  %215 = vmatpush.bf16.msra.mxu0 %v154
  %216 = vmatpush.bf16.msra.mxu0 %v150
  %217 = vmatpush.bf16.msra.mxu0 %v146
  %218 = vmatmul.bf16.gmra.mxu0 %v17
  %v219 = vpop.f32.mrf.mxu0
  %v220 = vadd.f32 0.0, %v219
  %v221 = vpop.f32.mrf.mxu0
  %222 = vdwg.mxu0
  %223 = vmatpush.bf16.msra.mxu0 %v175
  %224 = vmatpush.bf16.msra.mxu0 %v171
  %225 = vmatpush.bf16.msra.mxu0 %v167
  %226 = vmatpush.bf16.msra.mxu0 %v163
  %227 = vmatpush.bf16.msra.mxu0 %v159
  %228 = vmatpush.bf16.msra.mxu0 %v155
  %229 = vmatpush.bf16.msra.mxu0 %v151
  %230 = vmatpush.bf16.msra.mxu0 %v147
  %231 = vmatmul.bf16.gmra.mxu0 %v17
  %v232 = vpop.f32.mrf.mxu0
  %v233 = vadd.f32 0.0, %v232
  %v234 = vpop.f32.mrf.mxu0
  %235 = vdwg.mxu0
  %236 = vmatpush.bf16.msra.mxu0 %v176
  %237 = vmatpush.bf16.msra.mxu0 %v172
  %238 = vmatpush.bf16.msra.mxu0 %v168
  %239 = vmatpush.bf16.msra.mxu0 %v164
  %240 = vmatpush.bf16.msra.mxu0 %v160
  %241 = vmatpush.bf16.msra.mxu0 %v156
  %242 = vmatpush.bf16.msra.mxu0 %v152
  %243 = vmatpush.bf16.msra.mxu0 %v148
  %244 = vmatmul.bf16.gmra.mxu0 %v17
  %v245 = vpop.f32.mrf.mxu0
  %v246 = vadd.f32 0.0, %v245
  %v247 = vpop.f32.mrf.mxu0
  %248 = vdwg.mxu0
  %249 = vmatpush.bf16.msra.mxu0 %v177
  %250 = vmatpush.bf16.msra.mxu0 %v173
  %251 = vmatpush.bf16.msra.mxu0 %v169
  %252 = vmatpush.bf16.msra.mxu0 %v165
  %253 = vmatpush.bf16.msra.mxu0 %v161
  %254 = vmatpush.bf16.msra.mxu0 %v157
  %255 = vmatpush.bf16.msra.mxu0 %v153
  %256 = vmatpush.bf16.msra.mxu0 %v149
  %257 = vmatmul.bf16.gmra.mxu0 %v17
  %v258 = vpop.f32.mrf.mxu0
  %v259 = vadd.f32 0.0, %v258
  %v260 = vpop.f32.mrf.mxu0
  %261 = vdwg.mxu0
  %v262 = vld [vmem:[%s2] sm:$0xff]
  %v263 = vld [vmem:[%s3] sm:$0xff]
  %265 = vset.pattern.permute.xlu0 0
  %266 = vperm.xlu0 %265, %v262
  %v267 = vpop.permute.xlu0 %266
  %v269 = vmul.f32 %v220, %v267
  %v270 = vmul.f32 %v233, %v267
  %v271 = vmul.f32 %v246, %v267
  %v272 = vmul.f32 %v259, %v267
  %274 = vset.pattern.permute.xlu0 0
  %275 = vperm.xlu0 %274, %v263
  %v276 = vpop.permute.xlu0 %275
  %v278 = vadd.f32 %v269, %v276
  %v279 = vadd.f32 %v270, %v276
  %v280 = vadd.f32 %v271, %v276
  %v281 = vadd.f32 %v272, %v276
  %vm282 = vcmp.ge.f32.partialorder %v278, 0.0
  %vm283 = vcmp.ge.f32.partialorder %v279, 0.0
  %vm284 = vcmp.ge.f32.partialorder %v280, 0.0
  %vm285 = vcmp.ge.f32.partialorder %v281, 0.0
  %v286 = vmul.f32 %v278, 0.2
  %v287 = vmul.f32 %v279, 0.2
  %v288 = vmul.f32 %v280, 0.2
  %v289 = vmul.f32 %v281, 0.2
  %v290 = vsel %vm282, %v278, %v286
  %v291 = vsel %vm283, %v279, %v287
  %v292 = vsel %vm284, %v280, %v288
  %v293 = vsel %vm285, %v281, %v289
  %294 = vst [vmem:[%s4] sm:$0xff] %v290
  %295 = vst [vmem:[%s4 + $0x8] sm:$0xff] %v291
  %296 = vst [vmem:[%s4 + $0x10] sm:$0xff] %v292
  %297 = vst [vmem:[%s4 + $0x18] sm:$0xff] %v293
  // Predicated region
  $region18: #{register_vae_forward.92} parent=0 // pred_check
    _
  $region19: #{register_vae_forward.92} parent=0 // pred_check_branch
    %299 = sbr.rel (0) target = $region21
  $region20: #{register_vae_forward.92} parent=0 // pred_region
    _
  $region21: #{register_vae_forward.92} parent=0 // pred_fallthru
    _
  // Predicated region
  $region22: #{register_vae_forward.92} parent=0 // pred_check
    _
  $region23: #{register_vae_forward.92} parent=0 // pred_check_branch
    %301 = sbr.rel (0) target = $region25
  $region24: #{register_vae_forward.92} parent=0 // pred_region
    _
  $region25: #{register_vae_forward.92} parent=0 // pred_fallthru
    _

// kernel: register_vae_forward.96
$region0: #{register_vae_forward.96}
  #allocation0 [shape = 'u32[]', space=smem, size = 0x4, offset = 0x4, fixed_abs, tag = 'smem constant byte address 0x4 - core index']
  #allocation1 [shape = 'u32[72,128]{1,0:T(1,128)}', space=vmem, size = 0x9000, scoped, tag = 'internal scratch']
  %s0 = inlined_call_operand.vmem [shape: bf16[16,512], index: 0, kind: input, shape index: {}]
  %s1 = inlined_call_operand.vmem [shape: bf16[512,128], index: 1, kind: input, shape index: {}]
  %s2 = inlined_call_operand.vmem [shape: f32[16,1], index: 2, kind: input, shape index: {}]
  %s3 = inlined_call_operand.vmem [shape: f32[16,1], index: 3, kind: input, shape index: {}]
  %s4 = inlined_call_operand.vmem [shape: f32[16,128], index: 4, kind: output, shape index: {}]
  %s5 = sld [smem:[#allocation0]]
  $region26: #{register_vae_forward.96} parent=0
    _
  %s7 = ssub.s32 1, %s5
  %s8 = scalar_select 0, %s7, %s5
  // Predicated region
  $region2: #{register_vae_forward.96} parent=0 // pred_check
    _
  $region3: #{register_vae_forward.96} parent=0 // pred_check_branch
    %10 = sbr.rel (0) target = $region5
  $region4: #{register_vae_forward.96} parent=0 // pred_region
    _
  $region5: #{register_vae_forward.96} parent=0 // pred_fallthru
    _
  // Predicated region
  $region6: #{register_vae_forward.96} parent=0 // pred_check
    _
  $region7: #{register_vae_forward.96} parent=0 // pred_check_branch
    %12 = sbr.rel (0) target = $region9
  $region8: #{register_vae_forward.96} parent=0 // pred_region
    _
  $region9: #{register_vae_forward.96} parent=0 // pred_fallthru
    _
  // Predicated region
  $region10: #{register_vae_forward.96} parent=0 // pred_check
    _
  $region11: #{register_vae_forward.96} parent=0 // pred_check_branch
    %14 = sbr.rel (0) target = $region13
  $region12: #{register_vae_forward.96} parent=0 // pred_region
    _
  $region13: #{register_vae_forward.96} parent=0 // pred_fallthru
    _
  // Predicated region
  $region14: #{register_vae_forward.96} parent=0 // pred_check
    _
  $region15: #{register_vae_forward.96} parent=0 // pred_check_branch
    %16 = sbr.rel (0) target = $region17
  $region16: #{register_vae_forward.96} parent=0 // pred_region
    _
  $region17: #{register_vae_forward.96} parent=0 // pred_fallthru
    _
  %v17 = vld [vmem:[%s0] sm:$0xff]
  %v18 = vld [vmem:[%s0 + $0x8] sm:$0xff]
  %v19 = vld [vmem:[%s0 + $0x10] sm:$0xff]
  %v20 = vld [vmem:[%s0 + $0x18] sm:$0xff]
  %v21 = vld [vmem:[%s1] sm:$0xf]
  %v22 = vld [vmem:[%s1 + $0x4] sm:$0xf]
  %v23 = vld [vmem:[%s1 + $0x8] sm:$0xf]
  %v24 = vld [vmem:[%s1 + $0xc] sm:$0xf]
  %v25 = vld [vmem:[%s1 + $0x10] sm:$0xf]
  %v26 = vld [vmem:[%s1 + $0x14] sm:$0xf]
  %v27 = vld [vmem:[%s1 + $0x18] sm:$0xf]
  %v28 = vld [vmem:[%s1 + $0x1c] sm:$0xf]
  %v29 = vld [vmem:[%s1 + $0x20] sm:$0xf]
  %v30 = vld [vmem:[%s1 + $0x24] sm:$0xf]
  %v31 = vld [vmem:[%s1 + $0x28] sm:$0xf]
  %v32 = vld [vmem:[%s1 + $0x2c] sm:$0xf]
  %v33 = vld [vmem:[%s1 + $0x30] sm:$0xf]
  %v34 = vld [vmem:[%s1 + $0x34] sm:$0xf]
  %v35 = vld [vmem:[%s1 + $0x38] sm:$0xf]
  %v36 = vld [vmem:[%s1 + $0x3c] sm:$0xf]
  %v37 = vld [vmem:[%s1 + $0x40] sm:$0xf]
  %v38 = vld [vmem:[%s1 + $0x44] sm:$0xf]
  %v39 = vld [vmem:[%s1 + $0x48] sm:$0xf]
  %v40 = vld [vmem:[%s1 + $0x4c] sm:$0xf]
  %v41 = vld [vmem:[%s1 + $0x50] sm:$0xf]
  %v42 = vld [vmem:[%s1 + $0x54] sm:$0xf]
  %v43 = vld [vmem:[%s1 + $0x58] sm:$0xf]
  %v44 = vld [vmem:[%s1 + $0x5c] sm:$0xf]
  %v45 = vld [vmem:[%s1 + $0x60] sm:$0xf]
  %v46 = vld [vmem:[%s1 + $0x64] sm:$0xf]
  %v47 = vld [vmem:[%s1 + $0x68] sm:$0xf]
  %v48 = vld [vmem:[%s1 + $0x6c] sm:$0xf]
  %v49 = vld [vmem:[%s1 + $0x70] sm:$0xf]
  %v50 = vld [vmem:[%s1 + $0x74] sm:$0xf]
  %v51 = vld [vmem:[%s1 + $0x78] sm:$0xf]
  %v52 = vld [vmem:[%s1 + $0x7c] sm:$0xf]
  %v53 = vld [vmem:[%s1 + $0x80] sm:$0xf]
  %v54 = vld [vmem:[%s1 + $0x84] sm:$0xf]
  %v55 = vld [vmem:[%s1 + $0x88] sm:$0xf]
  %v56 = vld [vmem:[%s1 + $0x8c] sm:$0xf]
  %v57 = vld [vmem:[%s1 + $0x90] sm:$0xf]
  %v58 = vld [vmem:[%s1 + $0x94] sm:$0xf]
  %v59 = vld [vmem:[%s1 + $0x98] sm:$0xf]
  %v60 = vld [vmem:[%s1 + $0x9c] sm:$0xf]
  %v61 = vld [vmem:[%s1 + $0xa0] sm:$0xf]
  %v62 = vld [vmem:[%s1 + $0xa4] sm:$0xf]
  %v63 = vld [vmem:[%s1 + $0xa8] sm:$0xf]
  %v64 = vld [vmem:[%s1 + $0xac] sm:$0xf]
  %v65 = vld [vmem:[%s1 + $0xb0] sm:$0xf]
  %v66 = vld [vmem:[%s1 + $0xb4] sm:$0xf]
  %v67 = vld [vmem:[%s1 + $0xb8] sm:$0xf]
  %v68 = vld [vmem:[%s1 + $0xbc] sm:$0xf]
  %v69 = vld [vmem:[%s1 + $0xc0] sm:$0xf]
  %v70 = vld [vmem:[%s1 + $0xc4] sm:$0xf]
  %v71 = vld [vmem:[%s1 + $0xc8] sm:$0xf]
  %v72 = vld [vmem:[%s1 + $0xcc] sm:$0xf]
  %v73 = vld [vmem:[%s1 + $0xd0] sm:$0xf]
  %v74 = vld [vmem:[%s1 + $0xd4] sm:$0xf]
  %v75 = vld [vmem:[%s1 + $0xd8] sm:$0xf]
  %v76 = vld [vmem:[%s1 + $0xdc] sm:$0xf]
  %v77 = vld [vmem:[%s1 + $0xe0] sm:$0xf]
  %v78 = vld [vmem:[%s1 + $0xe4] sm:$0xf]
  %v79 = vld [vmem:[%s1 + $0xe8] sm:$0xf]
  %v80 = vld [vmem:[%s1 + $0xec] sm:$0xf]
  %v81 = vld [vmem:[%s1 + $0xf0] sm:$0xf]
  %v82 = vld [vmem:[%s1 + $0xf4] sm:$0xf]
  %v83 = vld [vmem:[%s1 + $0xf8] sm:$0xf]
  %v84 = vld [vmem:[%s1 + $0xfc] sm:$0xf]
  %v89 = vunpack.c.l.b16 %v17
  %v90 = vunpack.c.h.b16 %v17
  %v91 = vunpack.c.l.b16 %v18
  %v92 = vunpack.c.h.b16 %v18
  %v93 = vunpack.c.l.b16 %v19
  %v94 = vunpack.c.h.b16 %v19
  %v95 = vunpack.c.l.b16 %v20
  %v96 = vunpack.c.h.b16 %v20
  %v97 = vpack.c.b16 %v93, %v89
  %v98 = vpack.c.b16 %v94, %v90
  %v99 = vpack.c.b16 %v95, %v91
  %v100 = vpack.c.b16 %v96, %v92
  %v169 = vunpack.c.l.b16 %v21
  %v170 = vunpack.c.l.b16 %v22
  %v171 = vunpack.c.l.b16 %v23
  %v172 = vunpack.c.l.b16 %v24
  %v173 = vunpack.c.l.b16 %v25
  %v174 = vunpack.c.l.b16 %v26
  %v175 = vunpack.c.l.b16 %v27
  %v176 = vunpack.c.l.b16 %v28
  %v177 = vunpack.c.l.b16 %v29
  %v178 = vunpack.c.l.b16 %v30
  %v179 = vunpack.c.l.b16 %v31
  %v180 = vunpack.c.l.b16 %v32
  %v181 = vunpack.c.l.b16 %v33
  %v182 = vunpack.c.l.b16 %v34
  %v183 = vunpack.c.l.b16 %v35
  %v184 = vunpack.c.l.b16 %v36
  %v185 = vunpack.c.l.b16 %v37
  %v186 = vunpack.c.l.b16 %v38
  %v187 = vunpack.c.l.b16 %v39
  %v188 = vunpack.c.l.b16 %v40
  %v189 = vunpack.c.l.b16 %v41
  %v190 = vunpack.c.l.b16 %v42
  %v191 = vunpack.c.l.b16 %v43
  %v192 = vunpack.c.l.b16 %v44
  %v193 = vunpack.c.l.b16 %v45
  %v194 = vunpack.c.l.b16 %v46
  %v195 = vunpack.c.l.b16 %v47
  %v196 = vunpack.c.l.b16 %v48
  %v197 = vunpack.c.l.b16 %v49
  %v198 = vunpack.c.l.b16 %v50
  %v199 = vunpack.c.l.b16 %v51
  %v200 = vunpack.c.l.b16 %v52
  %v201 = vunpack.c.l.b16 %v53
  %v202 = vunpack.c.l.b16 %v54
  %v203 = vunpack.c.l.b16 %v55
  %v204 = vunpack.c.l.b16 %v56
  %v205 = vunpack.c.l.b16 %v57
  %v206 = vunpack.c.l.b16 %v58
  %v207 = vunpack.c.l.b16 %v59
  %v208 = vunpack.c.l.b16 %v60
  %v209 = vunpack.c.l.b16 %v61
  %v210 = vunpack.c.l.b16 %v62
  %v211 = vunpack.c.l.b16 %v63
  %v212 = vunpack.c.l.b16 %v64
  %v213 = vunpack.c.l.b16 %v65
  %v214 = vunpack.c.l.b16 %v66
  %v215 = vunpack.c.l.b16 %v67
  %v216 = vunpack.c.l.b16 %v68
  %v217 = vunpack.c.l.b16 %v69
  %v218 = vunpack.c.l.b16 %v70
  %v219 = vunpack.c.l.b16 %v71
  %v220 = vunpack.c.l.b16 %v72
  %v221 = vunpack.c.l.b16 %v73
  %v222 = vunpack.c.l.b16 %v74
  %v223 = vunpack.c.l.b16 %v75
  %v224 = vunpack.c.l.b16 %v76
  %v225 = vunpack.c.l.b16 %v77
  %v226 = vunpack.c.l.b16 %v78
  %v227 = vunpack.c.l.b16 %v79
  %v228 = vunpack.c.l.b16 %v80
  %v229 = vunpack.c.l.b16 %v81
  %v230 = vunpack.c.l.b16 %v82
  %v231 = vunpack.c.l.b16 %v83
  %v232 = vunpack.c.l.b16 %v84
  %v233 = vpack.c.b16 %v170, %v169
  %v234 = vpack.c.b16 %v172, %v171
  %v235 = vpack.c.b16 %v174, %v173
  %v236 = vpack.c.b16 %v176, %v175
  %v237 = vpack.c.b16 %v178, %v177
  %v238 = vpack.c.b16 %v180, %v179
  %v239 = vpack.c.b16 %v182, %v181
  %v240 = vpack.c.b16 %v184, %v183
  %v241 = vpack.c.b16 %v186, %v185
  %v242 = vpack.c.b16 %v188, %v187
  %v243 = vpack.c.b16 %v190, %v189
  %v244 = vpack.c.b16 %v192, %v191
  %v245 = vpack.c.b16 %v194, %v193
  %v246 = vpack.c.b16 %v196, %v195
  %v247 = vpack.c.b16 %v198, %v197
  %v248 = vpack.c.b16 %v200, %v199
  %v249 = vpack.c.b16 %v202, %v201
  %v250 = vpack.c.b16 %v204, %v203
  %v251 = vpack.c.b16 %v206, %v205
  %v252 = vpack.c.b16 %v208, %v207
  %v253 = vpack.c.b16 %v210, %v209
  %v254 = vpack.c.b16 %v212, %v211
  %v255 = vpack.c.b16 %v214, %v213
  %v256 = vpack.c.b16 %v216, %v215
  %v257 = vpack.c.b16 %v218, %v217
  %v258 = vpack.c.b16 %v220, %v219
  %v259 = vpack.c.b16 %v222, %v221
  %v260 = vpack.c.b16 %v224, %v223
  %v261 = vpack.c.b16 %v226, %v225
  %v262 = vpack.c.b16 %v228, %v227
  %v263 = vpack.c.b16 %v230, %v229
  %v264 = vpack.c.b16 %v232, %v231
  %297 = vmatpush.bf16.msra.mxu0 %v240
  %298 = vmatpush.bf16.msra.mxu0 %v239
  %299 = vmatpush.bf16.msra.mxu0 %v238
  %300 = vmatpush.bf16.msra.mxu0 %v237
  %301 = vmatpush.bf16.msra.mxu0 %v236
  %302 = vmatpush.bf16.msra.mxu0 %v235
  %303 = vmatpush.bf16.msra.mxu0 %v234
  %304 = vmatpush.bf16.msra.mxu0 %v233
  %305 = vmatmul.bf16.gmra.mxu0 %v97
  %v306 = vpop.f32.mrf.mxu0
  %v307 = vadd.f32 0.0, %v306
  %v308 = vpop.f32.mrf.mxu0
  %v309 = vadd.f32 0.0, %v308
  %310 = vdwg.mxu0
  %311 = vmatpush.bf16.msra.mxu0 %v248
  %312 = vmatpush.bf16.msra.mxu0 %v247
  %313 = vmatpush.bf16.msra.mxu0 %v246
  %314 = vmatpush.bf16.msra.mxu0 %v245
  %315 = vmatpush.bf16.msra.mxu0 %v244
  %316 = vmatpush.bf16.msra.mxu0 %v243
  %317 = vmatpush.bf16.msra.mxu0 %v242
  %318 = vmatpush.bf16.msra.mxu0 %v241
  %319 = vmatmul.bf16.gmra.mxu0 %v98
  %v320 = vpop.f32.mrf.mxu0
  %v321 = vadd.f32 %v307, %v320
  %v322 = vpop.f32.mrf.mxu0
  %v323 = vadd.f32 %v309, %v322
  %324 = vdwg.mxu0
  %325 = vmatpush.bf16.msra.mxu0 %v256
  %326 = vmatpush.bf16.msra.mxu0 %v255
  %327 = vmatpush.bf16.msra.mxu0 %v254
  %328 = vmatpush.bf16.msra.mxu0 %v253
  %329 = vmatpush.bf16.msra.mxu0 %v252
  %330 = vmatpush.bf16.msra.mxu0 %v251
  %331 = vmatpush.bf16.msra.mxu0 %v250
  %332 = vmatpush.bf16.msra.mxu0 %v249
  %333 = vmatmul.bf16.gmra.mxu0 %v99
  %v334 = vpop.f32.mrf.mxu0
  %v335 = vadd.f32 %v321, %v334
  %v336 = vpop.f32.mrf.mxu0
  %v337 = vadd.f32 %v323, %v336
  %338 = vdwg.mxu0
  %339 = vmatpush.bf16.msra.mxu0 %v264
  %340 = vmatpush.bf16.msra.mxu0 %v263
  %341 = vmatpush.bf16.msra.mxu0 %v262
  %342 = vmatpush.bf16.msra.mxu0 %v261
  %343 = vmatpush.bf16.msra.mxu0 %v260
  %344 = vmatpush.bf16.msra.mxu0 %v259
  %345 = vmatpush.bf16.msra.mxu0 %v258
  %346 = vmatpush.bf16.msra.mxu0 %v257
  %347 = vmatmul.bf16.gmra.mxu0 %v100
  %v348 = vpop.f32.mrf.mxu0
  %v349 = vadd.f32 %v335, %v348
  %v350 = vpop.f32.mrf.mxu0
  %v351 = vadd.f32 %v337, %v350
  %352 = vdwg.mxu0
  %v353 = vld [vmem:[%s2] sm:$0xff]
  %v354 = vld [vmem:[%s2 + $0x8] sm:$0xff]
  %v355 = vld [vmem:[%s3] sm:$0xff]
  %v356 = vld [vmem:[%s3 + $0x8] sm:$0xff]
  %358 = vset.pattern.permute.xlu0 0
  %359 = vperm.xlu0 %358, %v353
  %v360 = vpop.permute.xlu0 %359
  %363 = vset.pattern.permute.xlu0 0
  %364 = vperm.xlu0 %363, %v354
  %v365 = vpop.permute.xlu0 %364
  %v367 = vmul.f32 %v349, %v360
  %v368 = vmul.f32 %v351, %v365
  %370 = vset.pattern.permute.xlu0 0
  %371 = vperm.xlu0 %370, %v355
  %v372 = vpop.permute.xlu0 %371
  %375 = vset.pattern.permute.xlu0 0
  %376 = vperm.xlu0 %375, %v356
  %v377 = vpop.permute.xlu0 %376
  %v379 = vadd.f32 %v367, %v372
  %v380 = vadd.f32 %v368, %v377
  %vm381 = vcmp.ge.f32.partialorder %v379, 0.0
  %vm382 = vcmp.ge.f32.partialorder %v380, 0.0
  %v383 = vmul.f32 %v379, 0.04
  %v384 = vmul.f32 %v380, 0.04
  %v385 = vsel %vm381, %v379, %v383
  %v386 = vsel %vm382, %v380, %v384
  %387 = vst [vmem:[%s4] sm:$0xff] %v385
  %388 = vst [vmem:[%s4 + $0x8] sm:$0xff] %v386
  // Predicated region
  $region18: #{register_vae_forward.96} parent=0 // pred_check
    _
  $region19: #{register_vae_forward.96} parent=0 // pred_check_branch
    %390 = sbr.rel (0) target = $region21
  $region20: #{register_vae_forward.96} parent=0 // pred_region
    _
  $region21: #{register_vae_forward.96} parent=0 // pred_fallthru
    _
  // Predicated region
  $region22: #{register_vae_forward.96} parent=0 // pred_check
    _
  $region23: #{register_vae_forward.96} parent=0 // pred_check_branch
    %392 = sbr.rel (0) target = $region25
  $region24: #{register_vae_forward.96} parent=0 // pred_region
    _
  $region25: #{register_vae_forward.96} parent=0 // pred_fallthru
    _

// kernel: register_vae_forward.97
$region0: #{register_vae_forward.97}
  #allocation0 [shape = 'u32[]', space=smem, size = 0x4, offset = 0x4, fixed_abs, tag = 'smem constant byte address 0x4 - core index']
  #allocation1 [shape = 'u32[72,128]{1,0:T(1,128)}', space=vmem, size = 0x9000, scoped, tag = 'internal scratch']
  %s0 = inlined_call_operand.vmem [shape: bf16[16,512], index: 0, kind: input, shape index: {}]
  %s1 = inlined_call_operand.vmem [shape: bf16[512,128], index: 1, kind: input, shape index: {}]
  %s2 = inlined_call_operand.vmem [shape: f32[16,1], index: 2, kind: input, shape index: {}]
  %s3 = inlined_call_operand.vmem [shape: f32[16,1], index: 3, kind: input, shape index: {}]
  %s4 = inlined_call_operand.vmem [shape: f32[16,128], index: 4, kind: input, shape index: {}]
  %s5 = inlined_call_operand.vmem [shape: f32[16,128], index: 5, kind: output, shape index: {}]
  %s6 = sld [smem:[#allocation0]]
  $region30: #{register_vae_forward.97} parent=0
    _
  %s8 = ssub.s32 1, %s6
  %s9 = scalar_select 0, %s8, %s6
  // Predicated region
  $region2: #{register_vae_forward.97} parent=0 // pred_check
    _
  $region3: #{register_vae_forward.97} parent=0 // pred_check_branch
    %11 = sbr.rel (0) target = $region5
  $region4: #{register_vae_forward.97} parent=0 // pred_region
    _
  $region5: #{register_vae_forward.97} parent=0 // pred_fallthru
    _
  // Predicated region
  $region6: #{register_vae_forward.97} parent=0 // pred_check
    _
  $region7: #{register_vae_forward.97} parent=0 // pred_check_branch
    %13 = sbr.rel (0) target = $region9
  $region8: #{register_vae_forward.97} parent=0 // pred_region
    _
  $region9: #{register_vae_forward.97} parent=0 // pred_fallthru
    _
  // Predicated region
  $region10: #{register_vae_forward.97} parent=0 // pred_check
    _
  $region11: #{register_vae_forward.97} parent=0 // pred_check_branch
    %15 = sbr.rel (0) target = $region13
  $region12: #{register_vae_forward.97} parent=0 // pred_region
    _
  $region13: #{register_vae_forward.97} parent=0 // pred_fallthru
    _
  // Predicated region
  $region14: #{register_vae_forward.97} parent=0 // pred_check
    _
  $region15: #{register_vae_forward.97} parent=0 // pred_check_branch
    %17 = sbr.rel (0) target = $region17
  $region16: #{register_vae_forward.97} parent=0 // pred_region
    _
  $region17: #{register_vae_forward.97} parent=0 // pred_fallthru
    _
  // Predicated region
  $region18: #{register_vae_forward.97} parent=0 // pred_check
    _
  $region19: #{register_vae_forward.97} parent=0 // pred_check_branch
    %19 = sbr.rel (0) target = $region21
  $region20: #{register_vae_forward.97} parent=0 // pred_region
    _
  $region21: #{register_vae_forward.97} parent=0 // pred_fallthru
    _
  %v20 = vld [vmem:[%s4] sm:$0xff]
  %v21 = vld [vmem:[%s4 + $0x8] sm:$0xff]
  %v22 = vld [vmem:[%s0] sm:$0xff]
  %v23 = vld [vmem:[%s0 + $0x8] sm:$0xff]
  %v24 = vld [vmem:[%s0 + $0x10] sm:$0xff]
  %v25 = vld [vmem:[%s0 + $0x18] sm:$0xff]
  %v26 = vld [vmem:[%s1] sm:$0xf]
  %v27 = vld [vmem:[%s1 + $0x4] sm:$0xf]
  %v28 = vld [vmem:[%s1 + $0x8] sm:$0xf]
  %v29 = vld [vmem:[%s1 + $0xc] sm:$0xf]
  %v30 = vld [vmem:[%s1 + $0x10] sm:$0xf]
  %v31 = vld [vmem:[%s1 + $0x14] sm:$0xf]
  %v32 = vld [vmem:[%s1 + $0x18] sm:$0xf]
  %v33 = vld [vmem:[%s1 + $0x1c] sm:$0xf]
  %v34 = vld [vmem:[%s1 + $0x20] sm:$0xf]
  %v35 = vld [vmem:[%s1 + $0x24] sm:$0xf]
  %v36 = vld [vmem:[%s1 + $0x28] sm:$0xf]
  %v37 = vld [vmem:[%s1 + $0x2c] sm:$0xf]
  %v38 = vld [vmem:[%s1 + $0x30] sm:$0xf]
  %v39 = vld [vmem:[%s1 + $0x34] sm:$0xf]
  %v40 = vld [vmem:[%s1 + $0x38] sm:$0xf]
  %v41 = vld [vmem:[%s1 + $0x3c] sm:$0xf]
  %v42 = vld [vmem:[%s1 + $0x40] sm:$0xf]
  %v43 = vld [vmem:[%s1 + $0x44] sm:$0xf]
  %v44 = vld [vmem:[%s1 + $0x48] sm:$0xf]
  %v45 = vld [vmem:[%s1 + $0x4c] sm:$0xf]
  %v46 = vld [vmem:[%s1 + $0x50] sm:$0xf]
  %v47 = vld [vmem:[%s1 + $0x54] sm:$0xf]
  %v48 = vld [vmem:[%s1 + $0x58] sm:$0xf]
  %v49 = vld [vmem:[%s1 + $0x5c] sm:$0xf]
  %v50 = vld [vmem:[%s1 + $0x60] sm:$0xf]
  %v51 = vld [vmem:[%s1 + $0x64] sm:$0xf]
  %v52 = vld [vmem:[%s1 + $0x68] sm:$0xf]
  %v53 = vld [vmem:[%s1 + $0x6c] sm:$0xf]
  %v54 = vld [vmem:[%s1 + $0x70] sm:$0xf]
  %v55 = vld [vmem:[%s1 + $0x74] sm:$0xf]
  %v56 = vld [vmem:[%s1 + $0x78] sm:$0xf]
  %v57 = vld [vmem:[%s1 + $0x7c] sm:$0xf]
  %v58 = vld [vmem:[%s1 + $0x80] sm:$0xf]
  %v59 = vld [vmem:[%s1 + $0x84] sm:$0xf]
  %v60 = vld [vmem:[%s1 + $0x88] sm:$0xf]
  %v61 = vld [vmem:[%s1 + $0x8c] sm:$0xf]
  %v62 = vld [vmem:[%s1 + $0x90] sm:$0xf]
  %v63 = vld [vmem:[%s1 + $0x94] sm:$0xf]
  %v64 = vld [vmem:[%s1 + $0x98] sm:$0xf]
  %v65 = vld [vmem:[%s1 + $0x9c] sm:$0xf]
  %v66 = vld [vmem:[%s1 + $0xa0] sm:$0xf]
  %v67 = vld [vmem:[%s1 + $0xa4] sm:$0xf]
  %v68 = vld [vmem:[%s1 + $0xa8] sm:$0xf]
  %v69 = vld [vmem:[%s1 + $0xac] sm:$0xf]
  %v70 = vld [vmem:[%s1 + $0xb0] sm:$0xf]
  %v71 = vld [vmem:[%s1 + $0xb4] sm:$0xf]
  %v72 = vld [vmem:[%s1 + $0xb8] sm:$0xf]
  %v73 = vld [vmem:[%s1 + $0xbc] sm:$0xf]
  %v74 = vld [vmem:[%s1 + $0xc0] sm:$0xf]
  %v75 = vld [vmem:[%s1 + $0xc4] sm:$0xf]
  %v76 = vld [vmem:[%s1 + $0xc8] sm:$0xf]
  %v77 = vld [vmem:[%s1 + $0xcc] sm:$0xf]
  %v78 = vld [vmem:[%s1 + $0xd0] sm:$0xf]
  %v79 = vld [vmem:[%s1 + $0xd4] sm:$0xf]
  %v80 = vld [vmem:[%s1 + $0xd8] sm:$0xf]
  %v81 = vld [vmem:[%s1 + $0xdc] sm:$0xf]
  %v82 = vld [vmem:[%s1 + $0xe0] sm:$0xf]
  %v83 = vld [vmem:[%s1 + $0xe4] sm:$0xf]
  %v84 = vld [vmem:[%s1 + $0xe8] sm:$0xf]
  %v85 = vld [vmem:[%s1 + $0xec] sm:$0xf]
  %v86 = vld [vmem:[%s1 + $0xf0] sm:$0xf]
  %v87 = vld [vmem:[%s1 + $0xf4] sm:$0xf]
  %v88 = vld [vmem:[%s1 + $0xf8] sm:$0xf]
  %v89 = vld [vmem:[%s1 + $0xfc] sm:$0xf]
  %v94 = vunpack.c.l.b16 %v22
  %v95 = vunpack.c.h.b16 %v22
  %v96 = vunpack.c.l.b16 %v23
  %v97 = vunpack.c.h.b16 %v23
  %v98 = vunpack.c.l.b16 %v24
  %v99 = vunpack.c.h.b16 %v24
  %v100 = vunpack.c.l.b16 %v25
  %v101 = vunpack.c.h.b16 %v25
  %v102 = vpack.c.b16 %v98, %v94
  %v103 = vpack.c.b16 %v99, %v95
  %v104 = vpack.c.b16 %v100, %v96
  %v105 = vpack.c.b16 %v101, %v97
  %v174 = vunpack.c.l.b16 %v26
  %v175 = vunpack.c.l.b16 %v27
  %v176 = vunpack.c.l.b16 %v28
  %v177 = vunpack.c.l.b16 %v29
  %v178 = vunpack.c.l.b16 %v30
  %v179 = vunpack.c.l.b16 %v31
  %v180 = vunpack.c.l.b16 %v32
  %v181 = vunpack.c.l.b16 %v33
  %v182 = vunpack.c.l.b16 %v34
  %v183 = vunpack.c.l.b16 %v35
  %v184 = vunpack.c.l.b16 %v36
  %v185 = vunpack.c.l.b16 %v37
  %v186 = vunpack.c.l.b16 %v38
  %v187 = vunpack.c.l.b16 %v39
  %v188 = vunpack.c.l.b16 %v40
  %v189 = vunpack.c.l.b16 %v41
  %v190 = vunpack.c.l.b16 %v42
  %v191 = vunpack.c.l.b16 %v43
  %v192 = vunpack.c.l.b16 %v44
  %v193 = vunpack.c.l.b16 %v45
  %v194 = vunpack.c.l.b16 %v46
  %v195 = vunpack.c.l.b16 %v47
  %v196 = vunpack.c.l.b16 %v48
  %v197 = vunpack.c.l.b16 %v49
  %v198 = vunpack.c.l.b16 %v50
  %v199 = vunpack.c.l.b16 %v51
  %v200 = vunpack.c.l.b16 %v52
  %v201 = vunpack.c.l.b16 %v53
  %v202 = vunpack.c.l.b16 %v54
  %v203 = vunpack.c.l.b16 %v55
  %v204 = vunpack.c.l.b16 %v56
  %v205 = vunpack.c.l.b16 %v57
  %v206 = vunpack.c.l.b16 %v58
  %v207 = vunpack.c.l.b16 %v59
  %v208 = vunpack.c.l.b16 %v60
  %v209 = vunpack.c.l.b16 %v61
  %v210 = vunpack.c.l.b16 %v62
  %v211 = vunpack.c.l.b16 %v63
  %v212 = vunpack.c.l.b16 %v64
  %v213 = vunpack.c.l.b16 %v65
  %v214 = vunpack.c.l.b16 %v66
  %v215 = vunpack.c.l.b16 %v67
  %v216 = vunpack.c.l.b16 %v68
  %v217 = vunpack.c.l.b16 %v69
  %v218 = vunpack.c.l.b16 %v70
  %v219 = vunpack.c.l.b16 %v71
  %v220 = vunpack.c.l.b16 %v72
  %v221 = vunpack.c.l.b16 %v73
  %v222 = vunpack.c.l.b16 %v74
  %v223 = vunpack.c.l.b16 %v75
  %v224 = vunpack.c.l.b16 %v76
  %v225 = vunpack.c.l.b16 %v77
  %v226 = vunpack.c.l.b16 %v78
  %v227 = vunpack.c.l.b16 %v79
  %v228 = vunpack.c.l.b16 %v80
  %v229 = vunpack.c.l.b16 %v81
  %v230 = vunpack.c.l.b16 %v82
  %v231 = vunpack.c.l.b16 %v83
  %v232 = vunpack.c.l.b16 %v84
  %v233 = vunpack.c.l.b16 %v85
  %v234 = vunpack.c.l.b16 %v86
  %v235 = vunpack.c.l.b16 %v87
  %v236 = vunpack.c.l.b16 %v88
  %v237 = vunpack.c.l.b16 %v89
  %v238 = vpack.c.b16 %v175, %v174
  %v239 = vpack.c.b16 %v177, %v176
  %v240 = vpack.c.b16 %v179, %v178
  %v241 = vpack.c.b16 %v181, %v180
  %v242 = vpack.c.b16 %v183, %v182
  %v243 = vpack.c.b16 %v185, %v184
  %v244 = vpack.c.b16 %v187, %v186
  %v245 = vpack.c.b16 %v189, %v188
  %v246 = vpack.c.b16 %v191, %v190
  %v247 = vpack.c.b16 %v193, %v192
  %v248 = vpack.c.b16 %v195, %v194
  %v249 = vpack.c.b16 %v197, %v196
  %v250 = vpack.c.b16 %v199, %v198
  %v251 = vpack.c.b16 %v201, %v200
  %v252 = vpack.c.b16 %v203, %v202
  %v253 = vpack.c.b16 %v205, %v204
  %v254 = vpack.c.b16 %v207, %v206
  %v255 = vpack.c.b16 %v209, %v208
  %v256 = vpack.c.b16 %v211, %v210
  %v257 = vpack.c.b16 %v213, %v212
  %v258 = vpack.c.b16 %v215, %v214
  %v259 = vpack.c.b16 %v217, %v216
  %v260 = vpack.c.b16 %v219, %v218
  %v261 = vpack.c.b16 %v221, %v220
  %v262 = vpack.c.b16 %v223, %v222
  %v263 = vpack.c.b16 %v225, %v224
  %v264 = vpack.c.b16 %v227, %v226
  %v265 = vpack.c.b16 %v229, %v228
  %v266 = vpack.c.b16 %v231, %v230
  %v267 = vpack.c.b16 %v233, %v232
  %v268 = vpack.c.b16 %v235, %v234
  %v269 = vpack.c.b16 %v237, %v236
  %302 = vmatpush.bf16.msra.mxu0 %v245
  %303 = vmatpush.bf16.msra.mxu0 %v244
  %304 = vmatpush.bf16.msra.mxu0 %v243
  %305 = vmatpush.bf16.msra.mxu0 %v242
  %306 = vmatpush.bf16.msra.mxu0 %v241
  %307 = vmatpush.bf16.msra.mxu0 %v240
  %308 = vmatpush.bf16.msra.mxu0 %v239
  %309 = vmatpush.bf16.msra.mxu0 %v238
  %310 = vmatmul.bf16.gmra.mxu0 %v102
  %v311 = vpop.f32.mrf.mxu0
  %v312 = vadd.f32 0.0, %v311
  %v313 = vpop.f32.mrf.mxu0
  %v314 = vadd.f32 0.0, %v313
  %315 = vdwg.mxu0
  %316 = vmatpush.bf16.msra.mxu0 %v253
  %317 = vmatpush.bf16.msra.mxu0 %v252
  %318 = vmatpush.bf16.msra.mxu0 %v251
  %319 = vmatpush.bf16.msra.mxu0 %v250
  %320 = vmatpush.bf16.msra.mxu0 %v249
  %321 = vmatpush.bf16.msra.mxu0 %v248
  %322 = vmatpush.bf16.msra.mxu0 %v247
  %323 = vmatpush.bf16.msra.mxu0 %v246
  %324 = vmatmul.bf16.gmra.mxu0 %v103
  %v325 = vpop.f32.mrf.mxu0
  %v326 = vadd.f32 %v312, %v325
  %v327 = vpop.f32.mrf.mxu0
  %v328 = vadd.f32 %v314, %v327
  %329 = vdwg.mxu0
  %330 = vmatpush.bf16.msra.mxu0 %v261
  %331 = vmatpush.bf16.msra.mxu0 %v260
  %332 = vmatpush.bf16.msra.mxu0 %v259
  %333 = vmatpush.bf16.msra.mxu0 %v258
  %334 = vmatpush.bf16.msra.mxu0 %v257
  %335 = vmatpush.bf16.msra.mxu0 %v256
  %336 = vmatpush.bf16.msra.mxu0 %v255
  %337 = vmatpush.bf16.msra.mxu0 %v254
  %338 = vmatmul.bf16.gmra.mxu0 %v104
  %v339 = vpop.f32.mrf.mxu0
  %v340 = vadd.f32 %v326, %v339
  %v341 = vpop.f32.mrf.mxu0
  %v342 = vadd.f32 %v328, %v341
  %343 = vdwg.mxu0
  %344 = vmatpush.bf16.msra.mxu0 %v269
  %345 = vmatpush.bf16.msra.mxu0 %v268
  %346 = vmatpush.bf16.msra.mxu0 %v267
  %347 = vmatpush.bf16.msra.mxu0 %v266
  %348 = vmatpush.bf16.msra.mxu0 %v265
  %349 = vmatpush.bf16.msra.mxu0 %v264
  %350 = vmatpush.bf16.msra.mxu0 %v263
  %351 = vmatpush.bf16.msra.mxu0 %v262
  %352 = vmatmul.bf16.gmra.mxu0 %v105
  %v353 = vpop.f32.mrf.mxu0
  %v354 = vadd.f32 %v340, %v353
  %v355 = vpop.f32.mrf.mxu0
  %v356 = vadd.f32 %v342, %v355
  %357 = vdwg.mxu0
  %v358 = vld [vmem:[%s2] sm:$0xff]
  %v359 = vld [vmem:[%s2 + $0x8] sm:$0xff]
  %v360 = vld [vmem:[%s3] sm:$0xff]
  %v361 = vld [vmem:[%s3 + $0x8] sm:$0xff]
  %363 = vset.pattern.permute.xlu0 0
  %364 = vperm.xlu0 %363, %v358
  %v365 = vpop.permute.xlu0 %364
  %368 = vset.pattern.permute.xlu0 0
  %369 = vperm.xlu0 %368, %v359
  %v370 = vpop.permute.xlu0 %369
  %v372 = vmul.f32 %v354, %v365
  %v373 = vmul.f32 %v356, %v370
  %375 = vset.pattern.permute.xlu0 0
  %376 = vperm.xlu0 %375, %v360
  %v377 = vpop.permute.xlu0 %376
  %380 = vset.pattern.permute.xlu0 0
  %381 = vperm.xlu0 %380, %v361
  %v382 = vpop.permute.xlu0 %381
  %v384 = vadd.f32 %v372, %v377
  %v385 = vadd.f32 %v373, %v382
  %vm386 = vcmp.ge.f32.partialorder %v384, 0.0
  %vm387 = vcmp.ge.f32.partialorder %v385, 0.0
  %v388 = vmul.f32 %v384, 0.04
  %v389 = vmul.f32 %v385, 0.04
  %v390 = vsel %vm386, %v384, %v388
  %v391 = vsel %vm387, %v385, %v389
  %v392 = vadd.f32 %v390, %v20
  %v393 = vadd.f32 %v391, %v21
  %394 = vst [vmem:[%s5] sm:$0xff] %v392
  %395 = vst [vmem:[%s5 + $0x8] sm:$0xff] %v393
  // Predicated region
  $region22: #{register_vae_forward.97} parent=0 // pred_check
    _
  $region23: #{register_vae_forward.97} parent=0 // pred_check_branch
    %397 = sbr.rel (0) target = $region25
  $region24: #{register_vae_forward.97} parent=0 // pred_region
    _
  $region25: #{register_vae_forward.97} parent=0 // pred_fallthru
    _
  // Predicated region
  $region26: #{register_vae_forward.97} parent=0 // pred_check
    _
  $region27: #{register_vae_forward.97} parent=0 // pred_check_branch
    %399 = sbr.rel (0) target = $region29
  $region28: #{register_vae_forward.97} parent=0 // pred_region
    _
  $region29: #{register_vae_forward.97} parent=0 // pred_fallthru
    _

// kernel: register_vae_forward.100
$region0: #{register_vae_forward.100}
  #allocation0 [shape = 'u32[]', space=smem, size = 0x4, offset = 0x4, fixed_abs, tag = 'smem constant byte address 0x4 - core index']
  #allocation1 [shape = 'u32[72,128]{1,0:T(1,128)}', space=vmem, size = 0x9000, scoped, tag = 'internal scratch']
  %s0 = inlined_call_operand.vmem [shape: bf16[16,512], index: 0, kind: input, shape index: {}]
  %s1 = inlined_call_operand.vmem [shape: bf16[512,128], index: 1, kind: input, shape index: {}]
  %s2 = inlined_call_operand.vmem [shape: f32[16,1], index: 2, kind: input, shape index: {}]
  %s3 = inlined_call_operand.vmem [shape: f32[16,1], index: 3, kind: input, shape index: {}]
  %s4 = inlined_call_operand.vmem [shape: f32[16,128], index: 4, kind: output, shape index: {}]
  %s5 = sld [smem:[#allocation0]]
  $region26: #{register_vae_forward.100} parent=0
    _
  %s7 = ssub.s32 1, %s5
  %s8 = scalar_select 0, %s7, %s5
  // Predicated region
  $region2: #{register_vae_forward.100} parent=0 // pred_check
    _
  $region3: #{register_vae_forward.100} parent=0 // pred_check_branch
    %10 = sbr.rel (0) target = $region5
  $region4: #{register_vae_forward.100} parent=0 // pred_region
    _
  $region5: #{register_vae_forward.100} parent=0 // pred_fallthru
    _
  // Predicated region
  $region6: #{register_vae_forward.100} parent=0 // pred_check
    _
  $region7: #{register_vae_forward.100} parent=0 // pred_check_branch
    %12 = sbr.rel (0) target = $region9
  $region8: #{register_vae_forward.100} parent=0 // pred_region
    _
  $region9: #{register_vae_forward.100} parent=0 // pred_fallthru
    _
  // Predicated region
  $region10: #{register_vae_forward.100} parent=0 // pred_check
    _
  $region11: #{register_vae_forward.100} parent=0 // pred_check_branch
    %14 = sbr.rel (0) target = $region13
  $region12: #{register_vae_forward.100} parent=0 // pred_region
    _
  $region13: #{register_vae_forward.100} parent=0 // pred_fallthru
    _
  // Predicated region
  $region14: #{register_vae_forward.100} parent=0 // pred_check
    _
  $region15: #{register_vae_forward.100} parent=0 // pred_check_branch
    %16 = sbr.rel (0) target = $region17
  $region16: #{register_vae_forward.100} parent=0 // pred_region
    _
  $region17: #{register_vae_forward.100} parent=0 // pred_fallthru
    _
  %v17 = vld [vmem:[%s0] sm:$0xff]
  %v18 = vld [vmem:[%s0 + $0x8] sm:$0xff]
  %v19 = vld [vmem:[%s0 + $0x10] sm:$0xff]
  %v20 = vld [vmem:[%s0 + $0x18] sm:$0xff]
  %v21 = vld [vmem:[%s1] sm:$0xf]
  %v22 = vld [vmem:[%s1 + $0x4] sm:$0xf]
  %v23 = vld [vmem:[%s1 + $0x8] sm:$0xf]
  %v24 = vld [vmem:[%s1 + $0xc] sm:$0xf]
  %v25 = vld [vmem:[%s1 + $0x10] sm:$0xf]
  %v26 = vld [vmem:[%s1 + $0x14] sm:$0xf]
  %v27 = vld [vmem:[%s1 + $0x18] sm:$0xf]
  %v28 = vld [vmem:[%s1 + $0x1c] sm:$0xf]
  %v29 = vld [vmem:[%s1 + $0x20] sm:$0xf]
  %v30 = vld [vmem:[%s1 + $0x24] sm:$0xf]
  %v31 = vld [vmem:[%s1 + $0x28] sm:$0xf]
  %v32 = vld [vmem:[%s1 + $0x2c] sm:$0xf]
  %v33 = vld [vmem:[%s1 + $0x30] sm:$0xf]
  %v34 = vld [vmem:[%s1 + $0x34] sm:$0xf]
  %v35 = vld [vmem:[%s1 + $0x38] sm:$0xf]
  %v36 = vld [vmem:[%s1 + $0x3c] sm:$0xf]
  %v37 = vld [vmem:[%s1 + $0x40] sm:$0xf]
  %v38 = vld [vmem:[%s1 + $0x44] sm:$0xf]
  %v39 = vld [vmem:[%s1 + $0x48] sm:$0xf]
  %v40 = vld [vmem:[%s1 + $0x4c] sm:$0xf]
  %v41 = vld [vmem:[%s1 + $0x50] sm:$0xf]
  %v42 = vld [vmem:[%s1 + $0x54] sm:$0xf]
  %v43 = vld [vmem:[%s1 + $0x58] sm:$0xf]
  %v44 = vld [vmem:[%s1 + $0x5c] sm:$0xf]
  %v45 = vld [vmem:[%s1 + $0x60] sm:$0xf]
  %v46 = vld [vmem:[%s1 + $0x64] sm:$0xf]
  %v47 = vld [vmem:[%s1 + $0x68] sm:$0xf]
  %v48 = vld [vmem:[%s1 + $0x6c] sm:$0xf]
  %v49 = vld [vmem:[%s1 + $0x70] sm:$0xf]
  %v50 = vld [vmem:[%s1 + $0x74] sm:$0xf]
  %v51 = vld [vmem:[%s1 + $0x78] sm:$0xf]
  %v52 = vld [vmem:[%s1 + $0x7c] sm:$0xf]
  %v53 = vld [vmem:[%s1 + $0x80] sm:$0xf]
  %v54 = vld [vmem:[%s1 + $0x84] sm:$0xf]
  %v55 = vld [vmem:[%s1 + $0x88] sm:$0xf]
  %v56 = vld [vmem:[%s1 + $0x8c] sm:$0xf]
  %v57 = vld [vmem:[%s1 + $0x90] sm:$0xf]
  %v58 = vld [vmem:[%s1 + $0x94] sm:$0xf]
  %v59 = vld [vmem:[%s1 + $0x98] sm:$0xf]
  %v60 = vld [vmem:[%s1 + $0x9c] sm:$0xf]
  %v61 = vld [vmem:[%s1 + $0xa0] sm:$0xf]
  %v62 = vld [vmem:[%s1 + $0xa4] sm:$0xf]
  %v63 = vld [vmem:[%s1 + $0xa8] sm:$0xf]
  %v64 = vld [vmem:[%s1 + $0xac] sm:$0xf]
  %v65 = vld [vmem:[%s1 + $0xb0] sm:$0xf]
  %v66 = vld [vmem:[%s1 + $0xb4] sm:$0xf]
  %v67 = vld [vmem:[%s1 + $0xb8] sm:$0xf]
  %v68 = vld [vmem:[%s1 + $0xbc] sm:$0xf]
  %v69 = vld [vmem:[%s1 + $0xc0] sm:$0xf]
  %v70 = vld [vmem:[%s1 + $0xc4] sm:$0xf]
  %v71 = vld [vmem:[%s1 + $0xc8] sm:$0xf]
  %v72 = vld [vmem:[%s1 + $0xcc] sm:$0xf]
  %v73 = vld [vmem:[%s1 + $0xd0] sm:$0xf]
  %v74 = vld [vmem:[%s1 + $0xd4] sm:$0xf]
  %v75 = vld [vmem:[%s1 + $0xd8] sm:$0xf]
  %v76 = vld [vmem:[%s1 + $0xdc] sm:$0xf]
  %v77 = vld [vmem:[%s1 + $0xe0] sm:$0xf]
  %v78 = vld [vmem:[%s1 + $0xe4] sm:$0xf]
  %v79 = vld [vmem:[%s1 + $0xe8] sm:$0xf]
  %v80 = vld [vmem:[%s1 + $0xec] sm:$0xf]
  %v81 = vld [vmem:[%s1 + $0xf0] sm:$0xf]
  %v82 = vld [vmem:[%s1 + $0xf4] sm:$0xf]
  %v83 = vld [vmem:[%s1 + $0xf8] sm:$0xf]
  %v84 = vld [vmem:[%s1 + $0xfc] sm:$0xf]
  %v89 = vunpack.c.l.b16 %v17
  %v90 = vunpack.c.h.b16 %v17
  %v91 = vunpack.c.l.b16 %v18
  %v92 = vunpack.c.h.b16 %v18
  %v93 = vunpack.c.l.b16 %v19
  %v94 = vunpack.c.h.b16 %v19
  %v95 = vunpack.c.l.b16 %v20
  %v96 = vunpack.c.h.b16 %v20
  %v97 = vpack.c.b16 %v93, %v89
  %v98 = vpack.c.b16 %v94, %v90
  %v99 = vpack.c.b16 %v95, %v91
  %v100 = vpack.c.b16 %v96, %v92
  %v169 = vunpack.c.l.b16 %v21
  %v170 = vunpack.c.l.b16 %v22
  %v171 = vunpack.c.l.b16 %v23
  %v172 = vunpack.c.l.b16 %v24
  %v173 = vunpack.c.l.b16 %v25
  %v174 = vunpack.c.l.b16 %v26
  %v175 = vunpack.c.l.b16 %v27
  %v176 = vunpack.c.l.b16 %v28
  %v177 = vunpack.c.l.b16 %v29
  %v178 = vunpack.c.l.b16 %v30
  %v179 = vunpack.c.l.b16 %v31
  %v180 = vunpack.c.l.b16 %v32
  %v181 = vunpack.c.l.b16 %v33
  %v182 = vunpack.c.l.b16 %v34
  %v183 = vunpack.c.l.b16 %v35
  %v184 = vunpack.c.l.b16 %v36
  %v185 = vunpack.c.l.b16 %v37
  %v186 = vunpack.c.l.b16 %v38
  %v187 = vunpack.c.l.b16 %v39
  %v188 = vunpack.c.l.b16 %v40
  %v189 = vunpack.c.l.b16 %v41
  %v190 = vunpack.c.l.b16 %v42
  %v191 = vunpack.c.l.b16 %v43
  %v192 = vunpack.c.l.b16 %v44
  %v193 = vunpack.c.l.b16 %v45
  %v194 = vunpack.c.l.b16 %v46
  %v195 = vunpack.c.l.b16 %v47
  %v196 = vunpack.c.l.b16 %v48
  %v197 = vunpack.c.l.b16 %v49
  %v198 = vunpack.c.l.b16 %v50
  %v199 = vunpack.c.l.b16 %v51
  %v200 = vunpack.c.l.b16 %v52
  %v201 = vunpack.c.l.b16 %v53
  %v202 = vunpack.c.l.b16 %v54
  %v203 = vunpack.c.l.b16 %v55
  %v204 = vunpack.c.l.b16 %v56
  %v205 = vunpack.c.l.b16 %v57
  %v206 = vunpack.c.l.b16 %v58
  %v207 = vunpack.c.l.b16 %v59
  %v208 = vunpack.c.l.b16 %v60
  %v209 = vunpack.c.l.b16 %v61
  %v210 = vunpack.c.l.b16 %v62
  %v211 = vunpack.c.l.b16 %v63
  %v212 = vunpack.c.l.b16 %v64
  %v213 = vunpack.c.l.b16 %v65
  %v214 = vunpack.c.l.b16 %v66
  %v215 = vunpack.c.l.b16 %v67
  %v216 = vunpack.c.l.b16 %v68
  %v217 = vunpack.c.l.b16 %v69
  %v218 = vunpack.c.l.b16 %v70
  %v219 = vunpack.c.l.b16 %v71
  %v220 = vunpack.c.l.b16 %v72
  %v221 = vunpack.c.l.b16 %v73
  %v222 = vunpack.c.l.b16 %v74
  %v223 = vunpack.c.l.b16 %v75
  %v224 = vunpack.c.l.b16 %v76
  %v225 = vunpack.c.l.b16 %v77
  %v226 = vunpack.c.l.b16 %v78
  %v227 = vunpack.c.l.b16 %v79
  %v228 = vunpack.c.l.b16 %v80
  %v229 = vunpack.c.l.b16 %v81
  %v230 = vunpack.c.l.b16 %v82
  %v231 = vunpack.c.l.b16 %v83
  %v232 = vunpack.c.l.b16 %v84
  %v233 = vpack.c.b16 %v170, %v169
  %v234 = vpack.c.b16 %v172, %v171
  %v235 = vpack.c.b16 %v174, %v173
  %v236 = vpack.c.b16 %v176, %v175
  %v237 = vpack.c.b16 %v178, %v177
  %v238 = vpack.c.b16 %v180, %v179
  %v239 = vpack.c.b16 %v182, %v181
  %v240 = vpack.c.b16 %v184, %v183
  %v241 = vpack.c.b16 %v186, %v185
  %v242 = vpack.c.b16 %v188, %v187
  %v243 = vpack.c.b16 %v190, %v189
  %v244 = vpack.c.b16 %v192, %v191
  %v245 = vpack.c.b16 %v194, %v193
  %v246 = vpack.c.b16 %v196, %v195
  %v247 = vpack.c.b16 %v198, %v197
  %v248 = vpack.c.b16 %v200, %v199
  %v249 = vpack.c.b16 %v202, %v201
  %v250 = vpack.c.b16 %v204, %v203
  %v251 = vpack.c.b16 %v206, %v205
  %v252 = vpack.c.b16 %v208, %v207
  %v253 = vpack.c.b16 %v210, %v209
  %v254 = vpack.c.b16 %v212, %v211
  %v255 = vpack.c.b16 %v214, %v213
  %v256 = vpack.c.b16 %v216, %v215
  %v257 = vpack.c.b16 %v218, %v217
  %v258 = vpack.c.b16 %v220, %v219
  %v259 = vpack.c.b16 %v222, %v221
  %v260 = vpack.c.b16 %v224, %v223
  %v261 = vpack.c.b16 %v226, %v225
  %v262 = vpack.c.b16 %v228, %v227
  %v263 = vpack.c.b16 %v230, %v229
  %v264 = vpack.c.b16 %v232, %v231
  %297 = vmatpush.bf16.msra.mxu0 %v240
  %298 = vmatpush.bf16.msra.mxu0 %v239
  %299 = vmatpush.bf16.msra.mxu0 %v238
  %300 = vmatpush.bf16.msra.mxu0 %v237
  %301 = vmatpush.bf16.msra.mxu0 %v236
  %302 = vmatpush.bf16.msra.mxu0 %v235
  %303 = vmatpush.bf16.msra.mxu0 %v234
  %304 = vmatpush.bf16.msra.mxu0 %v233
  %305 = vmatmul.bf16.gmra.mxu0 %v97
  %v306 = vpop.f32.mrf.mxu0
  %v307 = vadd.f32 0.0, %v306
  %v308 = vpop.f32.mrf.mxu0
  %v309 = vadd.f32 0.0, %v308
  %310 = vdwg.mxu0
  %311 = vmatpush.bf16.msra.mxu0 %v248
  %312 = vmatpush.bf16.msra.mxu0 %v247
  %313 = vmatpush.bf16.msra.mxu0 %v246
  %314 = vmatpush.bf16.msra.mxu0 %v245
  %315 = vmatpush.bf16.msra.mxu0 %v244
  %316 = vmatpush.bf16.msra.mxu0 %v243
  %317 = vmatpush.bf16.msra.mxu0 %v242
  %318 = vmatpush.bf16.msra.mxu0 %v241
  %319 = vmatmul.bf16.gmra.mxu0 %v98
  %v320 = vpop.f32.mrf.mxu0
  %v321 = vadd.f32 %v307, %v320
  %v322 = vpop.f32.mrf.mxu0
  %v323 = vadd.f32 %v309, %v322
  %324 = vdwg.mxu0
  %325 = vmatpush.bf16.msra.mxu0 %v256
  %326 = vmatpush.bf16.msra.mxu0 %v255
  %327 = vmatpush.bf16.msra.mxu0 %v254
  %328 = vmatpush.bf16.msra.mxu0 %v253
  %329 = vmatpush.bf16.msra.mxu0 %v252
  %330 = vmatpush.bf16.msra.mxu0 %v251
  %331 = vmatpush.bf16.msra.mxu0 %v250
  %332 = vmatpush.bf16.msra.mxu0 %v249
  %333 = vmatmul.bf16.gmra.mxu0 %v99
  %v334 = vpop.f32.mrf.mxu0
  %v335 = vadd.f32 %v321, %v334
  %v336 = vpop.f32.mrf.mxu0
  %v337 = vadd.f32 %v323, %v336
  %338 = vdwg.mxu0
  %339 = vmatpush.bf16.msra.mxu0 %v264
  %340 = vmatpush.bf16.msra.mxu0 %v263
  %341 = vmatpush.bf16.msra.mxu0 %v262
  %342 = vmatpush.bf16.msra.mxu0 %v261
  %343 = vmatpush.bf16.msra.mxu0 %v260
  %344 = vmatpush.bf16.msra.mxu0 %v259
  %345 = vmatpush.bf16.msra.mxu0 %v258
  %346 = vmatpush.bf16.msra.mxu0 %v257
  %347 = vmatmul.bf16.gmra.mxu0 %v100
  %v348 = vpop.f32.mrf.mxu0
  %v349 = vadd.f32 %v335, %v348
  %v350 = vpop.f32.mrf.mxu0
  %v351 = vadd.f32 %v337, %v350
  %352 = vdwg.mxu0
  %v353 = vld [vmem:[%s2] sm:$0xff]
  %v354 = vld [vmem:[%s2 + $0x8] sm:$0xff]
  %v355 = vld [vmem:[%s3] sm:$0xff]
  %v356 = vld [vmem:[%s3 + $0x8] sm:$0xff]
  %358 = vset.pattern.permute.xlu0 0
  %359 = vperm.xlu0 %358, %v353
  %v360 = vpop.permute.xlu0 %359
  %363 = vset.pattern.permute.xlu0 0
  %364 = vperm.xlu0 %363, %v354
  %v365 = vpop.permute.xlu0 %364
  %v367 = vmul.f32 %v349, %v360
  %v368 = vmul.f32 %v351, %v365
  %370 = vset.pattern.permute.xlu0 0
  %371 = vperm.xlu0 %370, %v355
  %v372 = vpop.permute.xlu0 %371
  %375 = vset.pattern.permute.xlu0 0
  %376 = vperm.xlu0 %375, %v356
  %v377 = vpop.permute.xlu0 %376
  %v379 = vadd.f32 %v367, %v372
  %v380 = vadd.f32 %v368, %v377
  %vm381 = vcmp.ge.f32.partialorder %v379, 0.0
  %vm382 = vcmp.ge.f32.partialorder %v380, 0.0
  %v383 = vmul.f32 %v379, 0.2
  %v384 = vmul.f32 %v380, 0.2
  %v385 = vsel %vm381, %v379, %v383
  %v386 = vsel %vm382, %v380, %v384
  %387 = vst [vmem:[%s4] sm:$0xff] %v385
  %388 = vst [vmem:[%s4 + $0x8] sm:$0xff] %v386
  // Predicated region
  $region18: #{register_vae_forward.100} parent=0 // pred_check
    _
  $region19: #{register_vae_forward.100} parent=0 // pred_check_branch
    %390 = sbr.rel (0) target = $region21
  $region20: #{register_vae_forward.100} parent=0 // pred_region
    _
  $region21: #{register_vae_forward.100} parent=0 // pred_fallthru
    _
  // Predicated region
  $region22: #{register_vae_forward.100} parent=0 // pred_check
    _
  $region23: #{register_vae_forward.100} parent=0 // pred_check_branch
    %392 = sbr.rel (0) target = $region25
  $region24: #{register_vae_forward.100} parent=0 // pred_region
    _
  $region25: #{register_vae_forward.100} parent=0 // pred_fallthru
    _

// kernel: register_vae_forward.155
$region0: #{register_vae_forward.155}
  #allocation0 [shape = 'u32[]', space=smem, size = 0x4, offset = 0x4, fixed_abs, tag = 'smem constant byte address 0x4 - core index']
  #allocation1 [shape = 'u32[72,128]{1,0:T(1,128)}', space=vmem, size = 0x9000, scoped, tag = 'internal scratch']
  %s0 = inlined_call_operand.vmem [shape: bf16[8,512], index: 0, kind: input, shape index: {}]
  %s1 = inlined_call_operand.vmem [shape: bf16[512,32], index: 1, kind: input, shape index: {}]
  %s2 = inlined_call_operand.vmem [shape: f32[8,1], index: 2, kind: input, shape index: {}]
  %s3 = inlined_call_operand.vmem [shape: f32[8,1], index: 3, kind: input, shape index: {}]
  %s4 = inlined_call_operand.vmem [shape: f32[8,32], index: 4, kind: output, shape index: {}]
  %s5 = sld [smem:[#allocation0]]
  $region26: #{register_vae_forward.155} parent=0
    _
  %s7 = ssub.s32 1, %s5
  %s8 = scalar_select 0, %s7, %s5
  // Predicated region
  $region2: #{register_vae_forward.155} parent=0 // pred_check
    _
  $region3: #{register_vae_forward.155} parent=0 // pred_check_branch
    %10 = sbr.rel (0) target = $region5
  $region4: #{register_vae_forward.155} parent=0 // pred_region
    _
  $region5: #{register_vae_forward.155} parent=0 // pred_fallthru
    _
  // Predicated region
  $region6: #{register_vae_forward.155} parent=0 // pred_check
    _
  $region7: #{register_vae_forward.155} parent=0 // pred_check_branch
    %12 = sbr.rel (0) target = $region9
  $region8: #{register_vae_forward.155} parent=0 // pred_region
    _
  $region9: #{register_vae_forward.155} parent=0 // pred_fallthru
    _
  // Predicated region
  $region10: #{register_vae_forward.155} parent=0 // pred_check
    _
  $region11: #{register_vae_forward.155} parent=0 // pred_check_branch
    %14 = sbr.rel (0) target = $region13
  $region12: #{register_vae_forward.155} parent=0 // pred_region
    _
  $region13: #{register_vae_forward.155} parent=0 // pred_fallthru
    _
  // Predicated region
  $region14: #{register_vae_forward.155} parent=0 // pred_check
    _
  $region15: #{register_vae_forward.155} parent=0 // pred_check_branch
    %16 = sbr.rel (0) target = $region17
  $region16: #{register_vae_forward.155} parent=0 // pred_region
    _
  $region17: #{register_vae_forward.155} parent=0 // pred_fallthru
    _
  %v17 = vld [vmem:[%s0] sm:$0xff]
  %v18 = vld [vmem:[%s0 + $0x8] sm:$0xff]
  %v19 = vld [vmem:[%s1] sm:$0xf]
  %v20 = vld [vmem:[%s1 + $0x4] sm:$0xf]
  %v21 = vld [vmem:[%s1 + $0x8] sm:$0xf]
  %v22 = vld [vmem:[%s1 + $0xc] sm:$0xf]
  %v23 = vld [vmem:[%s1 + $0x10] sm:$0xf]
  %v24 = vld [vmem:[%s1 + $0x14] sm:$0xf]
  %v25 = vld [vmem:[%s1 + $0x18] sm:$0xf]
  %v26 = vld [vmem:[%s1 + $0x1c] sm:$0xf]
  %v27 = vld [vmem:[%s1 + $0x20] sm:$0xf]
  %v28 = vld [vmem:[%s1 + $0x24] sm:$0xf]
  %v29 = vld [vmem:[%s1 + $0x28] sm:$0xf]
  %v30 = vld [vmem:[%s1 + $0x2c] sm:$0xf]
  %v31 = vld [vmem:[%s1 + $0x30] sm:$0xf]
  %v32 = vld [vmem:[%s1 + $0x34] sm:$0xf]
  %v33 = vld [vmem:[%s1 + $0x38] sm:$0xf]
  %v34 = vld [vmem:[%s1 + $0x3c] sm:$0xf]
  %v35 = vld [vmem:[%s1 + $0x40] sm:$0xf]
  %v36 = vld [vmem:[%s1 + $0x44] sm:$0xf]
  %v37 = vld [vmem:[%s1 + $0x48] sm:$0xf]
  %v38 = vld [vmem:[%s1 + $0x4c] sm:$0xf]
  %v39 = vld [vmem:[%s1 + $0x50] sm:$0xf]
  %v40 = vld [vmem:[%s1 + $0x54] sm:$0xf]
  %v41 = vld [vmem:[%s1 + $0x58] sm:$0xf]
  %v42 = vld [vmem:[%s1 + $0x5c] sm:$0xf]
  %v43 = vld [vmem:[%s1 + $0x60] sm:$0xf]
  %v44 = vld [vmem:[%s1 + $0x64] sm:$0xf]
  %v45 = vld [vmem:[%s1 + $0x68] sm:$0xf]
  %v46 = vld [vmem:[%s1 + $0x6c] sm:$0xf]
  %v47 = vld [vmem:[%s1 + $0x70] sm:$0xf]
  %v48 = vld [vmem:[%s1 + $0x74] sm:$0xf]
  %v49 = vld [vmem:[%s1 + $0x78] sm:$0xf]
  %v50 = vld [vmem:[%s1 + $0x7c] sm:$0xf]
  %v51 = vld [vmem:[%s1 + $0x80] sm:$0xf]
  %v52 = vld [vmem:[%s1 + $0x84] sm:$0xf]
  %v53 = vld [vmem:[%s1 + $0x88] sm:$0xf]
  %v54 = vld [vmem:[%s1 + $0x8c] sm:$0xf]
  %v55 = vld [vmem:[%s1 + $0x90] sm:$0xf]
  %v56 = vld [vmem:[%s1 + $0x94] sm:$0xf]
  %v57 = vld [vmem:[%s1 + $0x98] sm:$0xf]
  %v58 = vld [vmem:[%s1 + $0x9c] sm:$0xf]
  %v59 = vld [vmem:[%s1 + $0xa0] sm:$0xf]
  %v60 = vld [vmem:[%s1 + $0xa4] sm:$0xf]
  %v61 = vld [vmem:[%s1 + $0xa8] sm:$0xf]
  %v62 = vld [vmem:[%s1 + $0xac] sm:$0xf]
  %v63 = vld [vmem:[%s1 + $0xb0] sm:$0xf]
  %v64 = vld [vmem:[%s1 + $0xb4] sm:$0xf]
  %v65 = vld [vmem:[%s1 + $0xb8] sm:$0xf]
  %v66 = vld [vmem:[%s1 + $0xbc] sm:$0xf]
  %v67 = vld [vmem:[%s1 + $0xc0] sm:$0xf]
  %v68 = vld [vmem:[%s1 + $0xc4] sm:$0xf]
  %v69 = vld [vmem:[%s1 + $0xc8] sm:$0xf]
  %v70 = vld [vmem:[%s1 + $0xcc] sm:$0xf]
  %v71 = vld [vmem:[%s1 + $0xd0] sm:$0xf]
  %v72 = vld [vmem:[%s1 + $0xd4] sm:$0xf]
  %v73 = vld [vmem:[%s1 + $0xd8] sm:$0xf]
  %v74 = vld [vmem:[%s1 + $0xdc] sm:$0xf]
  %v75 = vld [vmem:[%s1 + $0xe0] sm:$0xf]
  %v76 = vld [vmem:[%s1 + $0xe4] sm:$0xf]
  %v77 = vld [vmem:[%s1 + $0xe8] sm:$0xf]
  %v78 = vld [vmem:[%s1 + $0xec] sm:$0xf]
  %v79 = vld [vmem:[%s1 + $0xf0] sm:$0xf]
  %v80 = vld [vmem:[%s1 + $0xf4] sm:$0xf]
  %v81 = vld [vmem:[%s1 + $0xf8] sm:$0xf]
  %v82 = vld [vmem:[%s1 + $0xfc] sm:$0xf]
  %v85 = vunpack.c.l.b16 %v17
  %v86 = vunpack.c.h.b16 %v17
  %v87 = vunpack.c.l.b16 %v18
  %v88 = vunpack.c.h.b16 %v18
  %v89 = vpack.c.b16 %v85, %v85
  %v90 = vpack.c.b16 %v86, %v86
  %v91 = vpack.c.b16 %v87, %v87
  %v92 = vpack.c.b16 %v88, %v88
  %v161 = vunpack.c.l.b16 %v19
  %v162 = vunpack.c.l.b16 %v20
  %v163 = vunpack.c.l.b16 %v21
  %v164 = vunpack.c.l.b16 %v22
  %v165 = vunpack.c.l.b16 %v23
  %v166 = vunpack.c.l.b16 %v24
  %v167 = vunpack.c.l.b16 %v25
  %v168 = vunpack.c.l.b16 %v26
  %v169 = vunpack.c.l.b16 %v27
  %v170 = vunpack.c.l.b16 %v28
  %v171 = vunpack.c.l.b16 %v29
  %v172 = vunpack.c.l.b16 %v30
  %v173 = vunpack.c.l.b16 %v31
  %v174 = vunpack.c.l.b16 %v32
  %v175 = vunpack.c.l.b16 %v33
  %v176 = vunpack.c.l.b16 %v34
  %v177 = vunpack.c.l.b16 %v35
  %v178 = vunpack.c.l.b16 %v36
  %v179 = vunpack.c.l.b16 %v37
  %v180 = vunpack.c.l.b16 %v38
  %v181 = vunpack.c.l.b16 %v39
  %v182 = vunpack.c.l.b16 %v40
  %v183 = vunpack.c.l.b16 %v41
  %v184 = vunpack.c.l.b16 %v42
  %v185 = vunpack.c.l.b16 %v43
  %v186 = vunpack.c.l.b16 %v44
  %v187 = vunpack.c.l.b16 %v45
  %v188 = vunpack.c.l.b16 %v46
  %v189 = vunpack.c.l.b16 %v47
  %v190 = vunpack.c.l.b16 %v48
  %v191 = vunpack.c.l.b16 %v49
  %v192 = vunpack.c.l.b16 %v50
  %v193 = vunpack.c.l.b16 %v51
  %v194 = vunpack.c.l.b16 %v52
  %v195 = vunpack.c.l.b16 %v53
  %v196 = vunpack.c.l.b16 %v54
  %v197 = vunpack.c.l.b16 %v55
  %v198 = vunpack.c.l.b16 %v56
  %v199 = vunpack.c.l.b16 %v57
  %v200 = vunpack.c.l.b16 %v58
  %v201 = vunpack.c.l.b16 %v59
  %v202 = vunpack.c.l.b16 %v60
  %v203 = vunpack.c.l.b16 %v61
  %v204 = vunpack.c.l.b16 %v62
  %v205 = vunpack.c.l.b16 %v63
  %v206 = vunpack.c.l.b16 %v64
  %v207 = vunpack.c.l.b16 %v65
  %v208 = vunpack.c.l.b16 %v66
  %v209 = vunpack.c.l.b16 %v67
  %v210 = vunpack.c.l.b16 %v68
  %v211 = vunpack.c.l.b16 %v69
  %v212 = vunpack.c.l.b16 %v70
  %v213 = vunpack.c.l.b16 %v71
  %v214 = vunpack.c.l.b16 %v72
  %v215 = vunpack.c.l.b16 %v73
  %v216 = vunpack.c.l.b16 %v74
  %v217 = vunpack.c.l.b16 %v75
  %v218 = vunpack.c.l.b16 %v76
  %v219 = vunpack.c.l.b16 %v77
  %v220 = vunpack.c.l.b16 %v78
  %v221 = vunpack.c.l.b16 %v79
  %v222 = vunpack.c.l.b16 %v80
  %v223 = vunpack.c.l.b16 %v81
  %v224 = vunpack.c.l.b16 %v82
  %v225 = vpack.c.b16 %v162, %v161
  %v226 = vpack.c.b16 %v164, %v163
  %v227 = vpack.c.b16 %v166, %v165
  %v228 = vpack.c.b16 %v168, %v167
  %v229 = vpack.c.b16 %v170, %v169
  %v230 = vpack.c.b16 %v172, %v171
  %v231 = vpack.c.b16 %v174, %v173
  %v232 = vpack.c.b16 %v176, %v175
  %v233 = vpack.c.b16 %v178, %v177
  %v234 = vpack.c.b16 %v180, %v179
  %v235 = vpack.c.b16 %v182, %v181
  %v236 = vpack.c.b16 %v184, %v183
  %v237 = vpack.c.b16 %v186, %v185
  %v238 = vpack.c.b16 %v188, %v187
  %v239 = vpack.c.b16 %v190, %v189
  %v240 = vpack.c.b16 %v192, %v191
  %v241 = vpack.c.b16 %v194, %v193
  %v242 = vpack.c.b16 %v196, %v195
  %v243 = vpack.c.b16 %v198, %v197
  %v244 = vpack.c.b16 %v200, %v199
  %v245 = vpack.c.b16 %v202, %v201
  %v246 = vpack.c.b16 %v204, %v203
  %v247 = vpack.c.b16 %v206, %v205
  %v248 = vpack.c.b16 %v208, %v207
  %v249 = vpack.c.b16 %v210, %v209
  %v250 = vpack.c.b16 %v212, %v211
  %v251 = vpack.c.b16 %v214, %v213
  %v252 = vpack.c.b16 %v216, %v215
  %v253 = vpack.c.b16 %v218, %v217
  %v254 = vpack.c.b16 %v220, %v219
  %v255 = vpack.c.b16 %v222, %v221
  %v256 = vpack.c.b16 %v224, %v223
  %289 = vmatpush.bf16.msra.mxu0 %v232
  %290 = vmatpush.bf16.msra.mxu0 %v231
  %291 = vmatpush.bf16.msra.mxu0 %v230
  %292 = vmatpush.bf16.msra.mxu0 %v229
  %293 = vmatpush.bf16.msra.mxu0 %v228
  %294 = vmatpush.bf16.msra.mxu0 %v227
  %295 = vmatpush.bf16.msra.mxu0 %v226
  %296 = vmatpush.bf16.msra.mxu0 %v225
  %297 = vmatmul.bf16.gmra.mxu0 %v89
  %v298 = vpop.f32.mrf.mxu0
  %v299 = vadd.f32 0.0, %v298
  %v300 = vpop.f32.mrf.mxu0
  %301 = vdwg.mxu0
  %302 = vmatpush.bf16.msra.mxu0 %v240
  %303 = vmatpush.bf16.msra.mxu0 %v239
  %304 = vmatpush.bf16.msra.mxu0 %v238
  %305 = vmatpush.bf16.msra.mxu0 %v237
  %306 = vmatpush.bf16.msra.mxu0 %v236
  %307 = vmatpush.bf16.msra.mxu0 %v235
  %308 = vmatpush.bf16.msra.mxu0 %v234
  %309 = vmatpush.bf16.msra.mxu0 %v233
  %310 = vmatmul.bf16.gmra.mxu0 %v90
  %v311 = vpop.f32.mrf.mxu0
  %v312 = vadd.f32 %v299, %v311
  %v313 = vpop.f32.mrf.mxu0
  %314 = vdwg.mxu0
  %315 = vmatpush.bf16.msra.mxu0 %v248
  %316 = vmatpush.bf16.msra.mxu0 %v247
  %317 = vmatpush.bf16.msra.mxu0 %v246
  %318 = vmatpush.bf16.msra.mxu0 %v245
  %319 = vmatpush.bf16.msra.mxu0 %v244
  %320 = vmatpush.bf16.msra.mxu0 %v243
  %321 = vmatpush.bf16.msra.mxu0 %v242
  %322 = vmatpush.bf16.msra.mxu0 %v241
  %323 = vmatmul.bf16.gmra.mxu0 %v91
  %v324 = vpop.f32.mrf.mxu0
  %v325 = vadd.f32 %v312, %v324
  %v326 = vpop.f32.mrf.mxu0
  %327 = vdwg.mxu0
  %328 = vmatpush.bf16.msra.mxu0 %v256
  %329 = vmatpush.bf16.msra.mxu0 %v255
  %330 = vmatpush.bf16.msra.mxu0 %v254
  %331 = vmatpush.bf16.msra.mxu0 %v253
  %332 = vmatpush.bf16.msra.mxu0 %v252
  %333 = vmatpush.bf16.msra.mxu0 %v251
  %334 = vmatpush.bf16.msra.mxu0 %v250
  %335 = vmatpush.bf16.msra.mxu0 %v249
  %336 = vmatmul.bf16.gmra.mxu0 %v92
  %v337 = vpop.f32.mrf.mxu0
  %v338 = vadd.f32 %v325, %v337
  %v339 = vpop.f32.mrf.mxu0
  %340 = vdwg.mxu0
  %v341 = vld [vmem:[%s2] sm:$0xff]
  %v342 = vld [vmem:[%s3] sm:$0xff]
  %344 = vset.pattern.permute.xlu0 0
  %345 = vperm.xlu0 %344, %v341
  %v346 = vpop.permute.xlu0 %345
  %v348 = vmul.f32 %v338, %v346
  %350 = vset.pattern.permute.xlu0 0
  %351 = vperm.xlu0 %350, %v342
  %v352 = vpop.permute.xlu0 %351
  %v354 = vadd.f32 %v348, %v352
  %vm355 = vcmp.ge.f32.partialorder %v354, 0.0
  %v356 = vmul.f32 %v354, 0.04
  %v357 = vsel %vm355, %v354, %v356
  %vm358 = vcmask 261120
  %359 = vst.msk [vmem:[%s4] sm:$0xff] %vm358, %v357
  // Predicated region
  $region18: #{register_vae_forward.155} parent=0 // pred_check
    _
  $region19: #{register_vae_forward.155} parent=0 // pred_check_branch
    %361 = sbr.rel (0) target = $region21
  $region20: #{register_vae_forward.155} parent=0 // pred_region
    _
  $region21: #{register_vae_forward.155} parent=0 // pred_fallthru
    _
  // Predicated region
  $region22: #{register_vae_forward.155} parent=0 // pred_check
    _
  $region23: #{register_vae_forward.155} parent=0 // pred_check_branch
    %363 = sbr.rel (0) target = $region25
  $region24: #{register_vae_forward.155} parent=0 // pred_region
    _
  $region25: #{register_vae_forward.155} parent=0 // pred_fallthru
    _

// kernel: register_vae_forward.156
$region0: #{register_vae_forward.156}
  #allocation0 [shape = 'u32[]', space=smem, size = 0x4, offset = 0x4, fixed_abs, tag = 'smem constant byte address 0x4 - core index']
  #allocation1 [shape = 'u32[72,128]{1,0:T(1,128)}', space=vmem, size = 0x9000, scoped, tag = 'internal scratch']
  %s0 = inlined_call_operand.vmem [shape: bf16[8,512], index: 0, kind: input, shape index: {}]
  %s1 = inlined_call_operand.vmem [shape: bf16[512,128], index: 1, kind: input, shape index: {}]
  %s2 = inlined_call_operand.vmem [shape: f32[8,1], index: 2, kind: input, shape index: {}]
  %s3 = inlined_call_operand.vmem [shape: f32[8,1], index: 3, kind: input, shape index: {}]
  %s4 = inlined_call_operand.vmem [shape: f32[8,128], index: 4, kind: input, shape index: {}]
  %s5 = inlined_call_operand.vmem [shape: f32[8,128], index: 5, kind: output, shape index: {}]
  %s6 = sld [smem:[#allocation0]]
  $region30: #{register_vae_forward.156} parent=0
    _
  %s8 = ssub.s32 1, %s6
  %s9 = scalar_select 0, %s8, %s6
  // Predicated region
  $region2: #{register_vae_forward.156} parent=0 // pred_check
    _
  $region3: #{register_vae_forward.156} parent=0 // pred_check_branch
    %11 = sbr.rel (0) target = $region5
  $region4: #{register_vae_forward.156} parent=0 // pred_region
    _
  $region5: #{register_vae_forward.156} parent=0 // pred_fallthru
    _
  // Predicated region
  $region6: #{register_vae_forward.156} parent=0 // pred_check
    _
  $region7: #{register_vae_forward.156} parent=0 // pred_check_branch
    %13 = sbr.rel (0) target = $region9
  $region8: #{register_vae_forward.156} parent=0 // pred_region
    _
  $region9: #{register_vae_forward.156} parent=0 // pred_fallthru
    _
  // Predicated region
  $region10: #{register_vae_forward.156} parent=0 // pred_check
    _
  $region11: #{register_vae_forward.156} parent=0 // pred_check_branch
    %15 = sbr.rel (0) target = $region13
  $region12: #{register_vae_forward.156} parent=0 // pred_region
    _
  $region13: #{register_vae_forward.156} parent=0 // pred_fallthru
    _
  // Predicated region
  $region14: #{register_vae_forward.156} parent=0 // pred_check
    _
  $region15: #{register_vae_forward.156} parent=0 // pred_check_branch
    %17 = sbr.rel (0) target = $region17
  $region16: #{register_vae_forward.156} parent=0 // pred_region
    _
  $region17: #{register_vae_forward.156} parent=0 // pred_fallthru
    _
  // Predicated region
  $region18: #{register_vae_forward.156} parent=0 // pred_check
    _
  $region19: #{register_vae_forward.156} parent=0 // pred_check_branch
    %19 = sbr.rel (0) target = $region21
  $region20: #{register_vae_forward.156} parent=0 // pred_region
    _
  $region21: #{register_vae_forward.156} parent=0 // pred_fallthru
    _
  %v20 = vld [vmem:[%s4] sm:$0xff]
  %v21 = vld [vmem:[%s0] sm:$0xff]
  %v22 = vld [vmem:[%s0 + $0x8] sm:$0xff]
  %v23 = vld [vmem:[%s1] sm:$0xf]
  %v24 = vld [vmem:[%s1 + $0x4] sm:$0xf]
  %v25 = vld [vmem:[%s1 + $0x8] sm:$0xf]
  %v26 = vld [vmem:[%s1 + $0xc] sm:$0xf]
  %v27 = vld [vmem:[%s1 + $0x10] sm:$0xf]
  %v28 = vld [vmem:[%s1 + $0x14] sm:$0xf]
  %v29 = vld [vmem:[%s1 + $0x18] sm:$0xf]
  %v30 = vld [vmem:[%s1 + $0x1c] sm:$0xf]
  %v31 = vld [vmem:[%s1 + $0x20] sm:$0xf]
  %v32 = vld [vmem:[%s1 + $0x24] sm:$0xf]
  %v33 = vld [vmem:[%s1 + $0x28] sm:$0xf]
  %v34 = vld [vmem:[%s1 + $0x2c] sm:$0xf]
  %v35 = vld [vmem:[%s1 + $0x30] sm:$0xf]
  %v36 = vld [vmem:[%s1 + $0x34] sm:$0xf]
  %v37 = vld [vmem:[%s1 + $0x38] sm:$0xf]
  %v38 = vld [vmem:[%s1 + $0x3c] sm:$0xf]
  %v39 = vld [vmem:[%s1 + $0x40] sm:$0xf]
  %v40 = vld [vmem:[%s1 + $0x44] sm:$0xf]
  %v41 = vld [vmem:[%s1 + $0x48] sm:$0xf]
  %v42 = vld [vmem:[%s1 + $0x4c] sm:$0xf]
  %v43 = vld [vmem:[%s1 + $0x50] sm:$0xf]
  %v44 = vld [vmem:[%s1 + $0x54] sm:$0xf]
  %v45 = vld [vmem:[%s1 + $0x58] sm:$0xf]
  %v46 = vld [vmem:[%s1 + $0x5c] sm:$0xf]
  %v47 = vld [vmem:[%s1 + $0x60] sm:$0xf]
  %v48 = vld [vmem:[%s1 + $0x64] sm:$0xf]
  %v49 = vld [vmem:[%s1 + $0x68] sm:$0xf]
  %v50 = vld [vmem:[%s1 + $0x6c] sm:$0xf]
  %v51 = vld [vmem:[%s1 + $0x70] sm:$0xf]
  %v52 = vld [vmem:[%s1 + $0x74] sm:$0xf]
  %v53 = vld [vmem:[%s1 + $0x78] sm:$0xf]
  %v54 = vld [vmem:[%s1 + $0x7c] sm:$0xf]
  %v55 = vld [vmem:[%s1 + $0x80] sm:$0xf]
  %v56 = vld [vmem:[%s1 + $0x84] sm:$0xf]
  %v57 = vld [vmem:[%s1 + $0x88] sm:$0xf]
  %v58 = vld [vmem:[%s1 + $0x8c] sm:$0xf]
  %v59 = vld [vmem:[%s1 + $0x90] sm:$0xf]
  %v60 = vld [vmem:[%s1 + $0x94] sm:$0xf]
  %v61 = vld [vmem:[%s1 + $0x98] sm:$0xf]
  %v62 = vld [vmem:[%s1 + $0x9c] sm:$0xf]
  %v63 = vld [vmem:[%s1 + $0xa0] sm:$0xf]
  %v64 = vld [vmem:[%s1 + $0xa4] sm:$0xf]
  %v65 = vld [vmem:[%s1 + $0xa8] sm:$0xf]
  %v66 = vld [vmem:[%s1 + $0xac] sm:$0xf]
  %v67 = vld [vmem:[%s1 + $0xb0] sm:$0xf]
  %v68 = vld [vmem:[%s1 + $0xb4] sm:$0xf]
  %v69 = vld [vmem:[%s1 + $0xb8] sm:$0xf]
  %v70 = vld [vmem:[%s1 + $0xbc] sm:$0xf]
  %v71 = vld [vmem:[%s1 + $0xc0] sm:$0xf]
  %v72 = vld [vmem:[%s1 + $0xc4] sm:$0xf]
  %v73 = vld [vmem:[%s1 + $0xc8] sm:$0xf]
  %v74 = vld [vmem:[%s1 + $0xcc] sm:$0xf]
  %v75 = vld [vmem:[%s1 + $0xd0] sm:$0xf]
  %v76 = vld [vmem:[%s1 + $0xd4] sm:$0xf]
  %v77 = vld [vmem:[%s1 + $0xd8] sm:$0xf]
  %v78 = vld [vmem:[%s1 + $0xdc] sm:$0xf]
  %v79 = vld [vmem:[%s1 + $0xe0] sm:$0xf]
  %v80 = vld [vmem:[%s1 + $0xe4] sm:$0xf]
  %v81 = vld [vmem:[%s1 + $0xe8] sm:$0xf]
  %v82 = vld [vmem:[%s1 + $0xec] sm:$0xf]
  %v83 = vld [vmem:[%s1 + $0xf0] sm:$0xf]
  %v84 = vld [vmem:[%s1 + $0xf4] sm:$0xf]
  %v85 = vld [vmem:[%s1 + $0xf8] sm:$0xf]
  %v86 = vld [vmem:[%s1 + $0xfc] sm:$0xf]
  %v89 = vunpack.c.l.b16 %v21
  %v90 = vunpack.c.h.b16 %v21
  %v91 = vunpack.c.l.b16 %v22
  %v92 = vunpack.c.h.b16 %v22
  %v93 = vpack.c.b16 %v89, %v89
  %v94 = vpack.c.b16 %v90, %v90
  %v95 = vpack.c.b16 %v91, %v91
  %v96 = vpack.c.b16 %v92, %v92
  %v165 = vunpack.c.l.b16 %v23
  %v166 = vunpack.c.l.b16 %v24
  %v167 = vunpack.c.l.b16 %v25
  %v168 = vunpack.c.l.b16 %v26
  %v169 = vunpack.c.l.b16 %v27
  %v170 = vunpack.c.l.b16 %v28
  %v171 = vunpack.c.l.b16 %v29
  %v172 = vunpack.c.l.b16 %v30
  %v173 = vunpack.c.l.b16 %v31
  %v174 = vunpack.c.l.b16 %v32
  %v175 = vunpack.c.l.b16 %v33
  %v176 = vunpack.c.l.b16 %v34
  %v177 = vunpack.c.l.b16 %v35
  %v178 = vunpack.c.l.b16 %v36
  %v179 = vunpack.c.l.b16 %v37
  %v180 = vunpack.c.l.b16 %v38
  %v181 = vunpack.c.l.b16 %v39
  %v182 = vunpack.c.l.b16 %v40
  %v183 = vunpack.c.l.b16 %v41
  %v184 = vunpack.c.l.b16 %v42
  %v185 = vunpack.c.l.b16 %v43
  %v186 = vunpack.c.l.b16 %v44
  %v187 = vunpack.c.l.b16 %v45
  %v188 = vunpack.c.l.b16 %v46
  %v189 = vunpack.c.l.b16 %v47
  %v190 = vunpack.c.l.b16 %v48
  %v191 = vunpack.c.l.b16 %v49
  %v192 = vunpack.c.l.b16 %v50
  %v193 = vunpack.c.l.b16 %v51
  %v194 = vunpack.c.l.b16 %v52
  %v195 = vunpack.c.l.b16 %v53
  %v196 = vunpack.c.l.b16 %v54
  %v197 = vunpack.c.l.b16 %v55
  %v198 = vunpack.c.l.b16 %v56
  %v199 = vunpack.c.l.b16 %v57
  %v200 = vunpack.c.l.b16 %v58
  %v201 = vunpack.c.l.b16 %v59
  %v202 = vunpack.c.l.b16 %v60
  %v203 = vunpack.c.l.b16 %v61
  %v204 = vunpack.c.l.b16 %v62
  %v205 = vunpack.c.l.b16 %v63
  %v206 = vunpack.c.l.b16 %v64
  %v207 = vunpack.c.l.b16 %v65
  %v208 = vunpack.c.l.b16 %v66
  %v209 = vunpack.c.l.b16 %v67
  %v210 = vunpack.c.l.b16 %v68
  %v211 = vunpack.c.l.b16 %v69
  %v212 = vunpack.c.l.b16 %v70
  %v213 = vunpack.c.l.b16 %v71
  %v214 = vunpack.c.l.b16 %v72
  %v215 = vunpack.c.l.b16 %v73
  %v216 = vunpack.c.l.b16 %v74
  %v217 = vunpack.c.l.b16 %v75
  %v218 = vunpack.c.l.b16 %v76
  %v219 = vunpack.c.l.b16 %v77
  %v220 = vunpack.c.l.b16 %v78
  %v221 = vunpack.c.l.b16 %v79
  %v222 = vunpack.c.l.b16 %v80
  %v223 = vunpack.c.l.b16 %v81
  %v224 = vunpack.c.l.b16 %v82
  %v225 = vunpack.c.l.b16 %v83
  %v226 = vunpack.c.l.b16 %v84
  %v227 = vunpack.c.l.b16 %v85
  %v228 = vunpack.c.l.b16 %v86
  %v229 = vpack.c.b16 %v166, %v165
  %v230 = vpack.c.b16 %v168, %v167
  %v231 = vpack.c.b16 %v170, %v169
  %v232 = vpack.c.b16 %v172, %v171
  %v233 = vpack.c.b16 %v174, %v173
  %v234 = vpack.c.b16 %v176, %v175
  %v235 = vpack.c.b16 %v178, %v177
  %v236 = vpack.c.b16 %v180, %v179
  %v237 = vpack.c.b16 %v182, %v181
  %v238 = vpack.c.b16 %v184, %v183
  %v239 = vpack.c.b16 %v186, %v185
  %v240 = vpack.c.b16 %v188, %v187
  %v241 = vpack.c.b16 %v190, %v189
  %v242 = vpack.c.b16 %v192, %v191
  %v243 = vpack.c.b16 %v194, %v193
  %v244 = vpack.c.b16 %v196, %v195
  %v245 = vpack.c.b16 %v198, %v197
  %v246 = vpack.c.b16 %v200, %v199
  %v247 = vpack.c.b16 %v202, %v201
  %v248 = vpack.c.b16 %v204, %v203
  %v249 = vpack.c.b16 %v206, %v205
  %v250 = vpack.c.b16 %v208, %v207
  %v251 = vpack.c.b16 %v210, %v209
  %v252 = vpack.c.b16 %v212, %v211
  %v253 = vpack.c.b16 %v214, %v213
  %v254 = vpack.c.b16 %v216, %v215
  %v255 = vpack.c.b16 %v218, %v217
  %v256 = vpack.c.b16 %v220, %v219
  %v257 = vpack.c.b16 %v222, %v221
  %v258 = vpack.c.b16 %v224, %v223
  %v259 = vpack.c.b16 %v226, %v225
  %v260 = vpack.c.b16 %v228, %v227
  %293 = vmatpush.bf16.msra.mxu0 %v236
  %294 = vmatpush.bf16.msra.mxu0 %v235
  %295 = vmatpush.bf16.msra.mxu0 %v234
  %296 = vmatpush.bf16.msra.mxu0 %v233
  %297 = vmatpush.bf16.msra.mxu0 %v232
  %298 = vmatpush.bf16.msra.mxu0 %v231
  %299 = vmatpush.bf16.msra.mxu0 %v230
  %300 = vmatpush.bf16.msra.mxu0 %v229
  %301 = vmatmul.bf16.gmra.mxu0 %v93
  %v302 = vpop.f32.mrf.mxu0
  %v303 = vadd.f32 0.0, %v302
  %v304 = vpop.f32.mrf.mxu0
  %305 = vdwg.mxu0
  %306 = vmatpush.bf16.msra.mxu0 %v244
  %307 = vmatpush.bf16.msra.mxu0 %v243
  %308 = vmatpush.bf16.msra.mxu0 %v242
  %309 = vmatpush.bf16.msra.mxu0 %v241
  %310 = vmatpush.bf16.msra.mxu0 %v240
  %311 = vmatpush.bf16.msra.mxu0 %v239
  %312 = vmatpush.bf16.msra.mxu0 %v238
  %313 = vmatpush.bf16.msra.mxu0 %v237
  %314 = vmatmul.bf16.gmra.mxu0 %v94
  %v315 = vpop.f32.mrf.mxu0
  %v316 = vadd.f32 %v303, %v315
  %v317 = vpop.f32.mrf.mxu0
  %318 = vdwg.mxu0
  %319 = vmatpush.bf16.msra.mxu0 %v252
  %320 = vmatpush.bf16.msra.mxu0 %v251
  %321 = vmatpush.bf16.msra.mxu0 %v250
  %322 = vmatpush.bf16.msra.mxu0 %v249
  %323 = vmatpush.bf16.msra.mxu0 %v248
  %324 = vmatpush.bf16.msra.mxu0 %v247
  %325 = vmatpush.bf16.msra.mxu0 %v246
  %326 = vmatpush.bf16.msra.mxu0 %v245
  %327 = vmatmul.bf16.gmra.mxu0 %v95
  %v328 = vpop.f32.mrf.mxu0
  %v329 = vadd.f32 %v316, %v328
  %v330 = vpop.f32.mrf.mxu0
  %331 = vdwg.mxu0
  %332 = vmatpush.bf16.msra.mxu0 %v260
  %333 = vmatpush.bf16.msra.mxu0 %v259
  %334 = vmatpush.bf16.msra.mxu0 %v258
  %335 = vmatpush.bf16.msra.mxu0 %v257
  %336 = vmatpush.bf16.msra.mxu0 %v256
  %337 = vmatpush.bf16.msra.mxu0 %v255
  %338 = vmatpush.bf16.msra.mxu0 %v254
  %339 = vmatpush.bf16.msra.mxu0 %v253
  %340 = vmatmul.bf16.gmra.mxu0 %v96
  %v341 = vpop.f32.mrf.mxu0
  %v342 = vadd.f32 %v329, %v341
  %v343 = vpop.f32.mrf.mxu0
  %344 = vdwg.mxu0
  %v345 = vld [vmem:[%s2] sm:$0xff]
  %v346 = vld [vmem:[%s3] sm:$0xff]
  %348 = vset.pattern.permute.xlu0 0
  %349 = vperm.xlu0 %348, %v345
  %v350 = vpop.permute.xlu0 %349
  %v352 = vmul.f32 %v342, %v350
  %354 = vset.pattern.permute.xlu0 0
  %355 = vperm.xlu0 %354, %v346
  %v356 = vpop.permute.xlu0 %355
  %v358 = vadd.f32 %v352, %v356
  %vm359 = vcmp.ge.f32.partialorder %v358, 0.0
  %v360 = vmul.f32 %v358, 0.2
  %v361 = vsel %vm359, %v358, %v360
  %v362 = vadd.f32 %v361, %v20
  %363 = vst [vmem:[%s5] sm:$0xff] %v362
  // Predicated region
  $region22: #{register_vae_forward.156} parent=0 // pred_check
    _
  $region23: #{register_vae_forward.156} parent=0 // pred_check_branch
    %365 = sbr.rel (0) target = $region25
  $region24: #{register_vae_forward.156} parent=0 // pred_region
    _
  $region25: #{register_vae_forward.156} parent=0 // pred_fallthru
    _
  // Predicated region
  $region26: #{register_vae_forward.156} parent=0 // pred_check
    _
  $region27: #{register_vae_forward.156} parent=0 // pred_check_branch
    %367 = sbr.rel (0) target = $region29
  $region28: #{register_vae_forward.156} parent=0 // pred_region
    _
  $region29: #{register_vae_forward.156} parent=0 // pred_fallthru
    _

// kernel: register_vae_forward.158
$region0: #{register_vae_forward.158}
  #allocation0 [shape = 'u32[]', space=smem, size = 0x4, offset = 0x4, fixed_abs, tag = 'smem constant byte address 0x4 - core index']
  #allocation1 [shape = 'u32[72,128]{1,0:T(1,128)}', space=vmem, size = 0x9000, scoped, tag = 'internal scratch']
  %s0 = inlined_call_operand.vmem [shape: bf16[8,256], index: 0, kind: input, shape index: {}]
  %s1 = inlined_call_operand.vmem [shape: bf16[256,128], index: 1, kind: input, shape index: {}]
  %s2 = inlined_call_operand.vmem [shape: f32[8,1], index: 2, kind: input, shape index: {}]
  %s3 = inlined_call_operand.vmem [shape: f32[8,1], index: 3, kind: input, shape index: {}]
  %s4 = inlined_call_operand.vmem [shape: f32[8,128], index: 4, kind: output, shape index: {}]
  %s5 = sld [smem:[#allocation0]]
  $region26: #{register_vae_forward.158} parent=0
    _
  %s7 = ssub.s32 1, %s5
  %s8 = scalar_select 0, %s7, %s5
  // Predicated region
  $region2: #{register_vae_forward.158} parent=0 // pred_check
    _
  $region3: #{register_vae_forward.158} parent=0 // pred_check_branch
    %10 = sbr.rel (0) target = $region5
  $region4: #{register_vae_forward.158} parent=0 // pred_region
    _
  $region5: #{register_vae_forward.158} parent=0 // pred_fallthru
    _
  // Predicated region
  $region6: #{register_vae_forward.158} parent=0 // pred_check
    _
  $region7: #{register_vae_forward.158} parent=0 // pred_check_branch
    %12 = sbr.rel (0) target = $region9
  $region8: #{register_vae_forward.158} parent=0 // pred_region
    _
  $region9: #{register_vae_forward.158} parent=0 // pred_fallthru
    _
  // Predicated region
  $region10: #{register_vae_forward.158} parent=0 // pred_check
    _
  $region11: #{register_vae_forward.158} parent=0 // pred_check_branch
    %14 = sbr.rel (0) target = $region13
  $region12: #{register_vae_forward.158} parent=0 // pred_region
    _
  $region13: #{register_vae_forward.158} parent=0 // pred_fallthru
    _
  // Predicated region
  $region14: #{register_vae_forward.158} parent=0 // pred_check
    _
  $region15: #{register_vae_forward.158} parent=0 // pred_check_branch
    %16 = sbr.rel (0) target = $region17
  $region16: #{register_vae_forward.158} parent=0 // pred_region
    _
  $region17: #{register_vae_forward.158} parent=0 // pred_fallthru
    _
  %v17 = vld [vmem:[%s0] sm:$0xff]
  %v18 = vld [vmem:[%s1] sm:$0xf]
  %v19 = vld [vmem:[%s1 + $0x4] sm:$0xf]
  %v20 = vld [vmem:[%s1 + $0x8] sm:$0xf]
  %v21 = vld [vmem:[%s1 + $0xc] sm:$0xf]
  %v22 = vld [vmem:[%s1 + $0x10] sm:$0xf]
  %v23 = vld [vmem:[%s1 + $0x14] sm:$0xf]
  %v24 = vld [vmem:[%s1 + $0x18] sm:$0xf]
  %v25 = vld [vmem:[%s1 + $0x1c] sm:$0xf]
  %v26 = vld [vmem:[%s1 + $0x20] sm:$0xf]
  %v27 = vld [vmem:[%s1 + $0x24] sm:$0xf]
  %v28 = vld [vmem:[%s1 + $0x28] sm:$0xf]
  %v29 = vld [vmem:[%s1 + $0x2c] sm:$0xf]
  %v30 = vld [vmem:[%s1 + $0x30] sm:$0xf]
  %v31 = vld [vmem:[%s1 + $0x34] sm:$0xf]
  %v32 = vld [vmem:[%s1 + $0x38] sm:$0xf]
  %v33 = vld [vmem:[%s1 + $0x3c] sm:$0xf]
  %v34 = vld [vmem:[%s1 + $0x40] sm:$0xf]
  %v35 = vld [vmem:[%s1 + $0x44] sm:$0xf]
  %v36 = vld [vmem:[%s1 + $0x48] sm:$0xf]
  %v37 = vld [vmem:[%s1 + $0x4c] sm:$0xf]
  %v38 = vld [vmem:[%s1 + $0x50] sm:$0xf]
  %v39 = vld [vmem:[%s1 + $0x54] sm:$0xf]
  %v40 = vld [vmem:[%s1 + $0x58] sm:$0xf]
  %v41 = vld [vmem:[%s1 + $0x5c] sm:$0xf]
  %v42 = vld [vmem:[%s1 + $0x60] sm:$0xf]
  %v43 = vld [vmem:[%s1 + $0x64] sm:$0xf]
  %v44 = vld [vmem:[%s1 + $0x68] sm:$0xf]
  %v45 = vld [vmem:[%s1 + $0x6c] sm:$0xf]
  %v46 = vld [vmem:[%s1 + $0x70] sm:$0xf]
  %v47 = vld [vmem:[%s1 + $0x74] sm:$0xf]
  %v48 = vld [vmem:[%s1 + $0x78] sm:$0xf]
  %v49 = vld [vmem:[%s1 + $0x7c] sm:$0xf]
  %v51 = vunpack.c.l.b16 %v17
  %v52 = vunpack.c.h.b16 %v17
  %v53 = vpack.c.b16 %v51, %v51
  %v54 = vpack.c.b16 %v52, %v52
  %v89 = vunpack.c.l.b16 %v18
  %v90 = vunpack.c.l.b16 %v19
  %v91 = vunpack.c.l.b16 %v20
  %v92 = vunpack.c.l.b16 %v21
  %v93 = vunpack.c.l.b16 %v22
  %v94 = vunpack.c.l.b16 %v23
  %v95 = vunpack.c.l.b16 %v24
  %v96 = vunpack.c.l.b16 %v25
  %v97 = vunpack.c.l.b16 %v26
  %v98 = vunpack.c.l.b16 %v27
  %v99 = vunpack.c.l.b16 %v28
  %v100 = vunpack.c.l.b16 %v29
  %v101 = vunpack.c.l.b16 %v30
  %v102 = vunpack.c.l.b16 %v31
  %v103 = vunpack.c.l.b16 %v32
  %v104 = vunpack.c.l.b16 %v33
  %v105 = vunpack.c.l.b16 %v34
  %v106 = vunpack.c.l.b16 %v35
  %v107 = vunpack.c.l.b16 %v36
  %v108 = vunpack.c.l.b16 %v37
  %v109 = vunpack.c.l.b16 %v38
  %v110 = vunpack.c.l.b16 %v39
  %v111 = vunpack.c.l.b16 %v40
  %v112 = vunpack.c.l.b16 %v41
  %v113 = vunpack.c.l.b16 %v42
  %v114 = vunpack.c.l.b16 %v43
  %v115 = vunpack.c.l.b16 %v44
  %v116 = vunpack.c.l.b16 %v45
  %v117 = vunpack.c.l.b16 %v46
  %v118 = vunpack.c.l.b16 %v47
  %v119 = vunpack.c.l.b16 %v48
  %v120 = vunpack.c.l.b16 %v49
  %v121 = vpack.c.b16 %v90, %v89
  %v122 = vpack.c.b16 %v92, %v91
  %v123 = vpack.c.b16 %v94, %v93
  %v124 = vpack.c.b16 %v96, %v95
  %v125 = vpack.c.b16 %v98, %v97
  %v126 = vpack.c.b16 %v100, %v99
  %v127 = vpack.c.b16 %v102, %v101
  %v128 = vpack.c.b16 %v104, %v103
  %v129 = vpack.c.b16 %v106, %v105
  %v130 = vpack.c.b16 %v108, %v107
  %v131 = vpack.c.b16 %v110, %v109
  %v132 = vpack.c.b16 %v112, %v111
  %v133 = vpack.c.b16 %v114, %v113
  %v134 = vpack.c.b16 %v116, %v115
  %v135 = vpack.c.b16 %v118, %v117
  %v136 = vpack.c.b16 %v120, %v119
  %153 = vmatpush.bf16.msra.mxu0 %v128
  %154 = vmatpush.bf16.msra.mxu0 %v127
  %155 = vmatpush.bf16.msra.mxu0 %v126
  %156 = vmatpush.bf16.msra.mxu0 %v125
  %157 = vmatpush.bf16.msra.mxu0 %v124
  %158 = vmatpush.bf16.msra.mxu0 %v123
  %159 = vmatpush.bf16.msra.mxu0 %v122
  %160 = vmatpush.bf16.msra.mxu0 %v121
  %161 = vmatmul.bf16.gmra.mxu0 %v53
  %v162 = vpop.f32.mrf.mxu0
  %v163 = vadd.f32 0.0, %v162
  %v164 = vpop.f32.mrf.mxu0
  %165 = vdwg.mxu0
  %166 = vmatpush.bf16.msra.mxu0 %v136
  %167 = vmatpush.bf16.msra.mxu0 %v135
  %168 = vmatpush.bf16.msra.mxu0 %v134
  %169 = vmatpush.bf16.msra.mxu0 %v133
  %170 = vmatpush.bf16.msra.mxu0 %v132
  %171 = vmatpush.bf16.msra.mxu0 %v131
  %172 = vmatpush.bf16.msra.mxu0 %v130
  %173 = vmatpush.bf16.msra.mxu0 %v129
  %174 = vmatmul.bf16.gmra.mxu0 %v54
  %v175 = vpop.f32.mrf.mxu0
  %v176 = vadd.f32 %v163, %v175
  %v177 = vpop.f32.mrf.mxu0
  %178 = vdwg.mxu0
  %v179 = vld [vmem:[%s2] sm:$0xff]
  %v180 = vld [vmem:[%s3] sm:$0xff]
  %182 = vset.pattern.permute.xlu0 0
  %183 = vperm.xlu0 %182, %v179
  %v184 = vpop.permute.xlu0 %183
  %v186 = vmul.f32 %v176, %v184
  %188 = vset.pattern.permute.xlu0 0
  %189 = vperm.xlu0 %188, %v180
  %v190 = vpop.permute.xlu0 %189
  %v192 = vadd.f32 %v186, %v190
  %vm193 = vcmp.ge.f32.partialorder %v192, 0.0
  %v194 = vmul.f32 %v192, 0.04
  %v195 = vsel %vm193, %v192, %v194
  %196 = vst [vmem:[%s4] sm:$0xff] %v195
  // Predicated region
  $region18: #{register_vae_forward.158} parent=0 // pred_check
    _
  $region19: #{register_vae_forward.158} parent=0 // pred_check_branch
    %198 = sbr.rel (0) target = $region21
  $region20: #{register_vae_forward.158} parent=0 // pred_region
    _
  $region21: #{register_vae_forward.158} parent=0 // pred_fallthru
    _
  // Predicated region
  $region22: #{register_vae_forward.158} parent=0 // pred_check
    _
  $region23: #{register_vae_forward.158} parent=0 // pred_check_branch
    %200 = sbr.rel (0) target = $region25
  $region24: #{register_vae_forward.158} parent=0 // pred_region
    _
  $region25: #{register_vae_forward.158} parent=0 // pred_fallthru
    _

// kernel: register_vae_forward.159
$region0: #{register_vae_forward.159}
  #allocation0 [shape = 'u32[]', space=smem, size = 0x4, offset = 0x4, fixed_abs, tag = 'smem constant byte address 0x4 - core index']
  #allocation1 [shape = 'u32[72,128]{1,0:T(1,128)}', space=vmem, size = 0x9000, scoped, tag = 'internal scratch']
  %s0 = inlined_call_operand.vmem [shape: bf16[8,256], index: 0, kind: input, shape index: {}]
  %s1 = inlined_call_operand.vmem [shape: bf16[256,512], index: 1, kind: input, shape index: {}]
  %s2 = inlined_call_operand.vmem [shape: f32[8,1], index: 2, kind: input, shape index: {}]
  %s3 = inlined_call_operand.vmem [shape: f32[8,1], index: 3, kind: input, shape index: {}]
  %s4 = inlined_call_operand.vmem [shape: f32[8,512], index: 4, kind: input, shape index: {}]
  %s5 = inlined_call_operand.vmem [shape: f32[8,512], index: 5, kind: output, shape index: {}]
  %s6 = sld [smem:[#allocation0]]
  $region30: #{register_vae_forward.159} parent=0
    _
  %s8 = ssub.s32 1, %s6
  %s9 = scalar_select 0, %s8, %s6
  // Predicated region
  $region2: #{register_vae_forward.159} parent=0 // pred_check
    _
  $region3: #{register_vae_forward.159} parent=0 // pred_check_branch
    %11 = sbr.rel (0) target = $region5
  $region4: #{register_vae_forward.159} parent=0 // pred_region
    _
  $region5: #{register_vae_forward.159} parent=0 // pred_fallthru
    _
  // Predicated region
  $region6: #{register_vae_forward.159} parent=0 // pred_check
    _
  $region7: #{register_vae_forward.159} parent=0 // pred_check_branch
    %13 = sbr.rel (0) target = $region9
  $region8: #{register_vae_forward.159} parent=0 // pred_region
    _
  $region9: #{register_vae_forward.159} parent=0 // pred_fallthru
    _
  // Predicated region
  $region10: #{register_vae_forward.159} parent=0 // pred_check
    _
  $region11: #{register_vae_forward.159} parent=0 // pred_check_branch
    %15 = sbr.rel (0) target = $region13
  $region12: #{register_vae_forward.159} parent=0 // pred_region
    _
  $region13: #{register_vae_forward.159} parent=0 // pred_fallthru
    _
  // Predicated region
  $region14: #{register_vae_forward.159} parent=0 // pred_check
    _
  $region15: #{register_vae_forward.159} parent=0 // pred_check_branch
    %17 = sbr.rel (0) target = $region17
  $region16: #{register_vae_forward.159} parent=0 // pred_region
    _
  $region17: #{register_vae_forward.159} parent=0 // pred_fallthru
    _
  // Predicated region
  $region18: #{register_vae_forward.159} parent=0 // pred_check
    _
  $region19: #{register_vae_forward.159} parent=0 // pred_check_branch
    %19 = sbr.rel (0) target = $region21
  $region20: #{register_vae_forward.159} parent=0 // pred_region
    _
  $region21: #{register_vae_forward.159} parent=0 // pred_fallthru
    _
  %v20 = vld [vmem:[%s4] sm:$0xff]
  %v21 = vld [vmem:[%s4 + $0x8] sm:$0xff]
  %v22 = vld [vmem:[%s4 + $0x10] sm:$0xff]
  %v23 = vld [vmem:[%s4 + $0x18] sm:$0xff]
  %v24 = vld [vmem:[%s0] sm:$0xff]
  %v25 = vld [vmem:[%s1] sm:$0xff]
  %v26 = vld [vmem:[%s1 + $0x8] sm:$0xff]
  %v27 = vld [vmem:[%s1 + $0x10] sm:$0xff]
  %v28 = vld [vmem:[%s1 + $0x18] sm:$0xff]
  %v29 = vld [vmem:[%s1 + $0x20] sm:$0xff]
  %v30 = vld [vmem:[%s1 + $0x28] sm:$0xff]
  %v31 = vld [vmem:[%s1 + $0x30] sm:$0xff]
  %v32 = vld [vmem:[%s1 + $0x38] sm:$0xff]
  %v33 = vld [vmem:[%s1 + $0x40] sm:$0xff]
  %v34 = vld [vmem:[%s1 + $0x48] sm:$0xff]
  %v35 = vld [vmem:[%s1 + $0x50] sm:$0xff]
  %v36 = vld [vmem:[%s1 + $0x58] sm:$0xff]
  %v37 = vld [vmem:[%s1 + $0x60] sm:$0xff]
  %v38 = vld [vmem:[%s1 + $0x68] sm:$0xff]
  %v39 = vld [vmem:[%s1 + $0x70] sm:$0xff]
  %v40 = vld [vmem:[%s1 + $0x78] sm:$0xff]
  %v41 = vld [vmem:[%s1 + $0x80] sm:$0xff]
  %v42 = vld [vmem:[%s1 + $0x88] sm:$0xff]
  %v43 = vld [vmem:[%s1 + $0x90] sm:$0xff]
  %v44 = vld [vmem:[%s1 + $0x98] sm:$0xff]
  %v45 = vld [vmem:[%s1 + $0xa0] sm:$0xff]
  %v46 = vld [vmem:[%s1 + $0xa8] sm:$0xff]
  %v47 = vld [vmem:[%s1 + $0xb0] sm:$0xff]
  %v48 = vld [vmem:[%s1 + $0xb8] sm:$0xff]
  %v49 = vld [vmem:[%s1 + $0xc0] sm:$0xff]
  %v50 = vld [vmem:[%s1 + $0xc8] sm:$0xff]
  %v51 = vld [vmem:[%s1 + $0xd0] sm:$0xff]
  %v52 = vld [vmem:[%s1 + $0xd8] sm:$0xff]
  %v53 = vld [vmem:[%s1 + $0xe0] sm:$0xff]
  %v54 = vld [vmem:[%s1 + $0xe8] sm:$0xff]
  %v55 = vld [vmem:[%s1 + $0xf0] sm:$0xff]
  %v56 = vld [vmem:[%s1 + $0xf8] sm:$0xff]
  %v57 = vld [vmem:[%s1 + $0x100] sm:$0xff]
  %v58 = vld [vmem:[%s1 + $0x108] sm:$0xff]
  %v59 = vld [vmem:[%s1 + $0x110] sm:$0xff]
  %v60 = vld [vmem:[%s1 + $0x118] sm:$0xff]
  %v61 = vld [vmem:[%s1 + $0x120] sm:$0xff]
  %v62 = vld [vmem:[%s1 + $0x128] sm:$0xff]
  %v63 = vld [vmem:[%s1 + $0x130] sm:$0xff]
  %v64 = vld [vmem:[%s1 + $0x138] sm:$0xff]
  %v65 = vld [vmem:[%s1 + $0x140] sm:$0xff]
  %v66 = vld [vmem:[%s1 + $0x148] sm:$0xff]
  %v67 = vld [vmem:[%s1 + $0x150] sm:$0xff]
  %v68 = vld [vmem:[%s1 + $0x158] sm:$0xff]
  %v69 = vld [vmem:[%s1 + $0x160] sm:$0xff]
  %v70 = vld [vmem:[%s1 + $0x168] sm:$0xff]
  %v71 = vld [vmem:[%s1 + $0x170] sm:$0xff]
  %v72 = vld [vmem:[%s1 + $0x178] sm:$0xff]
  %v73 = vld [vmem:[%s1 + $0x180] sm:$0xff]
  %v74 = vld [vmem:[%s1 + $0x188] sm:$0xff]
  %v75 = vld [vmem:[%s1 + $0x190] sm:$0xff]
  %v76 = vld [vmem:[%s1 + $0x198] sm:$0xff]
  %v77 = vld [vmem:[%s1 + $0x1a0] sm:$0xff]
  %v78 = vld [vmem:[%s1 + $0x1a8] sm:$0xff]
  %v79 = vld [vmem:[%s1 + $0x1b0] sm:$0xff]
  %v80 = vld [vmem:[%s1 + $0x1b8] sm:$0xff]
  %v81 = vld [vmem:[%s1 + $0x1c0] sm:$0xff]
  %v82 = vld [vmem:[%s1 + $0x1c8] sm:$0xff]
  %v83 = vld [vmem:[%s1 + $0x1d0] sm:$0xff]
  %v84 = vld [vmem:[%s1 + $0x1d8] sm:$0xff]
  %v85 = vld [vmem:[%s1 + $0x1e0] sm:$0xff]
  %v86 = vld [vmem:[%s1 + $0x1e8] sm:$0xff]
  %v87 = vld [vmem:[%s1 + $0x1f0] sm:$0xff]
  %v88 = vld [vmem:[%s1 + $0x1f8] sm:$0xff]
  %v90 = vunpack.c.l.b16 %v24
  %v91 = vunpack.c.h.b16 %v24
  %v92 = vpack.c.b16 %v90, %v90
  %v93 = vpack.c.b16 %v91, %v91
  %v160 = vunpack.c.l.b16 %v25
  %v161 = vunpack.c.h.b16 %v25
  %v162 = vunpack.c.l.b16 %v26
  %v163 = vunpack.c.h.b16 %v26
  %v164 = vunpack.c.l.b16 %v27
  %v165 = vunpack.c.h.b16 %v27
  %v166 = vunpack.c.l.b16 %v28
  %v167 = vunpack.c.h.b16 %v28
  %v168 = vunpack.c.l.b16 %v29
  %v169 = vunpack.c.h.b16 %v29
  %v170 = vunpack.c.l.b16 %v30
  %v171 = vunpack.c.h.b16 %v30
  %v172 = vunpack.c.l.b16 %v31
  %v173 = vunpack.c.h.b16 %v31
  %v174 = vunpack.c.l.b16 %v32
  %v175 = vunpack.c.h.b16 %v32
  %v176 = vunpack.c.l.b16 %v33
  %v177 = vunpack.c.h.b16 %v33
  %v178 = vunpack.c.l.b16 %v34
  %v179 = vunpack.c.h.b16 %v34
  %v180 = vunpack.c.l.b16 %v35
  %v181 = vunpack.c.h.b16 %v35
  %v182 = vunpack.c.l.b16 %v36
  %v183 = vunpack.c.h.b16 %v36
  %v184 = vunpack.c.l.b16 %v37
  %v185 = vunpack.c.h.b16 %v37
  %v186 = vunpack.c.l.b16 %v38
  %v187 = vunpack.c.h.b16 %v38
  %v188 = vunpack.c.l.b16 %v39
  %v189 = vunpack.c.h.b16 %v39
  %v190 = vunpack.c.l.b16 %v40
  %v191 = vunpack.c.h.b16 %v40
  %v192 = vunpack.c.l.b16 %v41
  %v193 = vunpack.c.h.b16 %v41
  %v194 = vunpack.c.l.b16 %v42
  %v195 = vunpack.c.h.b16 %v42
  %v196 = vunpack.c.l.b16 %v43
  %v197 = vunpack.c.h.b16 %v43
  %v198 = vunpack.c.l.b16 %v44
  %v199 = vunpack.c.h.b16 %v44
  %v200 = vunpack.c.l.b16 %v45
  %v201 = vunpack.c.h.b16 %v45
  %v202 = vunpack.c.l.b16 %v46
  %v203 = vunpack.c.h.b16 %v46
  %v204 = vunpack.c.l.b16 %v47
  %v205 = vunpack.c.h.b16 %v47
  %v206 = vunpack.c.l.b16 %v48
  %v207 = vunpack.c.h.b16 %v48
  %v208 = vunpack.c.l.b16 %v49
  %v209 = vunpack.c.h.b16 %v49
  %v210 = vunpack.c.l.b16 %v50
  %v211 = vunpack.c.h.b16 %v50
  %v212 = vunpack.c.l.b16 %v51
  %v213 = vunpack.c.h.b16 %v51
  %v214 = vunpack.c.l.b16 %v52
  %v215 = vunpack.c.h.b16 %v52
  %v216 = vunpack.c.l.b16 %v53
  %v217 = vunpack.c.h.b16 %v53
  %v218 = vunpack.c.l.b16 %v54
  %v219 = vunpack.c.h.b16 %v54
  %v220 = vunpack.c.l.b16 %v55
  %v221 = vunpack.c.h.b16 %v55
  %v222 = vunpack.c.l.b16 %v56
  %v223 = vunpack.c.h.b16 %v56
  %v224 = vunpack.c.l.b16 %v57
  %v225 = vunpack.c.h.b16 %v57
  %v226 = vunpack.c.l.b16 %v58
  %v227 = vunpack.c.h.b16 %v58
  %v228 = vunpack.c.l.b16 %v59
  %v229 = vunpack.c.h.b16 %v59
  %v230 = vunpack.c.l.b16 %v60
  %v231 = vunpack.c.h.b16 %v60
  %v232 = vunpack.c.l.b16 %v61
  %v233 = vunpack.c.h.b16 %v61
  %v234 = vunpack.c.l.b16 %v62
  %v235 = vunpack.c.h.b16 %v62
  %v236 = vunpack.c.l.b16 %v63
  %v237 = vunpack.c.h.b16 %v63
  %v238 = vunpack.c.l.b16 %v64
  %v239 = vunpack.c.h.b16 %v64
  %v240 = vunpack.c.l.b16 %v65
  %v241 = vunpack.c.h.b16 %v65
  %v242 = vunpack.c.l.b16 %v66
  %v243 = vunpack.c.h.b16 %v66
  %v244 = vunpack.c.l.b16 %v67
  %v245 = vunpack.c.h.b16 %v67
  %v246 = vunpack.c.l.b16 %v68
  %v247 = vunpack.c.h.b16 %v68
  %v248 = vunpack.c.l.b16 %v69
  %v249 = vunpack.c.h.b16 %v69
  %v250 = vunpack.c.l.b16 %v70
  %v251 = vunpack.c.h.b16 %v70
  %v252 = vunpack.c.l.b16 %v71
  %v253 = vunpack.c.h.b16 %v71
  %v254 = vunpack.c.l.b16 %v72
  %v255 = vunpack.c.h.b16 %v72
  %v256 = vunpack.c.l.b16 %v73
  %v257 = vunpack.c.h.b16 %v73
  %v258 = vunpack.c.l.b16 %v74
  %v259 = vunpack.c.h.b16 %v74
  %v260 = vunpack.c.l.b16 %v75
  %v261 = vunpack.c.h.b16 %v75
  %v262 = vunpack.c.l.b16 %v76
  %v263 = vunpack.c.h.b16 %v76
  %v264 = vunpack.c.l.b16 %v77
  %v265 = vunpack.c.h.b16 %v77
  %v266 = vunpack.c.l.b16 %v78
  %v267 = vunpack.c.h.b16 %v78
  %v268 = vunpack.c.l.b16 %v79
  %v269 = vunpack.c.h.b16 %v79
  %v270 = vunpack.c.l.b16 %v80
  %v271 = vunpack.c.h.b16 %v80
  %v272 = vunpack.c.l.b16 %v81
  %v273 = vunpack.c.h.b16 %v81
  %v274 = vunpack.c.l.b16 %v82
  %v275 = vunpack.c.h.b16 %v82
  %v276 = vunpack.c.l.b16 %v83
  %v277 = vunpack.c.h.b16 %v83
  %v278 = vunpack.c.l.b16 %v84
  %v279 = vunpack.c.h.b16 %v84
  %v280 = vunpack.c.l.b16 %v85
  %v281 = vunpack.c.h.b16 %v85
  %v282 = vunpack.c.l.b16 %v86
  %v283 = vunpack.c.h.b16 %v86
  %v284 = vunpack.c.l.b16 %v87
  %v285 = vunpack.c.h.b16 %v87
  %v286 = vunpack.c.l.b16 %v88
  %v287 = vunpack.c.h.b16 %v88
  %v288 = vpack.c.b16 %v164, %v160
  %v289 = vpack.c.b16 %v165, %v161
  %v290 = vpack.c.b16 %v166, %v162
  %v291 = vpack.c.b16 %v167, %v163
  %v292 = vpack.c.b16 %v172, %v168
  %v293 = vpack.c.b16 %v173, %v169
  %v294 = vpack.c.b16 %v174, %v170
  %v295 = vpack.c.b16 %v175, %v171
  %v296 = vpack.c.b16 %v180, %v176
  %v297 = vpack.c.b16 %v181, %v177
  %v298 = vpack.c.b16 %v182, %v178
  %v299 = vpack.c.b16 %v183, %v179
  %v300 = vpack.c.b16 %v188, %v184
  %v301 = vpack.c.b16 %v189, %v185
  %v302 = vpack.c.b16 %v190, %v186
  %v303 = vpack.c.b16 %v191, %v187
  %v304 = vpack.c.b16 %v196, %v192
  %v305 = vpack.c.b16 %v197, %v193
  %v306 = vpack.c.b16 %v198, %v194
  %v307 = vpack.c.b16 %v199, %v195
  %v308 = vpack.c.b16 %v204, %v200
  %v309 = vpack.c.b16 %v205, %v201
  %v310 = vpack.c.b16 %v206, %v202
  %v311 = vpack.c.b16 %v207, %v203
  %v312 = vpack.c.b16 %v212, %v208
  %v313 = vpack.c.b16 %v213, %v209
  %v314 = vpack.c.b16 %v214, %v210
  %v315 = vpack.c.b16 %v215, %v211
  %v316 = vpack.c.b16 %v220, %v216
  %v317 = vpack.c.b16 %v221, %v217
  %v318 = vpack.c.b16 %v222, %v218
  %v319 = vpack.c.b16 %v223, %v219
  %v320 = vpack.c.b16 %v228, %v224
  %v321 = vpack.c.b16 %v229, %v225
  %v322 = vpack.c.b16 %v230, %v226
  %v323 = vpack.c.b16 %v231, %v227
  %v324 = vpack.c.b16 %v236, %v232
  %v325 = vpack.c.b16 %v237, %v233
  %v326 = vpack.c.b16 %v238, %v234
  %v327 = vpack.c.b16 %v239, %v235
  %v328 = vpack.c.b16 %v244, %v240
  %v329 = vpack.c.b16 %v245, %v241
  %v330 = vpack.c.b16 %v246, %v242
  %v331 = vpack.c.b16 %v247, %v243
  %v332 = vpack.c.b16 %v252, %v248
  %v333 = vpack.c.b16 %v253, %v249
  %v334 = vpack.c.b16 %v254, %v250
  %v335 = vpack.c.b16 %v255, %v251
  %v336 = vpack.c.b16 %v260, %v256
  %v337 = vpack.c.b16 %v261, %v257
  %v338 = vpack.c.b16 %v262, %v258
  %v339 = vpack.c.b16 %v263, %v259
  %v340 = vpack.c.b16 %v268, %v264
  %v341 = vpack.c.b16 %v269, %v265
  %v342 = vpack.c.b16 %v270, %v266
  %v343 = vpack.c.b16 %v271, %v267
  %v344 = vpack.c.b16 %v276, %v272
  %v345 = vpack.c.b16 %v277, %v273
  %v346 = vpack.c.b16 %v278, %v274
  %v347 = vpack.c.b16 %v279, %v275
  %v348 = vpack.c.b16 %v284, %v280
  %v349 = vpack.c.b16 %v285, %v281
  %v350 = vpack.c.b16 %v286, %v282
  %v351 = vpack.c.b16 %v287, %v283
  %416 = vmatpush.bf16.msra.mxu0 %v316
  %417 = vmatpush.bf16.msra.mxu0 %v312
  %418 = vmatpush.bf16.msra.mxu0 %v308
  %419 = vmatpush.bf16.msra.mxu0 %v304
  %420 = vmatpush.bf16.msra.mxu0 %v300
  %421 = vmatpush.bf16.msra.mxu0 %v296
  %422 = vmatpush.bf16.msra.mxu0 %v292
  %423 = vmatpush.bf16.msra.mxu0 %v288
  %424 = vmatmul.bf16.gmra.mxu0 %v92
  %v425 = vpop.f32.mrf.mxu0
  %v426 = vadd.f32 0.0, %v425
  %v427 = vpop.f32.mrf.mxu0
  %428 = vdwg.mxu0
  %429 = vmatpush.bf16.msra.mxu0 %v348
  %430 = vmatpush.bf16.msra.mxu0 %v344
  %431 = vmatpush.bf16.msra.mxu0 %v340
  %432 = vmatpush.bf16.msra.mxu0 %v336
  %433 = vmatpush.bf16.msra.mxu0 %v332
  %434 = vmatpush.bf16.msra.mxu0 %v328
  %435 = vmatpush.bf16.msra.mxu0 %v324
  %436 = vmatpush.bf16.msra.mxu0 %v320
  %437 = vmatmul.bf16.gmra.mxu0 %v93
  %v438 = vpop.f32.mrf.mxu0
  %v439 = vadd.f32 %v426, %v438
  %v440 = vpop.f32.mrf.mxu0
  %441 = vdwg.mxu0
  %442 = vmatpush.bf16.msra.mxu0 %v317
  %443 = vmatpush.bf16.msra.mxu0 %v313
  %444 = vmatpush.bf16.msra.mxu0 %v309
  %445 = vmatpush.bf16.msra.mxu0 %v305
  %446 = vmatpush.bf16.msra.mxu0 %v301
  %447 = vmatpush.bf16.msra.mxu0 %v297
  %448 = vmatpush.bf16.msra.mxu0 %v293
  %449 = vmatpush.bf16.msra.mxu0 %v289
  %450 = vmatmul.bf16.gmra.mxu0 %v92
  %v451 = vpop.f32.mrf.mxu0
  %v452 = vadd.f32 0.0, %v451
  %v453 = vpop.f32.mrf.mxu0
  %454 = vdwg.mxu0
  %455 = vmatpush.bf16.msra.mxu0 %v349
  %456 = vmatpush.bf16.msra.mxu0 %v345
  %457 = vmatpush.bf16.msra.mxu0 %v341
  %458 = vmatpush.bf16.msra.mxu0 %v337
  %459 = vmatpush.bf16.msra.mxu0 %v333
  %460 = vmatpush.bf16.msra.mxu0 %v329
  %461 = vmatpush.bf16.msra.mxu0 %v325
  %462 = vmatpush.bf16.msra.mxu0 %v321
  %463 = vmatmul.bf16.gmra.mxu0 %v93
  %v464 = vpop.f32.mrf.mxu0
  %v465 = vadd.f32 %v452, %v464
  %v466 = vpop.f32.mrf.mxu0
  %467 = vdwg.mxu0
  %468 = vmatpush.bf16.msra.mxu0 %v318
  %469 = vmatpush.bf16.msra.mxu0 %v314
  %470 = vmatpush.bf16.msra.mxu0 %v310
  %471 = vmatpush.bf16.msra.mxu0 %v306
  %472 = vmatpush.bf16.msra.mxu0 %v302
  %473 = vmatpush.bf16.msra.mxu0 %v298
  %474 = vmatpush.bf16.msra.mxu0 %v294
  %475 = vmatpush.bf16.msra.mxu0 %v290
  %476 = vmatmul.bf16.gmra.mxu0 %v92
  %v477 = vpop.f32.mrf.mxu0
  %v478 = vadd.f32 0.0, %v477
  %v479 = vpop.f32.mrf.mxu0
  %480 = vdwg.mxu0
  %481 = vmatpush.bf16.msra.mxu0 %v350
  %482 = vmatpush.bf16.msra.mxu0 %v346
  %483 = vmatpush.bf16.msra.mxu0 %v342
  %484 = vmatpush.bf16.msra.mxu0 %v338
  %485 = vmatpush.bf16.msra.mxu0 %v334
  %486 = vmatpush.bf16.msra.mxu0 %v330
  %487 = vmatpush.bf16.msra.mxu0 %v326
  %488 = vmatpush.bf16.msra.mxu0 %v322
  %489 = vmatmul.bf16.gmra.mxu0 %v93
  %v490 = vpop.f32.mrf.mxu0
  %v491 = vadd.f32 %v478, %v490
  %v492 = vpop.f32.mrf.mxu0
  %493 = vdwg.mxu0
  %494 = vmatpush.bf16.msra.mxu0 %v319
  %495 = vmatpush.bf16.msra.mxu0 %v315
  %496 = vmatpush.bf16.msra.mxu0 %v311
  %497 = vmatpush.bf16.msra.mxu0 %v307
  %498 = vmatpush.bf16.msra.mxu0 %v303
  %499 = vmatpush.bf16.msra.mxu0 %v299
  %500 = vmatpush.bf16.msra.mxu0 %v295
  %501 = vmatpush.bf16.msra.mxu0 %v291
  %502 = vmatmul.bf16.gmra.mxu0 %v92
  %v503 = vpop.f32.mrf.mxu0
  %v504 = vadd.f32 0.0, %v503
  %v505 = vpop.f32.mrf.mxu0
  %506 = vdwg.mxu0
  %507 = vmatpush.bf16.msra.mxu0 %v351
  %508 = vmatpush.bf16.msra.mxu0 %v347
  %509 = vmatpush.bf16.msra.mxu0 %v343
  %510 = vmatpush.bf16.msra.mxu0 %v339
  %511 = vmatpush.bf16.msra.mxu0 %v335
  %512 = vmatpush.bf16.msra.mxu0 %v331
  %513 = vmatpush.bf16.msra.mxu0 %v327
  %514 = vmatpush.bf16.msra.mxu0 %v323
  %515 = vmatmul.bf16.gmra.mxu0 %v93
  %v516 = vpop.f32.mrf.mxu0
  %v517 = vadd.f32 %v504, %v516
  %v518 = vpop.f32.mrf.mxu0
  %519 = vdwg.mxu0
  %v520 = vld [vmem:[%s2] sm:$0xff]
  %v521 = vld [vmem:[%s3] sm:$0xff]
  %523 = vset.pattern.permute.xlu0 0
  %524 = vperm.xlu0 %523, %v520
  %v525 = vpop.permute.xlu0 %524
  %v527 = vmul.f32 %v439, %v525
  %v528 = vmul.f32 %v465, %v525
  %v529 = vmul.f32 %v491, %v525
  %v530 = vmul.f32 %v517, %v525
  %532 = vset.pattern.permute.xlu0 0
  %533 = vperm.xlu0 %532, %v521
  %v534 = vpop.permute.xlu0 %533
  %v536 = vadd.f32 %v527, %v534
  %v537 = vadd.f32 %v528, %v534
  %v538 = vadd.f32 %v529, %v534
  %v539 = vadd.f32 %v530, %v534
  %vm540 = vcmp.ge.f32.partialorder %v536, 0.0
  %vm541 = vcmp.ge.f32.partialorder %v537, 0.0
  %vm542 = vcmp.ge.f32.partialorder %v538, 0.0
  %vm543 = vcmp.ge.f32.partialorder %v539, 0.0
  %v544 = vmul.f32 %v536, 0.2
  %v545 = vmul.f32 %v537, 0.2
  %v546 = vmul.f32 %v538, 0.2
  %v547 = vmul.f32 %v539, 0.2
  %v548 = vsel %vm540, %v536, %v544
  %v549 = vsel %vm541, %v537, %v545
  %v550 = vsel %vm542, %v538, %v546
  %v551 = vsel %vm543, %v539, %v547
  %v552 = vadd.f32 %v548, %v20
  %v553 = vadd.f32 %v549, %v21
  %v554 = vadd.f32 %v550, %v22
  %v555 = vadd.f32 %v551, %v23
  %556 = vst [vmem:[%s5] sm:$0xff] %v552
  %557 = vst [vmem:[%s5 + $0x8] sm:$0xff] %v553
  %558 = vst [vmem:[%s5 + $0x10] sm:$0xff] %v554
  %559 = vst [vmem:[%s5 + $0x18] sm:$0xff] %v555
  // Predicated region
  $region22: #{register_vae_forward.159} parent=0 // pred_check
    _
  $region23: #{register_vae_forward.159} parent=0 // pred_check_branch
    %561 = sbr.rel (0) target = $region25
  $region24: #{register_vae_forward.159} parent=0 // pred_region
    _
  $region25: #{register_vae_forward.159} parent=0 // pred_fallthru
    _
  // Predicated region
  $region26: #{register_vae_forward.159} parent=0 // pred_check
    _
  $region27: #{register_vae_forward.159} parent=0 // pred_check_branch
    %563 = sbr.rel (0) target = $region29
  $region28: #{register_vae_forward.159} parent=0 // pred_region
    _
  $region29: #{register_vae_forward.159} parent=0 // pred_fallthru
    _

// kernel: register_vae_forward.160
$region0: #{register_vae_forward.160}
  #allocation0 [shape = 'u32[]', space=smem, size = 0x4, offset = 0x4, fixed_abs, tag = 'smem constant byte address 0x4 - core index']
  #allocation1 [shape = 'u32[72,128]{1,0:T(1,128)}', space=vmem, size = 0x9000, scoped, tag = 'internal scratch']
  %s0 = inlined_call_operand.vmem [shape: bf16[8,256], index: 0, kind: input, shape index: {}]
  %s1 = inlined_call_operand.vmem [shape: bf16[256,512], index: 1, kind: input, shape index: {}]
  %s2 = inlined_call_operand.vmem [shape: f32[8,1], index: 2, kind: input, shape index: {}]
  %s3 = inlined_call_operand.vmem [shape: f32[8,1], index: 3, kind: input, shape index: {}]
  %s4 = inlined_call_operand.vmem [shape: f32[8,512], index: 4, kind: output, shape index: {}]
  %s5 = sld [smem:[#allocation0]]
  $region26: #{register_vae_forward.160} parent=0
    _
  %s7 = ssub.s32 1, %s5
  %s8 = scalar_select 0, %s7, %s5
  // Predicated region
  $region2: #{register_vae_forward.160} parent=0 // pred_check
    _
  $region3: #{register_vae_forward.160} parent=0 // pred_check_branch
    %10 = sbr.rel (0) target = $region5
  $region4: #{register_vae_forward.160} parent=0 // pred_region
    _
  $region5: #{register_vae_forward.160} parent=0 // pred_fallthru
    _
  // Predicated region
  $region6: #{register_vae_forward.160} parent=0 // pred_check
    _
  $region7: #{register_vae_forward.160} parent=0 // pred_check_branch
    %12 = sbr.rel (0) target = $region9
  $region8: #{register_vae_forward.160} parent=0 // pred_region
    _
  $region9: #{register_vae_forward.160} parent=0 // pred_fallthru
    _
  // Predicated region
  $region10: #{register_vae_forward.160} parent=0 // pred_check
    _
  $region11: #{register_vae_forward.160} parent=0 // pred_check_branch
    %14 = sbr.rel (0) target = $region13
  $region12: #{register_vae_forward.160} parent=0 // pred_region
    _
  $region13: #{register_vae_forward.160} parent=0 // pred_fallthru
    _
  // Predicated region
  $region14: #{register_vae_forward.160} parent=0 // pred_check
    _
  $region15: #{register_vae_forward.160} parent=0 // pred_check_branch
    %16 = sbr.rel (0) target = $region17
  $region16: #{register_vae_forward.160} parent=0 // pred_region
    _
  $region17: #{register_vae_forward.160} parent=0 // pred_fallthru
    _
  %v17 = vld [vmem:[%s0] sm:$0xff]
  %v18 = vld [vmem:[%s1] sm:$0xff]
  %v19 = vld [vmem:[%s1 + $0x8] sm:$0xff]
  %v20 = vld [vmem:[%s1 + $0x10] sm:$0xff]
  %v21 = vld [vmem:[%s1 + $0x18] sm:$0xff]
  %v22 = vld [vmem:[%s1 + $0x20] sm:$0xff]
  %v23 = vld [vmem:[%s1 + $0x28] sm:$0xff]
  %v24 = vld [vmem:[%s1 + $0x30] sm:$0xff]
  %v25 = vld [vmem:[%s1 + $0x38] sm:$0xff]
  %v26 = vld [vmem:[%s1 + $0x40] sm:$0xff]
  %v27 = vld [vmem:[%s1 + $0x48] sm:$0xff]
  %v28 = vld [vmem:[%s1 + $0x50] sm:$0xff]
  %v29 = vld [vmem:[%s1 + $0x58] sm:$0xff]
  %v30 = vld [vmem:[%s1 + $0x60] sm:$0xff]
  %v31 = vld [vmem:[%s1 + $0x68] sm:$0xff]
  %v32 = vld [vmem:[%s1 + $0x70] sm:$0xff]
  %v33 = vld [vmem:[%s1 + $0x78] sm:$0xff]
  %v34 = vld [vmem:[%s1 + $0x80] sm:$0xff]
  %v35 = vld [vmem:[%s1 + $0x88] sm:$0xff]
  %v36 = vld [vmem:[%s1 + $0x90] sm:$0xff]
  %v37 = vld [vmem:[%s1 + $0x98] sm:$0xff]
  %v38 = vld [vmem:[%s1 + $0xa0] sm:$0xff]
  %v39 = vld [vmem:[%s1 + $0xa8] sm:$0xff]
  %v40 = vld [vmem:[%s1 + $0xb0] sm:$0xff]
  %v41 = vld [vmem:[%s1 + $0xb8] sm:$0xff]
  %v42 = vld [vmem:[%s1 + $0xc0] sm:$0xff]
  %v43 = vld [vmem:[%s1 + $0xc8] sm:$0xff]
  %v44 = vld [vmem:[%s1 + $0xd0] sm:$0xff]
  %v45 = vld [vmem:[%s1 + $0xd8] sm:$0xff]
  %v46 = vld [vmem:[%s1 + $0xe0] sm:$0xff]
  %v47 = vld [vmem:[%s1 + $0xe8] sm:$0xff]
  %v48 = vld [vmem:[%s1 + $0xf0] sm:$0xff]
  %v49 = vld [vmem:[%s1 + $0xf8] sm:$0xff]
  %v50 = vld [vmem:[%s1 + $0x100] sm:$0xff]
  %v51 = vld [vmem:[%s1 + $0x108] sm:$0xff]
  %v52 = vld [vmem:[%s1 + $0x110] sm:$0xff]
  %v53 = vld [vmem:[%s1 + $0x118] sm:$0xff]
  %v54 = vld [vmem:[%s1 + $0x120] sm:$0xff]
  %v55 = vld [vmem:[%s1 + $0x128] sm:$0xff]
  %v56 = vld [vmem:[%s1 + $0x130] sm:$0xff]
  %v57 = vld [vmem:[%s1 + $0x138] sm:$0xff]
  %v58 = vld [vmem:[%s1 + $0x140] sm:$0xff]
  %v59 = vld [vmem:[%s1 + $0x148] sm:$0xff]
  %v60 = vld [vmem:[%s1 + $0x150] sm:$0xff]
  %v61 = vld [vmem:[%s1 + $0x158] sm:$0xff]
  %v62 = vld [vmem:[%s1 + $0x160] sm:$0xff]
  %v63 = vld [vmem:[%s1 + $0x168] sm:$0xff]
  %v64 = vld [vmem:[%s1 + $0x170] sm:$0xff]
  %v65 = vld [vmem:[%s1 + $0x178] sm:$0xff]
  %v66 = vld [vmem:[%s1 + $0x180] sm:$0xff]
  %v67 = vld [vmem:[%s1 + $0x188] sm:$0xff]
  %v68 = vld [vmem:[%s1 + $0x190] sm:$0xff]
  %v69 = vld [vmem:[%s1 + $0x198] sm:$0xff]
  %v70 = vld [vmem:[%s1 + $0x1a0] sm:$0xff]
  %v71 = vld [vmem:[%s1 + $0x1a8] sm:$0xff]
  %v72 = vld [vmem:[%s1 + $0x1b0] sm:$0xff]
  %v73 = vld [vmem:[%s1 + $0x1b8] sm:$0xff]
  %v74 = vld [vmem:[%s1 + $0x1c0] sm:$0xff]
  %v75 = vld [vmem:[%s1 + $0x1c8] sm:$0xff]
  %v76 = vld [vmem:[%s1 + $0x1d0] sm:$0xff]
  %v77 = vld [vmem:[%s1 + $0x1d8] sm:$0xff]
  %v78 = vld [vmem:[%s1 + $0x1e0] sm:$0xff]
  %v79 = vld [vmem:[%s1 + $0x1e8] sm:$0xff]
  %v80 = vld [vmem:[%s1 + $0x1f0] sm:$0xff]
  %v81 = vld [vmem:[%s1 + $0x1f8] sm:$0xff]
  %v83 = vunpack.c.l.b16 %v17
  %v84 = vunpack.c.h.b16 %v17
  %v85 = vpack.c.b16 %v83, %v83
  %v86 = vpack.c.b16 %v84, %v84
  %v153 = vunpack.c.l.b16 %v18
  %v154 = vunpack.c.h.b16 %v18
  %v155 = vunpack.c.l.b16 %v19
  %v156 = vunpack.c.h.b16 %v19
  %v157 = vunpack.c.l.b16 %v20
  %v158 = vunpack.c.h.b16 %v20
  %v159 = vunpack.c.l.b16 %v21
  %v160 = vunpack.c.h.b16 %v21
  %v161 = vunpack.c.l.b16 %v22
  %v162 = vunpack.c.h.b16 %v22
  %v163 = vunpack.c.l.b16 %v23
  %v164 = vunpack.c.h.b16 %v23
  %v165 = vunpack.c.l.b16 %v24
  %v166 = vunpack.c.h.b16 %v24
  %v167 = vunpack.c.l.b16 %v25
  %v168 = vunpack.c.h.b16 %v25
  %v169 = vunpack.c.l.b16 %v26
  %v170 = vunpack.c.h.b16 %v26
  %v171 = vunpack.c.l.b16 %v27
  %v172 = vunpack.c.h.b16 %v27
  %v173 = vunpack.c.l.b16 %v28
  %v174 = vunpack.c.h.b16 %v28
  %v175 = vunpack.c.l.b16 %v29
  %v176 = vunpack.c.h.b16 %v29
  %v177 = vunpack.c.l.b16 %v30
  %v178 = vunpack.c.h.b16 %v30
  %v179 = vunpack.c.l.b16 %v31
  %v180 = vunpack.c.h.b16 %v31
  %v181 = vunpack.c.l.b16 %v32
  %v182 = vunpack.c.h.b16 %v32
  %v183 = vunpack.c.l.b16 %v33
  %v184 = vunpack.c.h.b16 %v33
  %v185 = vunpack.c.l.b16 %v34
  %v186 = vunpack.c.h.b16 %v34
  %v187 = vunpack.c.l.b16 %v35
  %v188 = vunpack.c.h.b16 %v35
  %v189 = vunpack.c.l.b16 %v36
  %v190 = vunpack.c.h.b16 %v36
  %v191 = vunpack.c.l.b16 %v37
  %v192 = vunpack.c.h.b16 %v37
  %v193 = vunpack.c.l.b16 %v38
  %v194 = vunpack.c.h.b16 %v38
  %v195 = vunpack.c.l.b16 %v39
  %v196 = vunpack.c.h.b16 %v39
  %v197 = vunpack.c.l.b16 %v40
  %v198 = vunpack.c.h.b16 %v40
  %v199 = vunpack.c.l.b16 %v41
  %v200 = vunpack.c.h.b16 %v41
  %v201 = vunpack.c.l.b16 %v42
  %v202 = vunpack.c.h.b16 %v42
  %v203 = vunpack.c.l.b16 %v43
  %v204 = vunpack.c.h.b16 %v43
  %v205 = vunpack.c.l.b16 %v44
  %v206 = vunpack.c.h.b16 %v44
  %v207 = vunpack.c.l.b16 %v45
  %v208 = vunpack.c.h.b16 %v45
  %v209 = vunpack.c.l.b16 %v46
  %v210 = vunpack.c.h.b16 %v46
  %v211 = vunpack.c.l.b16 %v47
  %v212 = vunpack.c.h.b16 %v47
  %v213 = vunpack.c.l.b16 %v48
  %v214 = vunpack.c.h.b16 %v48
  %v215 = vunpack.c.l.b16 %v49
  %v216 = vunpack.c.h.b16 %v49
  %v217 = vunpack.c.l.b16 %v50
  %v218 = vunpack.c.h.b16 %v50
  %v219 = vunpack.c.l.b16 %v51
  %v220 = vunpack.c.h.b16 %v51
  %v221 = vunpack.c.l.b16 %v52
  %v222 = vunpack.c.h.b16 %v52
  %v223 = vunpack.c.l.b16 %v53
  %v224 = vunpack.c.h.b16 %v53
  %v225 = vunpack.c.l.b16 %v54
  %v226 = vunpack.c.h.b16 %v54
  %v227 = vunpack.c.l.b16 %v55
  %v228 = vunpack.c.h.b16 %v55
  %v229 = vunpack.c.l.b16 %v56
  %v230 = vunpack.c.h.b16 %v56
  %v231 = vunpack.c.l.b16 %v57
  %v232 = vunpack.c.h.b16 %v57
  %v233 = vunpack.c.l.b16 %v58
  %v234 = vunpack.c.h.b16 %v58
  %v235 = vunpack.c.l.b16 %v59
  %v236 = vunpack.c.h.b16 %v59
  %v237 = vunpack.c.l.b16 %v60
  %v238 = vunpack.c.h.b16 %v60
  %v239 = vunpack.c.l.b16 %v61
  %v240 = vunpack.c.h.b16 %v61
  %v241 = vunpack.c.l.b16 %v62
  %v242 = vunpack.c.h.b16 %v62
  %v243 = vunpack.c.l.b16 %v63
  %v244 = vunpack.c.h.b16 %v63
  %v245 = vunpack.c.l.b16 %v64
  %v246 = vunpack.c.h.b16 %v64
  %v247 = vunpack.c.l.b16 %v65
  %v248 = vunpack.c.h.b16 %v65
  %v249 = vunpack.c.l.b16 %v66
  %v250 = vunpack.c.h.b16 %v66
  %v251 = vunpack.c.l.b16 %v67
  %v252 = vunpack.c.h.b16 %v67
  %v253 = vunpack.c.l.b16 %v68
  %v254 = vunpack.c.h.b16 %v68
  %v255 = vunpack.c.l.b16 %v69
  %v256 = vunpack.c.h.b16 %v69
  %v257 = vunpack.c.l.b16 %v70
  %v258 = vunpack.c.h.b16 %v70
  %v259 = vunpack.c.l.b16 %v71
  %v260 = vunpack.c.h.b16 %v71
  %v261 = vunpack.c.l.b16 %v72
  %v262 = vunpack.c.h.b16 %v72
  %v263 = vunpack.c.l.b16 %v73
  %v264 = vunpack.c.h.b16 %v73
  %v265 = vunpack.c.l.b16 %v74
  %v266 = vunpack.c.h.b16 %v74
  %v267 = vunpack.c.l.b16 %v75
  %v268 = vunpack.c.h.b16 %v75
  %v269 = vunpack.c.l.b16 %v76
  %v270 = vunpack.c.h.b16 %v76
  %v271 = vunpack.c.l.b16 %v77
  %v272 = vunpack.c.h.b16 %v77
  %v273 = vunpack.c.l.b16 %v78
  %v274 = vunpack.c.h.b16 %v78
  %v275 = vunpack.c.l.b16 %v79
  %v276 = vunpack.c.h.b16 %v79
  %v277 = vunpack.c.l.b16 %v80
  %v278 = vunpack.c.h.b16 %v80
  %v279 = vunpack.c.l.b16 %v81
  %v280 = vunpack.c.h.b16 %v81
  %v281 = vpack.c.b16 %v157, %v153
  %v282 = vpack.c.b16 %v158, %v154
  %v283 = vpack.c.b16 %v159, %v155
  %v284 = vpack.c.b16 %v160, %v156
  %v285 = vpack.c.b16 %v165, %v161
  %v286 = vpack.c.b16 %v166, %v162
  %v287 = vpack.c.b16 %v167, %v163
  %v288 = vpack.c.b16 %v168, %v164
  %v289 = vpack.c.b16 %v173, %v169
  %v290 = vpack.c.b16 %v174, %v170
  %v291 = vpack.c.b16 %v175, %v171
  %v292 = vpack.c.b16 %v176, %v172
  %v293 = vpack.c.b16 %v181, %v177
  %v294 = vpack.c.b16 %v182, %v178
  %v295 = vpack.c.b16 %v183, %v179
  %v296 = vpack.c.b16 %v184, %v180
  %v297 = vpack.c.b16 %v189, %v185
  %v298 = vpack.c.b16 %v190, %v186
  %v299 = vpack.c.b16 %v191, %v187
  %v300 = vpack.c.b16 %v192, %v188
  %v301 = vpack.c.b16 %v197, %v193
  %v302 = vpack.c.b16 %v198, %v194
  %v303 = vpack.c.b16 %v199, %v195
  %v304 = vpack.c.b16 %v200, %v196
  %v305 = vpack.c.b16 %v205, %v201
  %v306 = vpack.c.b16 %v206, %v202
  %v307 = vpack.c.b16 %v207, %v203
  %v308 = vpack.c.b16 %v208, %v204
  %v309 = vpack.c.b16 %v213, %v209
  %v310 = vpack.c.b16 %v214, %v210
  %v311 = vpack.c.b16 %v215, %v211
  %v312 = vpack.c.b16 %v216, %v212
  %v313 = vpack.c.b16 %v221, %v217
  %v314 = vpack.c.b16 %v222, %v218
  %v315 = vpack.c.b16 %v223, %v219
  %v316 = vpack.c.b16 %v224, %v220
  %v317 = vpack.c.b16 %v229, %v225
  %v318 = vpack.c.b16 %v230, %v226
  %v319 = vpack.c.b16 %v231, %v227
  %v320 = vpack.c.b16 %v232, %v228
  %v321 = vpack.c.b16 %v237, %v233
  %v322 = vpack.c.b16 %v238, %v234
  %v323 = vpack.c.b16 %v239, %v235
  %v324 = vpack.c.b16 %v240, %v236
  %v325 = vpack.c.b16 %v245, %v241
  %v326 = vpack.c.b16 %v246, %v242
  %v327 = vpack.c.b16 %v247, %v243
  %v328 = vpack.c.b16 %v248, %v244
  %v329 = vpack.c.b16 %v253, %v249
  %v330 = vpack.c.b16 %v254, %v250
  %v331 = vpack.c.b16 %v255, %v251
  %v332 = vpack.c.b16 %v256, %v252
  %v333 = vpack.c.b16 %v261, %v257
  %v334 = vpack.c.b16 %v262, %v258
  %v335 = vpack.c.b16 %v263, %v259
  %v336 = vpack.c.b16 %v264, %v260
  %v337 = vpack.c.b16 %v269, %v265
  %v338 = vpack.c.b16 %v270, %v266
  %v339 = vpack.c.b16 %v271, %v267
  %v340 = vpack.c.b16 %v272, %v268
  %v341 = vpack.c.b16 %v277, %v273
  %v342 = vpack.c.b16 %v278, %v274
  %v343 = vpack.c.b16 %v279, %v275
  %v344 = vpack.c.b16 %v280, %v276
  %409 = vmatpush.bf16.msra.mxu0 %v309
  %410 = vmatpush.bf16.msra.mxu0 %v305
  %411 = vmatpush.bf16.msra.mxu0 %v301
  %412 = vmatpush.bf16.msra.mxu0 %v297
  %413 = vmatpush.bf16.msra.mxu0 %v293
  %414 = vmatpush.bf16.msra.mxu0 %v289
  %415 = vmatpush.bf16.msra.mxu0 %v285
  %416 = vmatpush.bf16.msra.mxu0 %v281
  %417 = vmatmul.bf16.gmra.mxu0 %v85
  %v418 = vpop.f32.mrf.mxu0
  %v419 = vadd.f32 0.0, %v418
  %v420 = vpop.f32.mrf.mxu0
  %421 = vdwg.mxu0
  %422 = vmatpush.bf16.msra.mxu0 %v341
  %423 = vmatpush.bf16.msra.mxu0 %v337
  %424 = vmatpush.bf16.msra.mxu0 %v333
  %425 = vmatpush.bf16.msra.mxu0 %v329
  %426 = vmatpush.bf16.msra.mxu0 %v325
  %427 = vmatpush.bf16.msra.mxu0 %v321
  %428 = vmatpush.bf16.msra.mxu0 %v317
  %429 = vmatpush.bf16.msra.mxu0 %v313
  %430 = vmatmul.bf16.gmra.mxu0 %v86
  %v431 = vpop.f32.mrf.mxu0
  %v432 = vadd.f32 %v419, %v431
  %v433 = vpop.f32.mrf.mxu0
  %434 = vdwg.mxu0
  %435 = vmatpush.bf16.msra.mxu0 %v310
  %436 = vmatpush.bf16.msra.mxu0 %v306
  %437 = vmatpush.bf16.msra.mxu0 %v302
  %438 = vmatpush.bf16.msra.mxu0 %v298
  %439 = vmatpush.bf16.msra.mxu0 %v294
  %440 = vmatpush.bf16.msra.mxu0 %v290
  %441 = vmatpush.bf16.msra.mxu0 %v286
  %442 = vmatpush.bf16.msra.mxu0 %v282
  %443 = vmatmul.bf16.gmra.mxu0 %v85
  %v444 = vpop.f32.mrf.mxu0
  %v445 = vadd.f32 0.0, %v444
  %v446 = vpop.f32.mrf.mxu0
  %447 = vdwg.mxu0
  %448 = vmatpush.bf16.msra.mxu0 %v342
  %449 = vmatpush.bf16.msra.mxu0 %v338
  %450 = vmatpush.bf16.msra.mxu0 %v334
  %451 = vmatpush.bf16.msra.mxu0 %v330
  %452 = vmatpush.bf16.msra.mxu0 %v326
  %453 = vmatpush.bf16.msra.mxu0 %v322
  %454 = vmatpush.bf16.msra.mxu0 %v318
  %455 = vmatpush.bf16.msra.mxu0 %v314
  %456 = vmatmul.bf16.gmra.mxu0 %v86
  %v457 = vpop.f32.mrf.mxu0
  %v458 = vadd.f32 %v445, %v457
  %v459 = vpop.f32.mrf.mxu0
  %460 = vdwg.mxu0
  %461 = vmatpush.bf16.msra.mxu0 %v311
  %462 = vmatpush.bf16.msra.mxu0 %v307
  %463 = vmatpush.bf16.msra.mxu0 %v303
  %464 = vmatpush.bf16.msra.mxu0 %v299
  %465 = vmatpush.bf16.msra.mxu0 %v295
  %466 = vmatpush.bf16.msra.mxu0 %v291
  %467 = vmatpush.bf16.msra.mxu0 %v287
  %468 = vmatpush.bf16.msra.mxu0 %v283
  %469 = vmatmul.bf16.gmra.mxu0 %v85
  %v470 = vpop.f32.mrf.mxu0
  %v471 = vadd.f32 0.0, %v470
  %v472 = vpop.f32.mrf.mxu0
  %473 = vdwg.mxu0
  %474 = vmatpush.bf16.msra.mxu0 %v343
  %475 = vmatpush.bf16.msra.mxu0 %v339
  %476 = vmatpush.bf16.msra.mxu0 %v335
  %477 = vmatpush.bf16.msra.mxu0 %v331
  %478 = vmatpush.bf16.msra.mxu0 %v327
  %479 = vmatpush.bf16.msra.mxu0 %v323
  %480 = vmatpush.bf16.msra.mxu0 %v319
  %481 = vmatpush.bf16.msra.mxu0 %v315
  %482 = vmatmul.bf16.gmra.mxu0 %v86
  %v483 = vpop.f32.mrf.mxu0
  %v484 = vadd.f32 %v471, %v483
  %v485 = vpop.f32.mrf.mxu0
  %486 = vdwg.mxu0
  %487 = vmatpush.bf16.msra.mxu0 %v312
  %488 = vmatpush.bf16.msra.mxu0 %v308
  %489 = vmatpush.bf16.msra.mxu0 %v304
  %490 = vmatpush.bf16.msra.mxu0 %v300
  %491 = vmatpush.bf16.msra.mxu0 %v296
  %492 = vmatpush.bf16.msra.mxu0 %v292
  %493 = vmatpush.bf16.msra.mxu0 %v288
  %494 = vmatpush.bf16.msra.mxu0 %v284
  %495 = vmatmul.bf16.gmra.mxu0 %v85
  %v496 = vpop.f32.mrf.mxu0
  %v497 = vadd.f32 0.0, %v496
  %v498 = vpop.f32.mrf.mxu0
  %499 = vdwg.mxu0
  %500 = vmatpush.bf16.msra.mxu0 %v344
  %501 = vmatpush.bf16.msra.mxu0 %v340
  %502 = vmatpush.bf16.msra.mxu0 %v336
  %503 = vmatpush.bf16.msra.mxu0 %v332
  %504 = vmatpush.bf16.msra.mxu0 %v328
  %505 = vmatpush.bf16.msra.mxu0 %v324
  %506 = vmatpush.bf16.msra.mxu0 %v320
  %507 = vmatpush.bf16.msra.mxu0 %v316
  %508 = vmatmul.bf16.gmra.mxu0 %v86
  %v509 = vpop.f32.mrf.mxu0
  %v510 = vadd.f32 %v497, %v509
  %v511 = vpop.f32.mrf.mxu0
  %512 = vdwg.mxu0
  %v513 = vld [vmem:[%s2] sm:$0xff]
  %v514 = vld [vmem:[%s3] sm:$0xff]
  %516 = vset.pattern.permute.xlu0 0
  %517 = vperm.xlu0 %516, %v513
  %v518 = vpop.permute.xlu0 %517
  %v520 = vmul.f32 %v432, %v518
  %v521 = vmul.f32 %v458, %v518
  %v522 = vmul.f32 %v484, %v518
  %v523 = vmul.f32 %v510, %v518
  %525 = vset.pattern.permute.xlu0 0
  %526 = vperm.xlu0 %525, %v514
  %v527 = vpop.permute.xlu0 %526
  %v529 = vadd.f32 %v520, %v527
  %v530 = vadd.f32 %v521, %v527
  %v531 = vadd.f32 %v522, %v527
  %v532 = vadd.f32 %v523, %v527
  %vm533 = vcmp.ge.f32.partialorder %v529, 0.0
  %vm534 = vcmp.ge.f32.partialorder %v530, 0.0
  %vm535 = vcmp.ge.f32.partialorder %v531, 0.0
  %vm536 = vcmp.ge.f32.partialorder %v532, 0.0
  %v537 = vmul.f32 %v529, 0.2
  %v538 = vmul.f32 %v530, 0.2
  %v539 = vmul.f32 %v531, 0.2
  %v540 = vmul.f32 %v532, 0.2
  %v541 = vsel %vm533, %v529, %v537
  %v542 = vsel %vm534, %v530, %v538
  %v543 = vsel %vm535, %v531, %v539
  %v544 = vsel %vm536, %v532, %v540
  %545 = vst [vmem:[%s4] sm:$0xff] %v541
  %546 = vst [vmem:[%s4 + $0x8] sm:$0xff] %v542
  %547 = vst [vmem:[%s4 + $0x10] sm:$0xff] %v543
  %548 = vst [vmem:[%s4 + $0x18] sm:$0xff] %v544
  // Predicated region
  $region18: #{register_vae_forward.160} parent=0 // pred_check
    _
  $region19: #{register_vae_forward.160} parent=0 // pred_check_branch
    %550 = sbr.rel (0) target = $region21
  $region20: #{register_vae_forward.160} parent=0 // pred_region
    _
  $region21: #{register_vae_forward.160} parent=0 // pred_fallthru
    _
  // Predicated region
  $region22: #{register_vae_forward.160} parent=0 // pred_check
    _
  $region23: #{register_vae_forward.160} parent=0 // pred_check_branch
    %552 = sbr.rel (0) target = $region25
  $region24: #{register_vae_forward.160} parent=0 // pred_region
    _
  $region25: #{register_vae_forward.160} parent=0 // pred_fallthru
    _

// kernel: register_vae_forward.161
$region0: #{register_vae_forward.161}
  #allocation0 [shape = 'u32[]', space=smem, size = 0x4, offset = 0x4, fixed_abs, tag = 'smem constant byte address 0x4 - core index']
  #allocation1 [shape = 'u32[72,128]{1,0:T(1,128)}', space=vmem, size = 0x9000, scoped, tag = 'internal scratch']
  %s0 = inlined_call_operand.vmem [shape: bf16[2,256], index: 0, kind: input, shape index: {}]
  %s1 = inlined_call_operand.vmem [shape: bf16[256,512], index: 1, kind: input, shape index: {}]
  %s2 = inlined_call_operand.vmem [shape: f32[2,1], index: 2, kind: input, shape index: {}]
  %s3 = inlined_call_operand.vmem [shape: f32[2,1], index: 3, kind: input, shape index: {}]
  %s4 = inlined_call_operand.vmem [shape: f32[2,512], index: 4, kind: output, shape index: {}]
  %s5 = sld [smem:[#allocation0]]
  $region26: #{register_vae_forward.161} parent=0
    _
  %s7 = ssub.s32 1, %s5
  %s8 = scalar_select 0, %s7, %s5
  // Predicated region
  $region2: #{register_vae_forward.161} parent=0 // pred_check
    _
  $region3: #{register_vae_forward.161} parent=0 // pred_check_branch
    %10 = sbr.rel (0) target = $region5
  $region4: #{register_vae_forward.161} parent=0 // pred_region
    _
  $region5: #{register_vae_forward.161} parent=0 // pred_fallthru
    _
  // Predicated region
  $region6: #{register_vae_forward.161} parent=0 // pred_check
    _
  $region7: #{register_vae_forward.161} parent=0 // pred_check_branch
    %12 = sbr.rel (0) target = $region9
  $region8: #{register_vae_forward.161} parent=0 // pred_region
    _
  $region9: #{register_vae_forward.161} parent=0 // pred_fallthru
    _
  // Predicated region
  $region10: #{register_vae_forward.161} parent=0 // pred_check
    _
  $region11: #{register_vae_forward.161} parent=0 // pred_check_branch
    %14 = sbr.rel (0) target = $region13
  $region12: #{register_vae_forward.161} parent=0 // pred_region
    _
  $region13: #{register_vae_forward.161} parent=0 // pred_fallthru
    _
  // Predicated region
  $region14: #{register_vae_forward.161} parent=0 // pred_check
    _
  $region15: #{register_vae_forward.161} parent=0 // pred_check_branch
    %16 = sbr.rel (0) target = $region17
  $region16: #{register_vae_forward.161} parent=0 // pred_region
    _
  $region17: #{register_vae_forward.161} parent=0 // pred_fallthru
    _
  %v17 = vld [vmem:[%s0] sm:$0x3]
  %v18 = vld [vmem:[%s1] sm:$0xff]
  %v19 = vld [vmem:[%s1 + $0x8] sm:$0xff]
  %v20 = vld [vmem:[%s1 + $0x10] sm:$0xff]
  %v21 = vld [vmem:[%s1 + $0x18] sm:$0xff]
  %v22 = vld [vmem:[%s1 + $0x20] sm:$0xff]
  %v23 = vld [vmem:[%s1 + $0x28] sm:$0xff]
  %v24 = vld [vmem:[%s1 + $0x30] sm:$0xff]
  %v25 = vld [vmem:[%s1 + $0x38] sm:$0xff]
  %v26 = vld [vmem:[%s1 + $0x40] sm:$0xff]
  %v27 = vld [vmem:[%s1 + $0x48] sm:$0xff]
  %v28 = vld [vmem:[%s1 + $0x50] sm:$0xff]
  %v29 = vld [vmem:[%s1 + $0x58] sm:$0xff]
  %v30 = vld [vmem:[%s1 + $0x60] sm:$0xff]
  %v31 = vld [vmem:[%s1 + $0x68] sm:$0xff]
  %v32 = vld [vmem:[%s1 + $0x70] sm:$0xff]
  %v33 = vld [vmem:[%s1 + $0x78] sm:$0xff]
  %v34 = vld [vmem:[%s1 + $0x80] sm:$0xff]
  %v35 = vld [vmem:[%s1 + $0x88] sm:$0xff]
  %v36 = vld [vmem:[%s1 + $0x90] sm:$0xff]
  %v37 = vld [vmem:[%s1 + $0x98] sm:$0xff]
  %v38 = vld [vmem:[%s1 + $0xa0] sm:$0xff]
  %v39 = vld [vmem:[%s1 + $0xa8] sm:$0xff]
  %v40 = vld [vmem:[%s1 + $0xb0] sm:$0xff]
  %v41 = vld [vmem:[%s1 + $0xb8] sm:$0xff]
  %v42 = vld [vmem:[%s1 + $0xc0] sm:$0xff]
  %v43 = vld [vmem:[%s1 + $0xc8] sm:$0xff]
  %v44 = vld [vmem:[%s1 + $0xd0] sm:$0xff]
  %v45 = vld [vmem:[%s1 + $0xd8] sm:$0xff]
  %v46 = vld [vmem:[%s1 + $0xe0] sm:$0xff]
  %v47 = vld [vmem:[%s1 + $0xe8] sm:$0xff]
  %v48 = vld [vmem:[%s1 + $0xf0] sm:$0xff]
  %v49 = vld [vmem:[%s1 + $0xf8] sm:$0xff]
  %v50 = vld [vmem:[%s1 + $0x100] sm:$0xff]
  %v51 = vld [vmem:[%s1 + $0x108] sm:$0xff]
  %v52 = vld [vmem:[%s1 + $0x110] sm:$0xff]
  %v53 = vld [vmem:[%s1 + $0x118] sm:$0xff]
  %v54 = vld [vmem:[%s1 + $0x120] sm:$0xff]
  %v55 = vld [vmem:[%s1 + $0x128] sm:$0xff]
  %v56 = vld [vmem:[%s1 + $0x130] sm:$0xff]
  %v57 = vld [vmem:[%s1 + $0x138] sm:$0xff]
  %v58 = vld [vmem:[%s1 + $0x140] sm:$0xff]
  %v59 = vld [vmem:[%s1 + $0x148] sm:$0xff]
  %v60 = vld [vmem:[%s1 + $0x150] sm:$0xff]
  %v61 = vld [vmem:[%s1 + $0x158] sm:$0xff]
  %v62 = vld [vmem:[%s1 + $0x160] sm:$0xff]
  %v63 = vld [vmem:[%s1 + $0x168] sm:$0xff]
  %v64 = vld [vmem:[%s1 + $0x170] sm:$0xff]
  %v65 = vld [vmem:[%s1 + $0x178] sm:$0xff]
  %v66 = vld [vmem:[%s1 + $0x180] sm:$0xff]
  %v67 = vld [vmem:[%s1 + $0x188] sm:$0xff]
  %v68 = vld [vmem:[%s1 + $0x190] sm:$0xff]
  %v69 = vld [vmem:[%s1 + $0x198] sm:$0xff]
  %v70 = vld [vmem:[%s1 + $0x1a0] sm:$0xff]
  %v71 = vld [vmem:[%s1 + $0x1a8] sm:$0xff]
  %v72 = vld [vmem:[%s1 + $0x1b0] sm:$0xff]
  %v73 = vld [vmem:[%s1 + $0x1b8] sm:$0xff]
  %v74 = vld [vmem:[%s1 + $0x1c0] sm:$0xff]
  %v75 = vld [vmem:[%s1 + $0x1c8] sm:$0xff]
  %v76 = vld [vmem:[%s1 + $0x1d0] sm:$0xff]
  %v77 = vld [vmem:[%s1 + $0x1d8] sm:$0xff]
  %v78 = vld [vmem:[%s1 + $0x1e0] sm:$0xff]
  %v79 = vld [vmem:[%s1 + $0x1e8] sm:$0xff]
  %v80 = vld [vmem:[%s1 + $0x1f0] sm:$0xff]
  %v81 = vld [vmem:[%s1 + $0x1f8] sm:$0xff]
  %83 = vst [vmem:[#allocation1] ss:$9 sm:$0xff] %v17
  %v84 = vld [vmem:[#allocation1] sm:$0xff]
  %v85 = vld [vmem:[#allocation1 + $0x9] sm:$0xff]
  %v152 = vunpack.c.l.b16 %v18
  %v153 = vunpack.c.h.b16 %v18
  %v154 = vunpack.c.l.b16 %v19
  %v155 = vunpack.c.h.b16 %v19
  %v156 = vunpack.c.l.b16 %v20
  %v157 = vunpack.c.h.b16 %v20
  %v158 = vunpack.c.l.b16 %v21
  %v159 = vunpack.c.h.b16 %v21
  %v160 = vunpack.c.l.b16 %v22
  %v161 = vunpack.c.h.b16 %v22
  %v162 = vunpack.c.l.b16 %v23
  %v163 = vunpack.c.h.b16 %v23
  %v164 = vunpack.c.l.b16 %v24
  %v165 = vunpack.c.h.b16 %v24
  %v166 = vunpack.c.l.b16 %v25
  %v167 = vunpack.c.h.b16 %v25
  %v168 = vunpack.c.l.b16 %v26
  %v169 = vunpack.c.h.b16 %v26
  %v170 = vunpack.c.l.b16 %v27
  %v171 = vunpack.c.h.b16 %v27
  %v172 = vunpack.c.l.b16 %v28
  %v173 = vunpack.c.h.b16 %v28
  %v174 = vunpack.c.l.b16 %v29
  %v175 = vunpack.c.h.b16 %v29
  %v176 = vunpack.c.l.b16 %v30
  %v177 = vunpack.c.h.b16 %v30
  %v178 = vunpack.c.l.b16 %v31
  %v179 = vunpack.c.h.b16 %v31
  %v180 = vunpack.c.l.b16 %v32
  %v181 = vunpack.c.h.b16 %v32
  %v182 = vunpack.c.l.b16 %v33
  %v183 = vunpack.c.h.b16 %v33
  %v184 = vunpack.c.l.b16 %v34
  %v185 = vunpack.c.h.b16 %v34
  %v186 = vunpack.c.l.b16 %v35
  %v187 = vunpack.c.h.b16 %v35
  %v188 = vunpack.c.l.b16 %v36
  %v189 = vunpack.c.h.b16 %v36
  %v190 = vunpack.c.l.b16 %v37
  %v191 = vunpack.c.h.b16 %v37
  %v192 = vunpack.c.l.b16 %v38
  %v193 = vunpack.c.h.b16 %v38
  %v194 = vunpack.c.l.b16 %v39
  %v195 = vunpack.c.h.b16 %v39
  %v196 = vunpack.c.l.b16 %v40
  %v197 = vunpack.c.h.b16 %v40
  %v198 = vunpack.c.l.b16 %v41
  %v199 = vunpack.c.h.b16 %v41
  %v200 = vunpack.c.l.b16 %v42
  %v201 = vunpack.c.h.b16 %v42
  %v202 = vunpack.c.l.b16 %v43
  %v203 = vunpack.c.h.b16 %v43
  %v204 = vunpack.c.l.b16 %v44
  %v205 = vunpack.c.h.b16 %v44
  %v206 = vunpack.c.l.b16 %v45
  %v207 = vunpack.c.h.b16 %v45
  %v208 = vunpack.c.l.b16 %v46
  %v209 = vunpack.c.h.b16 %v46
  %v210 = vunpack.c.l.b16 %v47
  %v211 = vunpack.c.h.b16 %v47
  %v212 = vunpack.c.l.b16 %v48
  %v213 = vunpack.c.h.b16 %v48
  %v214 = vunpack.c.l.b16 %v49
  %v215 = vunpack.c.h.b16 %v49
  %v216 = vunpack.c.l.b16 %v50
  %v217 = vunpack.c.h.b16 %v50
  %v218 = vunpack.c.l.b16 %v51
  %v219 = vunpack.c.h.b16 %v51
  %v220 = vunpack.c.l.b16 %v52
  %v221 = vunpack.c.h.b16 %v52
  %v222 = vunpack.c.l.b16 %v53
  %v223 = vunpack.c.h.b16 %v53
  %v224 = vunpack.c.l.b16 %v54
  %v225 = vunpack.c.h.b16 %v54
  %v226 = vunpack.c.l.b16 %v55
  %v227 = vunpack.c.h.b16 %v55
  %v228 = vunpack.c.l.b16 %v56
  %v229 = vunpack.c.h.b16 %v56
  %v230 = vunpack.c.l.b16 %v57
  %v231 = vunpack.c.h.b16 %v57
  %v232 = vunpack.c.l.b16 %v58
  %v233 = vunpack.c.h.b16 %v58
  %v234 = vunpack.c.l.b16 %v59
  %v235 = vunpack.c.h.b16 %v59
  %v236 = vunpack.c.l.b16 %v60
  %v237 = vunpack.c.h.b16 %v60
  %v238 = vunpack.c.l.b16 %v61
  %v239 = vunpack.c.h.b16 %v61
  %v240 = vunpack.c.l.b16 %v62
  %v241 = vunpack.c.h.b16 %v62
  %v242 = vunpack.c.l.b16 %v63
  %v243 = vunpack.c.h.b16 %v63
  %v244 = vunpack.c.l.b16 %v64
  %v245 = vunpack.c.h.b16 %v64
  %v246 = vunpack.c.l.b16 %v65
  %v247 = vunpack.c.h.b16 %v65
  %v248 = vunpack.c.l.b16 %v66
  %v249 = vunpack.c.h.b16 %v66
  %v250 = vunpack.c.l.b16 %v67
  %v251 = vunpack.c.h.b16 %v67
  %v252 = vunpack.c.l.b16 %v68
  %v253 = vunpack.c.h.b16 %v68
  %v254 = vunpack.c.l.b16 %v69
  %v255 = vunpack.c.h.b16 %v69
  %v256 = vunpack.c.l.b16 %v70
  %v257 = vunpack.c.h.b16 %v70
  %v258 = vunpack.c.l.b16 %v71
  %v259 = vunpack.c.h.b16 %v71
  %v260 = vunpack.c.l.b16 %v72
  %v261 = vunpack.c.h.b16 %v72
  %v262 = vunpack.c.l.b16 %v73
  %v263 = vunpack.c.h.b16 %v73
  %v264 = vunpack.c.l.b16 %v74
  %v265 = vunpack.c.h.b16 %v74
  %v266 = vunpack.c.l.b16 %v75
  %v267 = vunpack.c.h.b16 %v75
  %v268 = vunpack.c.l.b16 %v76
  %v269 = vunpack.c.h.b16 %v76
  %v270 = vunpack.c.l.b16 %v77
  %v271 = vunpack.c.h.b16 %v77
  %v272 = vunpack.c.l.b16 %v78
  %v273 = vunpack.c.h.b16 %v78
  %v274 = vunpack.c.l.b16 %v79
  %v275 = vunpack.c.h.b16 %v79
  %v276 = vunpack.c.l.b16 %v80
  %v277 = vunpack.c.h.b16 %v80
  %v278 = vunpack.c.l.b16 %v81
  %v279 = vunpack.c.h.b16 %v81
  %v280 = vpack.c.b16 %v156, %v152
  %v281 = vpack.c.b16 %v157, %v153
  %v282 = vpack.c.b16 %v158, %v154
  %v283 = vpack.c.b16 %v159, %v155
  %v284 = vpack.c.b16 %v164, %v160
  %v285 = vpack.c.b16 %v165, %v161
  %v286 = vpack.c.b16 %v166, %v162
  %v287 = vpack.c.b16 %v167, %v163
  %v288 = vpack.c.b16 %v172, %v168
  %v289 = vpack.c.b16 %v173, %v169
  %v290 = vpack.c.b16 %v174, %v170
  %v291 = vpack.c.b16 %v175, %v171
  %v292 = vpack.c.b16 %v180, %v176
  %v293 = vpack.c.b16 %v181, %v177
  %v294 = vpack.c.b16 %v182, %v178
  %v295 = vpack.c.b16 %v183, %v179
  %v296 = vpack.c.b16 %v188, %v184
  %v297 = vpack.c.b16 %v189, %v185
  %v298 = vpack.c.b16 %v190, %v186
  %v299 = vpack.c.b16 %v191, %v187
  %v300 = vpack.c.b16 %v196, %v192
  %v301 = vpack.c.b16 %v197, %v193
  %v302 = vpack.c.b16 %v198, %v194
  %v303 = vpack.c.b16 %v199, %v195
  %v304 = vpack.c.b16 %v204, %v200
  %v305 = vpack.c.b16 %v205, %v201
  %v306 = vpack.c.b16 %v206, %v202
  %v307 = vpack.c.b16 %v207, %v203
  %v308 = vpack.c.b16 %v212, %v208
  %v309 = vpack.c.b16 %v213, %v209
  %v310 = vpack.c.b16 %v214, %v210
  %v311 = vpack.c.b16 %v215, %v211
  %v312 = vpack.c.b16 %v220, %v216
  %v313 = vpack.c.b16 %v221, %v217
  %v314 = vpack.c.b16 %v222, %v218
  %v315 = vpack.c.b16 %v223, %v219
  %v316 = vpack.c.b16 %v228, %v224
  %v317 = vpack.c.b16 %v229, %v225
  %v318 = vpack.c.b16 %v230, %v226
  %v319 = vpack.c.b16 %v231, %v227
  %v320 = vpack.c.b16 %v236, %v232
  %v321 = vpack.c.b16 %v237, %v233
  %v322 = vpack.c.b16 %v238, %v234
  %v323 = vpack.c.b16 %v239, %v235
  %v324 = vpack.c.b16 %v244, %v240
  %v325 = vpack.c.b16 %v245, %v241
  %v326 = vpack.c.b16 %v246, %v242
  %v327 = vpack.c.b16 %v247, %v243
  %v328 = vpack.c.b16 %v252, %v248
  %v329 = vpack.c.b16 %v253, %v249
  %v330 = vpack.c.b16 %v254, %v250
  %v331 = vpack.c.b16 %v255, %v251
  %v332 = vpack.c.b16 %v260, %v256
  %v333 = vpack.c.b16 %v261, %v257
  %v334 = vpack.c.b16 %v262, %v258
  %v335 = vpack.c.b16 %v263, %v259
  %v336 = vpack.c.b16 %v268, %v264
  %v337 = vpack.c.b16 %v269, %v265
  %v338 = vpack.c.b16 %v270, %v266
  %v339 = vpack.c.b16 %v271, %v267
  %v340 = vpack.c.b16 %v276, %v272
  %v341 = vpack.c.b16 %v277, %v273
  %v342 = vpack.c.b16 %v278, %v274
  %v343 = vpack.c.b16 %v279, %v275
  %408 = vmatpush.bf16.msra.mxu0 %v308
  %409 = vmatpush.bf16.msra.mxu0 %v304
  %410 = vmatpush.bf16.msra.mxu0 %v300
  %411 = vmatpush.bf16.msra.mxu0 %v296
  %412 = vmatpush.bf16.msra.mxu0 %v292
  %413 = vmatpush.bf16.msra.mxu0 %v288
  %414 = vmatpush.bf16.msra.mxu0 %v284
  %415 = vmatpush.bf16.msra.mxu0 %v280
  %416 = vmatmul.bf16.gmra.mxu0 %v84
  %v417 = vpop.f32.mrf.mxu0
  %v418 = vadd.f32 0.0, %v417
  %v419 = vpop.f32.mrf.mxu0
  %420 = vdwg.mxu0
  %421 = vmatpush.bf16.msra.mxu0 %v340
  %422 = vmatpush.bf16.msra.mxu0 %v336
  %423 = vmatpush.bf16.msra.mxu0 %v332
  %424 = vmatpush.bf16.msra.mxu0 %v328
  %425 = vmatpush.bf16.msra.mxu0 %v324
  %426 = vmatpush.bf16.msra.mxu0 %v320
  %427 = vmatpush.bf16.msra.mxu0 %v316
  %428 = vmatpush.bf16.msra.mxu0 %v312
  %429 = vmatmul.bf16.gmra.mxu0 %v85
  %v430 = vpop.f32.mrf.mxu0
  %v431 = vadd.f32 %v418, %v430
  %v432 = vpop.f32.mrf.mxu0
  %433 = vdwg.mxu0
  %434 = vmatpush.bf16.msra.mxu0 %v309
  %435 = vmatpush.bf16.msra.mxu0 %v305
  %436 = vmatpush.bf16.msra.mxu0 %v301
  %437 = vmatpush.bf16.msra.mxu0 %v297
  %438 = vmatpush.bf16.msra.mxu0 %v293
  %439 = vmatpush.bf16.msra.mxu0 %v289
  %440 = vmatpush.bf16.msra.mxu0 %v285
  %441 = vmatpush.bf16.msra.mxu0 %v281
  %442 = vmatmul.bf16.gmra.mxu0 %v84
  %v443 = vpop.f32.mrf.mxu0
  %v444 = vadd.f32 0.0, %v443
  %v445 = vpop.f32.mrf.mxu0
  %446 = vdwg.mxu0
  %447 = vmatpush.bf16.msra.mxu0 %v341
  %448 = vmatpush.bf16.msra.mxu0 %v337
  %449 = vmatpush.bf16.msra.mxu0 %v333
  %450 = vmatpush.bf16.msra.mxu0 %v329
  %451 = vmatpush.bf16.msra.mxu0 %v325
  %452 = vmatpush.bf16.msra.mxu0 %v321
  %453 = vmatpush.bf16.msra.mxu0 %v317
  %454 = vmatpush.bf16.msra.mxu0 %v313
  %455 = vmatmul.bf16.gmra.mxu0 %v85
  %v456 = vpop.f32.mrf.mxu0
  %v457 = vadd.f32 %v444, %v456
  %v458 = vpop.f32.mrf.mxu0
  %459 = vdwg.mxu0
  %460 = vmatpush.bf16.msra.mxu0 %v310
  %461 = vmatpush.bf16.msra.mxu0 %v306
  %462 = vmatpush.bf16.msra.mxu0 %v302
  %463 = vmatpush.bf16.msra.mxu0 %v298
  %464 = vmatpush.bf16.msra.mxu0 %v294
  %465 = vmatpush.bf16.msra.mxu0 %v290
  %466 = vmatpush.bf16.msra.mxu0 %v286
  %467 = vmatpush.bf16.msra.mxu0 %v282
  %468 = vmatmul.bf16.gmra.mxu0 %v84
  %v469 = vpop.f32.mrf.mxu0
  %v470 = vadd.f32 0.0, %v469
  %v471 = vpop.f32.mrf.mxu0
  %472 = vdwg.mxu0
  %473 = vmatpush.bf16.msra.mxu0 %v342
  %474 = vmatpush.bf16.msra.mxu0 %v338
  %475 = vmatpush.bf16.msra.mxu0 %v334
  %476 = vmatpush.bf16.msra.mxu0 %v330
  %477 = vmatpush.bf16.msra.mxu0 %v326
  %478 = vmatpush.bf16.msra.mxu0 %v322
  %479 = vmatpush.bf16.msra.mxu0 %v318
  %480 = vmatpush.bf16.msra.mxu0 %v314
  %481 = vmatmul.bf16.gmra.mxu0 %v85
  %v482 = vpop.f32.mrf.mxu0
  %v483 = vadd.f32 %v470, %v482
  %v484 = vpop.f32.mrf.mxu0
  %485 = vdwg.mxu0
  %486 = vmatpush.bf16.msra.mxu0 %v311
  %487 = vmatpush.bf16.msra.mxu0 %v307
  %488 = vmatpush.bf16.msra.mxu0 %v303
  %489 = vmatpush.bf16.msra.mxu0 %v299
  %490 = vmatpush.bf16.msra.mxu0 %v295
  %491 = vmatpush.bf16.msra.mxu0 %v291
  %492 = vmatpush.bf16.msra.mxu0 %v287
  %493 = vmatpush.bf16.msra.mxu0 %v283
  %494 = vmatmul.bf16.gmra.mxu0 %v84
  %v495 = vpop.f32.mrf.mxu0
  %v496 = vadd.f32 0.0, %v495
  %v497 = vpop.f32.mrf.mxu0
  %498 = vdwg.mxu0
  %499 = vmatpush.bf16.msra.mxu0 %v343
  %500 = vmatpush.bf16.msra.mxu0 %v339
  %501 = vmatpush.bf16.msra.mxu0 %v335
  %502 = vmatpush.bf16.msra.mxu0 %v331
  %503 = vmatpush.bf16.msra.mxu0 %v327
  %504 = vmatpush.bf16.msra.mxu0 %v323
  %505 = vmatpush.bf16.msra.mxu0 %v319
  %506 = vmatpush.bf16.msra.mxu0 %v315
  %507 = vmatmul.bf16.gmra.mxu0 %v85
  %v508 = vpop.f32.mrf.mxu0
  %v509 = vadd.f32 %v496, %v508
  %v510 = vpop.f32.mrf.mxu0
  %511 = vdwg.mxu0
  %v512 = vld [vmem:[%s2] sm:$0x3]
  %v513 = vld [vmem:[%s3] sm:$0x3]
  %515 = vset.pattern.permute.xlu0 0
  %516 = vperm.xlu0 %515, %v512
  %v517 = vpop.permute.xlu0 %516
  %v519 = vmul.f32 %v431, %v517
  %v520 = vmul.f32 %v457, %v517
  %v521 = vmul.f32 %v483, %v517
  %v522 = vmul.f32 %v509, %v517
  %524 = vset.pattern.permute.xlu0 0
  %525 = vperm.xlu0 %524, %v513
  %v526 = vpop.permute.xlu0 %525
  %v528 = vadd.f32 %v519, %v526
  %v529 = vadd.f32 %v520, %v526
  %v530 = vadd.f32 %v521, %v526
  %v531 = vadd.f32 %v522, %v526
  %v536 = vrot.slane %v529, 6
  %v537 = vrot.slane %v530, 4
  %v538 = vrot.slane %v531, 2
  %vm539 = vcmask 1041408
  %v540 = vsel %vm539, %v528, %v536
  %vm541 = vcmask 1045508
  %v542 = vsel %vm541, %v537, %v538
  %vm543 = vcmask 1043456
  %v544 = vsel %vm543, %v540, %v542
  %546 = vst [vmem:[%s4] sm:$0xff] %v544
  // Predicated region
  $region18: #{register_vae_forward.161} parent=0 // pred_check
    _
  $region19: #{register_vae_forward.161} parent=0 // pred_check_branch
    %548 = sbr.rel (0) target = $region21
  $region20: #{register_vae_forward.161} parent=0 // pred_region
    _
  $region21: #{register_vae_forward.161} parent=0 // pred_fallthru
    _
  // Predicated region
  $region22: #{register_vae_forward.161} parent=0 // pred_check
    _
  $region23: #{register_vae_forward.161} parent=0 // pred_check_branch
    %550 = sbr.rel (0) target = $region25
  $region24: #{register_vae_forward.161} parent=0 // pred_region
    _
  $region25: #{register_vae_forward.161} parent=0 // pred_fallthru
    _

</llo_original>
